<compile_context>
chip_gen: v5e
topology: v5e:2x2
jax: 0.10.0
libtpu: 0.0.40
codegen_flags: <defaults>
</compile_context>

<pallas_src>
import functools

import jax
import jax.numpy as jnp
import numpy as np
from jax.experimental import pallas as pl
from jax.experimental.pallas import tpu as pltpu

_LAYER_CFG = ((2, 1, 1), (2, 1, 1), (1, 1, 0))  # (stride, padding, output_padding)
_KSIZE = 3


# -----------------------------------------------------------------------------
# Fused decoder kernel (one batch element per grid step)
# -----------------------------------------------------------------------------
def _decoder_kernel(a0_ref, m1_ref, b1_ref, m2_ref, b2_ref, m3_ref, b3_ref,
                    out_ref, *, side, shifts):
    def shifted(a, dm, dn):
        # sh[m*side + n, :] = a[(m+dm)*side + (n+dn), :], zero outside the grid.
        rows, cols = a.shape
        k = dm * side + dn
        if k > 0:
            sh = jnp.concatenate(
                [a[k:, :], jnp.zeros((k, cols), a.dtype)], axis=0)
        elif k < 0:
            sh = jnp.concatenate(
                [jnp.zeros((-k, cols), a.dtype), a[:rows + k, :]], axis=0)
        else:
            sh = a
        if dn != 0:
            col = jax.lax.broadcasted_iota(jnp.int32, (rows, 1), 0) % side
            ok = (col < side - dn) if dn > 0 else (col >= -dn)
            sh = jnp.where(ok, sh, jnp.zeros_like(sh))
        return sh

    def layer(a, m_ref, b_ref, shift_list, relu):
        acc = jnp.zeros((a.shape[0], m_ref.shape[-1]), jnp.float32)
        for j, (dm, dn) in enumerate(shift_list):
            acc = acc + jnp.dot(shifted(a, dm, dn), m_ref[j],
                                preferred_element_type=jnp.float32)
        acc = acc + b_ref[...]
        return jnp.maximum(acc, 0.0) if relu else acc

    a0 = a0_ref[0]                                   # (S*S, Cin)
    a1 = layer(a0, m1_ref, b1_ref, shifts[0], True)  # (S*S, 4*64)
    a2 = layer(a1, m2_ref, b2_ref, shifts[1], True)  # (S*S, 16*32)
    a3 = layer(a2, m3_ref, b3_ref, shifts[2], False) # (S*S, 16*3)
    out_ref[0] = a3.astype(out_ref.dtype)


# -----------------------------------------------------------------------------
# One-time host-side packing of the PyTorch-layout weights into routing matrices
# -----------------------------------------------------------------------------
def pack_decoder_params(params):
    packed = {}
    shifts_all = []
    f_in = 1
    c_out = None
    for li, (stride, pad, out_pad) in enumerate(_LAYER_CFG, start=1):
        w = np.asarray(params[f"w{li}"], dtype=np.float32)  # (Cin, Cout, k, k)
        b = np.asarray(params[f"b{li}"], dtype=np.float32)
        cin, c_out, k, _ = w.shape
        assert k == _KSIZE and k + out_pad - stride - 2 * pad == 0
        f_out = f_in * stride
        axis_shifts = sorted({-((stride * a - pad + kh) // f_out)
                              for a in range(f_in) for kh in range(k)})
        shift_list = tuple((dm, dn) for dm in axis_shifts for dn in axis_shifts)
        sidx = {s: i for i, s in enumerate(shift_list)}
        m = np.zeros((len(shift_list), f_in * f_in * cin, f_out * f_out * c_out),
                     dtype=np.float32)
        for a in range(f_in):
            for kh in range(k):
                e_h = stride * a - pad + kh
                qh = e_h // f_out
                dm, ah = -qh, e_h - qh * f_out
                for bb in range(f_in):
                    for kw in range(k):
                        e_w = stride * bb - pad + kw
                        qw = e_w // f_out
                        dn, bw = -qw, e_w - qw * f_out
                        r0 = (a * f_in + bb) * cin
                        c0 = (ah * f_out + bw) * c_out
                        m[sidx[(dm, dn)], r0:r0 + cin, c0:c0 + c_out] += \
                            w[:, :, kh, kw]
        packed[f"m{li}"] = jnp.asarray(m)
        packed[f"b{li}"] = jnp.asarray(np.tile(b, f_out * f_out).reshape(1, -1))
        shifts_all.append(shift_list)
        f_in = f_out
    packed["shifts"] = tuple(shifts_all)
    packed["f_final"] = f_in
    packed["c_final"] = int(c_out)
    return packed


# -----------------------------------------------------------------------------
# Forward pass (NCHW in / NCHW out, matching PyTorch)
# -----------------------------------------------------------------------------
def decoder_forward(x_nchw, packed):
    n, cin, h, w = x_nchw.shape
    assert h == w, "square spatial input expected"
    side = h
    rows = side * side
    a0 = jnp.transpose(x_nchw.astype(jnp.float32), (0, 2, 3, 1))
    a0 = a0.reshape(n, rows, cin)

    m1, b1 = packed["m1"], packed["b1"]
    m2, b2 = packed["m2"], packed["b2"]
    m3, b3 = packed["m3"], packed["b3"]
    f_fin, c_fin = packed["f_final"], packed["c_final"]
    out_lanes = f_fin * f_fin * c_fin

    kernel = functools.partial(_decoder_kernel, side=side,
                               shifts=packed["shifts"])
    out_packed = pl.pallas_call(
        kernel,
        out_shape=jax.ShapeDtypeStruct((n, rows, out_lanes), jnp.float32),
        grid_spec=pltpu.PrefetchScalarGridSpec(
            num_scalar_prefetch=0,
            grid=(n,),
            in_specs=[
                pl.BlockSpec((1, rows, cin), lambda i: (i, 0, 0)),
                pl.BlockSpec(m1.shape, lambda i: (0, 0, 0)),
                pl.BlockSpec(b1.shape, lambda i: (0, 0)),
                pl.BlockSpec(m2.shape, lambda i: (0, 0, 0)),
                pl.BlockSpec(b2.shape, lambda i: (0, 0)),
                pl.BlockSpec(m3.shape, lambda i: (0, 0, 0)),
                pl.BlockSpec(b3.shape, lambda i: (0, 0)),
            ],
            out_specs=pl.BlockSpec((1, rows, out_lanes), lambda i: (i, 0, 0)),
        ),
        compiler_params=pltpu.CompilerParams(
            dimension_semantics=("parallel",),
            vmem_limit_bytes=32 * 1024 * 1024),
    )(a0, m1, b1, m2, b2, m3, b3)

    # Unpack (N, S*S, F*F*C) -> (N, C, S*F, S*F)  (tiny, done in XLA)
    y = out_packed.reshape(n, side, side, f_fin, f_fin, c_fin)
    y = jnp.transpose(y, (0, 5, 1, 3, 2, 4))
    return y.reshape(n, c_fin, side * f_fin, side * f_fin)


# -----------------------------------------------------------------------------
# Parameter init (PyTorch ConvTranspose2d weight layout: (Cin, Cout, kH, kW))
# -----------------------------------------------------------------------------
def init_params(key, latent_dim=16):
    ks = jax.random.split(key, 6)

    def tconv_init(kw, kb, cin, cout, k=_KSIZE):
        bound = 1.0 / float(np.sqrt(cin * k * k))
        w = jax.random.uniform(kw, (cin, cout, k, k), jnp.float32, -bound, bound)
        b = jax.random.uniform(kb, (cout,), jnp.float32, -bound, bound)
        return w, b

    w1, b1 = tconv_init(ks[0], ks[1], latent_dim, 64)
    w2, b2 = tconv_init(ks[2], ks[3], 64, 32)
    w3, b3 = tconv_init(ks[4], ks[5], 32, 3)
    return {"w1": w1, "b1": b1, "w2": w2, "b2": b2, "w3": w3, "b3": b3}


# -----------------------------------------------------------------------------
# Independent numpy reference (direct PyTorch ConvTranspose2d scatter formula)
# -----------------------------------------------------------------------------
def _reference_decoder_numpy(x_nchw, params):
    def tconv(h, w, b, stride, pad, out_pad):
        w = np.asarray(w, np.float32)
        b = np.asarray(b, np.float32)
        n, _, hi, wi = h.shape
        cout, k = w.shape[1], w.shape[2]
        ho = (hi - 1) * stride - 2 * pad + k + out_pad
        wo = (wi - 1) * stride - 2 * pad + k + out_pad
        out = np.zeros((n, cout, ho, wo), np.float32)
        for r in range(hi):
            for t in range(wi):
                xv = h[:, :, r, t]
                for kh in range(k):
                    u = r * stride - pad + kh
                    if not 0 <= u < ho:
                        continue
                    for kw in range(k):
                        v = t * stride - pad + kw
                        if not 0 <= v < wo:
                            continue
                        out[:, :, u, v] += xv @ w[:, :, kh, kw]
        return out + b.reshape(1, cout, 1, 1)

    h = np.asarray(x_nchw, np.float32)
    h = np.maximum(tconv(h, params["w1"], params["b1"], 2, 1, 1), 0.0)
    h = np.maximum(tconv(h, params["w2"], params["b2"], 2, 1, 1), 0.0)
    return tconv(h, params["w3"], params["b3"], 1, 1, 0)


if __name__ == "__main__":
    key = jax.random.PRNGKey(0)
    kx, kp = jax.random.split(key)

    latent_dim = 16
    x = jax.random.normal(kx, (2, latent_dim, 8, 8), jnp.float32)  # NCHW
    params = init_params(kp, latent_dim)
    packed = pack_decoder_params(params)  # one-time host-side packing

    out = decoder_forward(x, packed)
    out = jax.block_until_ready(out)
    assert out.shape == (2, 3, 32, 32), out.shape

    ref = _reference_decoder_numpy(np.asarray(x), params)
    np.testing.assert_allclose(np.asarray(out), ref, rtol=5e-3, atol=5e-3)

    print("KERNEL_OK")
</pallas_src>

<mosaic_0001>
module attributes {stable_mosaic.version = 11 : i64} {
  func.func @_decoder_kernel(%arg0: i32, %arg1: memref<1x64x16xf32, #tpu.memory_space<vmem>>, %arg2: memref<4x16x256xf32, #tpu.memory_space<vmem>>, %arg3: memref<1x256xf32, #tpu.memory_space<vmem>>, %arg4: memref<4x256x512xf32, #tpu.memory_space<vmem>>, %arg5: memref<1x512xf32, #tpu.memory_space<vmem>>, %arg6: memref<9x512x48xf32, #tpu.memory_space<vmem>>, %arg7: memref<1x48xf32, #tpu.memory_space<vmem>>, %arg8: memref<1x64x48xf32, #tpu.memory_space<vmem>>) attributes {dimension_semantics = [#tpu.dimension_semantics<parallel>], iteration_bounds = array<i64: 2>, scalar_prefetch = 0 : i64, scratch_operands = 0 : i64, tpu.core_type = #tpu.core_type<tc>, window_params = [{transform_indices = @transform_0, window_bounds = array<i64: 1, 64, 16>}, {pipeline_mode = #tpu.pipeline_mode<synchronous>, transform_indices = @transform_1, window_bounds = array<i64: 4, 16, 256>}, {pipeline_mode = #tpu.pipeline_mode<synchronous>, transform_indices = @transform_2, window_bounds = array<i64: 1, 256>}, {pipeline_mode = #tpu.pipeline_mode<synchronous>, transform_indices = @transform_3, window_bounds = array<i64: 4, 256, 512>}, {pipeline_mode = #tpu.pipeline_mode<synchronous>, transform_indices = @transform_4, window_bounds = array<i64: 1, 512>}, {pipeline_mode = #tpu.pipeline_mode<synchronous>, transform_indices = @transform_5, window_bounds = array<i64: 9, 512, 48>}, {pipeline_mode = #tpu.pipeline_mode<synchronous>, transform_indices = @transform_6, window_bounds = array<i64: 1, 48>}, {transform_indices = @transform_7, window_bounds = array<i64: 1, 64, 48>}]} {
    %c0 = arith.constant 0 : index
    %c0_0 = arith.constant 0 : index
    %c0_1 = arith.constant 0 : index
    %0 = vector.load %arg1[%c0, %c0_0, %c0_1] : memref<1x64x16xf32, #tpu.memory_space<vmem>>, vector<1x64x16xf32>
    %1 = vector.shape_cast %0 : vector<1x64x16xf32> to vector<64x16xf32>
    %cst = arith.constant 0.000000e+00 : f32
    %2 = vector.broadcast %cst : f32 to vector<64x256xf32>
    %c0_2 = arith.constant 0 : index
    %c0_3 = arith.constant 0 : index
    %c0_4 = arith.constant 0 : index
    %3 = vector.load %arg2[%c0_2, %c0_3, %c0_4] : memref<4x16x256xf32, #tpu.memory_space<vmem>>, vector<1x16x256xf32>
    %4 = vector.shape_cast %3 : vector<1x16x256xf32> to vector<16x256xf32>
    %cst_5 = arith.constant dense<0.000000e+00> : vector<64x256xf32>
    %5 = tpu.matmul %1, %4, %cst_5 {dimension_numbers = #tpu.dot_dimension_numbers<[1], [0], [0], [1], [0, 0, 1, 1], [], []>} : vector<64x16xf32>, vector<16x256xf32>, vector<64x256xf32> -> vector<64x256xf32>
    %6 = arith.addf %2, %5 : vector<64x256xf32>
    %7 = vector.extract_strided_slice %1 {offsets = [1, 0], sizes = [63, 16], strides = [1, 1]} : vector<64x16xf32> to vector<63x16xf32>
    %cst_6 = arith.constant 0.000000e+00 : f32
    %8 = vector.broadcast %cst_6 : f32 to vector<1x16xf32>
    %9 = tpu.concatenate %7, %8 in 0 : vector<63x16xf32>, vector<1x16xf32> -> vector<64x16xf32>
    %10 = tpu.iota {dimensions = array<i32: 0>} : vector<64x1xi32>
    %c8_i32 = arith.constant 8 : i32
    %c0_i32 = arith.constant 0 : i32
    %11 = arith.cmpi eq, %c8_i32, %c0_i32 : i32
    %c1_i32 = arith.constant 1 : i32
    %12 = arith.select %11, %c1_i32, %c8_i32 : i32
    %13 = vector.broadcast %12 : i32 to vector<64x1xi32>
    %14 = arith.remsi %10, %13 : vector<64x1xi32>
    %c0_i32_7 = arith.constant 0 : i32
    %15 = vector.broadcast %c0_i32_7 : i32 to vector<64x1xi32>
    %16 = arith.cmpi ne, %14, %15 : vector<64x1xi32>
    %c0_i32_8 = arith.constant 0 : i32
    %17 = vector.broadcast %c0_i32_8 : i32 to vector<64x1xi32>
    %18 = arith.cmpi slt, %14, %17 : vector<64x1xi32>
    %c0_i32_9 = arith.constant 0 : i32
    %19 = arith.cmpi slt, %12, %c0_i32_9 : i32
    %20 = vector.broadcast %19 : i1 to vector<64x1xi1>
    %21 = vector.broadcast %20 : vector<64x1xi1> to vector<64x1xi1>
    %22 = arith.xori %18, %21 : vector<64x1xi1>
    %23 = arith.andi %22, %16 : vector<64x1xi1>
    %24 = vector.broadcast %12 : i32 to vector<64x1xi32>
    %25 = arith.addi %14, %24 : vector<64x1xi32>
    %26 = arith.select %23, %25, %14 : vector<64x1xi1>, vector<64x1xi32>
    %c7_i32 = arith.constant 7 : i32
    %27 = vector.broadcast %c7_i32 : i32 to vector<64x1xi32>
    %28 = arith.cmpi slt, %26, %27 : vector<64x1xi32>
    %cst_10 = arith.constant 0.000000e+00 : f32
    %29 = vector.broadcast %cst_10 : f32 to vector<64x16xf32>
    %30 = vector.shape_cast %28 : vector<64x1xi1> to vector<64x1xi1>
    %31 = vector.broadcast %30 : vector<64x1xi1> to vector<64x16xi1>
    %32 = arith.select %31, %9, %29 : vector<64x16xi1>, vector<64x16xf32>
    %c1 = arith.constant 1 : index
    %c0_11 = arith.constant 0 : index
    %c0_12 = arith.constant 0 : index
    %33 = vector.load %arg2[%c1, %c0_11, %c0_12] : memref<4x16x256xf32, #tpu.memory_space<vmem>>, vector<1x16x256xf32>
    %34 = vector.shape_cast %33 : vector<1x16x256xf32> to vector<16x256xf32>
    %cst_13 = arith.constant dense<0.000000e+00> : vector<64x256xf32>
    %35 = tpu.matmul %32, %34, %cst_13 {dimension_numbers = #tpu.dot_dimension_numbers<[1], [0], [0], [1], [0, 0, 1, 1], [], []>} : vector<64x16xf32>, vector<16x256xf32>, vector<64x256xf32> -> vector<64x256xf32>
    %36 = arith.addf %6, %35 : vector<64x256xf32>
    %37 = vector.extract_strided_slice %1 {offsets = [8, 0], sizes = [56, 16], strides = [1, 1]} : vector<64x16xf32> to vector<56x16xf32>
    %cst_14 = arith.constant 0.000000e+00 : f32
    %38 = vector.broadcast %cst_14 : f32 to vector<8x16xf32>
    %39 = tpu.concatenate %37, %38 in 0 : vector<56x16xf32>, vector<8x16xf32> -> vector<64x16xf32>
    %c2 = arith.constant 2 : index
    %c0_15 = arith.constant 0 : index
    %c0_16 = arith.constant 0 : index
    %40 = vector.load %arg2[%c2, %c0_15, %c0_16] : memref<4x16x256xf32, #tpu.memory_space<vmem>>, vector<1x16x256xf32>
    %41 = vector.shape_cast %40 : vector<1x16x256xf32> to vector<16x256xf32>
    %cst_17 = arith.constant dense<0.000000e+00> : vector<64x256xf32>
    %42 = tpu.matmul %39, %41, %cst_17 {dimension_numbers = #tpu.dot_dimension_numbers<[1], [0], [0], [1], [0, 0, 1, 1], [], []>} : vector<64x16xf32>, vector<16x256xf32>, vector<64x256xf32> -> vector<64x256xf32>
    %43 = arith.addf %36, %42 : vector<64x256xf32>
    %44 = vector.extract_strided_slice %1 {offsets = [9, 0], sizes = [55, 16], strides = [1, 1]} : vector<64x16xf32> to vector<55x16xf32>
    %cst_18 = arith.constant 0.000000e+00 : f32
    %45 = vector.broadcast %cst_18 : f32 to vector<9x16xf32>
    %46 = tpu.concatenate %44, %45 in 0 : vector<55x16xf32>, vector<9x16xf32> -> vector<64x16xf32>
    %47 = tpu.iota {dimensions = array<i32: 0>} : vector<64x1xi32>
    %c8_i32_19 = arith.constant 8 : i32
    %c0_i32_20 = arith.constant 0 : i32
    %48 = arith.cmpi eq, %c8_i32_19, %c0_i32_20 : i32
    %c1_i32_21 = arith.constant 1 : i32
    %49 = arith.select %48, %c1_i32_21, %c8_i32_19 : i32
    %50 = vector.broadcast %49 : i32 to vector<64x1xi32>
    %51 = arith.remsi %47, %50 : vector<64x1xi32>
    %c0_i32_22 = arith.constant 0 : i32
    %52 = vector.broadcast %c0_i32_22 : i32 to vector<64x1xi32>
    %53 = arith.cmpi ne, %51, %52 : vector<64x1xi32>
    %c0_i32_23 = arith.constant 0 : i32
    %54 = vector.broadcast %c0_i32_23 : i32 to vector<64x1xi32>
    %55 = arith.cmpi slt, %51, %54 : vector<64x1xi32>
    %c0_i32_24 = arith.constant 0 : i32
    %56 = arith.cmpi slt, %49, %c0_i32_24 : i32
    %57 = vector.broadcast %56 : i1 to vector<64x1xi1>
    %58 = vector.broadcast %57 : vector<64x1xi1> to vector<64x1xi1>
    %59 = arith.xori %55, %58 : vector<64x1xi1>
    %60 = arith.andi %59, %53 : vector<64x1xi1>
    %61 = vector.broadcast %49 : i32 to vector<64x1xi32>
    %62 = arith.addi %51, %61 : vector<64x1xi32>
    %63 = arith.select %60, %62, %51 : vector<64x1xi1>, vector<64x1xi32>
    %c7_i32_25 = arith.constant 7 : i32
    %64 = vector.broadcast %c7_i32_25 : i32 to vector<64x1xi32>
    %65 = arith.cmpi slt, %63, %64 : vector<64x1xi32>
    %cst_26 = arith.constant 0.000000e+00 : f32
    %66 = vector.broadcast %cst_26 : f32 to vector<64x16xf32>
    %67 = vector.shape_cast %65 : vector<64x1xi1> to vector<64x1xi1>
    %68 = vector.broadcast %67 : vector<64x1xi1> to vector<64x16xi1>
    %69 = arith.select %68, %46, %66 : vector<64x16xi1>, vector<64x16xf32>
    %c3 = arith.constant 3 : index
    %c0_27 = arith.constant 0 : index
    %c0_28 = arith.constant 0 : index
    %70 = vector.load %arg2[%c3, %c0_27, %c0_28] : memref<4x16x256xf32, #tpu.memory_space<vmem>>, vector<1x16x256xf32>
    %71 = vector.shape_cast %70 : vector<1x16x256xf32> to vector<16x256xf32>
    %cst_29 = arith.constant dense<0.000000e+00> : vector<64x256xf32>
    %72 = tpu.matmul %69, %71, %cst_29 {dimension_numbers = #tpu.dot_dimension_numbers<[1], [0], [0], [1], [0, 0, 1, 1], [], []>} : vector<64x16xf32>, vector<16x256xf32>, vector<64x256xf32> -> vector<64x256xf32>
    %73 = arith.addf %43, %72 : vector<64x256xf32>
    %c0_30 = arith.constant 0 : index
    %c0_31 = arith.constant 0 : index
    %74 = vector.load %arg3[%c0_30, %c0_31] : memref<1x256xf32, #tpu.memory_space<vmem>>, vector<1x256xf32>
    %75 = vector.broadcast %74 : vector<1x256xf32> to vector<64x256xf32>
    %76 = arith.addf %73, %75 : vector<64x256xf32>
    %cst_32 = arith.constant 0.000000e+00 : f32
    %77 = vector.broadcast %cst_32 : f32 to vector<64x256xf32>
    %78 = arith.maximumf %76, %77 : vector<64x256xf32>
    %cst_33 = arith.constant 0.000000e+00 : f32
    %79 = vector.broadcast %cst_33 : f32 to vector<64x512xf32>
    %c0_34 = arith.constant 0 : index
    %c0_35 = arith.constant 0 : index
    %c0_36 = arith.constant 0 : index
    %80 = vector.load %arg4[%c0_34, %c0_35, %c0_36] : memref<4x256x512xf32, #tpu.memory_space<vmem>>, vector<1x256x512xf32>
    %81 = vector.shape_cast %80 : vector<1x256x512xf32> to vector<256x512xf32>
    %cst_37 = arith.constant dense<0.000000e+00> : vector<64x512xf32>
    %82 = tpu.matmul %78, %81, %cst_37 {dimension_numbers = #tpu.dot_dimension_numbers<[1], [0], [0], [1], [0, 0, 1, 1], [], []>} : vector<64x256xf32>, vector<256x512xf32>, vector<64x512xf32> -> vector<64x512xf32>
    %83 = arith.addf %79, %82 : vector<64x512xf32>
    %84 = vector.extract_strided_slice %78 {offsets = [1, 0], sizes = [63, 256], strides = [1, 1]} : vector<64x256xf32> to vector<63x256xf32>
    %cst_38 = arith.constant 0.000000e+00 : f32
    %85 = vector.broadcast %cst_38 : f32 to vector<1x256xf32>
    %86 = tpu.concatenate %84, %85 in 0 : vector<63x256xf32>, vector<1x256xf32> -> vector<64x256xf32>
    %87 = tpu.iota {dimensions = array<i32: 0>} : vector<64x1xi32>
    %c8_i32_39 = arith.constant 8 : i32
    %c0_i32_40 = arith.constant 0 : i32
    %88 = arith.cmpi eq, %c8_i32_39, %c0_i32_40 : i32
    %c1_i32_41 = arith.constant 1 : i32
    %89 = arith.select %88, %c1_i32_41, %c8_i32_39 : i32
    %90 = vector.broadcast %89 : i32 to vector<64x1xi32>
    %91 = arith.remsi %87, %90 : vector<64x1xi32>
    %c0_i32_42 = arith.constant 0 : i32
    %92 = vector.broadcast %c0_i32_42 : i32 to vector<64x1xi32>
    %93 = arith.cmpi ne, %91, %92 : vector<64x1xi32>
    %c0_i32_43 = arith.constant 0 : i32
    %94 = vector.broadcast %c0_i32_43 : i32 to vector<64x1xi32>
    %95 = arith.cmpi slt, %91, %94 : vector<64x1xi32>
    %c0_i32_44 = arith.constant 0 : i32
    %96 = arith.cmpi slt, %89, %c0_i32_44 : i32
    %97 = vector.broadcast %96 : i1 to vector<64x1xi1>
    %98 = vector.broadcast %97 : vector<64x1xi1> to vector<64x1xi1>
    %99 = arith.xori %95, %98 : vector<64x1xi1>
    %100 = arith.andi %99, %93 : vector<64x1xi1>
    %101 = vector.broadcast %89 : i32 to vector<64x1xi32>
    %102 = arith.addi %91, %101 : vector<64x1xi32>
    %103 = arith.select %100, %102, %91 : vector<64x1xi1>, vector<64x1xi32>
    %c7_i32_45 = arith.constant 7 : i32
    %104 = vector.broadcast %c7_i32_45 : i32 to vector<64x1xi32>
    %105 = arith.cmpi slt, %103, %104 : vector<64x1xi32>
    %cst_46 = arith.constant 0.000000e+00 : f32
    %106 = vector.broadcast %cst_46 : f32 to vector<64x256xf32>
    %107 = vector.shape_cast %105 : vector<64x1xi1> to vector<64x1xi1>
    %108 = vector.broadcast %107 : vector<64x1xi1> to vector<64x256xi1>
    %109 = arith.select %108, %86, %106 : vector<64x256xi1>, vector<64x256xf32>
    %c1_47 = arith.constant 1 : index
    %c0_48 = arith.constant 0 : index
    %c0_49 = arith.constant 0 : index
    %110 = vector.load %arg4[%c1_47, %c0_48, %c0_49] : memref<4x256x512xf32, #tpu.memory_space<vmem>>, vector<1x256x512xf32>
    %111 = vector.shape_cast %110 : vector<1x256x512xf32> to vector<256x512xf32>
    %cst_50 = arith.constant dense<0.000000e+00> : vector<64x512xf32>
    %112 = tpu.matmul %109, %111, %cst_50 {dimension_numbers = #tpu.dot_dimension_numbers<[1], [0], [0], [1], [0, 0, 1, 1], [], []>} : vector<64x256xf32>, vector<256x512xf32>, vector<64x512xf32> -> vector<64x512xf32>
    %113 = arith.addf %83, %112 : vector<64x512xf32>
    %114 = vector.extract_strided_slice %78 {offsets = [8, 0], sizes = [56, 256], strides = [1, 1]} : vector<64x256xf32> to vector<56x256xf32>
    %cst_51 = arith.constant 0.000000e+00 : f32
    %115 = vector.broadcast %cst_51 : f32 to vector<8x256xf32>
    %116 = tpu.concatenate %114, %115 in 0 : vector<56x256xf32>, vector<8x256xf32> -> vector<64x256xf32>
    %c2_52 = arith.constant 2 : index
    %c0_53 = arith.constant 0 : index
    %c0_54 = arith.constant 0 : index
    %117 = vector.load %arg4[%c2_52, %c0_53, %c0_54] : memref<4x256x512xf32, #tpu.memory_space<vmem>>, vector<1x256x512xf32>
    %118 = vector.shape_cast %117 : vector<1x256x512xf32> to vector<256x512xf32>
    %cst_55 = arith.constant dense<0.000000e+00> : vector<64x512xf32>
    %119 = tpu.matmul %116, %118, %cst_55 {dimension_numbers = #tpu.dot_dimension_numbers<[1], [0], [0], [1], [0, 0, 1, 1], [], []>} : vector<64x256xf32>, vector<256x512xf32>, vector<64x512xf32> -> vector<64x512xf32>
    %120 = arith.addf %113, %119 : vector<64x512xf32>
    %121 = vector.extract_strided_slice %78 {offsets = [9, 0], sizes = [55, 256], strides = [1, 1]} : vector<64x256xf32> to vector<55x256xf32>
    %cst_56 = arith.constant 0.000000e+00 : f32
    %122 = vector.broadcast %cst_56 : f32 to vector<9x256xf32>
    %123 = tpu.concatenate %121, %122 in 0 : vector<55x256xf32>, vector<9x256xf32> -> vector<64x256xf32>
    %124 = tpu.iota {dimensions = array<i32: 0>} : vector<64x1xi32>
    %c8_i32_57 = arith.constant 8 : i32
    %c0_i32_58 = arith.constant 0 : i32
    %125 = arith.cmpi eq, %c8_i32_57, %c0_i32_58 : i32
    %c1_i32_59 = arith.constant 1 : i32
    %126 = arith.select %125, %c1_i32_59, %c8_i32_57 : i32
    %127 = vector.broadcast %126 : i32 to vector<64x1xi32>
    %128 = arith.remsi %124, %127 : vector<64x1xi32>
    %c0_i32_60 = arith.constant 0 : i32
    %129 = vector.broadcast %c0_i32_60 : i32 to vector<64x1xi32>
    %130 = arith.cmpi ne, %128, %129 : vector<64x1xi32>
    %c0_i32_61 = arith.constant 0 : i32
    %131 = vector.broadcast %c0_i32_61 : i32 to vector<64x1xi32>
    %132 = arith.cmpi slt, %128, %131 : vector<64x1xi32>
    %c0_i32_62 = arith.constant 0 : i32
    %133 = arith.cmpi slt, %126, %c0_i32_62 : i32
    %134 = vector.broadcast %133 : i1 to vector<64x1xi1>
    %135 = vector.broadcast %134 : vector<64x1xi1> to vector<64x1xi1>
    %136 = arith.xori %132, %135 : vector<64x1xi1>
    %137 = arith.andi %136, %130 : vector<64x1xi1>
    %138 = vector.broadcast %126 : i32 to vector<64x1xi32>
    %139 = arith.addi %128, %138 : vector<64x1xi32>
    %140 = arith.select %137, %139, %128 : vector<64x1xi1>, vector<64x1xi32>
    %c7_i32_63 = arith.constant 7 : i32
    %141 = vector.broadcast %c7_i32_63 : i32 to vector<64x1xi32>
    %142 = arith.cmpi slt, %140, %141 : vector<64x1xi32>
    %cst_64 = arith.constant 0.000000e+00 : f32
    %143 = vector.broadcast %cst_64 : f32 to vector<64x256xf32>
    %144 = vector.shape_cast %142 : vector<64x1xi1> to vector<64x1xi1>
    %145 = vector.broadcast %144 : vector<64x1xi1> to vector<64x256xi1>
    %146 = arith.select %145, %123, %143 : vector<64x256xi1>, vector<64x256xf32>
    %c3_65 = arith.constant 3 : index
    %c0_66 = arith.constant 0 : index
    %c0_67 = arith.constant 0 : index
    %147 = vector.load %arg4[%c3_65, %c0_66, %c0_67] : memref<4x256x512xf32, #tpu.memory_space<vmem>>, vector<1x256x512xf32>
    %148 = vector.shape_cast %147 : vector<1x256x512xf32> to vector<256x512xf32>
    %cst_68 = arith.constant dense<0.000000e+00> : vector<64x512xf32>
    %149 = tpu.matmul %146, %148, %cst_68 {dimension_numbers = #tpu.dot_dimension_numbers<[1], [0], [0], [1], [0, 0, 1, 1], [], []>} : vector<64x256xf32>, vector<256x512xf32>, vector<64x512xf32> -> vector<64x512xf32>
    %150 = arith.addf %120, %149 : vector<64x512xf32>
    %c0_69 = arith.constant 0 : index
    %c0_70 = arith.constant 0 : index
    %151 = vector.load %arg5[%c0_69, %c0_70] : memref<1x512xf32, #tpu.memory_space<vmem>>, vector<1x512xf32>
    %152 = vector.broadcast %151 : vector<1x512xf32> to vector<64x512xf32>
    %153 = arith.addf %150, %152 : vector<64x512xf32>
    %cst_71 = arith.constant 0.000000e+00 : f32
    %154 = vector.broadcast %cst_71 : f32 to vector<64x512xf32>
    %155 = arith.maximumf %153, %154 : vector<64x512xf32>
    %cst_72 = arith.constant 0.000000e+00 : f32
    %156 = vector.broadcast %cst_72 : f32 to vector<64x48xf32>
    %cst_73 = arith.constant 0.000000e+00 : f32
    %157 = vector.broadcast %cst_73 : f32 to vector<9x512xf32>
    %158 = vector.extract_strided_slice %155 {offsets = [0, 0], sizes = [55, 512], strides = [1, 1]} : vector<64x512xf32> to vector<55x512xf32>
    %159 = tpu.concatenate %157, %158 in 0 : vector<9x512xf32>, vector<55x512xf32> -> vector<64x512xf32>
    %160 = tpu.iota {dimensions = array<i32: 0>} : vector<64x1xi32>
    %c8_i32_74 = arith.constant 8 : i32
    %c0_i32_75 = arith.constant 0 : i32
    %161 = arith.cmpi eq, %c8_i32_74, %c0_i32_75 : i32
    %c1_i32_76 = arith.constant 1 : i32
    %162 = arith.select %161, %c1_i32_76, %c8_i32_74 : i32
    %163 = vector.broadcast %162 : i32 to vector<64x1xi32>
    %164 = arith.remsi %160, %163 : vector<64x1xi32>
    %c0_i32_77 = arith.constant 0 : i32
    %165 = vector.broadcast %c0_i32_77 : i32 to vector<64x1xi32>
    %166 = arith.cmpi ne, %164, %165 : vector<64x1xi32>
    %c0_i32_78 = arith.constant 0 : i32
    %167 = vector.broadcast %c0_i32_78 : i32 to vector<64x1xi32>
    %168 = arith.cmpi slt, %164, %167 : vector<64x1xi32>
    %c0_i32_79 = arith.constant 0 : i32
    %169 = arith.cmpi slt, %162, %c0_i32_79 : i32
    %170 = vector.broadcast %169 : i1 to vector<64x1xi1>
    %171 = vector.broadcast %170 : vector<64x1xi1> to vector<64x1xi1>
    %172 = arith.xori %168, %171 : vector<64x1xi1>
    %173 = arith.andi %172, %166 : vector<64x1xi1>
    %174 = vector.broadcast %162 : i32 to vector<64x1xi32>
    %175 = arith.addi %164, %174 : vector<64x1xi32>
    %176 = arith.select %173, %175, %164 : vector<64x1xi1>, vector<64x1xi32>
    %c1_i32_80 = arith.constant 1 : i32
    %177 = vector.broadcast %c1_i32_80 : i32 to vector<64x1xi32>
    %178 = arith.cmpi sge, %176, %177 : vector<64x1xi32>
    %cst_81 = arith.constant 0.000000e+00 : f32
    %179 = vector.broadcast %cst_81 : f32 to vector<64x512xf32>
    %180 = vector.shape_cast %178 : vector<64x1xi1> to vector<64x1xi1>
    %181 = vector.broadcast %180 : vector<64x1xi1> to vector<64x512xi1>
    %182 = arith.select %181, %159, %179 : vector<64x512xi1>, vector<64x512xf32>
    %c0_82 = arith.constant 0 : index
    %c0_83 = arith.constant 0 : index
    %c0_84 = arith.constant 0 : index
    %183 = vector.load %arg6[%c0_82, %c0_83, %c0_84] : memref<9x512x48xf32, #tpu.memory_space<vmem>>, vector<1x512x48xf32>
    %184 = vector.shape_cast %183 : vector<1x512x48xf32> to vector<512x48xf32>
    %cst_85 = arith.constant dense<0.000000e+00> : vector<64x48xf32>
    %185 = tpu.matmul %182, %184, %cst_85 {dimension_numbers = #tpu.dot_dimension_numbers<[1], [0], [0], [1], [0, 0, 1, 1], [], []>} : vector<64x512xf32>, vector<512x48xf32>, vector<64x48xf32> -> vector<64x48xf32>
    %186 = arith.addf %156, %185 : vector<64x48xf32>
    %cst_86 = arith.constant 0.000000e+00 : f32
    %187 = vector.broadcast %cst_86 : f32 to vector<8x512xf32>
    %188 = vector.extract_strided_slice %155 {offsets = [0, 0], sizes = [56, 512], strides = [1, 1]} : vector<64x512xf32> to vector<56x512xf32>
    %189 = tpu.concatenate %187, %188 in 0 : vector<8x512xf32>, vector<56x512xf32> -> vector<64x512xf32>
    %c1_87 = arith.constant 1 : index
    %c0_88 = arith.constant 0 : index
    %c0_89 = arith.constant 0 : index
    %190 = vector.load %arg6[%c1_87, %c0_88, %c0_89] : memref<9x512x48xf32, #tpu.memory_space<vmem>>, vector<1x512x48xf32>
    %191 = vector.shape_cast %190 : vector<1x512x48xf32> to vector<512x48xf32>
    %cst_90 = arith.constant dense<0.000000e+00> : vector<64x48xf32>
    %192 = tpu.matmul %189, %191, %cst_90 {dimension_numbers = #tpu.dot_dimension_numbers<[1], [0], [0], [1], [0, 0, 1, 1], [], []>} : vector<64x512xf32>, vector<512x48xf32>, vector<64x48xf32> -> vector<64x48xf32>
    %193 = arith.addf %186, %192 : vector<64x48xf32>
    %cst_91 = arith.constant 0.000000e+00 : f32
    %194 = vector.broadcast %cst_91 : f32 to vector<7x512xf32>
    %195 = vector.extract_strided_slice %155 {offsets = [0, 0], sizes = [57, 512], strides = [1, 1]} : vector<64x512xf32> to vector<57x512xf32>
    %196 = tpu.concatenate %194, %195 in 0 : vector<7x512xf32>, vector<57x512xf32> -> vector<64x512xf32>
    %197 = tpu.iota {dimensions = array<i32: 0>} : vector<64x1xi32>
    %c8_i32_92 = arith.constant 8 : i32
    %c0_i32_93 = arith.constant 0 : i32
    %198 = arith.cmpi eq, %c8_i32_92, %c0_i32_93 : i32
    %c1_i32_94 = arith.constant 1 : i32
    %199 = arith.select %198, %c1_i32_94, %c8_i32_92 : i32
    %200 = vector.broadcast %199 : i32 to vector<64x1xi32>
    %201 = arith.remsi %197, %200 : vector<64x1xi32>
    %c0_i32_95 = arith.constant 0 : i32
    %202 = vector.broadcast %c0_i32_95 : i32 to vector<64x1xi32>
    %203 = arith.cmpi ne, %201, %202 : vector<64x1xi32>
    %c0_i32_96 = arith.constant 0 : i32
    %204 = vector.broadcast %c0_i32_96 : i32 to vector<64x1xi32>
    %205 = arith.cmpi slt, %201, %204 : vector<64x1xi32>
    %c0_i32_97 = arith.constant 0 : i32
    %206 = arith.cmpi slt, %199, %c0_i32_97 : i32
    %207 = vector.broadcast %206 : i1 to vector<64x1xi1>
    %208 = vector.broadcast %207 : vector<64x1xi1> to vector<64x1xi1>
    %209 = arith.xori %205, %208 : vector<64x1xi1>
    %210 = arith.andi %209, %203 : vector<64x1xi1>
    %211 = vector.broadcast %199 : i32 to vector<64x1xi32>
    %212 = arith.addi %201, %211 : vector<64x1xi32>
    %213 = arith.select %210, %212, %201 : vector<64x1xi1>, vector<64x1xi32>
    %c7_i32_98 = arith.constant 7 : i32
    %214 = vector.broadcast %c7_i32_98 : i32 to vector<64x1xi32>
    %215 = arith.cmpi slt, %213, %214 : vector<64x1xi32>
    %cst_99 = arith.constant 0.000000e+00 : f32
    %216 = vector.broadcast %cst_99 : f32 to vector<64x512xf32>
    %217 = vector.shape_cast %215 : vector<64x1xi1> to vector<64x1xi1>
    %218 = vector.broadcast %217 : vector<64x1xi1> to vector<64x512xi1>
    %219 = arith.select %218, %196, %216 : vector<64x512xi1>, vector<64x512xf32>
    %c2_100 = arith.constant 2 : index
    %c0_101 = arith.constant 0 : index
    %c0_102 = arith.constant 0 : index
    %220 = vector.load %arg6[%c2_100, %c0_101, %c0_102] : memref<9x512x48xf32, #tpu.memory_space<vmem>>, vector<1x512x48xf32>
    %221 = vector.shape_cast %220 : vector<1x512x48xf32> to vector<512x48xf32>
    %cst_103 = arith.constant dense<0.000000e+00> : vector<64x48xf32>
    %222 = tpu.matmul %219, %221, %cst_103 {dimension_numbers = #tpu.dot_dimension_numbers<[1], [0], [0], [1], [0, 0, 1, 1], [], []>} : vector<64x512xf32>, vector<512x48xf32>, vector<64x48xf32> -> vector<64x48xf32>
    %223 = arith.addf %193, %222 : vector<64x48xf32>
    %cst_104 = arith.constant 0.000000e+00 : f32
    %224 = vector.broadcast %cst_104 : f32 to vector<1x512xf32>
    %225 = vector.extract_strided_slice %155 {offsets = [0, 0], sizes = [63, 512], strides = [1, 1]} : vector<64x512xf32> to vector<63x512xf32>
    %226 = tpu.concatenate %224, %225 in 0 : vector<1x512xf32>, vector<63x512xf32> -> vector<64x512xf32>
    %227 = tpu.iota {dimensions = array<i32: 0>} : vector<64x1xi32>
    %c8_i32_105 = arith.constant 8 : i32
    %c0_i32_106 = arith.constant 0 : i32
    %228 = arith.cmpi eq, %c8_i32_105, %c0_i32_106 : i32
    %c1_i32_107 = arith.constant 1 : i32
    %229 = arith.select %228, %c1_i32_107, %c8_i32_105 : i32
    %230 = vector.broadcast %229 : i32 to vector<64x1xi32>
    %231 = arith.remsi %227, %230 : vector<64x1xi32>
    %c0_i32_108 = arith.constant 0 : i32
    %232 = vector.broadcast %c0_i32_108 : i32 to vector<64x1xi32>
    %233 = arith.cmpi ne, %231, %232 : vector<64x1xi32>
    %c0_i32_109 = arith.constant 0 : i32
    %234 = vector.broadcast %c0_i32_109 : i32 to vector<64x1xi32>
    %235 = arith.cmpi slt, %231, %234 : vector<64x1xi32>
    %c0_i32_110 = arith.constant 0 : i32
    %236 = arith.cmpi slt, %229, %c0_i32_110 : i32
    %237 = vector.broadcast %236 : i1 to vector<64x1xi1>
    %238 = vector.broadcast %237 : vector<64x1xi1> to vector<64x1xi1>
    %239 = arith.xori %235, %238 : vector<64x1xi1>
    %240 = arith.andi %239, %233 : vector<64x1xi1>
    %241 = vector.broadcast %229 : i32 to vector<64x1xi32>
    %242 = arith.addi %231, %241 : vector<64x1xi32>
    %243 = arith.select %240, %242, %231 : vector<64x1xi1>, vector<64x1xi32>
    %c1_i32_111 = arith.constant 1 : i32
    %244 = vector.broadcast %c1_i32_111 : i32 to vector<64x1xi32>
    %245 = arith.cmpi sge, %243, %244 : vector<64x1xi32>
    %cst_112 = arith.constant 0.000000e+00 : f32
    %246 = vector.broadcast %cst_112 : f32 to vector<64x512xf32>
    %247 = vector.shape_cast %245 : vector<64x1xi1> to vector<64x1xi1>
    %248 = vector.broadcast %247 : vector<64x1xi1> to vector<64x512xi1>
    %249 = arith.select %248, %226, %246 : vector<64x512xi1>, vector<64x512xf32>
    %c3_113 = arith.constant 3 : index
    %c0_114 = arith.constant 0 : index
    %c0_115 = arith.constant 0 : index
    %250 = vector.load %arg6[%c3_113, %c0_114, %c0_115] : memref<9x512x48xf32, #tpu.memory_space<vmem>>, vector<1x512x48xf32>
    %251 = vector.shape_cast %250 : vector<1x512x48xf32> to vector<512x48xf32>
    %cst_116 = arith.constant dense<0.000000e+00> : vector<64x48xf32>
    %252 = tpu.matmul %249, %251, %cst_116 {dimension_numbers = #tpu.dot_dimension_numbers<[1], [0], [0], [1], [0, 0, 1, 1], [], []>} : vector<64x512xf32>, vector<512x48xf32>, vector<64x48xf32> -> vector<64x48xf32>
    %253 = arith.addf %223, %252 : vector<64x48xf32>
    %c4 = arith.constant 4 : index
    %c0_117 = arith.constant 0 : index
    %c0_118 = arith.constant 0 : index
    %254 = vector.load %arg6[%c4, %c0_117, %c0_118] : memref<9x512x48xf32, #tpu.memory_space<vmem>>, vector<1x512x48xf32>
    %255 = vector.shape_cast %254 : vector<1x512x48xf32> to vector<512x48xf32>
    %cst_119 = arith.constant dense<0.000000e+00> : vector<64x48xf32>
    %256 = tpu.matmul %155, %255, %cst_119 {dimension_numbers = #tpu.dot_dimension_numbers<[1], [0], [0], [1], [0, 0, 1, 1], [], []>} : vector<64x512xf32>, vector<512x48xf32>, vector<64x48xf32> -> vector<64x48xf32>
    %257 = arith.addf %253, %256 : vector<64x48xf32>
    %258 = vector.extract_strided_slice %155 {offsets = [1, 0], sizes = [63, 512], strides = [1, 1]} : vector<64x512xf32> to vector<63x512xf32>
    %cst_120 = arith.constant 0.000000e+00 : f32
    %259 = vector.broadcast %cst_120 : f32 to vector<1x512xf32>
    %260 = tpu.concatenate %258, %259 in 0 : vector<63x512xf32>, vector<1x512xf32> -> vector<64x512xf32>
    %261 = tpu.iota {dimensions = array<i32: 0>} : vector<64x1xi32>
    %c8_i32_121 = arith.constant 8 : i32
    %c0_i32_122 = arith.constant 0 : i32
    %262 = arith.cmpi eq, %c8_i32_121, %c0_i32_122 : i32
    %c1_i32_123 = arith.constant 1 : i32
    %263 = arith.select %262, %c1_i32_123, %c8_i32_121 : i32
    %264 = vector.broadcast %263 : i32 to vector<64x1xi32>
    %265 = arith.remsi %261, %264 : vector<64x1xi32>
    %c0_i32_124 = arith.constant 0 : i32
    %266 = vector.broadcast %c0_i32_124 : i32 to vector<64x1xi32>
    %267 = arith.cmpi ne, %265, %266 : vector<64x1xi32>
    %c0_i32_125 = arith.constant 0 : i32
    %268 = vector.broadcast %c0_i32_125 : i32 to vector<64x1xi32>
    %269 = arith.cmpi slt, %265, %268 : vector<64x1xi32>
    %c0_i32_126 = arith.constant 0 : i32
    %270 = arith.cmpi slt, %263, %c0_i32_126 : i32
    %271 = vector.broadcast %270 : i1 to vector<64x1xi1>
    %272 = vector.broadcast %271 : vector<64x1xi1> to vector<64x1xi1>
    %273 = arith.xori %269, %272 : vector<64x1xi1>
    %274 = arith.andi %273, %267 : vector<64x1xi1>
    %275 = vector.broadcast %263 : i32 to vector<64x1xi32>
    %276 = arith.addi %265, %275 : vector<64x1xi32>
    %277 = arith.select %274, %276, %265 : vector<64x1xi1>, vector<64x1xi32>
    %c7_i32_127 = arith.constant 7 : i32
    %278 = vector.broadcast %c7_i32_127 : i32 to vector<64x1xi32>
    %279 = arith.cmpi slt, %277, %278 : vector<64x1xi32>
    %cst_128 = arith.constant 0.000000e+00 : f32
    %280 = vector.broadcast %cst_128 : f32 to vector<64x512xf32>
    %281 = vector.shape_cast %279 : vector<64x1xi1> to vector<64x1xi1>
    %282 = vector.broadcast %281 : vector<64x1xi1> to vector<64x512xi1>
    %283 = arith.select %282, %260, %280 : vector<64x512xi1>, vector<64x512xf32>
    %c5 = arith.constant 5 : index
    %c0_129 = arith.constant 0 : index
    %c0_130 = arith.constant 0 : index
    %284 = vector.load %arg6[%c5, %c0_129, %c0_130] : memref<9x512x48xf32, #tpu.memory_space<vmem>>, vector<1x512x48xf32>
    %285 = vector.shape_cast %284 : vector<1x512x48xf32> to vector<512x48xf32>
    %cst_131 = arith.constant dense<0.000000e+00> : vector<64x48xf32>
    %286 = tpu.matmul %283, %285, %cst_131 {dimension_numbers = #tpu.dot_dimension_numbers<[1], [0], [0], [1], [0, 0, 1, 1], [], []>} : vector<64x512xf32>, vector<512x48xf32>, vector<64x48xf32> -> vector<64x48xf32>
    %287 = arith.addf %257, %286 : vector<64x48xf32>
    %288 = vector.extract_strided_slice %155 {offsets = [7, 0], sizes = [57, 512], strides = [1, 1]} : vector<64x512xf32> to vector<57x512xf32>
    %cst_132 = arith.constant 0.000000e+00 : f32
    %289 = vector.broadcast %cst_132 : f32 to vector<7x512xf32>
    %290 = tpu.concatenate %288, %289 in 0 : vector<57x512xf32>, vector<7x512xf32> -> vector<64x512xf32>
    %291 = tpu.iota {dimensions = array<i32: 0>} : vector<64x1xi32>
    %c8_i32_133 = arith.constant 8 : i32
    %c0_i32_134 = arith.constant 0 : i32
    %292 = arith.cmpi eq, %c8_i32_133, %c0_i32_134 : i32
    %c1_i32_135 = arith.constant 1 : i32
    %293 = arith.select %292, %c1_i32_135, %c8_i32_133 : i32
    %294 = vector.broadcast %293 : i32 to vector<64x1xi32>
    %295 = arith.remsi %291, %294 : vector<64x1xi32>
    %c0_i32_136 = arith.constant 0 : i32
    %296 = vector.broadcast %c0_i32_136 : i32 to vector<64x1xi32>
    %297 = arith.cmpi ne, %295, %296 : vector<64x1xi32>
    %c0_i32_137 = arith.constant 0 : i32
    %298 = vector.broadcast %c0_i32_137 : i32 to vector<64x1xi32>
    %299 = arith.cmpi slt, %295, %298 : vector<64x1xi32>
    %c0_i32_138 = arith.constant 0 : i32
    %300 = arith.cmpi slt, %293, %c0_i32_138 : i32
    %301 = vector.broadcast %300 : i1 to vector<64x1xi1>
    %302 = vector.broadcast %301 : vector<64x1xi1> to vector<64x1xi1>
    %303 = arith.xori %299, %302 : vector<64x1xi1>
    %304 = arith.andi %303, %297 : vector<64x1xi1>
    %305 = vector.broadcast %293 : i32 to vector<64x1xi32>
    %306 = arith.addi %295, %305 : vector<64x1xi32>
    %307 = arith.select %304, %306, %295 : vector<64x1xi1>, vector<64x1xi32>
    %c1_i32_139 = arith.constant 1 : i32
    %308 = vector.broadcast %c1_i32_139 : i32 to vector<64x1xi32>
    %309 = arith.cmpi sge, %307, %308 : vector<64x1xi32>
    %cst_140 = arith.constant 0.000000e+00 : f32
    %310 = vector.broadcast %cst_140 : f32 to vector<64x512xf32>
    %311 = vector.shape_cast %309 : vector<64x1xi1> to vector<64x1xi1>
    %312 = vector.broadcast %311 : vector<64x1xi1> to vector<64x512xi1>
    %313 = arith.select %312, %290, %310 : vector<64x512xi1>, vector<64x512xf32>
    %c6 = arith.constant 6 : index
    %c0_141 = arith.constant 0 : index
    %c0_142 = arith.constant 0 : index
    %314 = vector.load %arg6[%c6, %c0_141, %c0_142] : memref<9x512x48xf32, #tpu.memory_space<vmem>>, vector<1x512x48xf32>
    %315 = vector.shape_cast %314 : vector<1x512x48xf32> to vector<512x48xf32>
    %cst_143 = arith.constant dense<0.000000e+00> : vector<64x48xf32>
    %316 = tpu.matmul %313, %315, %cst_143 {dimension_numbers = #tpu.dot_dimension_numbers<[1], [0], [0], [1], [0, 0, 1, 1], [], []>} : vector<64x512xf32>, vector<512x48xf32>, vector<64x48xf32> -> vector<64x48xf32>
    %317 = arith.addf %287, %316 : vector<64x48xf32>
    %318 = vector.extract_strided_slice %155 {offsets = [8, 0], sizes = [56, 512], strides = [1, 1]} : vector<64x512xf32> to vector<56x512xf32>
    %cst_144 = arith.constant 0.000000e+00 : f32
    %319 = vector.broadcast %cst_144 : f32 to vector<8x512xf32>
    %320 = tpu.concatenate %318, %319 in 0 : vector<56x512xf32>, vector<8x512xf32> -> vector<64x512xf32>
    %c7 = arith.constant 7 : index
    %c0_145 = arith.constant 0 : index
    %c0_146 = arith.constant 0 : index
    %321 = vector.load %arg6[%c7, %c0_145, %c0_146] : memref<9x512x48xf32, #tpu.memory_space<vmem>>, vector<1x512x48xf32>
    %322 = vector.shape_cast %321 : vector<1x512x48xf32> to vector<512x48xf32>
    %cst_147 = arith.constant dense<0.000000e+00> : vector<64x48xf32>
    %323 = tpu.matmul %320, %322, %cst_147 {dimension_numbers = #tpu.dot_dimension_numbers<[1], [0], [0], [1], [0, 0, 1, 1], [], []>} : vector<64x512xf32>, vector<512x48xf32>, vector<64x48xf32> -> vector<64x48xf32>
    %324 = arith.addf %317, %323 : vector<64x48xf32>
    %325 = vector.extract_strided_slice %155 {offsets = [9, 0], sizes = [55, 512], strides = [1, 1]} : vector<64x512xf32> to vector<55x512xf32>
    %cst_148 = arith.constant 0.000000e+00 : f32
    %326 = vector.broadcast %cst_148 : f32 to vector<9x512xf32>
    %327 = tpu.concatenate %325, %326 in 0 : vector<55x512xf32>, vector<9x512xf32> -> vector<64x512xf32>
    %328 = tpu.iota {dimensions = array<i32: 0>} : vector<64x1xi32>
    %c8_i32_149 = arith.constant 8 : i32
    %c0_i32_150 = arith.constant 0 : i32
    %329 = arith.cmpi eq, %c8_i32_149, %c0_i32_150 : i32
    %c1_i32_151 = arith.constant 1 : i32
    %330 = arith.select %329, %c1_i32_151, %c8_i32_149 : i32
    %331 = vector.broadcast %330 : i32 to vector<64x1xi32>
    %332 = arith.remsi %328, %331 : vector<64x1xi32>
    %c0_i32_152 = arith.constant 0 : i32
    %333 = vector.broadcast %c0_i32_152 : i32 to vector<64x1xi32>
    %334 = arith.cmpi ne, %332, %333 : vector<64x1xi32>
    %c0_i32_153 = arith.constant 0 : i32
    %335 = vector.broadcast %c0_i32_153 : i32 to vector<64x1xi32>
    %336 = arith.cmpi slt, %332, %335 : vector<64x1xi32>
    %c0_i32_154 = arith.constant 0 : i32
    %337 = arith.cmpi slt, %330, %c0_i32_154 : i32
    %338 = vector.broadcast %337 : i1 to vector<64x1xi1>
    %339 = vector.broadcast %338 : vector<64x1xi1> to vector<64x1xi1>
    %340 = arith.xori %336, %339 : vector<64x1xi1>
    %341 = arith.andi %340, %334 : vector<64x1xi1>
    %342 = vector.broadcast %330 : i32 to vector<64x1xi32>
    %343 = arith.addi %332, %342 : vector<64x1xi32>
    %344 = arith.select %341, %343, %332 : vector<64x1xi1>, vector<64x1xi32>
    %c7_i32_155 = arith.constant 7 : i32
    %345 = vector.broadcast %c7_i32_155 : i32 to vector<64x1xi32>
    %346 = arith.cmpi slt, %344, %345 : vector<64x1xi32>
    %cst_156 = arith.constant 0.000000e+00 : f32
    %347 = vector.broadcast %cst_156 : f32 to vector<64x512xf32>
    %348 = vector.shape_cast %346 : vector<64x1xi1> to vector<64x1xi1>
    %349 = vector.broadcast %348 : vector<64x1xi1> to vector<64x512xi1>
    %350 = arith.select %349, %327, %347 : vector<64x512xi1>, vector<64x512xf32>
    %c8 = arith.constant 8 : index
    %c0_157 = arith.constant 0 : index
    %c0_158 = arith.constant 0 : index
    %351 = vector.load %arg6[%c8, %c0_157, %c0_158] : memref<9x512x48xf32, #tpu.memory_space<vmem>>, vector<1x512x48xf32>
    %352 = vector.shape_cast %351 : vector<1x512x48xf32> to vector<512x48xf32>
    %cst_159 = arith.constant dense<0.000000e+00> : vector<64x48xf32>
    %353 = tpu.matmul %350, %352, %cst_159 {dimension_numbers = #tpu.dot_dimension_numbers<[1], [0], [0], [1], [0, 0, 1, 1], [], []>} : vector<64x512xf32>, vector<512x48xf32>, vector<64x48xf32> -> vector<64x48xf32>
    %354 = arith.addf %324, %353 : vector<64x48xf32>
    %c0_160 = arith.constant 0 : index
    %c0_161 = arith.constant 0 : index
    %355 = vector.load %arg7[%c0_160, %c0_161] : memref<1x48xf32, #tpu.memory_space<vmem>>, vector<1x48xf32>
    %356 = vector.broadcast %355 : vector<1x48xf32> to vector<64x48xf32>
    %357 = arith.addf %354, %356 : vector<64x48xf32>
    %c0_162 = arith.constant 0 : index
    %c0_163 = arith.constant 0 : index
    %c0_164 = arith.constant 0 : index
    %358 = vector.load %arg8[%c0_162, %c0_163, %c0_164] : memref<1x64x48xf32, #tpu.memory_space<vmem>>, vector<1x64x48xf32>
    %359 = vector.shape_cast %358 : vector<1x64x48xf32> to vector<64x48xf32>
    %360 = vector.shape_cast %357 : vector<64x48xf32> to vector<1x64x48xf32>
    tpu.vector_store %arg8[%c0_162, %c0_163, %c0_164], %360 {strides = array<i32>} : memref<1x64x48xf32, #tpu.memory_space<vmem>>, vector<1x64x48xf32>,
    return
  }
  func.func @transform_0(%arg0: i32) -> (i32, i32, i32) {
    %c0_i32 = arith.constant 0 : i32
    %c0_i32_0 = arith.constant 0 : i32
    %c0_i32_1 = arith.constant 0 : i32
    return %arg0, %c0_i32, %c0_i32_0 : i32, i32, i32
  }
  func.func @transform_1(%arg0: i32) -> (i32, i32, i32) {
    %c0_i32 = arith.constant 0 : i32
    %c0_i32_0 = arith.constant 0 : i32
    %c0_i32_1 = arith.constant 0 : i32
    %c0_i32_2 = arith.constant 0 : i32
    return %c0_i32, %c0_i32_0, %c0_i32_1 : i32, i32, i32
  }
  func.func @transform_2(%arg0: i32) -> (i32, i32) {
    %c0_i32 = arith.constant 0 : i32
    %c0_i32_0 = arith.constant 0 : i32
    %c0_i32_1 = arith.constant 0 : i32
    return %c0_i32, %c0_i32_0 : i32, i32
  }
  func.func @transform_3(%arg0: i32) -> (i32, i32, i32) {
    %c0_i32 = arith.constant 0 : i32
    %c0_i32_0 = arith.constant 0 : i32
    %c0_i32_1 = arith.constant 0 : i32
    %c0_i32_2 = arith.constant 0 : i32
    return %c0_i32, %c0_i32_0, %c0_i32_1 : i32, i32, i32
  }
  func.func @transform_4(%arg0: i32) -> (i32, i32) {
    %c0_i32 = arith.constant 0 : i32
    %c0_i32_0 = arith.constant 0 : i32
    %c0_i32_1 = arith.constant 0 : i32
    return %c0_i32, %c0_i32_0 : i32, i32
  }
  func.func @transform_5(%arg0: i32) -> (i32, i32, i32) {
    %c0_i32 = arith.constant 0 : i32
    %c0_i32_0 = arith.constant 0 : i32
    %c0_i32_1 = arith.constant 0 : i32
    %c0_i32_2 = arith.constant 0 : i32
    return %c0_i32, %c0_i32_0, %c0_i32_1 : i32, i32, i32
  }
  func.func @transform_6(%arg0: i32) -> (i32, i32) {
    %c0_i32 = arith.constant 0 : i32
    %c0_i32_0 = arith.constant 0 : i32
    %c0_i32_1 = arith.constant 0 : i32
    return %c0_i32, %c0_i32_0 : i32, i32
  }
  func.func @transform_7(%arg0: i32) -> (i32, i32, i32) {
    %c0_i32 = arith.constant 0 : i32
    %c0_i32_0 = arith.constant 0 : i32
    %c0_i32_1 = arith.constant 0 : i32
    return %arg0, %c0_i32, %c0_i32_0 : i32, i32, i32
  }
}

</mosaic_0001>

<llo_original>
// kernel: tpu_custom_call.1
$region0: #{tpu_custom_call.1}
  #allocation0 [shape = 'u32[]', space=smem, size = 0x4, offset = 0x4, fixed_abs, tag = 'smem constant byte address 0x4 - core index']
  #allocation1 [shape = 'u32[72,128]{1,0:T(1,128)}', space=vmem, size = 0x9000, scoped, tag = 'internal scratch']
  %s0 = inlined_call_operand.vmem [shape: f32[2,64,16], index: 0, kind: input, shape index: {}]
  %s1 = inlined_call_operand.vmem [shape: f32[4,16,256], index: 1, kind: input, shape index: {}]
  %s2 = inlined_call_operand.vmem [shape: f32[1,256], index: 2, kind: input, shape index: {}]
  %s3 = inlined_call_operand.vmem [shape: f32[4,256,512], index: 3, kind: input, shape index: {}]
  %s4 = inlined_call_operand.vmem [shape: f32[1,512], index: 4, kind: input, shape index: {}]
  %s5 = inlined_call_operand.vmem [shape: f32[9,512,48], index: 5, kind: input, shape index: {}]
  %s6 = inlined_call_operand.vmem [shape: f32[1,48], index: 6, kind: input, shape index: {}]
  %s7 = inlined_call_operand.vmem [shape: f32[2,64,48], index: 7, kind: output, shape index: {}]
  %s8 = sld [smem:[#allocation0]]
  $region61: #{tpu_custom_call.1} parent=0
    _
  %s10 = ssub.s32 1, %s8
  %s11 = scalar_select 0, %s10, %s8
  loop: start=0, step=1, limit=4
  $region2: #{tpu_custom_call.1} parent=0 // loop_pre_header
    _
  $region3: #{tpu_custom_call.1} parent=0 // loop_header
    %s13 = sphi 0, %s17
    %p14 = scmp.ge.s32.totalorder %s13, 4
    %s23 = sphi 0, %s25
    %s26 = sphi 0, %s23
    %s27 = sphi 0, %s26
    %s43 = sphi 0, %s27
    %s47 = sphi 0, %s47
    %s49 = sphi 0, %s47
    %s50 = sphi 0, %s49
    %s64 = sphi 0, %s50
    %s68 = sphi 0, %s68
    %s70 = sphi 0, %s68
    %s71 = sphi 0, %s70
    %s85 = sphi 0, %s71
    %s89 = sphi 0, %s89
    %s91 = sphi 0, %s89
    %s92 = sphi 0, %s91
    %s106 = sphi 0, %s92
    %s110 = sphi 0, %s110
    %s112 = sphi 0, %s110
    %s113 = sphi 0, %s112
    %s127 = sphi 0, %s113
    %s131 = sphi 0, %s131
    %s133 = sphi 0, %s131
    %s134 = sphi 0, %s133
    %s148 = sphi 0, %s134
    %s152 = sphi 0, %s152
    %s154 = sphi 0, %s152
    %s155 = sphi 0, %s154
    %s169 = sphi 0, %s155
    %s175 = sphi 0, %s177
    %s178 = sphi 0, %s175
    %s179 = sphi 0, %s178
    %s195 = sphi 0, %s179
  $region4: #{tpu_custom_call.1} parent=0 // loop_header_branch
    %16 = sbr.rel (%p14) target = $region8
  $region5: #{tpu_custom_call.1} parent=0 // loop_body
    %s18 = ssub.s32 %s13, 1
    %s19 = ssub.s32 %s13, 2
    %s20 = sadd.s32 %s13, 1
    %s21 = ssub.s32 %s13, %s20
    %p22 = scmp.eq.s32.totalorder %s21, 0
    %s24 = sadd.s32 %s23, 1
    %s25 = scalar_select %p22, %s23, %s24
    %p28 = pneg %p22
    %p29 = scmp.eq.s32.totalorder %s13, 1
    %p30 = por %p28, %p29
    %p31 = scmp.ne.s32.totalorder %s23, %s26
    %p32 = scmp.eq.s32.totalorder %s13, 0
    %p33 = por %p31, %p32
    %p34 = scmp.ne.s32.totalorder %s23, %s26
    %p35 = scmp.eq.s32.totalorder %s18, 1
    %p36 = por %p34, %p35
    %p37 = scmp.ne.s32.totalorder %s26, %s27
    %p38 = scmp.eq.s32.totalorder %s18, 0
    %p39 = por %p37, %p38
    %p40 = scmp.ne.s32.totalorder %s26, %s27
    %p41 = scmp.eq.s32.totalorder %s19, 1
    %p42 = por %p40, %p41
    %p44 = scmp.ne.s32.totalorder %s27, %s43
    %p45 = scmp.eq.s32.totalorder %s19, 0
    %p46 = por %p44, %p45
    %s48 = sadd.s32 %s47, 1
    %p51 = scmp.eq.s32.totalorder %s13, 1
    %p52 = scmp.ne.s32.totalorder %s47, %s49
    %p53 = scmp.eq.s32.totalorder %s13, 0
    %p54 = por %p52, %p53
    %p55 = scmp.ne.s32.totalorder %s47, %s49
    %p56 = scmp.eq.s32.totalorder %s18, 1
    %p57 = por %p55, %p56
    %p58 = scmp.ne.s32.totalorder %s49, %s50
    %p59 = scmp.eq.s32.totalorder %s18, 0
    %p60 = por %p58, %p59
    %p61 = scmp.ne.s32.totalorder %s49, %s50
    %p62 = scmp.eq.s32.totalorder %s19, 1
    %p63 = por %p61, %p62
    %p65 = scmp.ne.s32.totalorder %s50, %s64
    %p66 = scmp.eq.s32.totalorder %s19, 0
    %p67 = por %p65, %p66
    %s69 = sadd.s32 %s68, 1
    %p72 = scmp.eq.s32.totalorder %s13, 1
    %p73 = scmp.ne.s32.totalorder %s68, %s70
    %p74 = scmp.eq.s32.totalorder %s13, 0
    %p75 = por %p73, %p74
    %p76 = scmp.ne.s32.totalorder %s68, %s70
    %p77 = scmp.eq.s32.totalorder %s18, 1
    %p78 = por %p76, %p77
    %p79 = scmp.ne.s32.totalorder %s70, %s71
    %p80 = scmp.eq.s32.totalorder %s18, 0
    %p81 = por %p79, %p80
    %p82 = scmp.ne.s32.totalorder %s70, %s71
    %p83 = scmp.eq.s32.totalorder %s19, 1
    %p84 = por %p82, %p83
    %p86 = scmp.ne.s32.totalorder %s71, %s85
    %p87 = scmp.eq.s32.totalorder %s19, 0
    %p88 = por %p86, %p87
    %s90 = sadd.s32 %s89, 1
    %p93 = scmp.eq.s32.totalorder %s13, 1
    %p94 = scmp.ne.s32.totalorder %s89, %s91
    %p95 = scmp.eq.s32.totalorder %s13, 0
    %p96 = por %p94, %p95
    %p97 = scmp.ne.s32.totalorder %s89, %s91
    %p98 = scmp.eq.s32.totalorder %s18, 1
    %p99 = por %p97, %p98
    %p100 = scmp.ne.s32.totalorder %s91, %s92
    %p101 = scmp.eq.s32.totalorder %s18, 0
    %p102 = por %p100, %p101
    %p103 = scmp.ne.s32.totalorder %s91, %s92
    %p104 = scmp.eq.s32.totalorder %s19, 1
    %p105 = por %p103, %p104
    %p107 = scmp.ne.s32.totalorder %s92, %s106
    %p108 = scmp.eq.s32.totalorder %s19, 0
    %p109 = por %p107, %p108
    %s111 = sadd.s32 %s110, 1
    %p114 = scmp.eq.s32.totalorder %s13, 1
    %p115 = scmp.ne.s32.totalorder %s110, %s112
    %p116 = scmp.eq.s32.totalorder %s13, 0
    %p117 = por %p115, %p116
    %p118 = scmp.ne.s32.totalorder %s110, %s112
    %p119 = scmp.eq.s32.totalorder %s18, 1
    %p120 = por %p118, %p119
    %p121 = scmp.ne.s32.totalorder %s112, %s113
    %p122 = scmp.eq.s32.totalorder %s18, 0
    %p123 = por %p121, %p122
    %p124 = scmp.ne.s32.totalorder %s112, %s113
    %p125 = scmp.eq.s32.totalorder %s19, 1
    %p126 = por %p124, %p125
    %p128 = scmp.ne.s32.totalorder %s113, %s127
    %p129 = scmp.eq.s32.totalorder %s19, 0
    %p130 = por %p128, %p129
    %s132 = sadd.s32 %s131, 1
    %p135 = scmp.eq.s32.totalorder %s13, 1
    %p136 = scmp.ne.s32.totalorder %s131, %s133
    %p137 = scmp.eq.s32.totalorder %s13, 0
    %p138 = por %p136, %p137
    %p139 = scmp.ne.s32.totalorder %s131, %s133
    %p140 = scmp.eq.s32.totalorder %s18, 1
    %p141 = por %p139, %p140
    %p142 = scmp.ne.s32.totalorder %s133, %s134
    %p143 = scmp.eq.s32.totalorder %s18, 0
    %p144 = por %p142, %p143
    %p145 = scmp.ne.s32.totalorder %s133, %s134
    %p146 = scmp.eq.s32.totalorder %s19, 1
    %p147 = por %p145, %p146
    %p149 = scmp.ne.s32.totalorder %s134, %s148
    %p150 = scmp.eq.s32.totalorder %s19, 0
    %p151 = por %p149, %p150
    %s153 = sadd.s32 %s152, 1
    %p156 = scmp.eq.s32.totalorder %s13, 1
    %p157 = scmp.ne.s32.totalorder %s152, %s154
    %p158 = scmp.eq.s32.totalorder %s13, 0
    %p159 = por %p157, %p158
    %p160 = scmp.ne.s32.totalorder %s152, %s154
    %p161 = scmp.eq.s32.totalorder %s18, 1
    %p162 = por %p160, %p161
    %p163 = scmp.ne.s32.totalorder %s154, %s155
    %p164 = scmp.eq.s32.totalorder %s18, 0
    %p165 = por %p163, %p164
    %p166 = scmp.ne.s32.totalorder %s154, %s155
    %p167 = scmp.eq.s32.totalorder %s19, 1
    %p168 = por %p166, %p167
    %p170 = scmp.ne.s32.totalorder %s155, %s169
    %p171 = scmp.eq.s32.totalorder %s19, 0
    %p172 = por %p170, %p171
    %s173 = ssub.s32 %s13, %s20
    %p174 = scmp.eq.s32.totalorder %s173, 0
    %s176 = sadd.s32 %s175, 1
    %s177 = scalar_select %p174, %s175, %s176
    %p180 = pneg %p174
    %p181 = scmp.eq.s32.totalorder %s13, 1
    %p182 = por %p180, %p181
    %p183 = scmp.ne.s32.totalorder %s175, %s178
    %p184 = scmp.eq.s32.totalorder %s13, 0
    %p185 = por %p183, %p184
    %p186 = scmp.ne.s32.totalorder %s175, %s178
    %p187 = scmp.eq.s32.totalorder %s18, 1
    %p188 = por %p186, %p187
    %p189 = scmp.ne.s32.totalorder %s178, %s179
    %p190 = scmp.eq.s32.totalorder %s18, 0
    %p191 = por %p189, %p190
    %p192 = scmp.ne.s32.totalorder %s178, %s179
    %p193 = scmp.eq.s32.totalorder %s19, 1
    %p194 = por %p192, %p193
    %p196 = scmp.ne.s32.totalorder %s179, %s195
    %p197 = scmp.eq.s32.totalorder %s19, 0
    %p198 = por %p196, %p197
    %p199 = scmp.le.s32.totalorder 1, %s13
    %p200 = scmp.lt.s32.totalorder %s13, 3
    %p201 = pnand %p199, %p200
    %p202 = pneg %p201
    // Predicated region
    $region9: #{tpu_custom_call.1} parent=5 // pred_check
      _
    $region10: #{tpu_custom_call.1} parent=5 // pred_check_branch
      %204 = sbr.rel (%p201) target = $region12
    $region11: #{tpu_custom_call.1} parent=5 // pred_region
      %s205 = ssub.s32 %s13, 1
      // Predicated region
      $region13: #{tpu_custom_call.1} parent=11 // pred_check
        %p206 = pneg %p60
      $region14: #{tpu_custom_call.1} parent=11 // pred_check_branch
        %208 = sbr.rel (%p206) target = $region16
      $region15: #{tpu_custom_call.1} parent=11 // pred_region
        _
      $region16: #{tpu_custom_call.1} parent=11 // pred_fallthru
        _
      // Predicated region
      $region17: #{tpu_custom_call.1} parent=11 // pred_check
        %p209 = pneg %p81
      $region18: #{tpu_custom_call.1} parent=11 // pred_check_branch
        %211 = sbr.rel (%p209) target = $region20
      $region19: #{tpu_custom_call.1} parent=11 // pred_region
        _
      $region20: #{tpu_custom_call.1} parent=11 // pred_fallthru
        _
      // Predicated region
      $region21: #{tpu_custom_call.1} parent=11 // pred_check
        %p212 = pneg %p102
      $region22: #{tpu_custom_call.1} parent=11 // pred_check_branch
        %214 = sbr.rel (%p212) target = $region24
      $region23: #{tpu_custom_call.1} parent=11 // pred_region
        _
      $region24: #{tpu_custom_call.1} parent=11 // pred_fallthru
        _
      // Predicated region
      $region25: #{tpu_custom_call.1} parent=11 // pred_check
        %p215 = pneg %p123
      $region26: #{tpu_custom_call.1} parent=11 // pred_check_branch
        %217 = sbr.rel (%p215) target = $region28
      $region27: #{tpu_custom_call.1} parent=11 // pred_region
        _
      $region28: #{tpu_custom_call.1} parent=11 // pred_fallthru
        _
      // Predicated region
      $region29: #{tpu_custom_call.1} parent=11 // pred_check
        %p218 = pneg %p144
      $region30: #{tpu_custom_call.1} parent=11 // pred_check_branch
        %220 = sbr.rel (%p218) target = $region32
      $region31: #{tpu_custom_call.1} parent=11 // pred_region
        _
      $region32: #{tpu_custom_call.1} parent=11 // pred_fallthru
        _
      // Predicated region
      $region33: #{tpu_custom_call.1} parent=11 // pred_check
        %p221 = pneg %p165
      $region34: #{tpu_custom_call.1} parent=11 // pred_check_branch
        %223 = sbr.rel (%p221) target = $region36
      $region35: #{tpu_custom_call.1} parent=11 // pred_region
        _
      $region36: #{tpu_custom_call.1} parent=11 // pred_fallthru
        _
    $region12: #{tpu_custom_call.1} parent=5 // pred_fallthru
      _
    %p224 = scmp.lt.s32.totalorder %s13, 2
    // Predicated region
    $region37: #{tpu_custom_call.1} parent=5 // pred_check
      %p225 = pneg %p224
    $region38: #{tpu_custom_call.1} parent=5 // pred_check_branch
      %227 = sbr.rel (%p225) target = $region40
    $region39: #{tpu_custom_call.1} parent=5 // pred_region
      // Predicated region
      $region41: #{tpu_custom_call.1} parent=39 // pred_check
        %p228 = pneg %p33
      $region42: #{tpu_custom_call.1} parent=39 // pred_check_branch
        %230 = sbr.rel (%p228) target = $region44
      $region43: #{tpu_custom_call.1} parent=39 // pred_region
        %p231 = scmp.lt.s32.totalorder %s13, 1
        %s232 = scalar_select %p231, %s13, 1
        %s233 = smul.addr %s232, 8
        %s234 = smul.addr %s233, 8
        %s235 = scalar_lea.vmem %s0, %s234
      $region44: #{tpu_custom_call.1} parent=39 // pred_fallthru
        _
    $region40: #{tpu_custom_call.1} parent=5 // pred_fallthru
      _
    %p236 = scmp.le.s32.totalorder 1, %s13
    %p237 = scmp.lt.s32.totalorder %s13, 3
    %p238 = pnand %p236, %p237
    %p239 = pneg %p238
    // Predicated region
    $region45: #{tpu_custom_call.1} parent=5 // pred_check
      _
    $region46: #{tpu_custom_call.1} parent=5 // pred_check_branch
      %241 = sbr.rel (%p238) target = $region48
    $region47: #{tpu_custom_call.1} parent=5 // pred_region
      %s242 = ssub.s32 %s13, 1
      %p243 = scmp.lt.s32.totalorder %s18, 1
      %s244 = scalar_select %p243, %s18, 1
      %s245 = smul.addr %s244, 8
      %s246 = smul.addr %s245, 8
      %s247 = scalar_lea.vmem %s0, %s246
      %p248 = pneg %p39
      %p249 = pneg %p36
      %p250 = pneg %p60
      %p251 = pneg %p57
      %p252 = pneg %p81
      %p253 = pneg %p78
      %p254 = pneg %p102
      %p255 = pneg %p99
      %p256 = pneg %p123
      %p257 = pneg %p120
      %p258 = pneg %p144
      %p259 = pneg %p141
      %p260 = pneg %p165
      %p261 = pneg %p162
      %p262 = pneg %p191
      %p263 = pneg %p188
      %p264 = scmp.lt.s32.totalorder %s18, 1
      %s265 = scalar_select %p264, %s18, 1
      %s266 = smul.addr %s265, 8
      %s267 = smul.addr %s266, 8
      %s268 = scalar_lea.vmem %s7, %s267
      %p269 = scmp.lt.s32.totalorder %s18, 1
      %s270 = scalar_select %p269, %s18, 1
      %s271 = smul.addr %s270, 8
      %s272 = smul.addr %s271, 8
      %s273 = scalar_lea.vmem %s0, %s272
      %p274 = scmp.lt.s32.totalorder %s18, 1
      %s275 = scalar_select %p274, %s18, 1
      %s276 = smul.addr %s275, 8
      %s277 = smul.addr %s276, 8
      %s278 = scalar_lea.vmem %s7, %s277
      %v279 = vld [vmem:[%s273] sm:$0xff]
      %v280 = vld [vmem:[%s273 + $0x8] sm:$0xff]
      %v281 = vld [vmem:[%s273 + $0x10] sm:$0xff]
      %v282 = vld [vmem:[%s273 + $0x18] sm:$0xff]
      %v283 = vld [vmem:[%s273 + $0x20] sm:$0xff]
      %v284 = vld [vmem:[%s273 + $0x28] sm:$0xff]
      %v285 = vld [vmem:[%s273 + $0x30] sm:$0xff]
      %v286 = vld [vmem:[%s273 + $0x38] sm:$0xff]
      %v287 = vld [vmem:[%s1] sm:$0xff]
      %v288 = vld [vmem:[%s1 + $0x8] sm:$0xff]
      %v289 = vld [vmem:[%s1 + $0x10] sm:$0xff]
      %v290 = vld [vmem:[%s1 + $0x18] sm:$0xff]
      %vm299 = vcmask 1046528
      %v300 = vrot.slane %v279, 1
      %v301 = vrot.slane %v280, 1
      %v302 = vsel %vm299, %v300, %v301
      %v303 = vrot.slane %v281, 1
      %v304 = vsel %vm299, %v301, %v303
      %v305 = vrot.slane %v282, 1
      %v306 = vsel %vm299, %v303, %v305
      %v307 = vrot.slane %v283, 1
      %v308 = vsel %vm299, %v305, %v307
      %v309 = vrot.slane %v284, 1
      %v310 = vsel %vm299, %v307, %v309
      %v311 = vrot.slane %v285, 1
      %v312 = vsel %vm299, %v309, %v311
      %v313 = vrot.slane %v286, 1
      %v314 = vsel %vm299, %v311, %v313
      %v323 = vsel %vm299, %v313, 0.0
      %v324 = vlaneseq
      %v325 = vshrl.u32 %v324, 7
      %v326 = vadd.s32 %v325, 8
      %v327 = vadd.s32 %v325, 16
      %v328 = vadd.s32 %v325, 24
      %v329 = vadd.s32 %v325, 32
      %v330 = vadd.s32 %v325, 40
      %v331 = vadd.s32 %v325, 48
      %v332 = vadd.s32 %v325, 56
      %vm333 = vcmp.lt.s32.totalorder %v325, 0
      %v334 = vsub.s32 0, %v325
      %v335 = vsel %vm333, %v334, %v325
      %v336 = vshrl.u32 %v335, 3
      %v337 = vand.u32 %v335, 7
      %v338 = vsub.s32 0, %v337
      %v339 = vsel %vm333, %v338, %v337
      %vm340 = vcmp.lt.s32.totalorder %v326, 0
      %v341 = vsub.s32 0, %v326
      %v342 = vsel %vm340, %v341, %v326
      %v343 = vshrl.u32 %v342, 3
      %v344 = vand.u32 %v342, 7
      %v345 = vsub.s32 0, %v344
      %v346 = vsel %vm340, %v345, %v344
      %vm347 = vcmp.lt.s32.totalorder %v327, 0
      %v348 = vsub.s32 0, %v327
      %v349 = vsel %vm347, %v348, %v327
      %v350 = vshrl.u32 %v349, 3
      %v351 = vand.u32 %v349, 7
      %v352 = vsub.s32 0, %v351
      %v353 = vsel %vm347, %v352, %v351
      %vm354 = vcmp.lt.s32.totalorder %v328, 0
      %v355 = vsub.s32 0, %v328
      %v356 = vsel %vm354, %v355, %v328
      %v357 = vshrl.u32 %v356, 3
      %v358 = vand.u32 %v356, 7
      %v359 = vsub.s32 0, %v358
      %v360 = vsel %vm354, %v359, %v358
      %vm361 = vcmp.lt.s32.totalorder %v329, 0
      %v362 = vsub.s32 0, %v329
      %v363 = vsel %vm361, %v362, %v329
      %v364 = vshrl.u32 %v363, 3
      %v365 = vand.u32 %v363, 7
      %v366 = vsub.s32 0, %v365
      %v367 = vsel %vm361, %v366, %v365
      %vm368 = vcmp.lt.s32.totalorder %v330, 0
      %v369 = vsub.s32 0, %v330
      %v370 = vsel %vm368, %v369, %v330
      %v371 = vshrl.u32 %v370, 3
      %v372 = vand.u32 %v370, 7
      %v373 = vsub.s32 0, %v372
      %v374 = vsel %vm368, %v373, %v372
      %vm375 = vcmp.lt.s32.totalorder %v331, 0
      %v376 = vsub.s32 0, %v331
      %v377 = vsel %vm375, %v376, %v331
      %v378 = vshrl.u32 %v377, 3
      %v379 = vand.u32 %v377, 7
      %v380 = vsub.s32 0, %v379
      %v381 = vsel %vm375, %v380, %v379
      %vm382 = vcmp.lt.s32.totalorder %v332, 0
      %v383 = vsub.s32 0, %v332
      %v384 = vsel %vm382, %v383, %v332
      %v385 = vshrl.u32 %v384, 3
      %v386 = vand.u32 %v384, 7
      %v387 = vsub.s32 0, %v386
      %v388 = vsel %vm382, %v387, %v386
      %vm389 = vcmp.ne.s32.totalorder %v339, 0
      %vm390 = vcmp.ne.s32.totalorder %v346, 0
      %vm391 = vcmp.ne.s32.totalorder %v353, 0
      %vm392 = vcmp.ne.s32.totalorder %v360, 0
      %vm393 = vcmp.ne.s32.totalorder %v367, 0
      %vm394 = vcmp.ne.s32.totalorder %v374, 0
      %vm395 = vcmp.ne.s32.totalorder %v381, 0
      %vm396 = vcmp.ne.s32.totalorder %v388, 0
      %vm397 = vcmp.lt.s32.totalorder %v339, 0
      %vm398 = vcmp.lt.s32.totalorder %v346, 0
      %vm399 = vcmp.lt.s32.totalorder %v353, 0
      %vm400 = vcmp.lt.s32.totalorder %v360, 0
      %vm401 = vcmp.lt.s32.totalorder %v367, 0
      %vm402 = vcmp.lt.s32.totalorder %v374, 0
      %vm403 = vcmp.lt.s32.totalorder %v381, 0
      %vm404 = vcmp.lt.s32.totalorder %v388, 0
      %vm405 = vmand %vm397, %vm389
      %vm406 = vmand %vm398, %vm390
      %vm407 = vmand %vm399, %vm391
      %vm408 = vmand %vm400, %vm392
      %vm409 = vmand %vm401, %vm393
      %vm410 = vmand %vm402, %vm394
      %vm411 = vmand %vm403, %vm395
      %vm412 = vmand %vm404, %vm396
      %v413 = vadd.s32 %v339, 8
      %v414 = vadd.s32 %v346, 8
      %v415 = vadd.s32 %v353, 8
      %v416 = vadd.s32 %v360, 8
      %v417 = vadd.s32 %v367, 8
      %v418 = vadd.s32 %v374, 8
      %v419 = vadd.s32 %v381, 8
      %v420 = vadd.s32 %v388, 8
      %v421 = vsel %vm405, %v413, %v339
      %v422 = vsel %vm406, %v414, %v346
      %v423 = vsel %vm407, %v415, %v353
      %v424 = vsel %vm408, %v416, %v360
      %v425 = vsel %vm409, %v417, %v367
      %v426 = vsel %vm410, %v418, %v374
      %v427 = vsel %vm411, %v419, %v381
      %v428 = vsel %vm412, %v420, %v388
      %vm429 = vcmp.lt.s32.totalorder %v421, 7
      %vm430 = vcmp.lt.s32.totalorder %v422, 7
      %vm431 = vcmp.lt.s32.totalorder %v423, 7
      %vm432 = vcmp.lt.s32.totalorder %v424, 7
      %vm433 = vcmp.lt.s32.totalorder %v425, 7
      %vm434 = vcmp.lt.s32.totalorder %v426, 7
      %vm435 = vcmp.lt.s32.totalorder %v427, 7
      %vm436 = vcmp.lt.s32.totalorder %v428, 7
      %v437 = vsel %vm429, 1, 0
      %v438 = vsel %vm430, 1, 0
      %v439 = vsel %vm431, 1, 0
      %v440 = vsel %vm432, 1, 0
      %v441 = vsel %vm433, 1, 0
      %v442 = vsel %vm434, 1, 0
      %v443 = vsel %vm435, 1, 0
      %v444 = vsel %vm436, 1, 0
      %vm445 = vcmp.eq.s32.totalorder %v437, 1
      %vm446 = vcmp.eq.s32.totalorder %v438, 1
      %vm447 = vcmp.eq.s32.totalorder %v439, 1
      %vm448 = vcmp.eq.s32.totalorder %v440, 1
      %vm449 = vcmp.eq.s32.totalorder %v441, 1
      %vm450 = vcmp.eq.s32.totalorder %v442, 1
      %vm451 = vcmp.eq.s32.totalorder %v443, 1
      %vm452 = vcmp.eq.s32.totalorder %v444, 1
      %v453 = vsel %vm445, %v302, 0.0
      %v454 = vsel %vm446, %v304, 0.0
      %v455 = vsel %vm447, %v306, 0.0
      %v456 = vsel %vm448, %v308, 0.0
      %v457 = vsel %vm449, %v310, 0.0
      %v458 = vsel %vm450, %v312, 0.0
      %v459 = vsel %vm451, %v314, 0.0
      %v460 = vsel %vm452, %v323, 0.0
      %s461 = scalar_lea.vmem %s1, 32
      %v462 = vld [vmem:[%s461] sm:$0xff]
      %v463 = vld [vmem:[%s461 + $0x8] sm:$0xff]
      %v464 = vld [vmem:[%s461 + $0x10] sm:$0xff]
      %v465 = vld [vmem:[%s461 + $0x18] sm:$0xff]
      %vm466 = vcmask 130048
      %v468 = vsel %vm466, %v453, 0
      %v471 = vsel %vm466, %v454, 0
      %v474 = vsel %vm466, %v455, 0
      %v477 = vsel %vm466, %v456, 0
      %v480 = vsel %vm466, %v457, 0
      %v483 = vsel %vm466, %v458, 0
      %v486 = vsel %vm466, %v459, 0
      %v489 = vsel %vm466, %v460, 0
      %491 = vmatpush.msra.mxu0 0.0
      %492 = vmatpush.msra.mxu0 0.0
      %493 = vmatpush.msra.mxu0 0.0
      %494 = vmatpush.msra.mxu0 0.0
      %495 = vmatpush.msra.mxu0 0.0
      %496 = vmatpush.msra.mxu0 0.0
      %497 = vmatpush.msra.mxu0 0.0
      %498 = vmatpush.msra.mxu0 0.0
      %499 = vmatpush.msra.mxu0 0.0
      %500 = vmatpush.msra.mxu0 0.0
      %501 = vmatpush.msra.mxu0 0.0
      %502 = vmatpush.msra.mxu0 0.0
      %503 = vmatpush.msra.mxu0 0.0
      %504 = vmatpush.msra.mxu0 0.0
      %505 = vmatpush.msra.mxu0 %v464
      %506 = vmatpush.msra.mxu0 %v462
      %507 = vmatmul.f32.gmra.mxu0 %v468
      %v508 = vpop.f32.mrf.mxu0
      %v509 = vadd.f32 0.0, %v508
      %510 = vmatmul.f32.gmra.mxu0 %v471
      %v511 = vpop.f32.mrf.mxu0
      %v512 = vadd.f32 0.0, %v511
      %513 = vmatmul.f32.gmra.mxu0 %v474
      %v514 = vpop.f32.mrf.mxu0
      %v515 = vadd.f32 0.0, %v514
      %516 = vmatmul.f32.gmra.mxu0 %v477
      %v517 = vpop.f32.mrf.mxu0
      %v518 = vadd.f32 0.0, %v517
      %519 = vmatmul.f32.gmra.mxu0 %v480
      %v520 = vpop.f32.mrf.mxu0
      %v521 = vadd.f32 0.0, %v520
      %522 = vmatmul.f32.gmra.mxu0 %v483
      %v523 = vpop.f32.mrf.mxu0
      %v524 = vadd.f32 0.0, %v523
      %525 = vmatmul.f32.gmra.mxu0 %v486
      %v526 = vpop.f32.mrf.mxu0
      %v527 = vadd.f32 0.0, %v526
      %528 = vmatmul.f32.gmra.mxu0 %v489
      %v529 = vpop.f32.mrf.mxu0
      %v530 = vadd.f32 0.0, %v529
      %531 = vdwg.mxu0
      %532 = vmatpush.msra.mxu0 0.0
      %533 = vmatpush.msra.mxu0 0.0
      %534 = vmatpush.msra.mxu0 0.0
      %535 = vmatpush.msra.mxu0 0.0
      %536 = vmatpush.msra.mxu0 0.0
      %537 = vmatpush.msra.mxu0 0.0
      %538 = vmatpush.msra.mxu0 0.0
      %539 = vmatpush.msra.mxu0 0.0
      %540 = vmatpush.msra.mxu0 0.0
      %541 = vmatpush.msra.mxu0 0.0
      %542 = vmatpush.msra.mxu0 0.0
      %543 = vmatpush.msra.mxu0 0.0
      %544 = vmatpush.msra.mxu0 0.0
      %545 = vmatpush.msra.mxu0 0.0
      %546 = vmatpush.msra.mxu0 %v465
      %547 = vmatpush.msra.mxu0 %v463
      %548 = vmatmul.f32.gmra.mxu0 %v468
      %v549 = vpop.f32.mrf.mxu0
      %v550 = vadd.f32 0.0, %v549
      %551 = vmatmul.f32.gmra.mxu0 %v471
      %v552 = vpop.f32.mrf.mxu0
      %v553 = vadd.f32 0.0, %v552
      %554 = vmatmul.f32.gmra.mxu0 %v474
      %v555 = vpop.f32.mrf.mxu0
      %v556 = vadd.f32 0.0, %v555
      %557 = vmatmul.f32.gmra.mxu0 %v477
      %v558 = vpop.f32.mrf.mxu0
      %v559 = vadd.f32 0.0, %v558
      %560 = vmatmul.f32.gmra.mxu0 %v480
      %v561 = vpop.f32.mrf.mxu0
      %v562 = vadd.f32 0.0, %v561
      %563 = vmatmul.f32.gmra.mxu0 %v483
      %v564 = vpop.f32.mrf.mxu0
      %v565 = vadd.f32 0.0, %v564
      %566 = vmatmul.f32.gmra.mxu0 %v486
      %v567 = vpop.f32.mrf.mxu0
      %v568 = vadd.f32 0.0, %v567
      %569 = vmatmul.f32.gmra.mxu0 %v489
      %v570 = vpop.f32.mrf.mxu0
      %v571 = vadd.f32 0.0, %v570
      %572 = vdwg.mxu0
      %v573 = vsel %vm466, %v279, 0
      %v575 = vsel %vm466, %v280, 0
      %v577 = vsel %vm466, %v281, 0
      %v579 = vsel %vm466, %v282, 0
      %v581 = vsel %vm466, %v283, 0
      %v583 = vsel %vm466, %v284, 0
      %v585 = vsel %vm466, %v285, 0
      %v587 = vsel %vm466, %v286, 0
      %589 = vmatpush.msra.mxu0 0.0
      %590 = vmatpush.msra.mxu0 0.0
      %591 = vmatpush.msra.mxu0 0.0
      %592 = vmatpush.msra.mxu0 0.0
      %593 = vmatpush.msra.mxu0 0.0
      %594 = vmatpush.msra.mxu0 0.0
      %595 = vmatpush.msra.mxu0 0.0
      %596 = vmatpush.msra.mxu0 0.0
      %597 = vmatpush.msra.mxu0 0.0
      %598 = vmatpush.msra.mxu0 0.0
      %599 = vmatpush.msra.mxu0 0.0
      %600 = vmatpush.msra.mxu0 0.0
      %601 = vmatpush.msra.mxu0 0.0
      %602 = vmatpush.msra.mxu0 0.0
      %603 = vmatpush.msra.mxu0 %v289
      %604 = vmatpush.msra.mxu0 %v287
      %605 = vmatmul.f32.gmra.mxu0 %v573
      %v606 = vpop.f32.mrf.mxu0
      %v607 = vadd.f32 %v509, %v606
      %608 = vmatmul.f32.gmra.mxu0 %v575
      %v609 = vpop.f32.mrf.mxu0
      %v610 = vadd.f32 %v512, %v609
      %611 = vmatmul.f32.gmra.mxu0 %v577
      %v612 = vpop.f32.mrf.mxu0
      %v613 = vadd.f32 %v515, %v612
      %614 = vmatmul.f32.gmra.mxu0 %v579
      %v615 = vpop.f32.mrf.mxu0
      %v616 = vadd.f32 %v518, %v615
      %617 = vmatmul.f32.gmra.mxu0 %v581
      %v618 = vpop.f32.mrf.mxu0
      %v619 = vadd.f32 %v521, %v618
      %620 = vmatmul.f32.gmra.mxu0 %v583
      %v621 = vpop.f32.mrf.mxu0
      %v622 = vadd.f32 %v524, %v621
      %623 = vmatmul.f32.gmra.mxu0 %v585
      %v624 = vpop.f32.mrf.mxu0
      %v625 = vadd.f32 %v527, %v624
      %626 = vmatmul.f32.gmra.mxu0 %v587
      %v627 = vpop.f32.mrf.mxu0
      %v628 = vadd.f32 %v530, %v627
      %629 = vdwg.mxu0
      %630 = vmatpush.msra.mxu0 0.0
      %631 = vmatpush.msra.mxu0 0.0
      %632 = vmatpush.msra.mxu0 0.0
      %633 = vmatpush.msra.mxu0 0.0
      %634 = vmatpush.msra.mxu0 0.0
      %635 = vmatpush.msra.mxu0 0.0
      %636 = vmatpush.msra.mxu0 0.0
      %637 = vmatpush.msra.mxu0 0.0
      %638 = vmatpush.msra.mxu0 0.0
      %639 = vmatpush.msra.mxu0 0.0
      %640 = vmatpush.msra.mxu0 0.0
      %641 = vmatpush.msra.mxu0 0.0
      %642 = vmatpush.msra.mxu0 0.0
      %643 = vmatpush.msra.mxu0 0.0
      %644 = vmatpush.msra.mxu0 %v290
      %645 = vmatpush.msra.mxu0 %v288
      %646 = vmatmul.f32.gmra.mxu0 %v573
      %v647 = vpop.f32.mrf.mxu0
      %v648 = vadd.f32 %v550, %v647
      %649 = vmatmul.f32.gmra.mxu0 %v575
      %v650 = vpop.f32.mrf.mxu0
      %v651 = vadd.f32 %v553, %v650
      %652 = vmatmul.f32.gmra.mxu0 %v577
      %v653 = vpop.f32.mrf.mxu0
      %v654 = vadd.f32 %v556, %v653
      %655 = vmatmul.f32.gmra.mxu0 %v579
      %v656 = vpop.f32.mrf.mxu0
      %v657 = vadd.f32 %v559, %v656
      %658 = vmatmul.f32.gmra.mxu0 %v581
      %v659 = vpop.f32.mrf.mxu0
      %v660 = vadd.f32 %v562, %v659
      %661 = vmatmul.f32.gmra.mxu0 %v583
      %v662 = vpop.f32.mrf.mxu0
      %v663 = vadd.f32 %v565, %v662
      %664 = vmatmul.f32.gmra.mxu0 %v585
      %v665 = vpop.f32.mrf.mxu0
      %v666 = vadd.f32 %v568, %v665
      %667 = vmatmul.f32.gmra.mxu0 %v587
      %v668 = vpop.f32.mrf.mxu0
      %v669 = vadd.f32 %v571, %v668
      %670 = vdwg.mxu0
      %s671 = scalar_lea.vmem %s1, 64
      %v672 = vld [vmem:[%s671] sm:$0xff]
      %v673 = vld [vmem:[%s671 + $0x8] sm:$0xff]
      %v674 = vld [vmem:[%s671 + $0x10] sm:$0xff]
      %v675 = vld [vmem:[%s671 + $0x18] sm:$0xff]
      %v677 = vsel %vm466, 0.0, 0
      %679 = vmatpush.msra.mxu0 0.0
      %680 = vmatpush.msra.mxu0 0.0
      %681 = vmatpush.msra.mxu0 0.0
      %682 = vmatpush.msra.mxu0 0.0
      %683 = vmatpush.msra.mxu0 0.0
      %684 = vmatpush.msra.mxu0 0.0
      %685 = vmatpush.msra.mxu0 0.0
      %686 = vmatpush.msra.mxu0 0.0
      %687 = vmatpush.msra.mxu0 0.0
      %688 = vmatpush.msra.mxu0 0.0
      %689 = vmatpush.msra.mxu0 0.0
      %690 = vmatpush.msra.mxu0 0.0
      %691 = vmatpush.msra.mxu0 0.0
      %692 = vmatpush.msra.mxu0 0.0
      %693 = vmatpush.msra.mxu0 %v674
      %694 = vmatpush.msra.mxu0 %v672
      %695 = vmatmul.f32.gmra.mxu0 %v575
      %v696 = vpop.f32.mrf.mxu0
      %v697 = vadd.f32 0.0, %v696
      %698 = vmatmul.f32.gmra.mxu0 %v577
      %v699 = vpop.f32.mrf.mxu0
      %v700 = vadd.f32 0.0, %v699
      %701 = vmatmul.f32.gmra.mxu0 %v579
      %v702 = vpop.f32.mrf.mxu0
      %v703 = vadd.f32 0.0, %v702
      %704 = vmatmul.f32.gmra.mxu0 %v581
      %v705 = vpop.f32.mrf.mxu0
      %v706 = vadd.f32 0.0, %v705
      %707 = vmatmul.f32.gmra.mxu0 %v583
      %v708 = vpop.f32.mrf.mxu0
      %v709 = vadd.f32 0.0, %v708
      %710 = vmatmul.f32.gmra.mxu0 %v585
      %v711 = vpop.f32.mrf.mxu0
      %v712 = vadd.f32 0.0, %v711
      %713 = vmatmul.f32.gmra.mxu0 %v587
      %v714 = vpop.f32.mrf.mxu0
      %v715 = vadd.f32 0.0, %v714
      %716 = vmatmul.f32.gmra.mxu0 %v677
      %v717 = vpop.f32.mrf.mxu0
      %v718 = vadd.f32 0.0, %v717
      %719 = vdwg.mxu0
      %720 = vmatpush.msra.mxu0 0.0
      %721 = vmatpush.msra.mxu0 0.0
      %722 = vmatpush.msra.mxu0 0.0
      %723 = vmatpush.msra.mxu0 0.0
      %724 = vmatpush.msra.mxu0 0.0
      %725 = vmatpush.msra.mxu0 0.0
      %726 = vmatpush.msra.mxu0 0.0
      %727 = vmatpush.msra.mxu0 0.0
      %728 = vmatpush.msra.mxu0 0.0
      %729 = vmatpush.msra.mxu0 0.0
      %730 = vmatpush.msra.mxu0 0.0
      %731 = vmatpush.msra.mxu0 0.0
      %732 = vmatpush.msra.mxu0 0.0
      %733 = vmatpush.msra.mxu0 0.0
      %734 = vmatpush.msra.mxu0 %v675
      %735 = vmatpush.msra.mxu0 %v673
      %736 = vmatmul.f32.gmra.mxu0 %v575
      %v737 = vpop.f32.mrf.mxu0
      %v738 = vadd.f32 0.0, %v737
      %739 = vmatmul.f32.gmra.mxu0 %v577
      %v740 = vpop.f32.mrf.mxu0
      %v741 = vadd.f32 0.0, %v740
      %742 = vmatmul.f32.gmra.mxu0 %v579
      %v743 = vpop.f32.mrf.mxu0
      %v744 = vadd.f32 0.0, %v743
      %745 = vmatmul.f32.gmra.mxu0 %v581
      %v746 = vpop.f32.mrf.mxu0
      %v747 = vadd.f32 0.0, %v746
      %748 = vmatmul.f32.gmra.mxu0 %v583
      %v749 = vpop.f32.mrf.mxu0
      %v750 = vadd.f32 0.0, %v749
      %751 = vmatmul.f32.gmra.mxu0 %v585
      %v752 = vpop.f32.mrf.mxu0
      %v753 = vadd.f32 0.0, %v752
      %754 = vmatmul.f32.gmra.mxu0 %v587
      %v755 = vpop.f32.mrf.mxu0
      %v756 = vadd.f32 0.0, %v755
      %757 = vmatmul.f32.gmra.mxu0 %v677
      %v758 = vpop.f32.mrf.mxu0
      %v759 = vadd.f32 0.0, %v758
      %760 = vdwg.mxu0
      %v761 = vadd.f32 %v607, %v697
      %v762 = vadd.f32 %v648, %v738
      %v763 = vadd.f32 %v610, %v700
      %v764 = vadd.f32 %v651, %v741
      %v765 = vadd.f32 %v613, %v703
      %v766 = vadd.f32 %v654, %v744
      %v767 = vadd.f32 %v616, %v706
      %v768 = vadd.f32 %v657, %v747
      %v769 = vadd.f32 %v619, %v709
      %v770 = vadd.f32 %v660, %v750
      %v771 = vadd.f32 %v622, %v712
      %v772 = vadd.f32 %v663, %v753
      %v773 = vadd.f32 %v625, %v715
      %v774 = vadd.f32 %v666, %v756
      %v775 = vadd.f32 %v628, %v718
      %v776 = vadd.f32 %v669, %v759
      %v777 = vsel %vm445, %v304, 0.0
      %v778 = vsel %vm446, %v306, 0.0
      %v779 = vsel %vm447, %v308, 0.0
      %v780 = vsel %vm448, %v310, 0.0
      %v781 = vsel %vm449, %v312, 0.0
      %v782 = vsel %vm450, %v314, 0.0
      %v783 = vsel %vm451, %v323, 0.0
      %s784 = scalar_lea.vmem %s1, 96
      %v785 = vld [vmem:[%s784] sm:$0xff]
      %v786 = vld [vmem:[%s784 + $0x8] sm:$0xff]
      %v787 = vld [vmem:[%s784 + $0x10] sm:$0xff]
      %v788 = vld [vmem:[%s784 + $0x18] sm:$0xff]
      %v790 = vsel %vm466, %v777, 0
      %v793 = vsel %vm466, %v778, 0
      %v796 = vsel %vm466, %v779, 0
      %v799 = vsel %vm466, %v780, 0
      %v802 = vsel %vm466, %v781, 0
      %v805 = vsel %vm466, %v782, 0
      %v808 = vsel %vm466, %v783, 0
      %810 = vmatpush.msra.mxu0 0.0
      %811 = vmatpush.msra.mxu0 0.0
      %812 = vmatpush.msra.mxu0 0.0
      %813 = vmatpush.msra.mxu0 0.0
      %814 = vmatpush.msra.mxu0 0.0
      %815 = vmatpush.msra.mxu0 0.0
      %816 = vmatpush.msra.mxu0 0.0
      %817 = vmatpush.msra.mxu0 0.0
      %818 = vmatpush.msra.mxu0 0.0
      %819 = vmatpush.msra.mxu0 0.0
      %820 = vmatpush.msra.mxu0 0.0
      %821 = vmatpush.msra.mxu0 0.0
      %822 = vmatpush.msra.mxu0 0.0
      %823 = vmatpush.msra.mxu0 0.0
      %824 = vmatpush.msra.mxu0 %v787
      %825 = vmatpush.msra.mxu0 %v785
      %826 = vmatmul.f32.gmra.mxu0 %v790
      %v827 = vpop.f32.mrf.mxu0
      %v828 = vadd.f32 0.0, %v827
      %829 = vmatmul.f32.gmra.mxu0 %v793
      %v830 = vpop.f32.mrf.mxu0
      %v831 = vadd.f32 0.0, %v830
      %832 = vmatmul.f32.gmra.mxu0 %v796
      %v833 = vpop.f32.mrf.mxu0
      %v834 = vadd.f32 0.0, %v833
      %835 = vmatmul.f32.gmra.mxu0 %v799
      %v836 = vpop.f32.mrf.mxu0
      %v837 = vadd.f32 0.0, %v836
      %838 = vmatmul.f32.gmra.mxu0 %v802
      %v839 = vpop.f32.mrf.mxu0
      %v840 = vadd.f32 0.0, %v839
      %841 = vmatmul.f32.gmra.mxu0 %v805
      %v842 = vpop.f32.mrf.mxu0
      %v843 = vadd.f32 0.0, %v842
      %844 = vmatmul.f32.gmra.mxu0 %v808
      %v845 = vpop.f32.mrf.mxu0
      %v846 = vadd.f32 0.0, %v845
      %847 = vmatmul.f32.gmra.mxu0 %v677
      %v848 = vpop.f32.mrf.mxu0
      %v849 = vadd.f32 0.0, %v848
      %850 = vdwg.mxu0
      %851 = vmatpush.msra.mxu0 0.0
      %852 = vmatpush.msra.mxu0 0.0
      %853 = vmatpush.msra.mxu0 0.0
      %854 = vmatpush.msra.mxu0 0.0
      %855 = vmatpush.msra.mxu0 0.0
      %856 = vmatpush.msra.mxu0 0.0
      %857 = vmatpush.msra.mxu0 0.0
      %858 = vmatpush.msra.mxu0 0.0
      %859 = vmatpush.msra.mxu0 0.0
      %860 = vmatpush.msra.mxu0 0.0
      %861 = vmatpush.msra.mxu0 0.0
      %862 = vmatpush.msra.mxu0 0.0
      %863 = vmatpush.msra.mxu0 0.0
      %864 = vmatpush.msra.mxu0 0.0
      %865 = vmatpush.msra.mxu0 %v788
      %866 = vmatpush.msra.mxu0 %v786
      %867 = vmatmul.f32.gmra.mxu0 %v790
      %v868 = vpop.f32.mrf.mxu0
      %v869 = vadd.f32 0.0, %v868
      %870 = vmatmul.f32.gmra.mxu0 %v793
      %v871 = vpop.f32.mrf.mxu0
      %v872 = vadd.f32 0.0, %v871
      %873 = vmatmul.f32.gmra.mxu0 %v796
      %v874 = vpop.f32.mrf.mxu0
      %v875 = vadd.f32 0.0, %v874
      %876 = vmatmul.f32.gmra.mxu0 %v799
      %v877 = vpop.f32.mrf.mxu0
      %v878 = vadd.f32 0.0, %v877
      %879 = vmatmul.f32.gmra.mxu0 %v802
      %v880 = vpop.f32.mrf.mxu0
      %v881 = vadd.f32 0.0, %v880
      %882 = vmatmul.f32.gmra.mxu0 %v805
      %v883 = vpop.f32.mrf.mxu0
      %v884 = vadd.f32 0.0, %v883
      %885 = vmatmul.f32.gmra.mxu0 %v808
      %v886 = vpop.f32.mrf.mxu0
      %v887 = vadd.f32 0.0, %v886
      %888 = vmatmul.f32.gmra.mxu0 %v677
      %v889 = vpop.f32.mrf.mxu0
      %v890 = vadd.f32 0.0, %v889
      %891 = vdwg.mxu0
      %v892 = vadd.f32 %v761, %v828
      %v893 = vadd.f32 %v762, %v869
      %v894 = vadd.f32 %v763, %v831
      %v895 = vadd.f32 %v764, %v872
      %v896 = vadd.f32 %v765, %v834
      %v897 = vadd.f32 %v766, %v875
      %v898 = vadd.f32 %v767, %v837
      %v899 = vadd.f32 %v768, %v878
      %v900 = vadd.f32 %v769, %v840
      %v901 = vadd.f32 %v770, %v881
      %v902 = vadd.f32 %v771, %v843
      %v903 = vadd.f32 %v772, %v884
      %v904 = vadd.f32 %v773, %v846
      %v905 = vadd.f32 %v774, %v887
      %v906 = vadd.f32 %v775, %v849
      %v907 = vadd.f32 %v776, %v890
      %v908 = vld [vmem:[%s2] sm:$0x3]
      %v910 = vperm.slane %v908, 0
      %v911 = vperm.slane %v908, 1
      %v914 = vadd.f32 %v892, %v910
      %v915 = vadd.f32 %v893, %v911
      %v916 = vadd.f32 %v894, %v910
      %v917 = vadd.f32 %v895, %v911
      %v918 = vadd.f32 %v896, %v910
      %v919 = vadd.f32 %v897, %v911
      %v920 = vadd.f32 %v898, %v910
      %v921 = vadd.f32 %v899, %v911
      %v922 = vadd.f32 %v900, %v910
      %v923 = vadd.f32 %v901, %v911
      %v924 = vadd.f32 %v902, %v910
      %v925 = vadd.f32 %v903, %v911
      %v926 = vadd.f32 %v904, %v910
      %v927 = vadd.f32 %v905, %v911
      %v928 = vadd.f32 %v906, %v910
      %v929 = vadd.f32 %v907, %v911
      %v930 = vmax.f32 %v914, 0.0
      %v931 = vmax.f32 %v915, 0.0
      %v932 = vmax.f32 %v916, 0.0
      %v933 = vmax.f32 %v917, 0.0
      %v934 = vmax.f32 %v918, 0.0
      %v935 = vmax.f32 %v919, 0.0
      %v936 = vmax.f32 %v920, 0.0
      %v937 = vmax.f32 %v921, 0.0
      %v938 = vmax.f32 %v922, 0.0
      %v939 = vmax.f32 %v923, 0.0
      %v940 = vmax.f32 %v924, 0.0
      %v941 = vmax.f32 %v925, 0.0
      %v942 = vmax.f32 %v926, 0.0
      %v943 = vmax.f32 %v927, 0.0
      %v944 = vmax.f32 %v928, 0.0
      %v945 = vmax.f32 %v929, 0.0
      %v946 = vld [vmem:[%s3] sm:$0xff]
      %v947 = vld [vmem:[%s3 + $0x8] sm:$0xff]
      %v948 = vld [vmem:[%s3 + $0x10] sm:$0xff]
      %v949 = vld [vmem:[%s3 + $0x18] sm:$0xff]
      %v950 = vld [vmem:[%s3 + $0x20] sm:$0xff]
      %v951 = vld [vmem:[%s3 + $0x28] sm:$0xff]
      %v952 = vld [vmem:[%s3 + $0x30] sm:$0xff]
      %v953 = vld [vmem:[%s3 + $0x38] sm:$0xff]
      %v954 = vld [vmem:[%s3 + $0x40] sm:$0xff]
      %v955 = vld [vmem:[%s3 + $0x48] sm:$0xff]
      %v956 = vld [vmem:[%s3 + $0x50] sm:$0xff]
      %v957 = vld [vmem:[%s3 + $0x58] sm:$0xff]
      %v958 = vld [vmem:[%s3 + $0x60] sm:$0xff]
      %v959 = vld [vmem:[%s3 + $0x68] sm:$0xff]
      %v960 = vld [vmem:[%s3 + $0x70] sm:$0xff]
      %v961 = vld [vmem:[%s3 + $0x78] sm:$0xff]
      %v962 = vld [vmem:[%s3 + $0x80] sm:$0xff]
      %v963 = vld [vmem:[%s3 + $0x88] sm:$0xff]
      %v964 = vld [vmem:[%s3 + $0x90] sm:$0xff]
      %v965 = vld [vmem:[%s3 + $0x98] sm:$0xff]
      %v966 = vld [vmem:[%s3 + $0xa0] sm:$0xff]
      %v967 = vld [vmem:[%s3 + $0xa8] sm:$0xff]
      %v968 = vld [vmem:[%s3 + $0xb0] sm:$0xff]
      %v969 = vld [vmem:[%s3 + $0xb8] sm:$0xff]
      %v970 = vld [vmem:[%s3 + $0xc0] sm:$0xff]
      %v971 = vld [vmem:[%s3 + $0xc8] sm:$0xff]
      %v972 = vld [vmem:[%s3 + $0xd0] sm:$0xff]
      %v973 = vld [vmem:[%s3 + $0xd8] sm:$0xff]
      %v974 = vld [vmem:[%s3 + $0xe0] sm:$0xff]
      %v975 = vld [vmem:[%s3 + $0xe8] sm:$0xff]
      %v976 = vld [vmem:[%s3 + $0xf0] sm:$0xff]
      %v977 = vld [vmem:[%s3 + $0xf8] sm:$0xff]
      %v978 = vld [vmem:[%s3 + $0x100] sm:$0xff]
      %v979 = vld [vmem:[%s3 + $0x108] sm:$0xff]
      %v980 = vld [vmem:[%s3 + $0x110] sm:$0xff]
      %v981 = vld [vmem:[%s3 + $0x118] sm:$0xff]
      %v982 = vld [vmem:[%s3 + $0x120] sm:$0xff]
      %v983 = vld [vmem:[%s3 + $0x128] sm:$0xff]
      %v984 = vld [vmem:[%s3 + $0x130] sm:$0xff]
      %v985 = vld [vmem:[%s3 + $0x138] sm:$0xff]
      %v986 = vld [vmem:[%s3 + $0x140] sm:$0xff]
      %v987 = vld [vmem:[%s3 + $0x148] sm:$0xff]
      %v988 = vld [vmem:[%s3 + $0x150] sm:$0xff]
      %v989 = vld [vmem:[%s3 + $0x158] sm:$0xff]
      %v990 = vld [vmem:[%s3 + $0x160] sm:$0xff]
      %v991 = vld [vmem:[%s3 + $0x168] sm:$0xff]
      %v992 = vld [vmem:[%s3 + $0x170] sm:$0xff]
      %v993 = vld [vmem:[%s3 + $0x178] sm:$0xff]
      %v994 = vld [vmem:[%s3 + $0x180] sm:$0xff]
      %v995 = vld [vmem:[%s3 + $0x188] sm:$0xff]
      %v996 = vld [vmem:[%s3 + $0x190] sm:$0xff]
      %v997 = vld [vmem:[%s3 + $0x198] sm:$0xff]
      %v998 = vld [vmem:[%s3 + $0x1a0] sm:$0xff]
      %v999 = vld [vmem:[%s3 + $0x1a8] sm:$0xff]
      %v1000 = vld [vmem:[%s3 + $0x1b0] sm:$0xff]
      %v1001 = vld [vmem:[%s3 + $0x1b8] sm:$0xff]
      %v1002 = vld [vmem:[%s3 + $0x1c0] sm:$0xff]
      %v1003 = vld [vmem:[%s3 + $0x1c8] sm:$0xff]
      %v1004 = vld [vmem:[%s3 + $0x1d0] sm:$0xff]
      %v1005 = vld [vmem:[%s3 + $0x1d8] sm:$0xff]
      %v1006 = vld [vmem:[%s3 + $0x1e0] sm:$0xff]
      %v1007 = vld [vmem:[%s3 + $0x1e8] sm:$0xff]
      %v1008 = vld [vmem:[%s3 + $0x1f0] sm:$0xff]
      %v1009 = vld [vmem:[%s3 + $0x1f8] sm:$0xff]
      %v1010 = vld [vmem:[%s3 + $0x200] sm:$0xff]
      %v1011 = vld [vmem:[%s3 + $0x208] sm:$0xff]
      %v1012 = vld [vmem:[%s3 + $0x210] sm:$0xff]
      %v1013 = vld [vmem:[%s3 + $0x218] sm:$0xff]
      %v1014 = vld [vmem:[%s3 + $0x220] sm:$0xff]
      %v1015 = vld [vmem:[%s3 + $0x228] sm:$0xff]
      %v1016 = vld [vmem:[%s3 + $0x230] sm:$0xff]
      %v1017 = vld [vmem:[%s3 + $0x238] sm:$0xff]
      %v1018 = vld [vmem:[%s3 + $0x240] sm:$0xff]
      %v1019 = vld [vmem:[%s3 + $0x248] sm:$0xff]
      %v1020 = vld [vmem:[%s3 + $0x250] sm:$0xff]
      %v1021 = vld [vmem:[%s3 + $0x258] sm:$0xff]
      %v1022 = vld [vmem:[%s3 + $0x260] sm:$0xff]
      %v1023 = vld [vmem:[%s3 + $0x268] sm:$0xff]
      %v1024 = vld [vmem:[%s3 + $0x270] sm:$0xff]
      %v1025 = vld [vmem:[%s3 + $0x278] sm:$0xff]
      %v1026 = vld [vmem:[%s3 + $0x280] sm:$0xff]
      %v1027 = vld [vmem:[%s3 + $0x288] sm:$0xff]
      %v1028 = vld [vmem:[%s3 + $0x290] sm:$0xff]
      %v1029 = vld [vmem:[%s3 + $0x298] sm:$0xff]
      %v1030 = vld [vmem:[%s3 + $0x2a0] sm:$0xff]
      %v1031 = vld [vmem:[%s3 + $0x2a8] sm:$0xff]
      %v1032 = vld [vmem:[%s3 + $0x2b0] sm:$0xff]
      %v1033 = vld [vmem:[%s3 + $0x2b8] sm:$0xff]
      %v1034 = vld [vmem:[%s3 + $0x2c0] sm:$0xff]
      %v1035 = vld [vmem:[%s3 + $0x2c8] sm:$0xff]
      %v1036 = vld [vmem:[%s3 + $0x2d0] sm:$0xff]
      %v1037 = vld [vmem:[%s3 + $0x2d8] sm:$0xff]
      %v1038 = vld [vmem:[%s3 + $0x2e0] sm:$0xff]
      %v1039 = vld [vmem:[%s3 + $0x2e8] sm:$0xff]
      %v1040 = vld [vmem:[%s3 + $0x2f0] sm:$0xff]
      %v1041 = vld [vmem:[%s3 + $0x2f8] sm:$0xff]
      %v1042 = vld [vmem:[%s3 + $0x300] sm:$0xff]
      %v1043 = vld [vmem:[%s3 + $0x308] sm:$0xff]
      %v1044 = vld [vmem:[%s3 + $0x310] sm:$0xff]
      %v1045 = vld [vmem:[%s3 + $0x318] sm:$0xff]
      %v1046 = vld [vmem:[%s3 + $0x320] sm:$0xff]
      %v1047 = vld [vmem:[%s3 + $0x328] sm:$0xff]
      %v1048 = vld [vmem:[%s3 + $0x330] sm:$0xff]
      %v1049 = vld [vmem:[%s3 + $0x338] sm:$0xff]
      %v1050 = vld [vmem:[%s3 + $0x340] sm:$0xff]
      %v1051 = vld [vmem:[%s3 + $0x348] sm:$0xff]
      %v1052 = vld [vmem:[%s3 + $0x350] sm:$0xff]
      %v1053 = vld [vmem:[%s3 + $0x358] sm:$0xff]
      %v1054 = vld [vmem:[%s3 + $0x360] sm:$0xff]
      %v1055 = vld [vmem:[%s3 + $0x368] sm:$0xff]
      %v1056 = vld [vmem:[%s3 + $0x370] sm:$0xff]
      %v1057 = vld [vmem:[%s3 + $0x378] sm:$0xff]
      %v1058 = vld [vmem:[%s3 + $0x380] sm:$0xff]
      %v1059 = vld [vmem:[%s3 + $0x388] sm:$0xff]
      %v1060 = vld [vmem:[%s3 + $0x390] sm:$0xff]
      %v1061 = vld [vmem:[%s3 + $0x398] sm:$0xff]
      %v1062 = vld [vmem:[%s3 + $0x3a0] sm:$0xff]
      %v1063 = vld [vmem:[%s3 + $0x3a8] sm:$0xff]
      %v1064 = vld [vmem:[%s3 + $0x3b0] sm:$0xff]
      %v1065 = vld [vmem:[%s3 + $0x3b8] sm:$0xff]
      %v1066 = vld [vmem:[%s3 + $0x3c0] sm:$0xff]
      %v1067 = vld [vmem:[%s3 + $0x3c8] sm:$0xff]
      %v1068 = vld [vmem:[%s3 + $0x3d0] sm:$0xff]
      %v1069 = vld [vmem:[%s3 + $0x3d8] sm:$0xff]
      %v1070 = vld [vmem:[%s3 + $0x3e0] sm:$0xff]
      %v1071 = vld [vmem:[%s3 + $0x3e8] sm:$0xff]
      %v1072 = vld [vmem:[%s3 + $0x3f0] sm:$0xff]
      %v1073 = vld [vmem:[%s3 + $0x3f8] sm:$0xff]
      %v1090 = vrot.slane %v930, 1
      %v1091 = vrot.slane %v932, 1
      %v1092 = vsel %vm299, %v1090, %v1091
      %v1093 = vrot.slane %v931, 1
      %v1094 = vrot.slane %v933, 1
      %v1095 = vsel %vm299, %v1093, %v1094
      %v1096 = vrot.slane %v934, 1
      %v1097 = vsel %vm299, %v1091, %v1096
      %v1098 = vrot.slane %v935, 1
      %v1099 = vsel %vm299, %v1094, %v1098
      %v1100 = vrot.slane %v936, 1
      %v1101 = vsel %vm299, %v1096, %v1100
      %v1102 = vrot.slane %v937, 1
      %v1103 = vsel %vm299, %v1098, %v1102
      %v1104 = vrot.slane %v938, 1
      %v1105 = vsel %vm299, %v1100, %v1104
      %v1106 = vrot.slane %v939, 1
      %v1107 = vsel %vm299, %v1102, %v1106
      %v1108 = vrot.slane %v940, 1
      %v1109 = vsel %vm299, %v1104, %v1108
      %v1110 = vrot.slane %v941, 1
      %v1111 = vsel %vm299, %v1106, %v1110
      %v1112 = vrot.slane %v942, 1
      %v1113 = vsel %vm299, %v1108, %v1112
      %v1114 = vrot.slane %v943, 1
      %v1115 = vsel %vm299, %v1110, %v1114
      %v1116 = vrot.slane %v944, 1
      %v1117 = vsel %vm299, %v1112, %v1116
      %v1118 = vrot.slane %v945, 1
      %v1119 = vsel %vm299, %v1114, %v1118
      %v1136 = vsel %vm299, %v1116, 0.0
      %v1137 = vsel %vm299, %v1118, 0.0
      %v1138 = vsel %vm445, %v1092, 0.0
      %v1139 = vsel %vm445, %v1095, 0.0
      %v1140 = vsel %vm446, %v1097, 0.0
      %v1141 = vsel %vm446, %v1099, 0.0
      %v1142 = vsel %vm447, %v1101, 0.0
      %v1143 = vsel %vm447, %v1103, 0.0
      %v1144 = vsel %vm448, %v1105, 0.0
      %v1145 = vsel %vm448, %v1107, 0.0
      %v1146 = vsel %vm449, %v1109, 0.0
      %v1147 = vsel %vm449, %v1111, 0.0
      %v1148 = vsel %vm450, %v1113, 0.0
      %v1149 = vsel %vm450, %v1115, 0.0
      %v1150 = vsel %vm451, %v1117, 0.0
      %v1151 = vsel %vm451, %v1119, 0.0
      %v1152 = vsel %vm452, %v1136, 0.0
      %v1153 = vsel %vm452, %v1137, 0.0
      %s1154 = scalar_lea.vmem %s3, 1024
      %v1155 = vld [vmem:[%s1154] sm:$0xff]
      %v1156 = vld [vmem:[%s1154 + $0x8] sm:$0xff]
      %v1157 = vld [vmem:[%s1154 + $0x10] sm:$0xff]
      %v1158 = vld [vmem:[%s1154 + $0x18] sm:$0xff]
      %v1159 = vld [vmem:[%s1154 + $0x20] sm:$0xff]
      %v1160 = vld [vmem:[%s1154 + $0x28] sm:$0xff]
      %v1161 = vld [vmem:[%s1154 + $0x30] sm:$0xff]
      %v1162 = vld [vmem:[%s1154 + $0x38] sm:$0xff]
      %v1163 = vld [vmem:[%s1154 + $0x40] sm:$0xff]
      %v1164 = vld [vmem:[%s1154 + $0x48] sm:$0xff]
      %v1165 = vld [vmem:[%s1154 + $0x50] sm:$0xff]
      %v1166 = vld [vmem:[%s1154 + $0x58] sm:$0xff]
      %v1167 = vld [vmem:[%s1154 + $0x60] sm:$0xff]
      %v1168 = vld [vmem:[%s1154 + $0x68] sm:$0xff]
      %v1169 = vld [vmem:[%s1154 + $0x70] sm:$0xff]
      %v1170 = vld [vmem:[%s1154 + $0x78] sm:$0xff]
      %v1171 = vld [vmem:[%s1154 + $0x80] sm:$0xff]
      %v1172 = vld [vmem:[%s1154 + $0x88] sm:$0xff]
      %v1173 = vld [vmem:[%s1154 + $0x90] sm:$0xff]
      %v1174 = vld [vmem:[%s1154 + $0x98] sm:$0xff]
      %v1175 = vld [vmem:[%s1154 + $0xa0] sm:$0xff]
      %v1176 = vld [vmem:[%s1154 + $0xa8] sm:$0xff]
      %v1177 = vld [vmem:[%s1154 + $0xb0] sm:$0xff]
      %v1178 = vld [vmem:[%s1154 + $0xb8] sm:$0xff]
      %v1179 = vld [vmem:[%s1154 + $0xc0] sm:$0xff]
      %v1180 = vld [vmem:[%s1154 + $0xc8] sm:$0xff]
      %v1181 = vld [vmem:[%s1154 + $0xd0] sm:$0xff]
      %v1182 = vld [vmem:[%s1154 + $0xd8] sm:$0xff]
      %v1183 = vld [vmem:[%s1154 + $0xe0] sm:$0xff]
      %v1184 = vld [vmem:[%s1154 + $0xe8] sm:$0xff]
      %v1185 = vld [vmem:[%s1154 + $0xf0] sm:$0xff]
      %v1186 = vld [vmem:[%s1154 + $0xf8] sm:$0xff]
      %v1187 = vld [vmem:[%s1154 + $0x100] sm:$0xff]
      %v1188 = vld [vmem:[%s1154 + $0x108] sm:$0xff]
      %v1189 = vld [vmem:[%s1154 + $0x110] sm:$0xff]
      %v1190 = vld [vmem:[%s1154 + $0x118] sm:$0xff]
      %v1191 = vld [vmem:[%s1154 + $0x120] sm:$0xff]
      %v1192 = vld [vmem:[%s1154 + $0x128] sm:$0xff]
      %v1193 = vld [vmem:[%s1154 + $0x130] sm:$0xff]
      %v1194 = vld [vmem:[%s1154 + $0x138] sm:$0xff]
      %v1195 = vld [vmem:[%s1154 + $0x140] sm:$0xff]
      %v1196 = vld [vmem:[%s1154 + $0x148] sm:$0xff]
      %v1197 = vld [vmem:[%s1154 + $0x150] sm:$0xff]
      %v1198 = vld [vmem:[%s1154 + $0x158] sm:$0xff]
      %v1199 = vld [vmem:[%s1154 + $0x160] sm:$0xff]
      %v1200 = vld [vmem:[%s1154 + $0x168] sm:$0xff]
      %v1201 = vld [vmem:[%s1154 + $0x170] sm:$0xff]
      %v1202 = vld [vmem:[%s1154 + $0x178] sm:$0xff]
      %v1203 = vld [vmem:[%s1154 + $0x180] sm:$0xff]
      %v1204 = vld [vmem:[%s1154 + $0x188] sm:$0xff]
      %v1205 = vld [vmem:[%s1154 + $0x190] sm:$0xff]
      %v1206 = vld [vmem:[%s1154 + $0x198] sm:$0xff]
      %v1207 = vld [vmem:[%s1154 + $0x1a0] sm:$0xff]
      %v1208 = vld [vmem:[%s1154 + $0x1a8] sm:$0xff]
      %v1209 = vld [vmem:[%s1154 + $0x1b0] sm:$0xff]
      %v1210 = vld [vmem:[%s1154 + $0x1b8] sm:$0xff]
      %v1211 = vld [vmem:[%s1154 + $0x1c0] sm:$0xff]
      %v1212 = vld [vmem:[%s1154 + $0x1c8] sm:$0xff]
      %v1213 = vld [vmem:[%s1154 + $0x1d0] sm:$0xff]
      %v1214 = vld [vmem:[%s1154 + $0x1d8] sm:$0xff]
      %v1215 = vld [vmem:[%s1154 + $0x1e0] sm:$0xff]
      %v1216 = vld [vmem:[%s1154 + $0x1e8] sm:$0xff]
      %v1217 = vld [vmem:[%s1154 + $0x1f0] sm:$0xff]
      %v1218 = vld [vmem:[%s1154 + $0x1f8] sm:$0xff]
      %v1219 = vld [vmem:[%s1154 + $0x200] sm:$0xff]
      %v1220 = vld [vmem:[%s1154 + $0x208] sm:$0xff]
      %v1221 = vld [vmem:[%s1154 + $0x210] sm:$0xff]
      %v1222 = vld [vmem:[%s1154 + $0x218] sm:$0xff]
      %v1223 = vld [vmem:[%s1154 + $0x220] sm:$0xff]
      %v1224 = vld [vmem:[%s1154 + $0x228] sm:$0xff]
      %v1225 = vld [vmem:[%s1154 + $0x230] sm:$0xff]
      %v1226 = vld [vmem:[%s1154 + $0x238] sm:$0xff]
      %v1227 = vld [vmem:[%s1154 + $0x240] sm:$0xff]
      %v1228 = vld [vmem:[%s1154 + $0x248] sm:$0xff]
      %v1229 = vld [vmem:[%s1154 + $0x250] sm:$0xff]
      %v1230 = vld [vmem:[%s1154 + $0x258] sm:$0xff]
      %v1231 = vld [vmem:[%s1154 + $0x260] sm:$0xff]
      %v1232 = vld [vmem:[%s1154 + $0x268] sm:$0xff]
      %v1233 = vld [vmem:[%s1154 + $0x270] sm:$0xff]
      %v1234 = vld [vmem:[%s1154 + $0x278] sm:$0xff]
      %v1235 = vld [vmem:[%s1154 + $0x280] sm:$0xff]
      %v1236 = vld [vmem:[%s1154 + $0x288] sm:$0xff]
      %v1237 = vld [vmem:[%s1154 + $0x290] sm:$0xff]
      %v1238 = vld [vmem:[%s1154 + $0x298] sm:$0xff]
      %v1239 = vld [vmem:[%s1154 + $0x2a0] sm:$0xff]
      %v1240 = vld [vmem:[%s1154 + $0x2a8] sm:$0xff]
      %v1241 = vld [vmem:[%s1154 + $0x2b0] sm:$0xff]
      %v1242 = vld [vmem:[%s1154 + $0x2b8] sm:$0xff]
      %v1243 = vld [vmem:[%s1154 + $0x2c0] sm:$0xff]
      %v1244 = vld [vmem:[%s1154 + $0x2c8] sm:$0xff]
      %v1245 = vld [vmem:[%s1154 + $0x2d0] sm:$0xff]
      %v1246 = vld [vmem:[%s1154 + $0x2d8] sm:$0xff]
      %v1247 = vld [vmem:[%s1154 + $0x2e0] sm:$0xff]
      %v1248 = vld [vmem:[%s1154 + $0x2e8] sm:$0xff]
      %v1249 = vld [vmem:[%s1154 + $0x2f0] sm:$0xff]
      %v1250 = vld [vmem:[%s1154 + $0x2f8] sm:$0xff]
      %v1251 = vld [vmem:[%s1154 + $0x300] sm:$0xff]
      %v1252 = vld [vmem:[%s1154 + $0x308] sm:$0xff]
      %v1253 = vld [vmem:[%s1154 + $0x310] sm:$0xff]
      %v1254 = vld [vmem:[%s1154 + $0x318] sm:$0xff]
      %v1255 = vld [vmem:[%s1154 + $0x320] sm:$0xff]
      %v1256 = vld [vmem:[%s1154 + $0x328] sm:$0xff]
      %v1257 = vld [vmem:[%s1154 + $0x330] sm:$0xff]
      %v1258 = vld [vmem:[%s1154 + $0x338] sm:$0xff]
      %v1259 = vld [vmem:[%s1154 + $0x340] sm:$0xff]
      %v1260 = vld [vmem:[%s1154 + $0x348] sm:$0xff]
      %v1261 = vld [vmem:[%s1154 + $0x350] sm:$0xff]
      %v1262 = vld [vmem:[%s1154 + $0x358] sm:$0xff]
      %v1263 = vld [vmem:[%s1154 + $0x360] sm:$0xff]
      %v1264 = vld [vmem:[%s1154 + $0x368] sm:$0xff]
      %v1265 = vld [vmem:[%s1154 + $0x370] sm:$0xff]
      %v1266 = vld [vmem:[%s1154 + $0x378] sm:$0xff]
      %v1267 = vld [vmem:[%s1154 + $0x380] sm:$0xff]
      %v1268 = vld [vmem:[%s1154 + $0x388] sm:$0xff]
      %v1269 = vld [vmem:[%s1154 + $0x390] sm:$0xff]
      %v1270 = vld [vmem:[%s1154 + $0x398] sm:$0xff]
      %v1271 = vld [vmem:[%s1154 + $0x3a0] sm:$0xff]
      %v1272 = vld [vmem:[%s1154 + $0x3a8] sm:$0xff]
      %v1273 = vld [vmem:[%s1154 + $0x3b0] sm:$0xff]
      %v1274 = vld [vmem:[%s1154 + $0x3b8] sm:$0xff]
      %v1275 = vld [vmem:[%s1154 + $0x3c0] sm:$0xff]
      %v1276 = vld [vmem:[%s1154 + $0x3c8] sm:$0xff]
      %v1277 = vld [vmem:[%s1154 + $0x3d0] sm:$0xff]
      %v1278 = vld [vmem:[%s1154 + $0x3d8] sm:$0xff]
      %v1279 = vld [vmem:[%s1154 + $0x3e0] sm:$0xff]
      %v1280 = vld [vmem:[%s1154 + $0x3e8] sm:$0xff]
      %v1281 = vld [vmem:[%s1154 + $0x3f0] sm:$0xff]
      %v1282 = vld [vmem:[%s1154 + $0x3f8] sm:$0xff]
      %1283 = vmatpush.msra.mxu0 %v1215
      %1284 = vmatpush.msra.mxu0 %v1211
      %1285 = vmatpush.msra.mxu0 %v1207
      %1286 = vmatpush.msra.mxu0 %v1203
      %1287 = vmatpush.msra.mxu0 %v1199
      %1288 = vmatpush.msra.mxu0 %v1195
      %1289 = vmatpush.msra.mxu0 %v1191
      %1290 = vmatpush.msra.mxu0 %v1187
      %1291 = vmatpush.msra.mxu0 %v1183
      %1292 = vmatpush.msra.mxu0 %v1179
      %1293 = vmatpush.msra.mxu0 %v1175
      %1294 = vmatpush.msra.mxu0 %v1171
      %1295 = vmatpush.msra.mxu0 %v1167
      %1296 = vmatpush.msra.mxu0 %v1163
      %1297 = vmatpush.msra.mxu0 %v1159
      %1298 = vmatpush.msra.mxu0 %v1155
      %1299 = vmatmul.f32.gmra.mxu0 %v1138
      %v1300 = vpop.f32.mrf.mxu0
      %v1301 = vadd.f32 0.0, %v1300
      %1302 = vmatmul.f32.gmra.mxu0 %v1140
      %v1303 = vpop.f32.mrf.mxu0
      %v1304 = vadd.f32 0.0, %v1303
      %1305 = vmatmul.f32.gmra.mxu0 %v1142
      %v1306 = vpop.f32.mrf.mxu0
      %v1307 = vadd.f32 0.0, %v1306
      %1308 = vmatmul.f32.gmra.mxu0 %v1144
      %v1309 = vpop.f32.mrf.mxu0
      %v1310 = vadd.f32 0.0, %v1309
      %1311 = vmatmul.f32.gmra.mxu0 %v1146
      %v1312 = vpop.f32.mrf.mxu0
      %v1313 = vadd.f32 0.0, %v1312
      %1314 = vmatmul.f32.gmra.mxu0 %v1148
      %v1315 = vpop.f32.mrf.mxu0
      %v1316 = vadd.f32 0.0, %v1315
      %1317 = vmatmul.f32.gmra.mxu0 %v1150
      %v1318 = vpop.f32.mrf.mxu0
      %v1319 = vadd.f32 0.0, %v1318
      %1320 = vmatmul.f32.gmra.mxu0 %v1152
      %v1321 = vpop.f32.mrf.mxu0
      %v1322 = vadd.f32 0.0, %v1321
      %1323 = vdwg.mxu0
      %1324 = vmatpush.msra.mxu0 %v1279
      %1325 = vmatpush.msra.mxu0 %v1275
      %1326 = vmatpush.msra.mxu0 %v1271
      %1327 = vmatpush.msra.mxu0 %v1267
      %1328 = vmatpush.msra.mxu0 %v1263
      %1329 = vmatpush.msra.mxu0 %v1259
      %1330 = vmatpush.msra.mxu0 %v1255
      %1331 = vmatpush.msra.mxu0 %v1251
      %1332 = vmatpush.msra.mxu0 %v1247
      %1333 = vmatpush.msra.mxu0 %v1243
      %1334 = vmatpush.msra.mxu0 %v1239
      %1335 = vmatpush.msra.mxu0 %v1235
      %1336 = vmatpush.msra.mxu0 %v1231
      %1337 = vmatpush.msra.mxu0 %v1227
      %1338 = vmatpush.msra.mxu0 %v1223
      %1339 = vmatpush.msra.mxu0 %v1219
      %1340 = vmatmul.f32.gmra.mxu0 %v1139
      %v1341 = vpop.f32.mrf.mxu0
      %v1342 = vadd.f32 %v1301, %v1341
      %1343 = vmatmul.f32.gmra.mxu0 %v1141
      %v1344 = vpop.f32.mrf.mxu0
      %v1345 = vadd.f32 %v1304, %v1344
      %1346 = vmatmul.f32.gmra.mxu0 %v1143
      %v1347 = vpop.f32.mrf.mxu0
      %v1348 = vadd.f32 %v1307, %v1347
      %1349 = vmatmul.f32.gmra.mxu0 %v1145
      %v1350 = vpop.f32.mrf.mxu0
      %v1351 = vadd.f32 %v1310, %v1350
      %1352 = vmatmul.f32.gmra.mxu0 %v1147
      %v1353 = vpop.f32.mrf.mxu0
      %v1354 = vadd.f32 %v1313, %v1353
      %1355 = vmatmul.f32.gmra.mxu0 %v1149
      %v1356 = vpop.f32.mrf.mxu0
      %v1357 = vadd.f32 %v1316, %v1356
      %1358 = vmatmul.f32.gmra.mxu0 %v1151
      %v1359 = vpop.f32.mrf.mxu0
      %v1360 = vadd.f32 %v1319, %v1359
      %1361 = vmatmul.f32.gmra.mxu0 %v1153
      %v1362 = vpop.f32.mrf.mxu0
      %v1363 = vadd.f32 %v1322, %v1362
      %1364 = vdwg.mxu0
      %1365 = vmatpush.msra.mxu0 %v1216
      %1366 = vmatpush.msra.mxu0 %v1212
      %1367 = vmatpush.msra.mxu0 %v1208
      %1368 = vmatpush.msra.mxu0 %v1204
      %1369 = vmatpush.msra.mxu0 %v1200
      %1370 = vmatpush.msra.mxu0 %v1196
      %1371 = vmatpush.msra.mxu0 %v1192
      %1372 = vmatpush.msra.mxu0 %v1188
      %1373 = vmatpush.msra.mxu0 %v1184
      %1374 = vmatpush.msra.mxu0 %v1180
      %1375 = vmatpush.msra.mxu0 %v1176
      %1376 = vmatpush.msra.mxu0 %v1172
      %1377 = vmatpush.msra.mxu0 %v1168
      %1378 = vmatpush.msra.mxu0 %v1164
      %1379 = vmatpush.msra.mxu0 %v1160
      %1380 = vmatpush.msra.mxu0 %v1156
      %1381 = vmatmul.f32.gmra.mxu0 %v1138
      %v1382 = vpop.f32.mrf.mxu0
      %v1383 = vadd.f32 0.0, %v1382
      %1384 = vmatmul.f32.gmra.mxu0 %v1140
      %v1385 = vpop.f32.mrf.mxu0
      %v1386 = vadd.f32 0.0, %v1385
      %1387 = vmatmul.f32.gmra.mxu0 %v1142
      %v1388 = vpop.f32.mrf.mxu0
      %v1389 = vadd.f32 0.0, %v1388
      %1390 = vmatmul.f32.gmra.mxu0 %v1144
      %v1391 = vpop.f32.mrf.mxu0
      %v1392 = vadd.f32 0.0, %v1391
      %1393 = vmatmul.f32.gmra.mxu0 %v1146
      %v1394 = vpop.f32.mrf.mxu0
      %v1395 = vadd.f32 0.0, %v1394
      %1396 = vmatmul.f32.gmra.mxu0 %v1148
      %v1397 = vpop.f32.mrf.mxu0
      %v1398 = vadd.f32 0.0, %v1397
      %1399 = vmatmul.f32.gmra.mxu0 %v1150
      %v1400 = vpop.f32.mrf.mxu0
      %v1401 = vadd.f32 0.0, %v1400
      %1402 = vmatmul.f32.gmra.mxu0 %v1152
      %v1403 = vpop.f32.mrf.mxu0
      %v1404 = vadd.f32 0.0, %v1403
      %1405 = vdwg.mxu0
      %1406 = vmatpush.msra.mxu0 %v1280
      %1407 = vmatpush.msra.mxu0 %v1276
      %1408 = vmatpush.msra.mxu0 %v1272
      %1409 = vmatpush.msra.mxu0 %v1268
      %1410 = vmatpush.msra.mxu0 %v1264
      %1411 = vmatpush.msra.mxu0 %v1260
      %1412 = vmatpush.msra.mxu0 %v1256
      %1413 = vmatpush.msra.mxu0 %v1252
      %1414 = vmatpush.msra.mxu0 %v1248
      %1415 = vmatpush.msra.mxu0 %v1244
      %1416 = vmatpush.msra.mxu0 %v1240
      %1417 = vmatpush.msra.mxu0 %v1236
      %1418 = vmatpush.msra.mxu0 %v1232
      %1419 = vmatpush.msra.mxu0 %v1228
      %1420 = vmatpush.msra.mxu0 %v1224
      %1421 = vmatpush.msra.mxu0 %v1220
      %1422 = vmatmul.f32.gmra.mxu0 %v1139
      %v1423 = vpop.f32.mrf.mxu0
      %v1424 = vadd.f32 %v1383, %v1423
      %1425 = vmatmul.f32.gmra.mxu0 %v1141
      %v1426 = vpop.f32.mrf.mxu0
      %v1427 = vadd.f32 %v1386, %v1426
      %1428 = vmatmul.f32.gmra.mxu0 %v1143
      %v1429 = vpop.f32.mrf.mxu0
      %v1430 = vadd.f32 %v1389, %v1429
      %1431 = vmatmul.f32.gmra.mxu0 %v1145
      %v1432 = vpop.f32.mrf.mxu0
      %v1433 = vadd.f32 %v1392, %v1432
      %1434 = vmatmul.f32.gmra.mxu0 %v1147
      %v1435 = vpop.f32.mrf.mxu0
      %v1436 = vadd.f32 %v1395, %v1435
      %1437 = vmatmul.f32.gmra.mxu0 %v1149
      %v1438 = vpop.f32.mrf.mxu0
      %v1439 = vadd.f32 %v1398, %v1438
      %1440 = vmatmul.f32.gmra.mxu0 %v1151
      %v1441 = vpop.f32.mrf.mxu0
      %v1442 = vadd.f32 %v1401, %v1441
      %1443 = vmatmul.f32.gmra.mxu0 %v1153
      %v1444 = vpop.f32.mrf.mxu0
      %v1445 = vadd.f32 %v1404, %v1444
      %1446 = vdwg.mxu0
      %1447 = vmatpush.msra.mxu0 %v1217
      %1448 = vmatpush.msra.mxu0 %v1213
      %1449 = vmatpush.msra.mxu0 %v1209
      %1450 = vmatpush.msra.mxu0 %v1205
      %1451 = vmatpush.msra.mxu0 %v1201
      %1452 = vmatpush.msra.mxu0 %v1197
      %1453 = vmatpush.msra.mxu0 %v1193
      %1454 = vmatpush.msra.mxu0 %v1189
      %1455 = vmatpush.msra.mxu0 %v1185
      %1456 = vmatpush.msra.mxu0 %v1181
      %1457 = vmatpush.msra.mxu0 %v1177
      %1458 = vmatpush.msra.mxu0 %v1173
      %1459 = vmatpush.msra.mxu0 %v1169
      %1460 = vmatpush.msra.mxu0 %v1165
      %1461 = vmatpush.msra.mxu0 %v1161
      %1462 = vmatpush.msra.mxu0 %v1157
      %1463 = vmatmul.f32.gmra.mxu0 %v1138
      %v1464 = vpop.f32.mrf.mxu0
      %v1465 = vadd.f32 0.0, %v1464
      %1466 = vmatmul.f32.gmra.mxu0 %v1140
      %v1467 = vpop.f32.mrf.mxu0
      %v1468 = vadd.f32 0.0, %v1467
      %1469 = vmatmul.f32.gmra.mxu0 %v1142
      %v1470 = vpop.f32.mrf.mxu0
      %v1471 = vadd.f32 0.0, %v1470
      %1472 = vmatmul.f32.gmra.mxu0 %v1144
      %v1473 = vpop.f32.mrf.mxu0
      %v1474 = vadd.f32 0.0, %v1473
      %1475 = vmatmul.f32.gmra.mxu0 %v1146
      %v1476 = vpop.f32.mrf.mxu0
      %v1477 = vadd.f32 0.0, %v1476
      %1478 = vmatmul.f32.gmra.mxu0 %v1148
      %v1479 = vpop.f32.mrf.mxu0
      %v1480 = vadd.f32 0.0, %v1479
      %1481 = vmatmul.f32.gmra.mxu0 %v1150
      %v1482 = vpop.f32.mrf.mxu0
      %v1483 = vadd.f32 0.0, %v1482
      %1484 = vmatmul.f32.gmra.mxu0 %v1152
      %v1485 = vpop.f32.mrf.mxu0
      %v1486 = vadd.f32 0.0, %v1485
      %1487 = vdwg.mxu0
      %1488 = vmatpush.msra.mxu0 %v1281
      %1489 = vmatpush.msra.mxu0 %v1277
      %1490 = vmatpush.msra.mxu0 %v1273
      %1491 = vmatpush.msra.mxu0 %v1269
      %1492 = vmatpush.msra.mxu0 %v1265
      %1493 = vmatpush.msra.mxu0 %v1261
      %1494 = vmatpush.msra.mxu0 %v1257
      %1495 = vmatpush.msra.mxu0 %v1253
      %1496 = vmatpush.msra.mxu0 %v1249
      %1497 = vmatpush.msra.mxu0 %v1245
      %1498 = vmatpush.msra.mxu0 %v1241
      %1499 = vmatpush.msra.mxu0 %v1237
      %1500 = vmatpush.msra.mxu0 %v1233
      %1501 = vmatpush.msra.mxu0 %v1229
      %1502 = vmatpush.msra.mxu0 %v1225
      %1503 = vmatpush.msra.mxu0 %v1221
      %1504 = vmatmul.f32.gmra.mxu0 %v1139
      %v1505 = vpop.f32.mrf.mxu0
      %v1506 = vadd.f32 %v1465, %v1505
      %1507 = vmatmul.f32.gmra.mxu0 %v1141
      %v1508 = vpop.f32.mrf.mxu0
      %v1509 = vadd.f32 %v1468, %v1508
      %1510 = vmatmul.f32.gmra.mxu0 %v1143
      %v1511 = vpop.f32.mrf.mxu0
      %v1512 = vadd.f32 %v1471, %v1511
      %1513 = vmatmul.f32.gmra.mxu0 %v1145
      %v1514 = vpop.f32.mrf.mxu0
      %v1515 = vadd.f32 %v1474, %v1514
      %1516 = vmatmul.f32.gmra.mxu0 %v1147
      %v1517 = vpop.f32.mrf.mxu0
      %v1518 = vadd.f32 %v1477, %v1517
      %1519 = vmatmul.f32.gmra.mxu0 %v1149
      %v1520 = vpop.f32.mrf.mxu0
      %v1521 = vadd.f32 %v1480, %v1520
      %1522 = vmatmul.f32.gmra.mxu0 %v1151
      %v1523 = vpop.f32.mrf.mxu0
      %v1524 = vadd.f32 %v1483, %v1523
      %1525 = vmatmul.f32.gmra.mxu0 %v1153
      %v1526 = vpop.f32.mrf.mxu0
      %v1527 = vadd.f32 %v1486, %v1526
      %1528 = vdwg.mxu0
      %1529 = vmatpush.msra.mxu0 %v1218
      %1530 = vmatpush.msra.mxu0 %v1214
      %1531 = vmatpush.msra.mxu0 %v1210
      %1532 = vmatpush.msra.mxu0 %v1206
      %1533 = vmatpush.msra.mxu0 %v1202
      %1534 = vmatpush.msra.mxu0 %v1198
      %1535 = vmatpush.msra.mxu0 %v1194
      %1536 = vmatpush.msra.mxu0 %v1190
      %1537 = vmatpush.msra.mxu0 %v1186
      %1538 = vmatpush.msra.mxu0 %v1182
      %1539 = vmatpush.msra.mxu0 %v1178
      %1540 = vmatpush.msra.mxu0 %v1174
      %1541 = vmatpush.msra.mxu0 %v1170
      %1542 = vmatpush.msra.mxu0 %v1166
      %1543 = vmatpush.msra.mxu0 %v1162
      %1544 = vmatpush.msra.mxu0 %v1158
      %1545 = vmatmul.f32.gmra.mxu0 %v1138
      %v1546 = vpop.f32.mrf.mxu0
      %v1547 = vadd.f32 0.0, %v1546
      %1548 = vmatmul.f32.gmra.mxu0 %v1140
      %v1549 = vpop.f32.mrf.mxu0
      %v1550 = vadd.f32 0.0, %v1549
      %1551 = vmatmul.f32.gmra.mxu0 %v1142
      %v1552 = vpop.f32.mrf.mxu0
      %v1553 = vadd.f32 0.0, %v1552
      %1554 = vmatmul.f32.gmra.mxu0 %v1144
      %v1555 = vpop.f32.mrf.mxu0
      %v1556 = vadd.f32 0.0, %v1555
      %1557 = vmatmul.f32.gmra.mxu0 %v1146
      %v1558 = vpop.f32.mrf.mxu0
      %v1559 = vadd.f32 0.0, %v1558
      %1560 = vmatmul.f32.gmra.mxu0 %v1148
      %v1561 = vpop.f32.mrf.mxu0
      %v1562 = vadd.f32 0.0, %v1561
      %1563 = vmatmul.f32.gmra.mxu0 %v1150
      %v1564 = vpop.f32.mrf.mxu0
      %v1565 = vadd.f32 0.0, %v1564
      %1566 = vmatmul.f32.gmra.mxu0 %v1152
      %v1567 = vpop.f32.mrf.mxu0
      %v1568 = vadd.f32 0.0, %v1567
      %1569 = vdwg.mxu0
      %1570 = vmatpush.msra.mxu0 %v1282
      %1571 = vmatpush.msra.mxu0 %v1278
      %1572 = vmatpush.msra.mxu0 %v1274
      %1573 = vmatpush.msra.mxu0 %v1270
      %1574 = vmatpush.msra.mxu0 %v1266
      %1575 = vmatpush.msra.mxu0 %v1262
      %1576 = vmatpush.msra.mxu0 %v1258
      %1577 = vmatpush.msra.mxu0 %v1254
      %1578 = vmatpush.msra.mxu0 %v1250
      %1579 = vmatpush.msra.mxu0 %v1246
      %1580 = vmatpush.msra.mxu0 %v1242
      %1581 = vmatpush.msra.mxu0 %v1238
      %1582 = vmatpush.msra.mxu0 %v1234
      %1583 = vmatpush.msra.mxu0 %v1230
      %1584 = vmatpush.msra.mxu0 %v1226
      %1585 = vmatpush.msra.mxu0 %v1222
      %1586 = vmatmul.f32.gmra.mxu0 %v1139
      %v1587 = vpop.f32.mrf.mxu0
      %v1588 = vadd.f32 %v1547, %v1587
      %1589 = vmatmul.f32.gmra.mxu0 %v1141
      %v1590 = vpop.f32.mrf.mxu0
      %v1591 = vadd.f32 %v1550, %v1590
      %1592 = vmatmul.f32.gmra.mxu0 %v1143
      %v1593 = vpop.f32.mrf.mxu0
      %v1594 = vadd.f32 %v1553, %v1593
      %1595 = vmatmul.f32.gmra.mxu0 %v1145
      %v1596 = vpop.f32.mrf.mxu0
      %v1597 = vadd.f32 %v1556, %v1596
      %1598 = vmatmul.f32.gmra.mxu0 %v1147
      %v1599 = vpop.f32.mrf.mxu0
      %v1600 = vadd.f32 %v1559, %v1599
      %1601 = vmatmul.f32.gmra.mxu0 %v1149
      %v1602 = vpop.f32.mrf.mxu0
      %v1603 = vadd.f32 %v1562, %v1602
      %1604 = vmatmul.f32.gmra.mxu0 %v1151
      %v1605 = vpop.f32.mrf.mxu0
      %v1606 = vadd.f32 %v1565, %v1605
      %1607 = vmatmul.f32.gmra.mxu0 %v1153
      %v1608 = vpop.f32.mrf.mxu0
      %v1609 = vadd.f32 %v1568, %v1608
      %1610 = vdwg.mxu0
      %1611 = vmatpush.msra.mxu0 %v1006
      %1612 = vmatpush.msra.mxu0 %v1002
      %1613 = vmatpush.msra.mxu0 %v998
      %1614 = vmatpush.msra.mxu0 %v994
      %1615 = vmatpush.msra.mxu0 %v990
      %1616 = vmatpush.msra.mxu0 %v986
      %1617 = vmatpush.msra.mxu0 %v982
      %1618 = vmatpush.msra.mxu0 %v978
      %1619 = vmatpush.msra.mxu0 %v974
      %1620 = vmatpush.msra.mxu0 %v970
      %1621 = vmatpush.msra.mxu0 %v966
      %1622 = vmatpush.msra.mxu0 %v962
      %1623 = vmatpush.msra.mxu0 %v958
      %1624 = vmatpush.msra.mxu0 %v954
      %1625 = vmatpush.msra.mxu0 %v950
      %1626 = vmatpush.msra.mxu0 %v946
      %1627 = vmatmul.f32.gmra.mxu0 %v930
      %v1628 = vpop.f32.mrf.mxu0
      %v1629 = vadd.f32 %v1342, %v1628
      %1630 = vmatmul.f32.gmra.mxu0 %v932
      %v1631 = vpop.f32.mrf.mxu0
      %v1632 = vadd.f32 %v1345, %v1631
      %1633 = vmatmul.f32.gmra.mxu0 %v934
      %v1634 = vpop.f32.mrf.mxu0
      %v1635 = vadd.f32 %v1348, %v1634
      %1636 = vmatmul.f32.gmra.mxu0 %v936
      %v1637 = vpop.f32.mrf.mxu0
      %v1638 = vadd.f32 %v1351, %v1637
      %1639 = vmatmul.f32.gmra.mxu0 %v938
      %v1640 = vpop.f32.mrf.mxu0
      %v1641 = vadd.f32 %v1354, %v1640
      %1642 = vmatmul.f32.gmra.mxu0 %v940
      %v1643 = vpop.f32.mrf.mxu0
      %v1644 = vadd.f32 %v1357, %v1643
      %1645 = vmatmul.f32.gmra.mxu0 %v942
      %v1646 = vpop.f32.mrf.mxu0
      %v1647 = vadd.f32 %v1360, %v1646
      %1648 = vmatmul.f32.gmra.mxu0 %v944
      %v1649 = vpop.f32.mrf.mxu0
      %v1650 = vadd.f32 %v1363, %v1649
      %1651 = vdwg.mxu0
      %1652 = vmatpush.msra.mxu0 %v1070
      %1653 = vmatpush.msra.mxu0 %v1066
      %1654 = vmatpush.msra.mxu0 %v1062
      %1655 = vmatpush.msra.mxu0 %v1058
      %1656 = vmatpush.msra.mxu0 %v1054
      %1657 = vmatpush.msra.mxu0 %v1050
      %1658 = vmatpush.msra.mxu0 %v1046
      %1659 = vmatpush.msra.mxu0 %v1042
      %1660 = vmatpush.msra.mxu0 %v1038
      %1661 = vmatpush.msra.mxu0 %v1034
      %1662 = vmatpush.msra.mxu0 %v1030
      %1663 = vmatpush.msra.mxu0 %v1026
      %1664 = vmatpush.msra.mxu0 %v1022
      %1665 = vmatpush.msra.mxu0 %v1018
      %1666 = vmatpush.msra.mxu0 %v1014
      %1667 = vmatpush.msra.mxu0 %v1010
      %1668 = vmatmul.f32.gmra.mxu0 %v931
      %v1669 = vpop.f32.mrf.mxu0
      %v1670 = vadd.f32 %v1629, %v1669
      %1671 = vmatmul.f32.gmra.mxu0 %v933
      %v1672 = vpop.f32.mrf.mxu0
      %v1673 = vadd.f32 %v1632, %v1672
      %1674 = vmatmul.f32.gmra.mxu0 %v935
      %v1675 = vpop.f32.mrf.mxu0
      %v1676 = vadd.f32 %v1635, %v1675
      %1677 = vmatmul.f32.gmra.mxu0 %v937
      %v1678 = vpop.f32.mrf.mxu0
      %v1679 = vadd.f32 %v1638, %v1678
      %1680 = vmatmul.f32.gmra.mxu0 %v939
      %v1681 = vpop.f32.mrf.mxu0
      %v1682 = vadd.f32 %v1641, %v1681
      %1683 = vmatmul.f32.gmra.mxu0 %v941
      %v1684 = vpop.f32.mrf.mxu0
      %v1685 = vadd.f32 %v1644, %v1684
      %1686 = vmatmul.f32.gmra.mxu0 %v943
      %v1687 = vpop.f32.mrf.mxu0
      %v1688 = vadd.f32 %v1647, %v1687
      %1689 = vmatmul.f32.gmra.mxu0 %v945
      %v1690 = vpop.f32.mrf.mxu0
      %v1691 = vadd.f32 %v1650, %v1690
      %1692 = vdwg.mxu0
      %1693 = vmatpush.msra.mxu0 %v1007
      %1694 = vmatpush.msra.mxu0 %v1003
      %1695 = vmatpush.msra.mxu0 %v999
      %1696 = vmatpush.msra.mxu0 %v995
      %1697 = vmatpush.msra.mxu0 %v991
      %1698 = vmatpush.msra.mxu0 %v987
      %1699 = vmatpush.msra.mxu0 %v983
      %1700 = vmatpush.msra.mxu0 %v979
      %1701 = vmatpush.msra.mxu0 %v975
      %1702 = vmatpush.msra.mxu0 %v971
      %1703 = vmatpush.msra.mxu0 %v967
      %1704 = vmatpush.msra.mxu0 %v963
      %1705 = vmatpush.msra.mxu0 %v959
      %1706 = vmatpush.msra.mxu0 %v955
      %1707 = vmatpush.msra.mxu0 %v951
      %1708 = vmatpush.msra.mxu0 %v947
      %1709 = vmatmul.f32.gmra.mxu0 %v930
      %v1710 = vpop.f32.mrf.mxu0
      %v1711 = vadd.f32 %v1424, %v1710
      %1712 = vmatmul.f32.gmra.mxu0 %v932
      %v1713 = vpop.f32.mrf.mxu0
      %v1714 = vadd.f32 %v1427, %v1713
      %1715 = vmatmul.f32.gmra.mxu0 %v934
      %v1716 = vpop.f32.mrf.mxu0
      %v1717 = vadd.f32 %v1430, %v1716
      %1718 = vmatmul.f32.gmra.mxu0 %v936
      %v1719 = vpop.f32.mrf.mxu0
      %v1720 = vadd.f32 %v1433, %v1719
      %1721 = vmatmul.f32.gmra.mxu0 %v938
      %v1722 = vpop.f32.mrf.mxu0
      %v1723 = vadd.f32 %v1436, %v1722
      %1724 = vmatmul.f32.gmra.mxu0 %v940
      %v1725 = vpop.f32.mrf.mxu0
      %v1726 = vadd.f32 %v1439, %v1725
      %1727 = vmatmul.f32.gmra.mxu0 %v942
      %v1728 = vpop.f32.mrf.mxu0
      %v1729 = vadd.f32 %v1442, %v1728
      %1730 = vmatmul.f32.gmra.mxu0 %v944
      %v1731 = vpop.f32.mrf.mxu0
      %v1732 = vadd.f32 %v1445, %v1731
      %1733 = vdwg.mxu0
      %1734 = vmatpush.msra.mxu0 %v1071
      %1735 = vmatpush.msra.mxu0 %v1067
      %1736 = vmatpush.msra.mxu0 %v1063
      %1737 = vmatpush.msra.mxu0 %v1059
      %1738 = vmatpush.msra.mxu0 %v1055
      %1739 = vmatpush.msra.mxu0 %v1051
      %1740 = vmatpush.msra.mxu0 %v1047
      %1741 = vmatpush.msra.mxu0 %v1043
      %1742 = vmatpush.msra.mxu0 %v1039
      %1743 = vmatpush.msra.mxu0 %v1035
      %1744 = vmatpush.msra.mxu0 %v1031
      %1745 = vmatpush.msra.mxu0 %v1027
      %1746 = vmatpush.msra.mxu0 %v1023
      %1747 = vmatpush.msra.mxu0 %v1019
      %1748 = vmatpush.msra.mxu0 %v1015
      %1749 = vmatpush.msra.mxu0 %v1011
      %1750 = vmatmul.f32.gmra.mxu0 %v931
      %v1751 = vpop.f32.mrf.mxu0
      %v1752 = vadd.f32 %v1711, %v1751
      %1753 = vmatmul.f32.gmra.mxu0 %v933
      %v1754 = vpop.f32.mrf.mxu0
      %v1755 = vadd.f32 %v1714, %v1754
      %1756 = vmatmul.f32.gmra.mxu0 %v935
      %v1757 = vpop.f32.mrf.mxu0
      %v1758 = vadd.f32 %v1717, %v1757
      %1759 = vmatmul.f32.gmra.mxu0 %v937
      %v1760 = vpop.f32.mrf.mxu0
      %v1761 = vadd.f32 %v1720, %v1760
      %1762 = vmatmul.f32.gmra.mxu0 %v939
      %v1763 = vpop.f32.mrf.mxu0
      %v1764 = vadd.f32 %v1723, %v1763
      %1765 = vmatmul.f32.gmra.mxu0 %v941
      %v1766 = vpop.f32.mrf.mxu0
      %v1767 = vadd.f32 %v1726, %v1766
      %1768 = vmatmul.f32.gmra.mxu0 %v943
      %v1769 = vpop.f32.mrf.mxu0
      %v1770 = vadd.f32 %v1729, %v1769
      %1771 = vmatmul.f32.gmra.mxu0 %v945
      %v1772 = vpop.f32.mrf.mxu0
      %v1773 = vadd.f32 %v1732, %v1772
      %1774 = vdwg.mxu0
      %1775 = vmatpush.msra.mxu0 %v1008
      %1776 = vmatpush.msra.mxu0 %v1004
      %1777 = vmatpush.msra.mxu0 %v1000
      %1778 = vmatpush.msra.mxu0 %v996
      %1779 = vmatpush.msra.mxu0 %v992
      %1780 = vmatpush.msra.mxu0 %v988
      %1781 = vmatpush.msra.mxu0 %v984
      %1782 = vmatpush.msra.mxu0 %v980
      %1783 = vmatpush.msra.mxu0 %v976
      %1784 = vmatpush.msra.mxu0 %v972
      %1785 = vmatpush.msra.mxu0 %v968
      %1786 = vmatpush.msra.mxu0 %v964
      %1787 = vmatpush.msra.mxu0 %v960
      %1788 = vmatpush.msra.mxu0 %v956
      %1789 = vmatpush.msra.mxu0 %v952
      %1790 = vmatpush.msra.mxu0 %v948
      %1791 = vmatmul.f32.gmra.mxu0 %v930
      %v1792 = vpop.f32.mrf.mxu0
      %v1793 = vadd.f32 %v1506, %v1792
      %1794 = vmatmul.f32.gmra.mxu0 %v932
      %v1795 = vpop.f32.mrf.mxu0
      %v1796 = vadd.f32 %v1509, %v1795
      %1797 = vmatmul.f32.gmra.mxu0 %v934
      %v1798 = vpop.f32.mrf.mxu0
      %v1799 = vadd.f32 %v1512, %v1798
      %1800 = vmatmul.f32.gmra.mxu0 %v936
      %v1801 = vpop.f32.mrf.mxu0
      %v1802 = vadd.f32 %v1515, %v1801
      %1803 = vmatmul.f32.gmra.mxu0 %v938
      %v1804 = vpop.f32.mrf.mxu0
      %v1805 = vadd.f32 %v1518, %v1804
      %1806 = vmatmul.f32.gmra.mxu0 %v940
      %v1807 = vpop.f32.mrf.mxu0
      %v1808 = vadd.f32 %v1521, %v1807
      %1809 = vmatmul.f32.gmra.mxu0 %v942
      %v1810 = vpop.f32.mrf.mxu0
      %v1811 = vadd.f32 %v1524, %v1810
      %1812 = vmatmul.f32.gmra.mxu0 %v944
      %v1813 = vpop.f32.mrf.mxu0
      %v1814 = vadd.f32 %v1527, %v1813
      %1815 = vdwg.mxu0
      %1816 = vmatpush.msra.mxu0 %v1072
      %1817 = vmatpush.msra.mxu0 %v1068
      %1818 = vmatpush.msra.mxu0 %v1064
      %1819 = vmatpush.msra.mxu0 %v1060
      %1820 = vmatpush.msra.mxu0 %v1056
      %1821 = vmatpush.msra.mxu0 %v1052
      %1822 = vmatpush.msra.mxu0 %v1048
      %1823 = vmatpush.msra.mxu0 %v1044
      %1824 = vmatpush.msra.mxu0 %v1040
      %1825 = vmatpush.msra.mxu0 %v1036
      %1826 = vmatpush.msra.mxu0 %v1032
      %1827 = vmatpush.msra.mxu0 %v1028
      %1828 = vmatpush.msra.mxu0 %v1024
      %1829 = vmatpush.msra.mxu0 %v1020
      %1830 = vmatpush.msra.mxu0 %v1016
      %1831 = vmatpush.msra.mxu0 %v1012
      %1832 = vmatmul.f32.gmra.mxu0 %v931
      %v1833 = vpop.f32.mrf.mxu0
      %v1834 = vadd.f32 %v1793, %v1833
      %1835 = vmatmul.f32.gmra.mxu0 %v933
      %v1836 = vpop.f32.mrf.mxu0
      %v1837 = vadd.f32 %v1796, %v1836
      %1838 = vmatmul.f32.gmra.mxu0 %v935
      %v1839 = vpop.f32.mrf.mxu0
      %v1840 = vadd.f32 %v1799, %v1839
      %1841 = vmatmul.f32.gmra.mxu0 %v937
      %v1842 = vpop.f32.mrf.mxu0
      %v1843 = vadd.f32 %v1802, %v1842
      %1844 = vmatmul.f32.gmra.mxu0 %v939
      %v1845 = vpop.f32.mrf.mxu0
      %v1846 = vadd.f32 %v1805, %v1845
      %1847 = vmatmul.f32.gmra.mxu0 %v941
      %v1848 = vpop.f32.mrf.mxu0
      %v1849 = vadd.f32 %v1808, %v1848
      %1850 = vmatmul.f32.gmra.mxu0 %v943
      %v1851 = vpop.f32.mrf.mxu0
      %v1852 = vadd.f32 %v1811, %v1851
      %1853 = vmatmul.f32.gmra.mxu0 %v945
      %v1854 = vpop.f32.mrf.mxu0
      %v1855 = vadd.f32 %v1814, %v1854
      %1856 = vdwg.mxu0
      %1857 = vmatpush.msra.mxu0 %v1009
      %1858 = vmatpush.msra.mxu0 %v1005
      %1859 = vmatpush.msra.mxu0 %v1001
      %1860 = vmatpush.msra.mxu0 %v997
      %1861 = vmatpush.msra.mxu0 %v993
      %1862 = vmatpush.msra.mxu0 %v989
      %1863 = vmatpush.msra.mxu0 %v985
      %1864 = vmatpush.msra.mxu0 %v981
      %1865 = vmatpush.msra.mxu0 %v977
      %1866 = vmatpush.msra.mxu0 %v973
      %1867 = vmatpush.msra.mxu0 %v969
      %1868 = vmatpush.msra.mxu0 %v965
      %1869 = vmatpush.msra.mxu0 %v961
      %1870 = vmatpush.msra.mxu0 %v957
      %1871 = vmatpush.msra.mxu0 %v953
      %1872 = vmatpush.msra.mxu0 %v949
      %1873 = vmatmul.f32.gmra.mxu0 %v930
      %v1874 = vpop.f32.mrf.mxu0
      %v1875 = vadd.f32 %v1588, %v1874
      %1876 = vmatmul.f32.gmra.mxu0 %v932
      %v1877 = vpop.f32.mrf.mxu0
      %v1878 = vadd.f32 %v1591, %v1877
      %1879 = vmatmul.f32.gmra.mxu0 %v934
      %v1880 = vpop.f32.mrf.mxu0
      %v1881 = vadd.f32 %v1594, %v1880
      %1882 = vmatmul.f32.gmra.mxu0 %v936
      %v1883 = vpop.f32.mrf.mxu0
      %v1884 = vadd.f32 %v1597, %v1883
      %1885 = vmatmul.f32.gmra.mxu0 %v938
      %v1886 = vpop.f32.mrf.mxu0
      %v1887 = vadd.f32 %v1600, %v1886
      %1888 = vmatmul.f32.gmra.mxu0 %v940
      %v1889 = vpop.f32.mrf.mxu0
      %v1890 = vadd.f32 %v1603, %v1889
      %1891 = vmatmul.f32.gmra.mxu0 %v942
      %v1892 = vpop.f32.mrf.mxu0
      %v1893 = vadd.f32 %v1606, %v1892
      %1894 = vmatmul.f32.gmra.mxu0 %v944
      %v1895 = vpop.f32.mrf.mxu0
      %v1896 = vadd.f32 %v1609, %v1895
      %1897 = vdwg.mxu0
      %1898 = vmatpush.msra.mxu0 %v1073
      %1899 = vmatpush.msra.mxu0 %v1069
      %1900 = vmatpush.msra.mxu0 %v1065
      %1901 = vmatpush.msra.mxu0 %v1061
      %1902 = vmatpush.msra.mxu0 %v1057
      %1903 = vmatpush.msra.mxu0 %v1053
      %1904 = vmatpush.msra.mxu0 %v1049
      %1905 = vmatpush.msra.mxu0 %v1045
      %1906 = vmatpush.msra.mxu0 %v1041
      %1907 = vmatpush.msra.mxu0 %v1037
      %1908 = vmatpush.msra.mxu0 %v1033
      %1909 = vmatpush.msra.mxu0 %v1029
      %1910 = vmatpush.msra.mxu0 %v1025
      %1911 = vmatpush.msra.mxu0 %v1021
      %1912 = vmatpush.msra.mxu0 %v1017
      %1913 = vmatpush.msra.mxu0 %v1013
      %1914 = vmatmul.f32.gmra.mxu0 %v931
      %v1915 = vpop.f32.mrf.mxu0
      %v1916 = vadd.f32 %v1875, %v1915
      %1917 = vmatmul.f32.gmra.mxu0 %v933
      %v1918 = vpop.f32.mrf.mxu0
      %v1919 = vadd.f32 %v1878, %v1918
      %1920 = vmatmul.f32.gmra.mxu0 %v935
      %v1921 = vpop.f32.mrf.mxu0
      %v1922 = vadd.f32 %v1881, %v1921
      %1923 = vmatmul.f32.gmra.mxu0 %v937
      %v1924 = vpop.f32.mrf.mxu0
      %v1925 = vadd.f32 %v1884, %v1924
      %1926 = vmatmul.f32.gmra.mxu0 %v939
      %v1927 = vpop.f32.mrf.mxu0
      %v1928 = vadd.f32 %v1887, %v1927
      %1929 = vmatmul.f32.gmra.mxu0 %v941
      %v1930 = vpop.f32.mrf.mxu0
      %v1931 = vadd.f32 %v1890, %v1930
      %1932 = vmatmul.f32.gmra.mxu0 %v943
      %v1933 = vpop.f32.mrf.mxu0
      %v1934 = vadd.f32 %v1893, %v1933
      %1935 = vmatmul.f32.gmra.mxu0 %v945
      %v1936 = vpop.f32.mrf.mxu0
      %v1937 = vadd.f32 %v1896, %v1936
      %1938 = vdwg.mxu0
      %s1939 = scalar_lea.vmem %s3, 2048
      %v1940 = vld [vmem:[%s1939] sm:$0xff]
      %v1941 = vld [vmem:[%s1939 + $0x8] sm:$0xff]
      %v1942 = vld [vmem:[%s1939 + $0x10] sm:$0xff]
      %v1943 = vld [vmem:[%s1939 + $0x18] sm:$0xff]
      %v1944 = vld [vmem:[%s1939 + $0x20] sm:$0xff]
      %v1945 = vld [vmem:[%s1939 + $0x28] sm:$0xff]
      %v1946 = vld [vmem:[%s1939 + $0x30] sm:$0xff]
      %v1947 = vld [vmem:[%s1939 + $0x38] sm:$0xff]
      %v1948 = vld [vmem:[%s1939 + $0x40] sm:$0xff]
      %v1949 = vld [vmem:[%s1939 + $0x48] sm:$0xff]
      %v1950 = vld [vmem:[%s1939 + $0x50] sm:$0xff]
      %v1951 = vld [vmem:[%s1939 + $0x58] sm:$0xff]
      %v1952 = vld [vmem:[%s1939 + $0x60] sm:$0xff]
      %v1953 = vld [vmem:[%s1939 + $0x68] sm:$0xff]
      %v1954 = vld [vmem:[%s1939 + $0x70] sm:$0xff]
      %v1955 = vld [vmem:[%s1939 + $0x78] sm:$0xff]
      %v1956 = vld [vmem:[%s1939 + $0x80] sm:$0xff]
      %v1957 = vld [vmem:[%s1939 + $0x88] sm:$0xff]
      %v1958 = vld [vmem:[%s1939 + $0x90] sm:$0xff]
      %v1959 = vld [vmem:[%s1939 + $0x98] sm:$0xff]
      %v1960 = vld [vmem:[%s1939 + $0xa0] sm:$0xff]
      %v1961 = vld [vmem:[%s1939 + $0xa8] sm:$0xff]
      %v1962 = vld [vmem:[%s1939 + $0xb0] sm:$0xff]
      %v1963 = vld [vmem:[%s1939 + $0xb8] sm:$0xff]
      %v1964 = vld [vmem:[%s1939 + $0xc0] sm:$0xff]
      %v1965 = vld [vmem:[%s1939 + $0xc8] sm:$0xff]
      %v1966 = vld [vmem:[%s1939 + $0xd0] sm:$0xff]
      %v1967 = vld [vmem:[%s1939 + $0xd8] sm:$0xff]
      %v1968 = vld [vmem:[%s1939 + $0xe0] sm:$0xff]
      %v1969 = vld [vmem:[%s1939 + $0xe8] sm:$0xff]
      %v1970 = vld [vmem:[%s1939 + $0xf0] sm:$0xff]
      %v1971 = vld [vmem:[%s1939 + $0xf8] sm:$0xff]
      %v1972 = vld [vmem:[%s1939 + $0x100] sm:$0xff]
      %v1973 = vld [vmem:[%s1939 + $0x108] sm:$0xff]
      %v1974 = vld [vmem:[%s1939 + $0x110] sm:$0xff]
      %v1975 = vld [vmem:[%s1939 + $0x118] sm:$0xff]
      %v1976 = vld [vmem:[%s1939 + $0x120] sm:$0xff]
      %v1977 = vld [vmem:[%s1939 + $0x128] sm:$0xff]
      %v1978 = vld [vmem:[%s1939 + $0x130] sm:$0xff]
      %v1979 = vld [vmem:[%s1939 + $0x138] sm:$0xff]
      %v1980 = vld [vmem:[%s1939 + $0x140] sm:$0xff]
      %v1981 = vld [vmem:[%s1939 + $0x148] sm:$0xff]
      %v1982 = vld [vmem:[%s1939 + $0x150] sm:$0xff]
      %v1983 = vld [vmem:[%s1939 + $0x158] sm:$0xff]
      %v1984 = vld [vmem:[%s1939 + $0x160] sm:$0xff]
      %v1985 = vld [vmem:[%s1939 + $0x168] sm:$0xff]
      %v1986 = vld [vmem:[%s1939 + $0x170] sm:$0xff]
      %v1987 = vld [vmem:[%s1939 + $0x178] sm:$0xff]
      %v1988 = vld [vmem:[%s1939 + $0x180] sm:$0xff]
      %v1989 = vld [vmem:[%s1939 + $0x188] sm:$0xff]
      %v1990 = vld [vmem:[%s1939 + $0x190] sm:$0xff]
      %v1991 = vld [vmem:[%s1939 + $0x198] sm:$0xff]
      %v1992 = vld [vmem:[%s1939 + $0x1a0] sm:$0xff]
      %v1993 = vld [vmem:[%s1939 + $0x1a8] sm:$0xff]
      %v1994 = vld [vmem:[%s1939 + $0x1b0] sm:$0xff]
      %v1995 = vld [vmem:[%s1939 + $0x1b8] sm:$0xff]
      %v1996 = vld [vmem:[%s1939 + $0x1c0] sm:$0xff]
      %v1997 = vld [vmem:[%s1939 + $0x1c8] sm:$0xff]
      %v1998 = vld [vmem:[%s1939 + $0x1d0] sm:$0xff]
      %v1999 = vld [vmem:[%s1939 + $0x1d8] sm:$0xff]
      %v2000 = vld [vmem:[%s1939 + $0x1e0] sm:$0xff]
      %v2001 = vld [vmem:[%s1939 + $0x1e8] sm:$0xff]
      %v2002 = vld [vmem:[%s1939 + $0x1f0] sm:$0xff]
      %v2003 = vld [vmem:[%s1939 + $0x1f8] sm:$0xff]
      %v2004 = vld [vmem:[%s1939 + $0x200] sm:$0xff]
      %v2005 = vld [vmem:[%s1939 + $0x208] sm:$0xff]
      %v2006 = vld [vmem:[%s1939 + $0x210] sm:$0xff]
      %v2007 = vld [vmem:[%s1939 + $0x218] sm:$0xff]
      %v2008 = vld [vmem:[%s1939 + $0x220] sm:$0xff]
      %v2009 = vld [vmem:[%s1939 + $0x228] sm:$0xff]
      %v2010 = vld [vmem:[%s1939 + $0x230] sm:$0xff]
      %v2011 = vld [vmem:[%s1939 + $0x238] sm:$0xff]
      %v2012 = vld [vmem:[%s1939 + $0x240] sm:$0xff]
      %v2013 = vld [vmem:[%s1939 + $0x248] sm:$0xff]
      %v2014 = vld [vmem:[%s1939 + $0x250] sm:$0xff]
      %v2015 = vld [vmem:[%s1939 + $0x258] sm:$0xff]
      %v2016 = vld [vmem:[%s1939 + $0x260] sm:$0xff]
      %v2017 = vld [vmem:[%s1939 + $0x268] sm:$0xff]
      %v2018 = vld [vmem:[%s1939 + $0x270] sm:$0xff]
      %v2019 = vld [vmem:[%s1939 + $0x278] sm:$0xff]
      %v2020 = vld [vmem:[%s1939 + $0x280] sm:$0xff]
      %v2021 = vld [vmem:[%s1939 + $0x288] sm:$0xff]
      %v2022 = vld [vmem:[%s1939 + $0x290] sm:$0xff]
      %v2023 = vld [vmem:[%s1939 + $0x298] sm:$0xff]
      %v2024 = vld [vmem:[%s1939 + $0x2a0] sm:$0xff]
      %v2025 = vld [vmem:[%s1939 + $0x2a8] sm:$0xff]
      %v2026 = vld [vmem:[%s1939 + $0x2b0] sm:$0xff]
      %v2027 = vld [vmem:[%s1939 + $0x2b8] sm:$0xff]
      %v2028 = vld [vmem:[%s1939 + $0x2c0] sm:$0xff]
      %v2029 = vld [vmem:[%s1939 + $0x2c8] sm:$0xff]
      %v2030 = vld [vmem:[%s1939 + $0x2d0] sm:$0xff]
      %v2031 = vld [vmem:[%s1939 + $0x2d8] sm:$0xff]
      %v2032 = vld [vmem:[%s1939 + $0x2e0] sm:$0xff]
      %v2033 = vld [vmem:[%s1939 + $0x2e8] sm:$0xff]
      %v2034 = vld [vmem:[%s1939 + $0x2f0] sm:$0xff]
      %v2035 = vld [vmem:[%s1939 + $0x2f8] sm:$0xff]
      %v2036 = vld [vmem:[%s1939 + $0x300] sm:$0xff]
      %v2037 = vld [vmem:[%s1939 + $0x308] sm:$0xff]
      %v2038 = vld [vmem:[%s1939 + $0x310] sm:$0xff]
      %v2039 = vld [vmem:[%s1939 + $0x318] sm:$0xff]
      %v2040 = vld [vmem:[%s1939 + $0x320] sm:$0xff]
      %v2041 = vld [vmem:[%s1939 + $0x328] sm:$0xff]
      %v2042 = vld [vmem:[%s1939 + $0x330] sm:$0xff]
      %v2043 = vld [vmem:[%s1939 + $0x338] sm:$0xff]
      %v2044 = vld [vmem:[%s1939 + $0x340] sm:$0xff]
      %v2045 = vld [vmem:[%s1939 + $0x348] sm:$0xff]
      %v2046 = vld [vmem:[%s1939 + $0x350] sm:$0xff]
      %v2047 = vld [vmem:[%s1939 + $0x358] sm:$0xff]
      %v2048 = vld [vmem:[%s1939 + $0x360] sm:$0xff]
      %v2049 = vld [vmem:[%s1939 + $0x368] sm:$0xff]
      %v2050 = vld [vmem:[%s1939 + $0x370] sm:$0xff]
      %v2051 = vld [vmem:[%s1939 + $0x378] sm:$0xff]
      %v2052 = vld [vmem:[%s1939 + $0x380] sm:$0xff]
      %v2053 = vld [vmem:[%s1939 + $0x388] sm:$0xff]
      %v2054 = vld [vmem:[%s1939 + $0x390] sm:$0xff]
      %v2055 = vld [vmem:[%s1939 + $0x398] sm:$0xff]
      %v2056 = vld [vmem:[%s1939 + $0x3a0] sm:$0xff]
      %v2057 = vld [vmem:[%s1939 + $0x3a8] sm:$0xff]
      %v2058 = vld [vmem:[%s1939 + $0x3b0] sm:$0xff]
      %v2059 = vld [vmem:[%s1939 + $0x3b8] sm:$0xff]
      %v2060 = vld [vmem:[%s1939 + $0x3c0] sm:$0xff]
      %v2061 = vld [vmem:[%s1939 + $0x3c8] sm:$0xff]
      %v2062 = vld [vmem:[%s1939 + $0x3d0] sm:$0xff]
      %v2063 = vld [vmem:[%s1939 + $0x3d8] sm:$0xff]
      %v2064 = vld [vmem:[%s1939 + $0x3e0] sm:$0xff]
      %v2065 = vld [vmem:[%s1939 + $0x3e8] sm:$0xff]
      %v2066 = vld [vmem:[%s1939 + $0x3f0] sm:$0xff]
      %v2067 = vld [vmem:[%s1939 + $0x3f8] sm:$0xff]
      %2068 = vmatpush.msra.mxu0 %v2000
      %2069 = vmatpush.msra.mxu0 %v1996
      %2070 = vmatpush.msra.mxu0 %v1992
      %2071 = vmatpush.msra.mxu0 %v1988
      %2072 = vmatpush.msra.mxu0 %v1984
      %2073 = vmatpush.msra.mxu0 %v1980
      %2074 = vmatpush.msra.mxu0 %v1976
      %2075 = vmatpush.msra.mxu0 %v1972
      %2076 = vmatpush.msra.mxu0 %v1968
      %2077 = vmatpush.msra.mxu0 %v1964
      %2078 = vmatpush.msra.mxu0 %v1960
      %2079 = vmatpush.msra.mxu0 %v1956
      %2080 = vmatpush.msra.mxu0 %v1952
      %2081 = vmatpush.msra.mxu0 %v1948
      %2082 = vmatpush.msra.mxu0 %v1944
      %2083 = vmatpush.msra.mxu0 %v1940
      %2084 = vmatmul.f32.gmra.mxu0 %v932
      %v2085 = vpop.f32.mrf.mxu0
      %v2086 = vadd.f32 0.0, %v2085
      %2087 = vmatmul.f32.gmra.mxu0 %v934
      %v2088 = vpop.f32.mrf.mxu0
      %v2089 = vadd.f32 0.0, %v2088
      %2090 = vmatmul.f32.gmra.mxu0 %v936
      %v2091 = vpop.f32.mrf.mxu0
      %v2092 = vadd.f32 0.0, %v2091
      %2093 = vmatmul.f32.gmra.mxu0 %v938
      %v2094 = vpop.f32.mrf.mxu0
      %v2095 = vadd.f32 0.0, %v2094
      %2096 = vmatmul.f32.gmra.mxu0 %v940
      %v2097 = vpop.f32.mrf.mxu0
      %v2098 = vadd.f32 0.0, %v2097
      %2099 = vmatmul.f32.gmra.mxu0 %v942
      %v2100 = vpop.f32.mrf.mxu0
      %v2101 = vadd.f32 0.0, %v2100
      %2102 = vmatmul.f32.gmra.mxu0 %v944
      %v2103 = vpop.f32.mrf.mxu0
      %v2104 = vadd.f32 0.0, %v2103
      %2105 = vmatmul.f32.gmra.mxu0 0.0
      %v2106 = vpop.f32.mrf.mxu0
      %v2107 = vadd.f32 0.0, %v2106
      %2108 = vdwg.mxu0
      %2109 = vmatpush.msra.mxu0 %v2064
      %2110 = vmatpush.msra.mxu0 %v2060
      %2111 = vmatpush.msra.mxu0 %v2056
      %2112 = vmatpush.msra.mxu0 %v2052
      %2113 = vmatpush.msra.mxu0 %v2048
      %2114 = vmatpush.msra.mxu0 %v2044
      %2115 = vmatpush.msra.mxu0 %v2040
      %2116 = vmatpush.msra.mxu0 %v2036
      %2117 = vmatpush.msra.mxu0 %v2032
      %2118 = vmatpush.msra.mxu0 %v2028
      %2119 = vmatpush.msra.mxu0 %v2024
      %2120 = vmatpush.msra.mxu0 %v2020
      %2121 = vmatpush.msra.mxu0 %v2016
      %2122 = vmatpush.msra.mxu0 %v2012
      %2123 = vmatpush.msra.mxu0 %v2008
      %2124 = vmatpush.msra.mxu0 %v2004
      %2125 = vmatmul.f32.gmra.mxu0 %v933
      %v2126 = vpop.f32.mrf.mxu0
      %v2127 = vadd.f32 %v2086, %v2126
      %2128 = vmatmul.f32.gmra.mxu0 %v935
      %v2129 = vpop.f32.mrf.mxu0
      %v2130 = vadd.f32 %v2089, %v2129
      %2131 = vmatmul.f32.gmra.mxu0 %v937
      %v2132 = vpop.f32.mrf.mxu0
      %v2133 = vadd.f32 %v2092, %v2132
      %2134 = vmatmul.f32.gmra.mxu0 %v939
      %v2135 = vpop.f32.mrf.mxu0
      %v2136 = vadd.f32 %v2095, %v2135
      %2137 = vmatmul.f32.gmra.mxu0 %v941
      %v2138 = vpop.f32.mrf.mxu0
      %v2139 = vadd.f32 %v2098, %v2138
      %2140 = vmatmul.f32.gmra.mxu0 %v943
      %v2141 = vpop.f32.mrf.mxu0
      %v2142 = vadd.f32 %v2101, %v2141
      %2143 = vmatmul.f32.gmra.mxu0 %v945
      %v2144 = vpop.f32.mrf.mxu0
      %v2145 = vadd.f32 %v2104, %v2144
      %2146 = vmatmul.f32.gmra.mxu0 0.0
      %v2147 = vpop.f32.mrf.mxu0
      %v2148 = vadd.f32 %v2107, %v2147
      %2149 = vdwg.mxu0
      %2150 = vmatpush.msra.mxu0 %v2001
      %2151 = vmatpush.msra.mxu0 %v1997
      %2152 = vmatpush.msra.mxu0 %v1993
      %2153 = vmatpush.msra.mxu0 %v1989
      %2154 = vmatpush.msra.mxu0 %v1985
      %2155 = vmatpush.msra.mxu0 %v1981
      %2156 = vmatpush.msra.mxu0 %v1977
      %2157 = vmatpush.msra.mxu0 %v1973
      %2158 = vmatpush.msra.mxu0 %v1969
      %2159 = vmatpush.msra.mxu0 %v1965
      %2160 = vmatpush.msra.mxu0 %v1961
      %2161 = vmatpush.msra.mxu0 %v1957
      %2162 = vmatpush.msra.mxu0 %v1953
      %2163 = vmatpush.msra.mxu0 %v1949
      %2164 = vmatpush.msra.mxu0 %v1945
      %2165 = vmatpush.msra.mxu0 %v1941
      %2166 = vmatmul.f32.gmra.mxu0 %v932
      %v2167 = vpop.f32.mrf.mxu0
      %v2168 = vadd.f32 0.0, %v2167
      %2169 = vmatmul.f32.gmra.mxu0 %v934
      %v2170 = vpop.f32.mrf.mxu0
      %v2171 = vadd.f32 0.0, %v2170
      %2172 = vmatmul.f32.gmra.mxu0 %v936
      %v2173 = vpop.f32.mrf.mxu0
      %v2174 = vadd.f32 0.0, %v2173
      %2175 = vmatmul.f32.gmra.mxu0 %v938
      %v2176 = vpop.f32.mrf.mxu0
      %v2177 = vadd.f32 0.0, %v2176
      %2178 = vmatmul.f32.gmra.mxu0 %v940
      %v2179 = vpop.f32.mrf.mxu0
      %v2180 = vadd.f32 0.0, %v2179
      %2181 = vmatmul.f32.gmra.mxu0 %v942
      %v2182 = vpop.f32.mrf.mxu0
      %v2183 = vadd.f32 0.0, %v2182
      %2184 = vmatmul.f32.gmra.mxu0 %v944
      %v2185 = vpop.f32.mrf.mxu0
      %v2186 = vadd.f32 0.0, %v2185
      %2187 = vmatmul.f32.gmra.mxu0 0.0
      %v2188 = vpop.f32.mrf.mxu0
      %v2189 = vadd.f32 0.0, %v2188
      %2190 = vdwg.mxu0
      %2191 = vmatpush.msra.mxu0 %v2065
      %2192 = vmatpush.msra.mxu0 %v2061
      %2193 = vmatpush.msra.mxu0 %v2057
      %2194 = vmatpush.msra.mxu0 %v2053
      %2195 = vmatpush.msra.mxu0 %v2049
      %2196 = vmatpush.msra.mxu0 %v2045
      %2197 = vmatpush.msra.mxu0 %v2041
      %2198 = vmatpush.msra.mxu0 %v2037
      %2199 = vmatpush.msra.mxu0 %v2033
      %2200 = vmatpush.msra.mxu0 %v2029
      %2201 = vmatpush.msra.mxu0 %v2025
      %2202 = vmatpush.msra.mxu0 %v2021
      %2203 = vmatpush.msra.mxu0 %v2017
      %2204 = vmatpush.msra.mxu0 %v2013
      %2205 = vmatpush.msra.mxu0 %v2009
      %2206 = vmatpush.msra.mxu0 %v2005
      %2207 = vmatmul.f32.gmra.mxu0 %v933
      %v2208 = vpop.f32.mrf.mxu0
      %v2209 = vadd.f32 %v2168, %v2208
      %2210 = vmatmul.f32.gmra.mxu0 %v935
      %v2211 = vpop.f32.mrf.mxu0
      %v2212 = vadd.f32 %v2171, %v2211
      %2213 = vmatmul.f32.gmra.mxu0 %v937
      %v2214 = vpop.f32.mrf.mxu0
      %v2215 = vadd.f32 %v2174, %v2214
      %2216 = vmatmul.f32.gmra.mxu0 %v939
      %v2217 = vpop.f32.mrf.mxu0
      %v2218 = vadd.f32 %v2177, %v2217
      %2219 = vmatmul.f32.gmra.mxu0 %v941
      %v2220 = vpop.f32.mrf.mxu0
      %v2221 = vadd.f32 %v2180, %v2220
      %2222 = vmatmul.f32.gmra.mxu0 %v943
      %v2223 = vpop.f32.mrf.mxu0
      %v2224 = vadd.f32 %v2183, %v2223
      %2225 = vmatmul.f32.gmra.mxu0 %v945
      %v2226 = vpop.f32.mrf.mxu0
      %v2227 = vadd.f32 %v2186, %v2226
      %2228 = vmatmul.f32.gmra.mxu0 0.0
      %v2229 = vpop.f32.mrf.mxu0
      %v2230 = vadd.f32 %v2189, %v2229
      %2231 = vdwg.mxu0
      %2232 = vmatpush.msra.mxu0 %v2002
      %2233 = vmatpush.msra.mxu0 %v1998
      %2234 = vmatpush.msra.mxu0 %v1994
      %2235 = vmatpush.msra.mxu0 %v1990
      %2236 = vmatpush.msra.mxu0 %v1986
      %2237 = vmatpush.msra.mxu0 %v1982
      %2238 = vmatpush.msra.mxu0 %v1978
      %2239 = vmatpush.msra.mxu0 %v1974
      %2240 = vmatpush.msra.mxu0 %v1970
      %2241 = vmatpush.msra.mxu0 %v1966
      %2242 = vmatpush.msra.mxu0 %v1962
      %2243 = vmatpush.msra.mxu0 %v1958
      %2244 = vmatpush.msra.mxu0 %v1954
      %2245 = vmatpush.msra.mxu0 %v1950
      %2246 = vmatpush.msra.mxu0 %v1946
      %2247 = vmatpush.msra.mxu0 %v1942
      %2248 = vmatmul.f32.gmra.mxu0 %v932
      %v2249 = vpop.f32.mrf.mxu0
      %v2250 = vadd.f32 0.0, %v2249
      %2251 = vmatmul.f32.gmra.mxu0 %v934
      %v2252 = vpop.f32.mrf.mxu0
      %v2253 = vadd.f32 0.0, %v2252
      %2254 = vmatmul.f32.gmra.mxu0 %v936
      %v2255 = vpop.f32.mrf.mxu0
      %v2256 = vadd.f32 0.0, %v2255
      %2257 = vmatmul.f32.gmra.mxu0 %v938
      %v2258 = vpop.f32.mrf.mxu0
      %v2259 = vadd.f32 0.0, %v2258
      %2260 = vmatmul.f32.gmra.mxu0 %v940
      %v2261 = vpop.f32.mrf.mxu0
      %v2262 = vadd.f32 0.0, %v2261
      %2263 = vmatmul.f32.gmra.mxu0 %v942
      %v2264 = vpop.f32.mrf.mxu0
      %v2265 = vadd.f32 0.0, %v2264
      %2266 = vmatmul.f32.gmra.mxu0 %v944
      %v2267 = vpop.f32.mrf.mxu0
      %v2268 = vadd.f32 0.0, %v2267
      %2269 = vmatmul.f32.gmra.mxu0 0.0
      %v2270 = vpop.f32.mrf.mxu0
      %v2271 = vadd.f32 0.0, %v2270
      %2272 = vdwg.mxu0
      %2273 = vmatpush.msra.mxu0 %v2066
      %2274 = vmatpush.msra.mxu0 %v2062
      %2275 = vmatpush.msra.mxu0 %v2058
      %2276 = vmatpush.msra.mxu0 %v2054
      %2277 = vmatpush.msra.mxu0 %v2050
      %2278 = vmatpush.msra.mxu0 %v2046
      %2279 = vmatpush.msra.mxu0 %v2042
      %2280 = vmatpush.msra.mxu0 %v2038
      %2281 = vmatpush.msra.mxu0 %v2034
      %2282 = vmatpush.msra.mxu0 %v2030
      %2283 = vmatpush.msra.mxu0 %v2026
      %2284 = vmatpush.msra.mxu0 %v2022
      %2285 = vmatpush.msra.mxu0 %v2018
      %2286 = vmatpush.msra.mxu0 %v2014
      %2287 = vmatpush.msra.mxu0 %v2010
      %2288 = vmatpush.msra.mxu0 %v2006
      %2289 = vmatmul.f32.gmra.mxu0 %v933
      %v2290 = vpop.f32.mrf.mxu0
      %v2291 = vadd.f32 %v2250, %v2290
      %2292 = vmatmul.f32.gmra.mxu0 %v935
      %v2293 = vpop.f32.mrf.mxu0
      %v2294 = vadd.f32 %v2253, %v2293
      %2295 = vmatmul.f32.gmra.mxu0 %v937
      %v2296 = vpop.f32.mrf.mxu0
      %v2297 = vadd.f32 %v2256, %v2296
      %2298 = vmatmul.f32.gmra.mxu0 %v939
      %v2299 = vpop.f32.mrf.mxu0
      %v2300 = vadd.f32 %v2259, %v2299
      %2301 = vmatmul.f32.gmra.mxu0 %v941
      %v2302 = vpop.f32.mrf.mxu0
      %v2303 = vadd.f32 %v2262, %v2302
      %2304 = vmatmul.f32.gmra.mxu0 %v943
      %v2305 = vpop.f32.mrf.mxu0
      %v2306 = vadd.f32 %v2265, %v2305
      %2307 = vmatmul.f32.gmra.mxu0 %v945
      %v2308 = vpop.f32.mrf.mxu0
      %v2309 = vadd.f32 %v2268, %v2308
      %2310 = vmatmul.f32.gmra.mxu0 0.0
      %v2311 = vpop.f32.mrf.mxu0
      %v2312 = vadd.f32 %v2271, %v2311
      %2313 = vdwg.mxu0
      %2314 = vmatpush.msra.mxu0 %v2003
      %2315 = vmatpush.msra.mxu0 %v1999
      %2316 = vmatpush.msra.mxu0 %v1995
      %2317 = vmatpush.msra.mxu0 %v1991
      %2318 = vmatpush.msra.mxu0 %v1987
      %2319 = vmatpush.msra.mxu0 %v1983
      %2320 = vmatpush.msra.mxu0 %v1979
      %2321 = vmatpush.msra.mxu0 %v1975
      %2322 = vmatpush.msra.mxu0 %v1971
      %2323 = vmatpush.msra.mxu0 %v1967
      %2324 = vmatpush.msra.mxu0 %v1963
      %2325 = vmatpush.msra.mxu0 %v1959
      %2326 = vmatpush.msra.mxu0 %v1955
      %2327 = vmatpush.msra.mxu0 %v1951
      %2328 = vmatpush.msra.mxu0 %v1947
      %2329 = vmatpush.msra.mxu0 %v1943
      %2330 = vmatmul.f32.gmra.mxu0 %v932
      %v2331 = vpop.f32.mrf.mxu0
      %v2332 = vadd.f32 0.0, %v2331
      %2333 = vmatmul.f32.gmra.mxu0 %v934
      %v2334 = vpop.f32.mrf.mxu0
      %v2335 = vadd.f32 0.0, %v2334
      %2336 = vmatmul.f32.gmra.mxu0 %v936
      %v2337 = vpop.f32.mrf.mxu0
      %v2338 = vadd.f32 0.0, %v2337
      %2339 = vmatmul.f32.gmra.mxu0 %v938
      %v2340 = vpop.f32.mrf.mxu0
      %v2341 = vadd.f32 0.0, %v2340
      %2342 = vmatmul.f32.gmra.mxu0 %v940
      %v2343 = vpop.f32.mrf.mxu0
      %v2344 = vadd.f32 0.0, %v2343
      %2345 = vmatmul.f32.gmra.mxu0 %v942
      %v2346 = vpop.f32.mrf.mxu0
      %v2347 = vadd.f32 0.0, %v2346
      %2348 = vmatmul.f32.gmra.mxu0 %v944
      %v2349 = vpop.f32.mrf.mxu0
      %v2350 = vadd.f32 0.0, %v2349
      %2351 = vmatmul.f32.gmra.mxu0 0.0
      %v2352 = vpop.f32.mrf.mxu0
      %v2353 = vadd.f32 0.0, %v2352
      %2354 = vdwg.mxu0
      %2355 = vmatpush.msra.mxu0 %v2067
      %2356 = vmatpush.msra.mxu0 %v2063
      %2357 = vmatpush.msra.mxu0 %v2059
      %2358 = vmatpush.msra.mxu0 %v2055
      %2359 = vmatpush.msra.mxu0 %v2051
      %2360 = vmatpush.msra.mxu0 %v2047
      %2361 = vmatpush.msra.mxu0 %v2043
      %2362 = vmatpush.msra.mxu0 %v2039
      %2363 = vmatpush.msra.mxu0 %v2035
      %2364 = vmatpush.msra.mxu0 %v2031
      %2365 = vmatpush.msra.mxu0 %v2027
      %2366 = vmatpush.msra.mxu0 %v2023
      %2367 = vmatpush.msra.mxu0 %v2019
      %2368 = vmatpush.msra.mxu0 %v2015
      %2369 = vmatpush.msra.mxu0 %v2011
      %2370 = vmatpush.msra.mxu0 %v2007
      %2371 = vmatmul.f32.gmra.mxu0 %v933
      %v2372 = vpop.f32.mrf.mxu0
      %v2373 = vadd.f32 %v2332, %v2372
      %2374 = vmatmul.f32.gmra.mxu0 %v935
      %v2375 = vpop.f32.mrf.mxu0
      %v2376 = vadd.f32 %v2335, %v2375
      %2377 = vmatmul.f32.gmra.mxu0 %v937
      %v2378 = vpop.f32.mrf.mxu0
      %v2379 = vadd.f32 %v2338, %v2378
      %2380 = vmatmul.f32.gmra.mxu0 %v939
      %v2381 = vpop.f32.mrf.mxu0
      %v2382 = vadd.f32 %v2341, %v2381
      %2383 = vmatmul.f32.gmra.mxu0 %v941
      %v2384 = vpop.f32.mrf.mxu0
      %v2385 = vadd.f32 %v2344, %v2384
      %2386 = vmatmul.f32.gmra.mxu0 %v943
      %v2387 = vpop.f32.mrf.mxu0
      %v2388 = vadd.f32 %v2347, %v2387
      %2389 = vmatmul.f32.gmra.mxu0 %v945
      %v2390 = vpop.f32.mrf.mxu0
      %v2391 = vadd.f32 %v2350, %v2390
      %2392 = vmatmul.f32.gmra.mxu0 0.0
      %v2393 = vpop.f32.mrf.mxu0
      %v2394 = vadd.f32 %v2353, %v2393
      %2395 = vdwg.mxu0
      %v2396 = vadd.f32 %v1670, %v2127
      %v2397 = vadd.f32 %v1752, %v2209
      %v2398 = vadd.f32 %v1834, %v2291
      %v2399 = vadd.f32 %v1916, %v2373
      %v2400 = vadd.f32 %v1673, %v2130
      %v2401 = vadd.f32 %v1755, %v2212
      %v2402 = vadd.f32 %v1837, %v2294
      %v2403 = vadd.f32 %v1919, %v2376
      %v2404 = vadd.f32 %v1676, %v2133
      %v2405 = vadd.f32 %v1758, %v2215
      %v2406 = vadd.f32 %v1840, %v2297
      %v2407 = vadd.f32 %v1922, %v2379
      %v2408 = vadd.f32 %v1679, %v2136
      %v2409 = vadd.f32 %v1761, %v2218
      %v2410 = vadd.f32 %v1843, %v2300
      %v2411 = vadd.f32 %v1925, %v2382
      %v2412 = vadd.f32 %v1682, %v2139
      %v2413 = vadd.f32 %v1764, %v2221
      %v2414 = vadd.f32 %v1846, %v2303
      %v2415 = vadd.f32 %v1928, %v2385
      %v2416 = vadd.f32 %v1685, %v2142
      %v2417 = vadd.f32 %v1767, %v2224
      %v2418 = vadd.f32 %v1849, %v2306
      %v2419 = vadd.f32 %v1931, %v2388
      %v2420 = vadd.f32 %v1688, %v2145
      %v2421 = vadd.f32 %v1770, %v2227
      %v2422 = vadd.f32 %v1852, %v2309
      %v2423 = vadd.f32 %v1934, %v2391
      %v2424 = vadd.f32 %v1691, %v2148
      %v2425 = vadd.f32 %v1773, %v2230
      %v2426 = vadd.f32 %v1855, %v2312
      %v2427 = vadd.f32 %v1937, %v2394
      %v2428 = vsel %vm445, %v1097, 0.0
      %v2429 = vsel %vm445, %v1099, 0.0
      %v2430 = vsel %vm446, %v1101, 0.0
      %v2431 = vsel %vm446, %v1103, 0.0
      %v2432 = vsel %vm447, %v1105, 0.0
      %v2433 = vsel %vm447, %v1107, 0.0
      %v2434 = vsel %vm448, %v1109, 0.0
      %v2435 = vsel %vm448, %v1111, 0.0
      %v2436 = vsel %vm449, %v1113, 0.0
      %v2437 = vsel %vm449, %v1115, 0.0
      %v2438 = vsel %vm450, %v1117, 0.0
      %v2439 = vsel %vm450, %v1119, 0.0
      %v2440 = vsel %vm451, %v1136, 0.0
      %v2441 = vsel %vm451, %v1137, 0.0
      %s2442 = scalar_lea.vmem %s3, 3072
      %v2443 = vld [vmem:[%s2442] sm:$0xff]
      %v2444 = vld [vmem:[%s2442 + $0x8] sm:$0xff]
      %v2445 = vld [vmem:[%s2442 + $0x10] sm:$0xff]
      %v2446 = vld [vmem:[%s2442 + $0x18] sm:$0xff]
      %v2447 = vld [vmem:[%s2442 + $0x20] sm:$0xff]
      %v2448 = vld [vmem:[%s2442 + $0x28] sm:$0xff]
      %v2449 = vld [vmem:[%s2442 + $0x30] sm:$0xff]
      %v2450 = vld [vmem:[%s2442 + $0x38] sm:$0xff]
      %v2451 = vld [vmem:[%s2442 + $0x40] sm:$0xff]
      %v2452 = vld [vmem:[%s2442 + $0x48] sm:$0xff]
      %v2453 = vld [vmem:[%s2442 + $0x50] sm:$0xff]
      %v2454 = vld [vmem:[%s2442 + $0x58] sm:$0xff]
      %v2455 = vld [vmem:[%s2442 + $0x60] sm:$0xff]
      %v2456 = vld [vmem:[%s2442 + $0x68] sm:$0xff]
      %v2457 = vld [vmem:[%s2442 + $0x70] sm:$0xff]
      %v2458 = vld [vmem:[%s2442 + $0x78] sm:$0xff]
      %v2459 = vld [vmem:[%s2442 + $0x80] sm:$0xff]
      %v2460 = vld [vmem:[%s2442 + $0x88] sm:$0xff]
      %v2461 = vld [vmem:[%s2442 + $0x90] sm:$0xff]
      %v2462 = vld [vmem:[%s2442 + $0x98] sm:$0xff]
      %v2463 = vld [vmem:[%s2442 + $0xa0] sm:$0xff]
      %v2464 = vld [vmem:[%s2442 + $0xa8] sm:$0xff]
      %v2465 = vld [vmem:[%s2442 + $0xb0] sm:$0xff]
      %v2466 = vld [vmem:[%s2442 + $0xb8] sm:$0xff]
      %v2467 = vld [vmem:[%s2442 + $0xc0] sm:$0xff]
      %v2468 = vld [vmem:[%s2442 + $0xc8] sm:$0xff]
      %v2469 = vld [vmem:[%s2442 + $0xd0] sm:$0xff]
      %v2470 = vld [vmem:[%s2442 + $0xd8] sm:$0xff]
      %v2471 = vld [vmem:[%s2442 + $0xe0] sm:$0xff]
      %v2472 = vld [vmem:[%s2442 + $0xe8] sm:$0xff]
      %v2473 = vld [vmem:[%s2442 + $0xf0] sm:$0xff]
      %v2474 = vld [vmem:[%s2442 + $0xf8] sm:$0xff]
      %v2475 = vld [vmem:[%s2442 + $0x100] sm:$0xff]
      %v2476 = vld [vmem:[%s2442 + $0x108] sm:$0xff]
      %v2477 = vld [vmem:[%s2442 + $0x110] sm:$0xff]
      %v2478 = vld [vmem:[%s2442 + $0x118] sm:$0xff]
      %v2479 = vld [vmem:[%s2442 + $0x120] sm:$0xff]
      %v2480 = vld [vmem:[%s2442 + $0x128] sm:$0xff]
      %v2481 = vld [vmem:[%s2442 + $0x130] sm:$0xff]
      %v2482 = vld [vmem:[%s2442 + $0x138] sm:$0xff]
      %v2483 = vld [vmem:[%s2442 + $0x140] sm:$0xff]
      %v2484 = vld [vmem:[%s2442 + $0x148] sm:$0xff]
      %v2485 = vld [vmem:[%s2442 + $0x150] sm:$0xff]
      %v2486 = vld [vmem:[%s2442 + $0x158] sm:$0xff]
      %v2487 = vld [vmem:[%s2442 + $0x160] sm:$0xff]
      %v2488 = vld [vmem:[%s2442 + $0x168] sm:$0xff]
      %v2489 = vld [vmem:[%s2442 + $0x170] sm:$0xff]
      %v2490 = vld [vmem:[%s2442 + $0x178] sm:$0xff]
      %v2491 = vld [vmem:[%s2442 + $0x180] sm:$0xff]
      %v2492 = vld [vmem:[%s2442 + $0x188] sm:$0xff]
      %v2493 = vld [vmem:[%s2442 + $0x190] sm:$0xff]
      %v2494 = vld [vmem:[%s2442 + $0x198] sm:$0xff]
      %v2495 = vld [vmem:[%s2442 + $0x1a0] sm:$0xff]
      %v2496 = vld [vmem:[%s2442 + $0x1a8] sm:$0xff]
      %v2497 = vld [vmem:[%s2442 + $0x1b0] sm:$0xff]
      %v2498 = vld [vmem:[%s2442 + $0x1b8] sm:$0xff]
      %v2499 = vld [vmem:[%s2442 + $0x1c0] sm:$0xff]
      %v2500 = vld [vmem:[%s2442 + $0x1c8] sm:$0xff]
      %v2501 = vld [vmem:[%s2442 + $0x1d0] sm:$0xff]
      %v2502 = vld [vmem:[%s2442 + $0x1d8] sm:$0xff]
      %v2503 = vld [vmem:[%s2442 + $0x1e0] sm:$0xff]
      %v2504 = vld [vmem:[%s2442 + $0x1e8] sm:$0xff]
      %v2505 = vld [vmem:[%s2442 + $0x1f0] sm:$0xff]
      %v2506 = vld [vmem:[%s2442 + $0x1f8] sm:$0xff]
      %v2507 = vld [vmem:[%s2442 + $0x200] sm:$0xff]
      %v2508 = vld [vmem:[%s2442 + $0x208] sm:$0xff]
      %v2509 = vld [vmem:[%s2442 + $0x210] sm:$0xff]
      %v2510 = vld [vmem:[%s2442 + $0x218] sm:$0xff]
      %v2511 = vld [vmem:[%s2442 + $0x220] sm:$0xff]
      %v2512 = vld [vmem:[%s2442 + $0x228] sm:$0xff]
      %v2513 = vld [vmem:[%s2442 + $0x230] sm:$0xff]
      %v2514 = vld [vmem:[%s2442 + $0x238] sm:$0xff]
      %v2515 = vld [vmem:[%s2442 + $0x240] sm:$0xff]
      %v2516 = vld [vmem:[%s2442 + $0x248] sm:$0xff]
      %v2517 = vld [vmem:[%s2442 + $0x250] sm:$0xff]
      %v2518 = vld [vmem:[%s2442 + $0x258] sm:$0xff]
      %v2519 = vld [vmem:[%s2442 + $0x260] sm:$0xff]
      %v2520 = vld [vmem:[%s2442 + $0x268] sm:$0xff]
      %v2521 = vld [vmem:[%s2442 + $0x270] sm:$0xff]
      %v2522 = vld [vmem:[%s2442 + $0x278] sm:$0xff]
      %v2523 = vld [vmem:[%s2442 + $0x280] sm:$0xff]
      %v2524 = vld [vmem:[%s2442 + $0x288] sm:$0xff]
      %v2525 = vld [vmem:[%s2442 + $0x290] sm:$0xff]
      %v2526 = vld [vmem:[%s2442 + $0x298] sm:$0xff]
      %v2527 = vld [vmem:[%s2442 + $0x2a0] sm:$0xff]
      %v2528 = vld [vmem:[%s2442 + $0x2a8] sm:$0xff]
      %v2529 = vld [vmem:[%s2442 + $0x2b0] sm:$0xff]
      %v2530 = vld [vmem:[%s2442 + $0x2b8] sm:$0xff]
      %v2531 = vld [vmem:[%s2442 + $0x2c0] sm:$0xff]
      %v2532 = vld [vmem:[%s2442 + $0x2c8] sm:$0xff]
      %v2533 = vld [vmem:[%s2442 + $0x2d0] sm:$0xff]
      %v2534 = vld [vmem:[%s2442 + $0x2d8] sm:$0xff]
      %v2535 = vld [vmem:[%s2442 + $0x2e0] sm:$0xff]
      %v2536 = vld [vmem:[%s2442 + $0x2e8] sm:$0xff]
      %v2537 = vld [vmem:[%s2442 + $0x2f0] sm:$0xff]
      %v2538 = vld [vmem:[%s2442 + $0x2f8] sm:$0xff]
      %v2539 = vld [vmem:[%s2442 + $0x300] sm:$0xff]
      %v2540 = vld [vmem:[%s2442 + $0x308] sm:$0xff]
      %v2541 = vld [vmem:[%s2442 + $0x310] sm:$0xff]
      %v2542 = vld [vmem:[%s2442 + $0x318] sm:$0xff]
      %v2543 = vld [vmem:[%s2442 + $0x320] sm:$0xff]
      %v2544 = vld [vmem:[%s2442 + $0x328] sm:$0xff]
      %v2545 = vld [vmem:[%s2442 + $0x330] sm:$0xff]
      %v2546 = vld [vmem:[%s2442 + $0x338] sm:$0xff]
      %v2547 = vld [vmem:[%s2442 + $0x340] sm:$0xff]
      %v2548 = vld [vmem:[%s2442 + $0x348] sm:$0xff]
      %v2549 = vld [vmem:[%s2442 + $0x350] sm:$0xff]
      %v2550 = vld [vmem:[%s2442 + $0x358] sm:$0xff]
      %v2551 = vld [vmem:[%s2442 + $0x360] sm:$0xff]
      %v2552 = vld [vmem:[%s2442 + $0x368] sm:$0xff]
      %v2553 = vld [vmem:[%s2442 + $0x370] sm:$0xff]
      %v2554 = vld [vmem:[%s2442 + $0x378] sm:$0xff]
      %v2555 = vld [vmem:[%s2442 + $0x380] sm:$0xff]
      %v2556 = vld [vmem:[%s2442 + $0x388] sm:$0xff]
      %v2557 = vld [vmem:[%s2442 + $0x390] sm:$0xff]
      %v2558 = vld [vmem:[%s2442 + $0x398] sm:$0xff]
      %v2559 = vld [vmem:[%s2442 + $0x3a0] sm:$0xff]
      %v2560 = vld [vmem:[%s2442 + $0x3a8] sm:$0xff]
      %v2561 = vld [vmem:[%s2442 + $0x3b0] sm:$0xff]
      %v2562 = vld [vmem:[%s2442 + $0x3b8] sm:$0xff]
      %v2563 = vld [vmem:[%s2442 + $0x3c0] sm:$0xff]
      %v2564 = vld [vmem:[%s2442 + $0x3c8] sm:$0xff]
      %v2565 = vld [vmem:[%s2442 + $0x3d0] sm:$0xff]
      %v2566 = vld [vmem:[%s2442 + $0x3d8] sm:$0xff]
      %v2567 = vld [vmem:[%s2442 + $0x3e0] sm:$0xff]
      %v2568 = vld [vmem:[%s2442 + $0x3e8] sm:$0xff]
      %v2569 = vld [vmem:[%s2442 + $0x3f0] sm:$0xff]
      %v2570 = vld [vmem:[%s2442 + $0x3f8] sm:$0xff]
      %2571 = vmatpush.msra.mxu0 %v2503
      %2572 = vmatpush.msra.mxu0 %v2499
      %2573 = vmatpush.msra.mxu0 %v2495
      %2574 = vmatpush.msra.mxu0 %v2491
      %2575 = vmatpush.msra.mxu0 %v2487
      %2576 = vmatpush.msra.mxu0 %v2483
      %2577 = vmatpush.msra.mxu0 %v2479
      %2578 = vmatpush.msra.mxu0 %v2475
      %2579 = vmatpush.msra.mxu0 %v2471
      %2580 = vmatpush.msra.mxu0 %v2467
      %2581 = vmatpush.msra.mxu0 %v2463
      %2582 = vmatpush.msra.mxu0 %v2459
      %2583 = vmatpush.msra.mxu0 %v2455
      %2584 = vmatpush.msra.mxu0 %v2451
      %2585 = vmatpush.msra.mxu0 %v2447
      %2586 = vmatpush.msra.mxu0 %v2443
      %2587 = vmatmul.f32.gmra.mxu0 %v2428
      %v2588 = vpop.f32.mrf.mxu0
      %v2589 = vadd.f32 0.0, %v2588
      %2590 = vmatmul.f32.gmra.mxu0 %v2430
      %v2591 = vpop.f32.mrf.mxu0
      %v2592 = vadd.f32 0.0, %v2591
      %2593 = vmatmul.f32.gmra.mxu0 %v2432
      %v2594 = vpop.f32.mrf.mxu0
      %v2595 = vadd.f32 0.0, %v2594
      %2596 = vmatmul.f32.gmra.mxu0 %v2434
      %v2597 = vpop.f32.mrf.mxu0
      %v2598 = vadd.f32 0.0, %v2597
      %2599 = vmatmul.f32.gmra.mxu0 %v2436
      %v2600 = vpop.f32.mrf.mxu0
      %v2601 = vadd.f32 0.0, %v2600
      %2602 = vmatmul.f32.gmra.mxu0 %v2438
      %v2603 = vpop.f32.mrf.mxu0
      %v2604 = vadd.f32 0.0, %v2603
      %2605 = vmatmul.f32.gmra.mxu0 %v2440
      %v2606 = vpop.f32.mrf.mxu0
      %v2607 = vadd.f32 0.0, %v2606
      %2608 = vmatmul.f32.gmra.mxu0 0.0
      %v2609 = vpop.f32.mrf.mxu0
      %v2610 = vadd.f32 0.0, %v2609
      %2611 = vdwg.mxu0
      %2612 = vmatpush.msra.mxu0 %v2567
      %2613 = vmatpush.msra.mxu0 %v2563
      %2614 = vmatpush.msra.mxu0 %v2559
      %2615 = vmatpush.msra.mxu0 %v2555
      %2616 = vmatpush.msra.mxu0 %v2551
      %2617 = vmatpush.msra.mxu0 %v2547
      %2618 = vmatpush.msra.mxu0 %v2543
      %2619 = vmatpush.msra.mxu0 %v2539
      %2620 = vmatpush.msra.mxu0 %v2535
      %2621 = vmatpush.msra.mxu0 %v2531
      %2622 = vmatpush.msra.mxu0 %v2527
      %2623 = vmatpush.msra.mxu0 %v2523
      %2624 = vmatpush.msra.mxu0 %v2519
      %2625 = vmatpush.msra.mxu0 %v2515
      %2626 = vmatpush.msra.mxu0 %v2511
      %2627 = vmatpush.msra.mxu0 %v2507
      %2628 = vmatmul.f32.gmra.mxu0 %v2429
      %v2629 = vpop.f32.mrf.mxu0
      %v2630 = vadd.f32 %v2589, %v2629
      %2631 = vmatmul.f32.gmra.mxu0 %v2431
      %v2632 = vpop.f32.mrf.mxu0
      %v2633 = vadd.f32 %v2592, %v2632
      %2634 = vmatmul.f32.gmra.mxu0 %v2433
      %v2635 = vpop.f32.mrf.mxu0
      %v2636 = vadd.f32 %v2595, %v2635
      %2637 = vmatmul.f32.gmra.mxu0 %v2435
      %v2638 = vpop.f32.mrf.mxu0
      %v2639 = vadd.f32 %v2598, %v2638
      %2640 = vmatmul.f32.gmra.mxu0 %v2437
      %v2641 = vpop.f32.mrf.mxu0
      %v2642 = vadd.f32 %v2601, %v2641
      %2643 = vmatmul.f32.gmra.mxu0 %v2439
      %v2644 = vpop.f32.mrf.mxu0
      %v2645 = vadd.f32 %v2604, %v2644
      %2646 = vmatmul.f32.gmra.mxu0 %v2441
      %v2647 = vpop.f32.mrf.mxu0
      %v2648 = vadd.f32 %v2607, %v2647
      %2649 = vmatmul.f32.gmra.mxu0 0.0
      %v2650 = vpop.f32.mrf.mxu0
      %v2651 = vadd.f32 %v2610, %v2650
      %2652 = vdwg.mxu0
      %2653 = vmatpush.msra.mxu0 %v2504
      %2654 = vmatpush.msra.mxu0 %v2500
      %2655 = vmatpush.msra.mxu0 %v2496
      %2656 = vmatpush.msra.mxu0 %v2492
      %2657 = vmatpush.msra.mxu0 %v2488
      %2658 = vmatpush.msra.mxu0 %v2484
      %2659 = vmatpush.msra.mxu0 %v2480
      %2660 = vmatpush.msra.mxu0 %v2476
      %2661 = vmatpush.msra.mxu0 %v2472
      %2662 = vmatpush.msra.mxu0 %v2468
      %2663 = vmatpush.msra.mxu0 %v2464
      %2664 = vmatpush.msra.mxu0 %v2460
      %2665 = vmatpush.msra.mxu0 %v2456
      %2666 = vmatpush.msra.mxu0 %v2452
      %2667 = vmatpush.msra.mxu0 %v2448
      %2668 = vmatpush.msra.mxu0 %v2444
      %2669 = vmatmul.f32.gmra.mxu0 %v2428
      %v2670 = vpop.f32.mrf.mxu0
      %v2671 = vadd.f32 0.0, %v2670
      %2672 = vmatmul.f32.gmra.mxu0 %v2430
      %v2673 = vpop.f32.mrf.mxu0
      %v2674 = vadd.f32 0.0, %v2673
      %2675 = vmatmul.f32.gmra.mxu0 %v2432
      %v2676 = vpop.f32.mrf.mxu0
      %v2677 = vadd.f32 0.0, %v2676
      %2678 = vmatmul.f32.gmra.mxu0 %v2434
      %v2679 = vpop.f32.mrf.mxu0
      %v2680 = vadd.f32 0.0, %v2679
      %2681 = vmatmul.f32.gmra.mxu0 %v2436
      %v2682 = vpop.f32.mrf.mxu0
      %v2683 = vadd.f32 0.0, %v2682
      %2684 = vmatmul.f32.gmra.mxu0 %v2438
      %v2685 = vpop.f32.mrf.mxu0
      %v2686 = vadd.f32 0.0, %v2685
      %2687 = vmatmul.f32.gmra.mxu0 %v2440
      %v2688 = vpop.f32.mrf.mxu0
      %v2689 = vadd.f32 0.0, %v2688
      %2690 = vmatmul.f32.gmra.mxu0 0.0
      %v2691 = vpop.f32.mrf.mxu0
      %v2692 = vadd.f32 0.0, %v2691
      %2693 = vdwg.mxu0
      %2694 = vmatpush.msra.mxu0 %v2568
      %2695 = vmatpush.msra.mxu0 %v2564
      %2696 = vmatpush.msra.mxu0 %v2560
      %2697 = vmatpush.msra.mxu0 %v2556
      %2698 = vmatpush.msra.mxu0 %v2552
      %2699 = vmatpush.msra.mxu0 %v2548
      %2700 = vmatpush.msra.mxu0 %v2544
      %2701 = vmatpush.msra.mxu0 %v2540
      %2702 = vmatpush.msra.mxu0 %v2536
      %2703 = vmatpush.msra.mxu0 %v2532
      %2704 = vmatpush.msra.mxu0 %v2528
      %2705 = vmatpush.msra.mxu0 %v2524
      %2706 = vmatpush.msra.mxu0 %v2520
      %2707 = vmatpush.msra.mxu0 %v2516
      %2708 = vmatpush.msra.mxu0 %v2512
      %2709 = vmatpush.msra.mxu0 %v2508
      %2710 = vmatmul.f32.gmra.mxu0 %v2429
      %v2711 = vpop.f32.mrf.mxu0
      %v2712 = vadd.f32 %v2671, %v2711
      %2713 = vmatmul.f32.gmra.mxu0 %v2431
      %v2714 = vpop.f32.mrf.mxu0
      %v2715 = vadd.f32 %v2674, %v2714
      %2716 = vmatmul.f32.gmra.mxu0 %v2433
      %v2717 = vpop.f32.mrf.mxu0
      %v2718 = vadd.f32 %v2677, %v2717
      %2719 = vmatmul.f32.gmra.mxu0 %v2435
      %v2720 = vpop.f32.mrf.mxu0
      %v2721 = vadd.f32 %v2680, %v2720
      %2722 = vmatmul.f32.gmra.mxu0 %v2437
      %v2723 = vpop.f32.mrf.mxu0
      %v2724 = vadd.f32 %v2683, %v2723
      %2725 = vmatmul.f32.gmra.mxu0 %v2439
      %v2726 = vpop.f32.mrf.mxu0
      %v2727 = vadd.f32 %v2686, %v2726
      %2728 = vmatmul.f32.gmra.mxu0 %v2441
      %v2729 = vpop.f32.mrf.mxu0
      %v2730 = vadd.f32 %v2689, %v2729
      %2731 = vmatmul.f32.gmra.mxu0 0.0
      %v2732 = vpop.f32.mrf.mxu0
      %v2733 = vadd.f32 %v2692, %v2732
      %2734 = vdwg.mxu0
      %2735 = vmatpush.msra.mxu0 %v2505
      %2736 = vmatpush.msra.mxu0 %v2501
      %2737 = vmatpush.msra.mxu0 %v2497
      %2738 = vmatpush.msra.mxu0 %v2493
      %2739 = vmatpush.msra.mxu0 %v2489
      %2740 = vmatpush.msra.mxu0 %v2485
      %2741 = vmatpush.msra.mxu0 %v2481
      %2742 = vmatpush.msra.mxu0 %v2477
      %2743 = vmatpush.msra.mxu0 %v2473
      %2744 = vmatpush.msra.mxu0 %v2469
      %2745 = vmatpush.msra.mxu0 %v2465
      %2746 = vmatpush.msra.mxu0 %v2461
      %2747 = vmatpush.msra.mxu0 %v2457
      %2748 = vmatpush.msra.mxu0 %v2453
      %2749 = vmatpush.msra.mxu0 %v2449
      %2750 = vmatpush.msra.mxu0 %v2445
      %2751 = vmatmul.f32.gmra.mxu0 %v2428
      %v2752 = vpop.f32.mrf.mxu0
      %v2753 = vadd.f32 0.0, %v2752
      %2754 = vmatmul.f32.gmra.mxu0 %v2430
      %v2755 = vpop.f32.mrf.mxu0
      %v2756 = vadd.f32 0.0, %v2755
      %2757 = vmatmul.f32.gmra.mxu0 %v2432
      %v2758 = vpop.f32.mrf.mxu0
      %v2759 = vadd.f32 0.0, %v2758
      %2760 = vmatmul.f32.gmra.mxu0 %v2434
      %v2761 = vpop.f32.mrf.mxu0
      %v2762 = vadd.f32 0.0, %v2761
      %2763 = vmatmul.f32.gmra.mxu0 %v2436
      %v2764 = vpop.f32.mrf.mxu0
      %v2765 = vadd.f32 0.0, %v2764
      %2766 = vmatmul.f32.gmra.mxu0 %v2438
      %v2767 = vpop.f32.mrf.mxu0
      %v2768 = vadd.f32 0.0, %v2767
      %2769 = vmatmul.f32.gmra.mxu0 %v2440
      %v2770 = vpop.f32.mrf.mxu0
      %v2771 = vadd.f32 0.0, %v2770
      %2772 = vmatmul.f32.gmra.mxu0 0.0
      %v2773 = vpop.f32.mrf.mxu0
      %v2774 = vadd.f32 0.0, %v2773
      %2775 = vdwg.mxu0
      %2776 = vmatpush.msra.mxu0 %v2569
      %2777 = vmatpush.msra.mxu0 %v2565
      %2778 = vmatpush.msra.mxu0 %v2561
      %2779 = vmatpush.msra.mxu0 %v2557
      %2780 = vmatpush.msra.mxu0 %v2553
      %2781 = vmatpush.msra.mxu0 %v2549
      %2782 = vmatpush.msra.mxu0 %v2545
      %2783 = vmatpush.msra.mxu0 %v2541
      %2784 = vmatpush.msra.mxu0 %v2537
      %2785 = vmatpush.msra.mxu0 %v2533
      %2786 = vmatpush.msra.mxu0 %v2529
      %2787 = vmatpush.msra.mxu0 %v2525
      %2788 = vmatpush.msra.mxu0 %v2521
      %2789 = vmatpush.msra.mxu0 %v2517
      %2790 = vmatpush.msra.mxu0 %v2513
      %2791 = vmatpush.msra.mxu0 %v2509
      %2792 = vmatmul.f32.gmra.mxu0 %v2429
      %v2793 = vpop.f32.mrf.mxu0
      %v2794 = vadd.f32 %v2753, %v2793
      %2795 = vmatmul.f32.gmra.mxu0 %v2431
      %v2796 = vpop.f32.mrf.mxu0
      %v2797 = vadd.f32 %v2756, %v2796
      %2798 = vmatmul.f32.gmra.mxu0 %v2433
      %v2799 = vpop.f32.mrf.mxu0
      %v2800 = vadd.f32 %v2759, %v2799
      %2801 = vmatmul.f32.gmra.mxu0 %v2435
      %v2802 = vpop.f32.mrf.mxu0
      %v2803 = vadd.f32 %v2762, %v2802
      %2804 = vmatmul.f32.gmra.mxu0 %v2437
      %v2805 = vpop.f32.mrf.mxu0
      %v2806 = vadd.f32 %v2765, %v2805
      %2807 = vmatmul.f32.gmra.mxu0 %v2439
      %v2808 = vpop.f32.mrf.mxu0
      %v2809 = vadd.f32 %v2768, %v2808
      %2810 = vmatmul.f32.gmra.mxu0 %v2441
      %v2811 = vpop.f32.mrf.mxu0
      %v2812 = vadd.f32 %v2771, %v2811
      %2813 = vmatmul.f32.gmra.mxu0 0.0
      %v2814 = vpop.f32.mrf.mxu0
      %v2815 = vadd.f32 %v2774, %v2814
      %2816 = vdwg.mxu0
      %2817 = vmatpush.msra.mxu0 %v2506
      %2818 = vmatpush.msra.mxu0 %v2502
      %2819 = vmatpush.msra.mxu0 %v2498
      %2820 = vmatpush.msra.mxu0 %v2494
      %2821 = vmatpush.msra.mxu0 %v2490
      %2822 = vmatpush.msra.mxu0 %v2486
      %2823 = vmatpush.msra.mxu0 %v2482
      %2824 = vmatpush.msra.mxu0 %v2478
      %2825 = vmatpush.msra.mxu0 %v2474
      %2826 = vmatpush.msra.mxu0 %v2470
      %2827 = vmatpush.msra.mxu0 %v2466
      %2828 = vmatpush.msra.mxu0 %v2462
      %2829 = vmatpush.msra.mxu0 %v2458
      %2830 = vmatpush.msra.mxu0 %v2454
      %2831 = vmatpush.msra.mxu0 %v2450
      %2832 = vmatpush.msra.mxu0 %v2446
      %2833 = vmatmul.f32.gmra.mxu0 %v2428
      %v2834 = vpop.f32.mrf.mxu0
      %v2835 = vadd.f32 0.0, %v2834
      %2836 = vmatmul.f32.gmra.mxu0 %v2430
      %v2837 = vpop.f32.mrf.mxu0
      %v2838 = vadd.f32 0.0, %v2837
      %2839 = vmatmul.f32.gmra.mxu0 %v2432
      %v2840 = vpop.f32.mrf.mxu0
      %v2841 = vadd.f32 0.0, %v2840
      %2842 = vmatmul.f32.gmra.mxu0 %v2434
      %v2843 = vpop.f32.mrf.mxu0
      %v2844 = vadd.f32 0.0, %v2843
      %2845 = vmatmul.f32.gmra.mxu0 %v2436
      %v2846 = vpop.f32.mrf.mxu0
      %v2847 = vadd.f32 0.0, %v2846
      %2848 = vmatmul.f32.gmra.mxu0 %v2438
      %v2849 = vpop.f32.mrf.mxu0
      %v2850 = vadd.f32 0.0, %v2849
      %2851 = vmatmul.f32.gmra.mxu0 %v2440
      %v2852 = vpop.f32.mrf.mxu0
      %v2853 = vadd.f32 0.0, %v2852
      %2854 = vmatmul.f32.gmra.mxu0 0.0
      %v2855 = vpop.f32.mrf.mxu0
      %v2856 = vadd.f32 0.0, %v2855
      %2857 = vdwg.mxu0
      %2858 = vmatpush.msra.mxu0 %v2570
      %2859 = vmatpush.msra.mxu0 %v2566
      %2860 = vmatpush.msra.mxu0 %v2562
      %2861 = vmatpush.msra.mxu0 %v2558
      %2862 = vmatpush.msra.mxu0 %v2554
      %2863 = vmatpush.msra.mxu0 %v2550
      %2864 = vmatpush.msra.mxu0 %v2546
      %2865 = vmatpush.msra.mxu0 %v2542
      %2866 = vmatpush.msra.mxu0 %v2538
      %2867 = vmatpush.msra.mxu0 %v2534
      %2868 = vmatpush.msra.mxu0 %v2530
      %2869 = vmatpush.msra.mxu0 %v2526
      %2870 = vmatpush.msra.mxu0 %v2522
      %2871 = vmatpush.msra.mxu0 %v2518
      %2872 = vmatpush.msra.mxu0 %v2514
      %2873 = vmatpush.msra.mxu0 %v2510
      %2874 = vmatmul.f32.gmra.mxu0 %v2429
      %v2875 = vpop.f32.mrf.mxu0
      %v2876 = vadd.f32 %v2835, %v2875
      %2877 = vmatmul.f32.gmra.mxu0 %v2431
      %v2878 = vpop.f32.mrf.mxu0
      %v2879 = vadd.f32 %v2838, %v2878
      %2880 = vmatmul.f32.gmra.mxu0 %v2433
      %v2881 = vpop.f32.mrf.mxu0
      %v2882 = vadd.f32 %v2841, %v2881
      %2883 = vmatmul.f32.gmra.mxu0 %v2435
      %v2884 = vpop.f32.mrf.mxu0
      %v2885 = vadd.f32 %v2844, %v2884
      %2886 = vmatmul.f32.gmra.mxu0 %v2437
      %v2887 = vpop.f32.mrf.mxu0
      %v2888 = vadd.f32 %v2847, %v2887
      %2889 = vmatmul.f32.gmra.mxu0 %v2439
      %v2890 = vpop.f32.mrf.mxu0
      %v2891 = vadd.f32 %v2850, %v2890
      %2892 = vmatmul.f32.gmra.mxu0 %v2441
      %v2893 = vpop.f32.mrf.mxu0
      %v2894 = vadd.f32 %v2853, %v2893
      %2895 = vmatmul.f32.gmra.mxu0 0.0
      %v2896 = vpop.f32.mrf.mxu0
      %v2897 = vadd.f32 %v2856, %v2896
      %2898 = vdwg.mxu0
      %v2899 = vadd.f32 %v2396, %v2630
      %v2900 = vadd.f32 %v2397, %v2712
      %v2901 = vadd.f32 %v2398, %v2794
      %v2902 = vadd.f32 %v2399, %v2876
      %v2903 = vadd.f32 %v2400, %v2633
      %v2904 = vadd.f32 %v2401, %v2715
      %v2905 = vadd.f32 %v2402, %v2797
      %v2906 = vadd.f32 %v2403, %v2879
      %v2907 = vadd.f32 %v2404, %v2636
      %v2908 = vadd.f32 %v2405, %v2718
      %v2909 = vadd.f32 %v2406, %v2800
      %v2910 = vadd.f32 %v2407, %v2882
      %v2911 = vadd.f32 %v2408, %v2639
      %v2912 = vadd.f32 %v2409, %v2721
      %v2913 = vadd.f32 %v2410, %v2803
      %v2914 = vadd.f32 %v2411, %v2885
      %v2915 = vadd.f32 %v2412, %v2642
      %v2916 = vadd.f32 %v2413, %v2724
      %v2917 = vadd.f32 %v2414, %v2806
      %v2918 = vadd.f32 %v2415, %v2888
      %v2919 = vadd.f32 %v2416, %v2645
      %v2920 = vadd.f32 %v2417, %v2727
      %v2921 = vadd.f32 %v2418, %v2809
      %v2922 = vadd.f32 %v2419, %v2891
      %v2923 = vadd.f32 %v2420, %v2648
      %v2924 = vadd.f32 %v2421, %v2730
      %v2925 = vadd.f32 %v2422, %v2812
      %v2926 = vadd.f32 %v2423, %v2894
      %v2927 = vadd.f32 %v2424, %v2651
      %v2928 = vadd.f32 %v2425, %v2733
      %v2929 = vadd.f32 %v2426, %v2815
      %v2930 = vadd.f32 %v2427, %v2897
      %v2931 = vld [vmem:[%s4] sm:$0xf]
      %v2933 = vperm.slane %v2931, 0
      %v2934 = vperm.slane %v2931, 1
      %v2935 = vperm.slane %v2931, 2
      %v2936 = vperm.slane %v2931, 3
      %v2941 = vadd.f32 %v2899, %v2933
      %v2942 = vadd.f32 %v2900, %v2934
      %v2943 = vadd.f32 %v2901, %v2935
      %v2944 = vadd.f32 %v2902, %v2936
      %v2945 = vadd.f32 %v2903, %v2933
      %v2946 = vadd.f32 %v2904, %v2934
      %v2947 = vadd.f32 %v2905, %v2935
      %v2948 = vadd.f32 %v2906, %v2936
      %v2949 = vadd.f32 %v2907, %v2933
      %v2950 = vadd.f32 %v2908, %v2934
      %v2951 = vadd.f32 %v2909, %v2935
      %v2952 = vadd.f32 %v2910, %v2936
      %v2953 = vadd.f32 %v2911, %v2933
      %v2954 = vadd.f32 %v2912, %v2934
      %v2955 = vadd.f32 %v2913, %v2935
      %v2956 = vadd.f32 %v2914, %v2936
      %v2957 = vadd.f32 %v2915, %v2933
      %v2958 = vadd.f32 %v2916, %v2934
      %v2959 = vadd.f32 %v2917, %v2935
      %v2960 = vadd.f32 %v2918, %v2936
      %v2961 = vadd.f32 %v2919, %v2933
      %v2962 = vadd.f32 %v2920, %v2934
      %v2963 = vadd.f32 %v2921, %v2935
      %v2964 = vadd.f32 %v2922, %v2936
      %v2965 = vadd.f32 %v2923, %v2933
      %v2966 = vadd.f32 %v2924, %v2934
      %v2967 = vadd.f32 %v2925, %v2935
      %v2968 = vadd.f32 %v2926, %v2936
      %v2969 = vadd.f32 %v2927, %v2933
      %v2970 = vadd.f32 %v2928, %v2934
      %v2971 = vadd.f32 %v2929, %v2935
      %v2972 = vadd.f32 %v2930, %v2936
      %v2973 = vmax.f32 %v2941, 0.0
      %v2974 = vmax.f32 %v2942, 0.0
      %v2975 = vmax.f32 %v2943, 0.0
      %v2976 = vmax.f32 %v2944, 0.0
      %v2977 = vmax.f32 %v2945, 0.0
      %v2978 = vmax.f32 %v2946, 0.0
      %v2979 = vmax.f32 %v2947, 0.0
      %v2980 = vmax.f32 %v2948, 0.0
      %v2981 = vmax.f32 %v2949, 0.0
      %v2982 = vmax.f32 %v2950, 0.0
      %v2983 = vmax.f32 %v2951, 0.0
      %v2984 = vmax.f32 %v2952, 0.0
      %v2985 = vmax.f32 %v2953, 0.0
      %v2986 = vmax.f32 %v2954, 0.0
      %v2987 = vmax.f32 %v2955, 0.0
      %v2988 = vmax.f32 %v2956, 0.0
      %v2989 = vmax.f32 %v2957, 0.0
      %v2990 = vmax.f32 %v2958, 0.0
      %v2991 = vmax.f32 %v2959, 0.0
      %v2992 = vmax.f32 %v2960, 0.0
      %v2993 = vmax.f32 %v2961, 0.0
      %v2994 = vmax.f32 %v2962, 0.0
      %v2995 = vmax.f32 %v2963, 0.0
      %v2996 = vmax.f32 %v2964, 0.0
      %v2997 = vmax.f32 %v2965, 0.0
      %v2998 = vmax.f32 %v2966, 0.0
      %v2999 = vmax.f32 %v2967, 0.0
      %v3000 = vmax.f32 %v2968, 0.0
      %v3001 = vmax.f32 %v2969, 0.0
      %v3002 = vmax.f32 %v2970, 0.0
      %v3003 = vmax.f32 %v2971, 0.0
      %v3004 = vmax.f32 %v2972, 0.0
      %vm3033 = vcmask 1040384
      %v3034 = vrot.slane %v2973, 7
      %v3035 = vrot.slane %v2974, 7
      %v3036 = vrot.slane %v2975, 7
      %v3037 = vrot.slane %v2976, 7
      %v3038 = vrot.slane %v2977, 7
      %v3039 = vsel %vm3033, %v3034, %v3038
      %v3040 = vrot.slane %v2978, 7
      %v3041 = vsel %vm3033, %v3035, %v3040
      %v3042 = vrot.slane %v2979, 7
      %v3043 = vsel %vm3033, %v3036, %v3042
      %v3044 = vrot.slane %v2980, 7
      %v3045 = vsel %vm3033, %v3037, %v3044
      %v3046 = vrot.slane %v2981, 7
      %v3047 = vsel %vm3033, %v3038, %v3046
      %v3048 = vrot.slane %v2982, 7
      %v3049 = vsel %vm3033, %v3040, %v3048
      %v3050 = vrot.slane %v2983, 7
      %v3051 = vsel %vm3033, %v3042, %v3050
      %v3052 = vrot.slane %v2984, 7
      %v3053 = vsel %vm3033, %v3044, %v3052
      %v3054 = vrot.slane %v2985, 7
      %v3055 = vsel %vm3033, %v3046, %v3054
      %v3056 = vrot.slane %v2986, 7
      %v3057 = vsel %vm3033, %v3048, %v3056
      %v3058 = vrot.slane %v2987, 7
      %v3059 = vsel %vm3033, %v3050, %v3058
      %v3060 = vrot.slane %v2988, 7
      %v3061 = vsel %vm3033, %v3052, %v3060
      %v3062 = vrot.slane %v2989, 7
      %v3063 = vsel %vm3033, %v3054, %v3062
      %v3064 = vrot.slane %v2990, 7
      %v3065 = vsel %vm3033, %v3056, %v3064
      %v3066 = vrot.slane %v2991, 7
      %v3067 = vsel %vm3033, %v3058, %v3066
      %v3068 = vrot.slane %v2992, 7
      %v3069 = vsel %vm3033, %v3060, %v3068
      %v3070 = vrot.slane %v2993, 7
      %v3071 = vsel %vm3033, %v3062, %v3070
      %v3072 = vrot.slane %v2994, 7
      %v3073 = vsel %vm3033, %v3064, %v3072
      %v3074 = vrot.slane %v2995, 7
      %v3075 = vsel %vm3033, %v3066, %v3074
      %v3076 = vrot.slane %v2996, 7
      %v3077 = vsel %vm3033, %v3068, %v3076
      %v3078 = vrot.slane %v2997, 7
      %v3079 = vsel %vm3033, %v3070, %v3078
      %v3080 = vrot.slane %v2998, 7
      %v3081 = vsel %vm3033, %v3072, %v3080
      %v3082 = vrot.slane %v2999, 7
      %v3083 = vsel %vm3033, %v3074, %v3082
      %v3084 = vrot.slane %v3000, 7
      %v3085 = vsel %vm3033, %v3076, %v3084
      %v3114 = vsel %vm3033, 0.0, %v3034
      %v3115 = vsel %vm3033, 0.0, %v3035
      %v3116 = vsel %vm3033, 0.0, %v3036
      %v3117 = vsel %vm3033, 0.0, %v3037
      %vm3118 = vcmp.ge.s32.totalorder %v421, 1
      %vm3119 = vcmp.ge.s32.totalorder %v422, 1
      %vm3120 = vcmp.ge.s32.totalorder %v423, 1
      %vm3121 = vcmp.ge.s32.totalorder %v424, 1
      %vm3122 = vcmp.ge.s32.totalorder %v425, 1
      %vm3123 = vcmp.ge.s32.totalorder %v426, 1
      %vm3124 = vcmp.ge.s32.totalorder %v427, 1
      %vm3125 = vcmp.ge.s32.totalorder %v428, 1
      %v3126 = vsel %vm3118, 1, 0
      %v3127 = vsel %vm3119, 1, 0
      %v3128 = vsel %vm3120, 1, 0
      %v3129 = vsel %vm3121, 1, 0
      %v3130 = vsel %vm3122, 1, 0
      %v3131 = vsel %vm3123, 1, 0
      %v3132 = vsel %vm3124, 1, 0
      %v3133 = vsel %vm3125, 1, 0
      %vm3134 = vcmp.eq.s32.totalorder %v3126, 1
      %vm3135 = vcmp.eq.s32.totalorder %v3127, 1
      %vm3136 = vcmp.eq.s32.totalorder %v3128, 1
      %vm3137 = vcmp.eq.s32.totalorder %v3129, 1
      %vm3138 = vcmp.eq.s32.totalorder %v3130, 1
      %vm3139 = vcmp.eq.s32.totalorder %v3131, 1
      %vm3140 = vcmp.eq.s32.totalorder %v3132, 1
      %vm3141 = vcmp.eq.s32.totalorder %v3133, 1
      %v3142 = vsel %vm3135, %v3114, 0.0
      %v3143 = vsel %vm3135, %v3115, 0.0
      %v3144 = vsel %vm3135, %v3116, 0.0
      %v3145 = vsel %vm3135, %v3117, 0.0
      %v3146 = vsel %vm3136, %v3039, 0.0
      %v3147 = vsel %vm3136, %v3041, 0.0
      %v3148 = vsel %vm3136, %v3043, 0.0
      %v3149 = vsel %vm3136, %v3045, 0.0
      %v3150 = vsel %vm3137, %v3047, 0.0
      %v3151 = vsel %vm3137, %v3049, 0.0
      %v3152 = vsel %vm3137, %v3051, 0.0
      %v3153 = vsel %vm3137, %v3053, 0.0
      %v3154 = vsel %vm3138, %v3055, 0.0
      %v3155 = vsel %vm3138, %v3057, 0.0
      %v3156 = vsel %vm3138, %v3059, 0.0
      %v3157 = vsel %vm3138, %v3061, 0.0
      %v3158 = vsel %vm3139, %v3063, 0.0
      %v3159 = vsel %vm3139, %v3065, 0.0
      %v3160 = vsel %vm3139, %v3067, 0.0
      %v3161 = vsel %vm3139, %v3069, 0.0
      %v3162 = vsel %vm3140, %v3071, 0.0
      %v3163 = vsel %vm3140, %v3073, 0.0
      %v3164 = vsel %vm3140, %v3075, 0.0
      %v3165 = vsel %vm3140, %v3077, 0.0
      %v3166 = vsel %vm3141, %v3079, 0.0
      %v3167 = vsel %vm3141, %v3081, 0.0
      %v3168 = vsel %vm3141, %v3083, 0.0
      %v3169 = vsel %vm3141, %v3085, 0.0
      %v3170 = vld [vmem:[%s5] sm:$0xff]
      %v3171 = vld [vmem:[%s5 + $0x8] sm:$0xff]
      %v3172 = vld [vmem:[%s5 + $0x10] sm:$0xff]
      %v3173 = vld [vmem:[%s5 + $0x18] sm:$0xff]
      %v3174 = vld [vmem:[%s5 + $0x20] sm:$0xff]
      %v3175 = vld [vmem:[%s5 + $0x28] sm:$0xff]
      %v3176 = vld [vmem:[%s5 + $0x30] sm:$0xff]
      %v3177 = vld [vmem:[%s5 + $0x38] sm:$0xff]
      %v3178 = vld [vmem:[%s5 + $0x40] sm:$0xff]
      %v3179 = vld [vmem:[%s5 + $0x48] sm:$0xff]
      %v3180 = vld [vmem:[%s5 + $0x50] sm:$0xff]
      %v3181 = vld [vmem:[%s5 + $0x58] sm:$0xff]
      %v3182 = vld [vmem:[%s5 + $0x60] sm:$0xff]
      %v3183 = vld [vmem:[%s5 + $0x68] sm:$0xff]
      %v3184 = vld [vmem:[%s5 + $0x70] sm:$0xff]
      %v3185 = vld [vmem:[%s5 + $0x78] sm:$0xff]
      %v3186 = vld [vmem:[%s5 + $0x80] sm:$0xff]
      %v3187 = vld [vmem:[%s5 + $0x88] sm:$0xff]
      %v3188 = vld [vmem:[%s5 + $0x90] sm:$0xff]
      %v3189 = vld [vmem:[%s5 + $0x98] sm:$0xff]
      %v3190 = vld [vmem:[%s5 + $0xa0] sm:$0xff]
      %v3191 = vld [vmem:[%s5 + $0xa8] sm:$0xff]
      %v3192 = vld [vmem:[%s5 + $0xb0] sm:$0xff]
      %v3193 = vld [vmem:[%s5 + $0xb8] sm:$0xff]
      %v3194 = vld [vmem:[%s5 + $0xc0] sm:$0xff]
      %v3195 = vld [vmem:[%s5 + $0xc8] sm:$0xff]
      %v3196 = vld [vmem:[%s5 + $0xd0] sm:$0xff]
      %v3197 = vld [vmem:[%s5 + $0xd8] sm:$0xff]
      %v3198 = vld [vmem:[%s5 + $0xe0] sm:$0xff]
      %v3199 = vld [vmem:[%s5 + $0xe8] sm:$0xff]
      %v3200 = vld [vmem:[%s5 + $0xf0] sm:$0xff]
      %v3201 = vld [vmem:[%s5 + $0xf8] sm:$0xff]
      %v3202 = vld [vmem:[%s5 + $0x100] sm:$0xff]
      %v3203 = vld [vmem:[%s5 + $0x108] sm:$0xff]
      %v3204 = vld [vmem:[%s5 + $0x110] sm:$0xff]
      %v3205 = vld [vmem:[%s5 + $0x118] sm:$0xff]
      %v3206 = vld [vmem:[%s5 + $0x120] sm:$0xff]
      %v3207 = vld [vmem:[%s5 + $0x128] sm:$0xff]
      %v3208 = vld [vmem:[%s5 + $0x130] sm:$0xff]
      %v3209 = vld [vmem:[%s5 + $0x138] sm:$0xff]
      %v3210 = vld [vmem:[%s5 + $0x140] sm:$0xff]
      %v3211 = vld [vmem:[%s5 + $0x148] sm:$0xff]
      %v3212 = vld [vmem:[%s5 + $0x150] sm:$0xff]
      %v3213 = vld [vmem:[%s5 + $0x158] sm:$0xff]
      %v3214 = vld [vmem:[%s5 + $0x160] sm:$0xff]
      %v3215 = vld [vmem:[%s5 + $0x168] sm:$0xff]
      %v3216 = vld [vmem:[%s5 + $0x170] sm:$0xff]
      %v3217 = vld [vmem:[%s5 + $0x178] sm:$0xff]
      %v3218 = vld [vmem:[%s5 + $0x180] sm:$0xff]
      %v3219 = vld [vmem:[%s5 + $0x188] sm:$0xff]
      %v3220 = vld [vmem:[%s5 + $0x190] sm:$0xff]
      %v3221 = vld [vmem:[%s5 + $0x198] sm:$0xff]
      %v3222 = vld [vmem:[%s5 + $0x1a0] sm:$0xff]
      %v3223 = vld [vmem:[%s5 + $0x1a8] sm:$0xff]
      %v3224 = vld [vmem:[%s5 + $0x1b0] sm:$0xff]
      %v3225 = vld [vmem:[%s5 + $0x1b8] sm:$0xff]
      %v3226 = vld [vmem:[%s5 + $0x1c0] sm:$0xff]
      %v3227 = vld [vmem:[%s5 + $0x1c8] sm:$0xff]
      %v3228 = vld [vmem:[%s5 + $0x1d0] sm:$0xff]
      %v3229 = vld [vmem:[%s5 + $0x1d8] sm:$0xff]
      %v3230 = vld [vmem:[%s5 + $0x1e0] sm:$0xff]
      %v3231 = vld [vmem:[%s5 + $0x1e8] sm:$0xff]
      %v3232 = vld [vmem:[%s5 + $0x1f0] sm:$0xff]
      %v3233 = vld [vmem:[%s5 + $0x1f8] sm:$0xff]
      %s3234 = scalar_lea.vmem %s5, 512
      %v3235 = vld [vmem:[%s3234] sm:$0xff]
      %v3236 = vld [vmem:[%s3234 + $0x8] sm:$0xff]
      %v3237 = vld [vmem:[%s3234 + $0x10] sm:$0xff]
      %v3238 = vld [vmem:[%s3234 + $0x18] sm:$0xff]
      %v3239 = vld [vmem:[%s3234 + $0x20] sm:$0xff]
      %v3240 = vld [vmem:[%s3234 + $0x28] sm:$0xff]
      %v3241 = vld [vmem:[%s3234 + $0x30] sm:$0xff]
      %v3242 = vld [vmem:[%s3234 + $0x38] sm:$0xff]
      %v3243 = vld [vmem:[%s3234 + $0x40] sm:$0xff]
      %v3244 = vld [vmem:[%s3234 + $0x48] sm:$0xff]
      %v3245 = vld [vmem:[%s3234 + $0x50] sm:$0xff]
      %v3246 = vld [vmem:[%s3234 + $0x58] sm:$0xff]
      %v3247 = vld [vmem:[%s3234 + $0x60] sm:$0xff]
      %v3248 = vld [vmem:[%s3234 + $0x68] sm:$0xff]
      %v3249 = vld [vmem:[%s3234 + $0x70] sm:$0xff]
      %v3250 = vld [vmem:[%s3234 + $0x78] sm:$0xff]
      %v3251 = vld [vmem:[%s3234 + $0x80] sm:$0xff]
      %v3252 = vld [vmem:[%s3234 + $0x88] sm:$0xff]
      %v3253 = vld [vmem:[%s3234 + $0x90] sm:$0xff]
      %v3254 = vld [vmem:[%s3234 + $0x98] sm:$0xff]
      %v3255 = vld [vmem:[%s3234 + $0xa0] sm:$0xff]
      %v3256 = vld [vmem:[%s3234 + $0xa8] sm:$0xff]
      %v3257 = vld [vmem:[%s3234 + $0xb0] sm:$0xff]
      %v3258 = vld [vmem:[%s3234 + $0xb8] sm:$0xff]
      %v3259 = vld [vmem:[%s3234 + $0xc0] sm:$0xff]
      %v3260 = vld [vmem:[%s3234 + $0xc8] sm:$0xff]
      %v3261 = vld [vmem:[%s3234 + $0xd0] sm:$0xff]
      %v3262 = vld [vmem:[%s3234 + $0xd8] sm:$0xff]
      %v3263 = vld [vmem:[%s3234 + $0xe0] sm:$0xff]
      %v3264 = vld [vmem:[%s3234 + $0xe8] sm:$0xff]
      %v3265 = vld [vmem:[%s3234 + $0xf0] sm:$0xff]
      %v3266 = vld [vmem:[%s3234 + $0xf8] sm:$0xff]
      %v3267 = vld [vmem:[%s3234 + $0x100] sm:$0xff]
      %v3268 = vld [vmem:[%s3234 + $0x108] sm:$0xff]
      %v3269 = vld [vmem:[%s3234 + $0x110] sm:$0xff]
      %v3270 = vld [vmem:[%s3234 + $0x118] sm:$0xff]
      %v3271 = vld [vmem:[%s3234 + $0x120] sm:$0xff]
      %v3272 = vld [vmem:[%s3234 + $0x128] sm:$0xff]
      %v3273 = vld [vmem:[%s3234 + $0x130] sm:$0xff]
      %v3274 = vld [vmem:[%s3234 + $0x138] sm:$0xff]
      %v3275 = vld [vmem:[%s3234 + $0x140] sm:$0xff]
      %v3276 = vld [vmem:[%s3234 + $0x148] sm:$0xff]
      %v3277 = vld [vmem:[%s3234 + $0x150] sm:$0xff]
      %v3278 = vld [vmem:[%s3234 + $0x158] sm:$0xff]
      %v3279 = vld [vmem:[%s3234 + $0x160] sm:$0xff]
      %v3280 = vld [vmem:[%s3234 + $0x168] sm:$0xff]
      %v3281 = vld [vmem:[%s3234 + $0x170] sm:$0xff]
      %v3282 = vld [vmem:[%s3234 + $0x178] sm:$0xff]
      %v3283 = vld [vmem:[%s3234 + $0x180] sm:$0xff]
      %v3284 = vld [vmem:[%s3234 + $0x188] sm:$0xff]
      %v3285 = vld [vmem:[%s3234 + $0x190] sm:$0xff]
      %v3286 = vld [vmem:[%s3234 + $0x198] sm:$0xff]
      %v3287 = vld [vmem:[%s3234 + $0x1a0] sm:$0xff]
      %v3288 = vld [vmem:[%s3234 + $0x1a8] sm:$0xff]
      %v3289 = vld [vmem:[%s3234 + $0x1b0] sm:$0xff]
      %v3290 = vld [vmem:[%s3234 + $0x1b8] sm:$0xff]
      %v3291 = vld [vmem:[%s3234 + $0x1c0] sm:$0xff]
      %v3292 = vld [vmem:[%s3234 + $0x1c8] sm:$0xff]
      %v3293 = vld [vmem:[%s3234 + $0x1d0] sm:$0xff]
      %v3294 = vld [vmem:[%s3234 + $0x1d8] sm:$0xff]
      %v3295 = vld [vmem:[%s3234 + $0x1e0] sm:$0xff]
      %v3296 = vld [vmem:[%s3234 + $0x1e8] sm:$0xff]
      %v3297 = vld [vmem:[%s3234 + $0x1f0] sm:$0xff]
      %v3298 = vld [vmem:[%s3234 + $0x1f8] sm:$0xff]
      %3299 = vmatpush.msra.mxu0 %v3250
      %3300 = vmatpush.msra.mxu0 %v3249
      %3301 = vmatpush.msra.mxu0 %v3248
      %3302 = vmatpush.msra.mxu0 %v3247
      %3303 = vmatpush.msra.mxu0 %v3246
      %3304 = vmatpush.msra.mxu0 %v3245
      %3305 = vmatpush.msra.mxu0 %v3244
      %3306 = vmatpush.msra.mxu0 %v3243
      %3307 = vmatpush.msra.mxu0 %v3242
      %3308 = vmatpush.msra.mxu0 %v3241
      %3309 = vmatpush.msra.mxu0 %v3240
      %3310 = vmatpush.msra.mxu0 %v3239
      %3311 = vmatpush.msra.mxu0 %v3238
      %3312 = vmatpush.msra.mxu0 %v3237
      %3313 = vmatpush.msra.mxu0 %v3236
      %3314 = vmatpush.msra.mxu0 %v3235
      %3315 = vmatmul.f32.gmra.mxu0 0.0
      %v3316 = vpop.f32.mrf.mxu0
      %v3317 = vadd.f32 0.0, %v3316
      %3318 = vmatmul.f32.gmra.mxu0 %v2973
      %v3319 = vpop.f32.mrf.mxu0
      %v3320 = vadd.f32 0.0, %v3319
      %3321 = vmatmul.f32.gmra.mxu0 %v2977
      %v3322 = vpop.f32.mrf.mxu0
      %v3323 = vadd.f32 0.0, %v3322
      %3324 = vmatmul.f32.gmra.mxu0 %v2981
      %v3325 = vpop.f32.mrf.mxu0
      %v3326 = vadd.f32 0.0, %v3325
      %3327 = vmatmul.f32.gmra.mxu0 %v2985
      %v3328 = vpop.f32.mrf.mxu0
      %v3329 = vadd.f32 0.0, %v3328
      %3330 = vmatmul.f32.gmra.mxu0 %v2989
      %v3331 = vpop.f32.mrf.mxu0
      %v3332 = vadd.f32 0.0, %v3331
      %3333 = vmatmul.f32.gmra.mxu0 %v2993
      %v3334 = vpop.f32.mrf.mxu0
      %v3335 = vadd.f32 0.0, %v3334
      %3336 = vmatmul.f32.gmra.mxu0 %v2997
      %v3337 = vpop.f32.mrf.mxu0
      %v3338 = vadd.f32 0.0, %v3337
      %3339 = vdwg.mxu0
      %3340 = vmatpush.msra.mxu0 %v3266
      %3341 = vmatpush.msra.mxu0 %v3265
      %3342 = vmatpush.msra.mxu0 %v3264
      %3343 = vmatpush.msra.mxu0 %v3263
      %3344 = vmatpush.msra.mxu0 %v3262
      %3345 = vmatpush.msra.mxu0 %v3261
      %3346 = vmatpush.msra.mxu0 %v3260
      %3347 = vmatpush.msra.mxu0 %v3259
      %3348 = vmatpush.msra.mxu0 %v3258
      %3349 = vmatpush.msra.mxu0 %v3257
      %3350 = vmatpush.msra.mxu0 %v3256
      %3351 = vmatpush.msra.mxu0 %v3255
      %3352 = vmatpush.msra.mxu0 %v3254
      %3353 = vmatpush.msra.mxu0 %v3253
      %3354 = vmatpush.msra.mxu0 %v3252
      %3355 = vmatpush.msra.mxu0 %v3251
      %3356 = vmatmul.f32.gmra.mxu0 0.0
      %v3357 = vpop.f32.mrf.mxu0
      %v3358 = vadd.f32 %v3317, %v3357
      %3359 = vmatmul.f32.gmra.mxu0 %v2974
      %v3360 = vpop.f32.mrf.mxu0
      %v3361 = vadd.f32 %v3320, %v3360
      %3362 = vmatmul.f32.gmra.mxu0 %v2978
      %v3363 = vpop.f32.mrf.mxu0
      %v3364 = vadd.f32 %v3323, %v3363
      %3365 = vmatmul.f32.gmra.mxu0 %v2982
      %v3366 = vpop.f32.mrf.mxu0
      %v3367 = vadd.f32 %v3326, %v3366
      %3368 = vmatmul.f32.gmra.mxu0 %v2986
      %v3369 = vpop.f32.mrf.mxu0
      %v3370 = vadd.f32 %v3329, %v3369
      %3371 = vmatmul.f32.gmra.mxu0 %v2990
      %v3372 = vpop.f32.mrf.mxu0
      %v3373 = vadd.f32 %v3332, %v3372
      %3374 = vmatmul.f32.gmra.mxu0 %v2994
      %v3375 = vpop.f32.mrf.mxu0
      %v3376 = vadd.f32 %v3335, %v3375
      %3377 = vmatmul.f32.gmra.mxu0 %v2998
      %v3378 = vpop.f32.mrf.mxu0
      %v3379 = vadd.f32 %v3338, %v3378
      %3380 = vdwg.mxu0
      %3381 = vmatpush.msra.mxu0 %v3282
      %3382 = vmatpush.msra.mxu0 %v3281
      %3383 = vmatpush.msra.mxu0 %v3280
      %3384 = vmatpush.msra.mxu0 %v3279
      %3385 = vmatpush.msra.mxu0 %v3278
      %3386 = vmatpush.msra.mxu0 %v3277
      %3387 = vmatpush.msra.mxu0 %v3276
      %3388 = vmatpush.msra.mxu0 %v3275
      %3389 = vmatpush.msra.mxu0 %v3274
      %3390 = vmatpush.msra.mxu0 %v3273
      %3391 = vmatpush.msra.mxu0 %v3272
      %3392 = vmatpush.msra.mxu0 %v3271
      %3393 = vmatpush.msra.mxu0 %v3270
      %3394 = vmatpush.msra.mxu0 %v3269
      %3395 = vmatpush.msra.mxu0 %v3268
      %3396 = vmatpush.msra.mxu0 %v3267
      %3397 = vmatmul.f32.gmra.mxu0 0.0
      %v3398 = vpop.f32.mrf.mxu0
      %v3399 = vadd.f32 %v3358, %v3398
      %3400 = vmatmul.f32.gmra.mxu0 %v2975
      %v3401 = vpop.f32.mrf.mxu0
      %v3402 = vadd.f32 %v3361, %v3401
      %3403 = vmatmul.f32.gmra.mxu0 %v2979
      %v3404 = vpop.f32.mrf.mxu0
      %v3405 = vadd.f32 %v3364, %v3404
      %3406 = vmatmul.f32.gmra.mxu0 %v2983
      %v3407 = vpop.f32.mrf.mxu0
      %v3408 = vadd.f32 %v3367, %v3407
      %3409 = vmatmul.f32.gmra.mxu0 %v2987
      %v3410 = vpop.f32.mrf.mxu0
      %v3411 = vadd.f32 %v3370, %v3410
      %3412 = vmatmul.f32.gmra.mxu0 %v2991
      %v3413 = vpop.f32.mrf.mxu0
      %v3414 = vadd.f32 %v3373, %v3413
      %3415 = vmatmul.f32.gmra.mxu0 %v2995
      %v3416 = vpop.f32.mrf.mxu0
      %v3417 = vadd.f32 %v3376, %v3416
      %3418 = vmatmul.f32.gmra.mxu0 %v2999
      %v3419 = vpop.f32.mrf.mxu0
      %v3420 = vadd.f32 %v3379, %v3419
      %3421 = vdwg.mxu0
      %3422 = vmatpush.msra.mxu0 %v3298
      %3423 = vmatpush.msra.mxu0 %v3297
      %3424 = vmatpush.msra.mxu0 %v3296
      %3425 = vmatpush.msra.mxu0 %v3295
      %3426 = vmatpush.msra.mxu0 %v3294
      %3427 = vmatpush.msra.mxu0 %v3293
      %3428 = vmatpush.msra.mxu0 %v3292
      %3429 = vmatpush.msra.mxu0 %v3291
      %3430 = vmatpush.msra.mxu0 %v3290
      %3431 = vmatpush.msra.mxu0 %v3289
      %3432 = vmatpush.msra.mxu0 %v3288
      %3433 = vmatpush.msra.mxu0 %v3287
      %3434 = vmatpush.msra.mxu0 %v3286
      %3435 = vmatpush.msra.mxu0 %v3285
      %3436 = vmatpush.msra.mxu0 %v3284
      %3437 = vmatpush.msra.mxu0 %v3283
      %3438 = vmatmul.f32.gmra.mxu0 0.0
      %v3439 = vpop.f32.mrf.mxu0
      %v3440 = vadd.f32 %v3399, %v3439
      %3441 = vmatmul.f32.gmra.mxu0 %v2976
      %v3442 = vpop.f32.mrf.mxu0
      %v3443 = vadd.f32 %v3402, %v3442
      %3444 = vmatmul.f32.gmra.mxu0 %v2980
      %v3445 = vpop.f32.mrf.mxu0
      %v3446 = vadd.f32 %v3405, %v3445
      %3447 = vmatmul.f32.gmra.mxu0 %v2984
      %v3448 = vpop.f32.mrf.mxu0
      %v3449 = vadd.f32 %v3408, %v3448
      %3450 = vmatmul.f32.gmra.mxu0 %v2988
      %v3451 = vpop.f32.mrf.mxu0
      %v3452 = vadd.f32 %v3411, %v3451
      %3453 = vmatmul.f32.gmra.mxu0 %v2992
      %v3454 = vpop.f32.mrf.mxu0
      %v3455 = vadd.f32 %v3414, %v3454
      %3456 = vmatmul.f32.gmra.mxu0 %v2996
      %v3457 = vpop.f32.mrf.mxu0
      %v3458 = vadd.f32 %v3417, %v3457
      %3459 = vmatmul.f32.gmra.mxu0 %v3000
      %v3460 = vpop.f32.mrf.mxu0
      %v3461 = vadd.f32 %v3420, %v3460
      %3462 = vdwg.mxu0
      %3463 = vmatpush.msra.mxu0 %v3185
      %3464 = vmatpush.msra.mxu0 %v3184
      %3465 = vmatpush.msra.mxu0 %v3183
      %3466 = vmatpush.msra.mxu0 %v3182
      %3467 = vmatpush.msra.mxu0 %v3181
      %3468 = vmatpush.msra.mxu0 %v3180
      %3469 = vmatpush.msra.mxu0 %v3179
      %3470 = vmatpush.msra.mxu0 %v3178
      %3471 = vmatpush.msra.mxu0 %v3177
      %3472 = vmatpush.msra.mxu0 %v3176
      %3473 = vmatpush.msra.mxu0 %v3175
      %3474 = vmatpush.msra.mxu0 %v3174
      %3475 = vmatpush.msra.mxu0 %v3173
      %3476 = vmatpush.msra.mxu0 %v3172
      %3477 = vmatpush.msra.mxu0 %v3171
      %3478 = vmatpush.msra.mxu0 %v3170
      %3479 = vmatmul.f32.gmra.mxu0 0.0
      %v3480 = vpop.f32.mrf.mxu0
      %v3481 = vadd.f32 %v3440, %v3480
      %3482 = vmatmul.f32.gmra.mxu0 %v3142
      %v3483 = vpop.f32.mrf.mxu0
      %v3484 = vadd.f32 %v3443, %v3483
      %3485 = vmatmul.f32.gmra.mxu0 %v3146
      %v3486 = vpop.f32.mrf.mxu0
      %v3487 = vadd.f32 %v3446, %v3486
      %3488 = vmatmul.f32.gmra.mxu0 %v3150
      %v3489 = vpop.f32.mrf.mxu0
      %v3490 = vadd.f32 %v3449, %v3489
      %3491 = vmatmul.f32.gmra.mxu0 %v3154
      %v3492 = vpop.f32.mrf.mxu0
      %v3493 = vadd.f32 %v3452, %v3492
      %3494 = vmatmul.f32.gmra.mxu0 %v3158
      %v3495 = vpop.f32.mrf.mxu0
      %v3496 = vadd.f32 %v3455, %v3495
      %3497 = vmatmul.f32.gmra.mxu0 %v3162
      %v3498 = vpop.f32.mrf.mxu0
      %v3499 = vadd.f32 %v3458, %v3498
      %3500 = vmatmul.f32.gmra.mxu0 %v3166
      %v3501 = vpop.f32.mrf.mxu0
      %v3502 = vadd.f32 %v3461, %v3501
      %3503 = vdwg.mxu0
      %3504 = vmatpush.msra.mxu0 %v3201
      %3505 = vmatpush.msra.mxu0 %v3200
      %3506 = vmatpush.msra.mxu0 %v3199
      %3507 = vmatpush.msra.mxu0 %v3198
      %3508 = vmatpush.msra.mxu0 %v3197
      %3509 = vmatpush.msra.mxu0 %v3196
      %3510 = vmatpush.msra.mxu0 %v3195
      %3511 = vmatpush.msra.mxu0 %v3194
      %3512 = vmatpush.msra.mxu0 %v3193
      %3513 = vmatpush.msra.mxu0 %v3192
      %3514 = vmatpush.msra.mxu0 %v3191
      %3515 = vmatpush.msra.mxu0 %v3190
      %3516 = vmatpush.msra.mxu0 %v3189
      %3517 = vmatpush.msra.mxu0 %v3188
      %3518 = vmatpush.msra.mxu0 %v3187
      %3519 = vmatpush.msra.mxu0 %v3186
      %3520 = vmatmul.f32.gmra.mxu0 0.0
      %v3521 = vpop.f32.mrf.mxu0
      %v3522 = vadd.f32 %v3481, %v3521
      %3523 = vmatmul.f32.gmra.mxu0 %v3143
      %v3524 = vpop.f32.mrf.mxu0
      %v3525 = vadd.f32 %v3484, %v3524
      %3526 = vmatmul.f32.gmra.mxu0 %v3147
      %v3527 = vpop.f32.mrf.mxu0
      %v3528 = vadd.f32 %v3487, %v3527
      %3529 = vmatmul.f32.gmra.mxu0 %v3151
      %v3530 = vpop.f32.mrf.mxu0
      %v3531 = vadd.f32 %v3490, %v3530
      %3532 = vmatmul.f32.gmra.mxu0 %v3155
      %v3533 = vpop.f32.mrf.mxu0
      %v3534 = vadd.f32 %v3493, %v3533
      %3535 = vmatmul.f32.gmra.mxu0 %v3159
      %v3536 = vpop.f32.mrf.mxu0
      %v3537 = vadd.f32 %v3496, %v3536
      %3538 = vmatmul.f32.gmra.mxu0 %v3163
      %v3539 = vpop.f32.mrf.mxu0
      %v3540 = vadd.f32 %v3499, %v3539
      %3541 = vmatmul.f32.gmra.mxu0 %v3167
      %v3542 = vpop.f32.mrf.mxu0
      %v3543 = vadd.f32 %v3502, %v3542
      %3544 = vdwg.mxu0
      %3545 = vmatpush.msra.mxu0 %v3217
      %3546 = vmatpush.msra.mxu0 %v3216
      %3547 = vmatpush.msra.mxu0 %v3215
      %3548 = vmatpush.msra.mxu0 %v3214
      %3549 = vmatpush.msra.mxu0 %v3213
      %3550 = vmatpush.msra.mxu0 %v3212
      %3551 = vmatpush.msra.mxu0 %v3211
      %3552 = vmatpush.msra.mxu0 %v3210
      %3553 = vmatpush.msra.mxu0 %v3209
      %3554 = vmatpush.msra.mxu0 %v3208
      %3555 = vmatpush.msra.mxu0 %v3207
      %3556 = vmatpush.msra.mxu0 %v3206
      %3557 = vmatpush.msra.mxu0 %v3205
      %3558 = vmatpush.msra.mxu0 %v3204
      %3559 = vmatpush.msra.mxu0 %v3203
      %3560 = vmatpush.msra.mxu0 %v3202
      %3561 = vmatmul.f32.gmra.mxu0 0.0
      %v3562 = vpop.f32.mrf.mxu0
      %v3563 = vadd.f32 %v3522, %v3562
      %3564 = vmatmul.f32.gmra.mxu0 %v3144
      %v3565 = vpop.f32.mrf.mxu0
      %v3566 = vadd.f32 %v3525, %v3565
      %3567 = vmatmul.f32.gmra.mxu0 %v3148
      %v3568 = vpop.f32.mrf.mxu0
      %v3569 = vadd.f32 %v3528, %v3568
      %3570 = vmatmul.f32.gmra.mxu0 %v3152
      %v3571 = vpop.f32.mrf.mxu0
      %v3572 = vadd.f32 %v3531, %v3571
      %3573 = vmatmul.f32.gmra.mxu0 %v3156
      %v3574 = vpop.f32.mrf.mxu0
      %v3575 = vadd.f32 %v3534, %v3574
      %3576 = vmatmul.f32.gmra.mxu0 %v3160
      %v3577 = vpop.f32.mrf.mxu0
      %v3578 = vadd.f32 %v3537, %v3577
      %3579 = vmatmul.f32.gmra.mxu0 %v3164
      %v3580 = vpop.f32.mrf.mxu0
      %v3581 = vadd.f32 %v3540, %v3580
      %3582 = vmatmul.f32.gmra.mxu0 %v3168
      %v3583 = vpop.f32.mrf.mxu0
      %v3584 = vadd.f32 %v3543, %v3583
      %3585 = vdwg.mxu0
      %3586 = vmatpush.msra.mxu0 %v3233
      %3587 = vmatpush.msra.mxu0 %v3232
      %3588 = vmatpush.msra.mxu0 %v3231
      %3589 = vmatpush.msra.mxu0 %v3230
      %3590 = vmatpush.msra.mxu0 %v3229
      %3591 = vmatpush.msra.mxu0 %v3228
      %3592 = vmatpush.msra.mxu0 %v3227
      %3593 = vmatpush.msra.mxu0 %v3226
      %3594 = vmatpush.msra.mxu0 %v3225
      %3595 = vmatpush.msra.mxu0 %v3224
      %3596 = vmatpush.msra.mxu0 %v3223
      %3597 = vmatpush.msra.mxu0 %v3222
      %3598 = vmatpush.msra.mxu0 %v3221
      %3599 = vmatpush.msra.mxu0 %v3220
      %3600 = vmatpush.msra.mxu0 %v3219
      %3601 = vmatpush.msra.mxu0 %v3218
      %3602 = vmatmul.f32.gmra.mxu0 0.0
      %v3603 = vpop.f32.mrf.mxu0
      %v3604 = vadd.f32 %v3563, %v3603
      %3605 = vmatmul.f32.gmra.mxu0 %v3145
      %v3606 = vpop.f32.mrf.mxu0
      %v3607 = vadd.f32 %v3566, %v3606
      %3608 = vmatmul.f32.gmra.mxu0 %v3149
      %v3609 = vpop.f32.mrf.mxu0
      %v3610 = vadd.f32 %v3569, %v3609
      %3611 = vmatmul.f32.gmra.mxu0 %v3153
      %v3612 = vpop.f32.mrf.mxu0
      %v3613 = vadd.f32 %v3572, %v3612
      %3614 = vmatmul.f32.gmra.mxu0 %v3157
      %v3615 = vpop.f32.mrf.mxu0
      %v3616 = vadd.f32 %v3575, %v3615
      %3617 = vmatmul.f32.gmra.mxu0 %v3161
      %v3618 = vpop.f32.mrf.mxu0
      %v3619 = vadd.f32 %v3578, %v3618
      %3620 = vmatmul.f32.gmra.mxu0 %v3165
      %v3621 = vpop.f32.mrf.mxu0
      %v3622 = vadd.f32 %v3581, %v3621
      %3623 = vmatmul.f32.gmra.mxu0 %v3169
      %v3624 = vpop.f32.mrf.mxu0
      %v3625 = vadd.f32 %v3584, %v3624
      %3626 = vdwg.mxu0
      %v3631 = vrot.slane %v2973, 1
      %v3632 = vrot.slane %v2974, 1
      %v3633 = vrot.slane %v2975, 1
      %v3634 = vrot.slane %v2976, 1
      %v3635 = vrot.slane %v2977, 1
      %v3636 = vsel %vm299, %v3631, %v3635
      %v3637 = vrot.slane %v2978, 1
      %v3638 = vsel %vm299, %v3632, %v3637
      %v3639 = vrot.slane %v2979, 1
      %v3640 = vsel %vm299, %v3633, %v3639
      %v3641 = vrot.slane %v2980, 1
      %v3642 = vsel %vm299, %v3634, %v3641
      %v3643 = vrot.slane %v2981, 1
      %v3644 = vsel %vm299, %v3635, %v3643
      %v3645 = vrot.slane %v2982, 1
      %v3646 = vsel %vm299, %v3637, %v3645
      %v3647 = vrot.slane %v2983, 1
      %v3648 = vsel %vm299, %v3639, %v3647
      %v3649 = vrot.slane %v2984, 1
      %v3650 = vsel %vm299, %v3641, %v3649
      %v3651 = vrot.slane %v2985, 1
      %v3652 = vsel %vm299, %v3643, %v3651
      %v3653 = vrot.slane %v2986, 1
      %v3654 = vsel %vm299, %v3645, %v3653
      %v3655 = vrot.slane %v2987, 1
      %v3656 = vsel %vm299, %v3647, %v3655
      %v3657 = vrot.slane %v2988, 1
      %v3658 = vsel %vm299, %v3649, %v3657
      %v3659 = vrot.slane %v2989, 1
      %v3660 = vsel %vm299, %v3651, %v3659
      %v3661 = vrot.slane %v2990, 1
      %v3662 = vsel %vm299, %v3653, %v3661
      %v3663 = vrot.slane %v2991, 1
      %v3664 = vsel %vm299, %v3655, %v3663
      %v3665 = vrot.slane %v2992, 1
      %v3666 = vsel %vm299, %v3657, %v3665
      %v3667 = vrot.slane %v2993, 1
      %v3668 = vsel %vm299, %v3659, %v3667
      %v3669 = vrot.slane %v2994, 1
      %v3670 = vsel %vm299, %v3661, %v3669
      %v3671 = vrot.slane %v2995, 1
      %v3672 = vsel %vm299, %v3663, %v3671
      %v3673 = vrot.slane %v2996, 1
      %v3674 = vsel %vm299, %v3665, %v3673
      %v3675 = vrot.slane %v2997, 1
      %v3676 = vsel %vm299, %v3667, %v3675
      %v3677 = vrot.slane %v2998, 1
      %v3678 = vsel %vm299, %v3669, %v3677
      %v3679 = vrot.slane %v2999, 1
      %v3680 = vsel %vm299, %v3671, %v3679
      %v3681 = vrot.slane %v3000, 1
      %v3682 = vsel %vm299, %v3673, %v3681
      %v3683 = vrot.slane %v3001, 1
      %v3684 = vsel %vm299, %v3675, %v3683
      %v3685 = vrot.slane %v3002, 1
      %v3686 = vsel %vm299, %v3677, %v3685
      %v3687 = vrot.slane %v3003, 1
      %v3688 = vsel %vm299, %v3679, %v3687
      %v3689 = vrot.slane %v3004, 1
      %v3690 = vsel %vm299, %v3681, %v3689
      %v3723 = vsel %vm299, 0.0, %v3631
      %v3724 = vsel %vm299, 0.0, %v3632
      %v3725 = vsel %vm299, 0.0, %v3633
      %v3726 = vsel %vm299, 0.0, %v3634
      %v3727 = vsel %vm445, %v3723, 0.0
      %v3728 = vsel %vm445, %v3724, 0.0
      %v3729 = vsel %vm445, %v3725, 0.0
      %v3730 = vsel %vm445, %v3726, 0.0
      %v3731 = vsel %vm446, %v3636, 0.0
      %v3732 = vsel %vm446, %v3638, 0.0
      %v3733 = vsel %vm446, %v3640, 0.0
      %v3734 = vsel %vm446, %v3642, 0.0
      %v3735 = vsel %vm447, %v3644, 0.0
      %v3736 = vsel %vm447, %v3646, 0.0
      %v3737 = vsel %vm447, %v3648, 0.0
      %v3738 = vsel %vm447, %v3650, 0.0
      %v3739 = vsel %vm448, %v3652, 0.0
      %v3740 = vsel %vm448, %v3654, 0.0
      %v3741 = vsel %vm448, %v3656, 0.0
      %v3742 = vsel %vm448, %v3658, 0.0
      %v3743 = vsel %vm449, %v3660, 0.0
      %v3744 = vsel %vm449, %v3662, 0.0
      %v3745 = vsel %vm449, %v3664, 0.0
      %v3746 = vsel %vm449, %v3666, 0.0
      %v3747 = vsel %vm450, %v3668, 0.0
      %v3748 = vsel %vm450, %v3670, 0.0
      %v3749 = vsel %vm450, %v3672, 0.0
      %v3750 = vsel %vm450, %v3674, 0.0
      %v3751 = vsel %vm451, %v3676, 0.0
      %v3752 = vsel %vm451, %v3678, 0.0
      %v3753 = vsel %vm451, %v3680, 0.0
      %v3754 = vsel %vm451, %v3682, 0.0
      %v3755 = vsel %vm452, %v3684, 0.0
      %v3756 = vsel %vm452, %v3686, 0.0
      %v3757 = vsel %vm452, %v3688, 0.0
      %v3758 = vsel %vm452, %v3690, 0.0
      %s3759 = scalar_lea.vmem %s5, 1024
      %v3760 = vld [vmem:[%s3759] sm:$0xff]
      %v3761 = vld [vmem:[%s3759 + $0x8] sm:$0xff]
      %v3762 = vld [vmem:[%s3759 + $0x10] sm:$0xff]
      %v3763 = vld [vmem:[%s3759 + $0x18] sm:$0xff]
      %v3764 = vld [vmem:[%s3759 + $0x20] sm:$0xff]
      %v3765 = vld [vmem:[%s3759 + $0x28] sm:$0xff]
      %v3766 = vld [vmem:[%s3759 + $0x30] sm:$0xff]
      %v3767 = vld [vmem:[%s3759 + $0x38] sm:$0xff]
      %v3768 = vld [vmem:[%s3759 + $0x40] sm:$0xff]
      %v3769 = vld [vmem:[%s3759 + $0x48] sm:$0xff]
      %v3770 = vld [vmem:[%s3759 + $0x50] sm:$0xff]
      %v3771 = vld [vmem:[%s3759 + $0x58] sm:$0xff]
      %v3772 = vld [vmem:[%s3759 + $0x60] sm:$0xff]
      %v3773 = vld [vmem:[%s3759 + $0x68] sm:$0xff]
      %v3774 = vld [vmem:[%s3759 + $0x70] sm:$0xff]
      %v3775 = vld [vmem:[%s3759 + $0x78] sm:$0xff]
      %v3776 = vld [vmem:[%s3759 + $0x80] sm:$0xff]
      %v3777 = vld [vmem:[%s3759 + $0x88] sm:$0xff]
      %v3778 = vld [vmem:[%s3759 + $0x90] sm:$0xff]
      %v3779 = vld [vmem:[%s3759 + $0x98] sm:$0xff]
      %v3780 = vld [vmem:[%s3759 + $0xa0] sm:$0xff]
      %v3781 = vld [vmem:[%s3759 + $0xa8] sm:$0xff]
      %v3782 = vld [vmem:[%s3759 + $0xb0] sm:$0xff]
      %v3783 = vld [vmem:[%s3759 + $0xb8] sm:$0xff]
      %v3784 = vld [vmem:[%s3759 + $0xc0] sm:$0xff]
      %v3785 = vld [vmem:[%s3759 + $0xc8] sm:$0xff]
      %v3786 = vld [vmem:[%s3759 + $0xd0] sm:$0xff]
      %v3787 = vld [vmem:[%s3759 + $0xd8] sm:$0xff]
      %v3788 = vld [vmem:[%s3759 + $0xe0] sm:$0xff]
      %v3789 = vld [vmem:[%s3759 + $0xe8] sm:$0xff]
      %v3790 = vld [vmem:[%s3759 + $0xf0] sm:$0xff]
      %v3791 = vld [vmem:[%s3759 + $0xf8] sm:$0xff]
      %v3792 = vld [vmem:[%s3759 + $0x100] sm:$0xff]
      %v3793 = vld [vmem:[%s3759 + $0x108] sm:$0xff]
      %v3794 = vld [vmem:[%s3759 + $0x110] sm:$0xff]
      %v3795 = vld [vmem:[%s3759 + $0x118] sm:$0xff]
      %v3796 = vld [vmem:[%s3759 + $0x120] sm:$0xff]
      %v3797 = vld [vmem:[%s3759 + $0x128] sm:$0xff]
      %v3798 = vld [vmem:[%s3759 + $0x130] sm:$0xff]
      %v3799 = vld [vmem:[%s3759 + $0x138] sm:$0xff]
      %v3800 = vld [vmem:[%s3759 + $0x140] sm:$0xff]
      %v3801 = vld [vmem:[%s3759 + $0x148] sm:$0xff]
      %v3802 = vld [vmem:[%s3759 + $0x150] sm:$0xff]
      %v3803 = vld [vmem:[%s3759 + $0x158] sm:$0xff]
      %v3804 = vld [vmem:[%s3759 + $0x160] sm:$0xff]
      %v3805 = vld [vmem:[%s3759 + $0x168] sm:$0xff]
      %v3806 = vld [vmem:[%s3759 + $0x170] sm:$0xff]
      %v3807 = vld [vmem:[%s3759 + $0x178] sm:$0xff]
      %v3808 = vld [vmem:[%s3759 + $0x180] sm:$0xff]
      %v3809 = vld [vmem:[%s3759 + $0x188] sm:$0xff]
      %v3810 = vld [vmem:[%s3759 + $0x190] sm:$0xff]
      %v3811 = vld [vmem:[%s3759 + $0x198] sm:$0xff]
      %v3812 = vld [vmem:[%s3759 + $0x1a0] sm:$0xff]
      %v3813 = vld [vmem:[%s3759 + $0x1a8] sm:$0xff]
      %v3814 = vld [vmem:[%s3759 + $0x1b0] sm:$0xff]
      %v3815 = vld [vmem:[%s3759 + $0x1b8] sm:$0xff]
      %v3816 = vld [vmem:[%s3759 + $0x1c0] sm:$0xff]
      %v3817 = vld [vmem:[%s3759 + $0x1c8] sm:$0xff]
      %v3818 = vld [vmem:[%s3759 + $0x1d0] sm:$0xff]
      %v3819 = vld [vmem:[%s3759 + $0x1d8] sm:$0xff]
      %v3820 = vld [vmem:[%s3759 + $0x1e0] sm:$0xff]
      %v3821 = vld [vmem:[%s3759 + $0x1e8] sm:$0xff]
      %v3822 = vld [vmem:[%s3759 + $0x1f0] sm:$0xff]
      %v3823 = vld [vmem:[%s3759 + $0x1f8] sm:$0xff]
      %3824 = vmatpush.msra.mxu0 %v3775
      %3825 = vmatpush.msra.mxu0 %v3774
      %3826 = vmatpush.msra.mxu0 %v3773
      %3827 = vmatpush.msra.mxu0 %v3772
      %3828 = vmatpush.msra.mxu0 %v3771
      %3829 = vmatpush.msra.mxu0 %v3770
      %3830 = vmatpush.msra.mxu0 %v3769
      %3831 = vmatpush.msra.mxu0 %v3768
      %3832 = vmatpush.msra.mxu0 %v3767
      %3833 = vmatpush.msra.mxu0 %v3766
      %3834 = vmatpush.msra.mxu0 %v3765
      %3835 = vmatpush.msra.mxu0 %v3764
      %3836 = vmatpush.msra.mxu0 %v3763
      %3837 = vmatpush.msra.mxu0 %v3762
      %3838 = vmatpush.msra.mxu0 %v3761
      %3839 = vmatpush.msra.mxu0 %v3760
      %3840 = vmatmul.f32.gmra.mxu0 %v3727
      %v3841 = vpop.f32.mrf.mxu0
      %v3842 = vadd.f32 0.0, %v3841
      %3843 = vmatmul.f32.gmra.mxu0 %v3731
      %v3844 = vpop.f32.mrf.mxu0
      %v3845 = vadd.f32 0.0, %v3844
      %3846 = vmatmul.f32.gmra.mxu0 %v3735
      %v3847 = vpop.f32.mrf.mxu0
      %v3848 = vadd.f32 0.0, %v3847
      %3849 = vmatmul.f32.gmra.mxu0 %v3739
      %v3850 = vpop.f32.mrf.mxu0
      %v3851 = vadd.f32 0.0, %v3850
      %3852 = vmatmul.f32.gmra.mxu0 %v3743
      %v3853 = vpop.f32.mrf.mxu0
      %v3854 = vadd.f32 0.0, %v3853
      %3855 = vmatmul.f32.gmra.mxu0 %v3747
      %v3856 = vpop.f32.mrf.mxu0
      %v3857 = vadd.f32 0.0, %v3856
      %3858 = vmatmul.f32.gmra.mxu0 %v3751
      %v3859 = vpop.f32.mrf.mxu0
      %v3860 = vadd.f32 0.0, %v3859
      %3861 = vmatmul.f32.gmra.mxu0 %v3755
      %v3862 = vpop.f32.mrf.mxu0
      %v3863 = vadd.f32 0.0, %v3862
      %3864 = vdwg.mxu0
      %3865 = vmatpush.msra.mxu0 %v3791
      %3866 = vmatpush.msra.mxu0 %v3790
      %3867 = vmatpush.msra.mxu0 %v3789
      %3868 = vmatpush.msra.mxu0 %v3788
      %3869 = vmatpush.msra.mxu0 %v3787
      %3870 = vmatpush.msra.mxu0 %v3786
      %3871 = vmatpush.msra.mxu0 %v3785
      %3872 = vmatpush.msra.mxu0 %v3784
      %3873 = vmatpush.msra.mxu0 %v3783
      %3874 = vmatpush.msra.mxu0 %v3782
      %3875 = vmatpush.msra.mxu0 %v3781
      %3876 = vmatpush.msra.mxu0 %v3780
      %3877 = vmatpush.msra.mxu0 %v3779
      %3878 = vmatpush.msra.mxu0 %v3778
      %3879 = vmatpush.msra.mxu0 %v3777
      %3880 = vmatpush.msra.mxu0 %v3776
      %3881 = vmatmul.f32.gmra.mxu0 %v3728
      %v3882 = vpop.f32.mrf.mxu0
      %v3883 = vadd.f32 %v3842, %v3882
      %3884 = vmatmul.f32.gmra.mxu0 %v3732
      %v3885 = vpop.f32.mrf.mxu0
      %v3886 = vadd.f32 %v3845, %v3885
      %3887 = vmatmul.f32.gmra.mxu0 %v3736
      %v3888 = vpop.f32.mrf.mxu0
      %v3889 = vadd.f32 %v3848, %v3888
      %3890 = vmatmul.f32.gmra.mxu0 %v3740
      %v3891 = vpop.f32.mrf.mxu0
      %v3892 = vadd.f32 %v3851, %v3891
      %3893 = vmatmul.f32.gmra.mxu0 %v3744
      %v3894 = vpop.f32.mrf.mxu0
      %v3895 = vadd.f32 %v3854, %v3894
      %3896 = vmatmul.f32.gmra.mxu0 %v3748
      %v3897 = vpop.f32.mrf.mxu0
      %v3898 = vadd.f32 %v3857, %v3897
      %3899 = vmatmul.f32.gmra.mxu0 %v3752
      %v3900 = vpop.f32.mrf.mxu0
      %v3901 = vadd.f32 %v3860, %v3900
      %3902 = vmatmul.f32.gmra.mxu0 %v3756
      %v3903 = vpop.f32.mrf.mxu0
      %v3904 = vadd.f32 %v3863, %v3903
      %3905 = vdwg.mxu0
      %3906 = vmatpush.msra.mxu0 %v3807
      %3907 = vmatpush.msra.mxu0 %v3806
      %3908 = vmatpush.msra.mxu0 %v3805
      %3909 = vmatpush.msra.mxu0 %v3804
      %3910 = vmatpush.msra.mxu0 %v3803
      %3911 = vmatpush.msra.mxu0 %v3802
      %3912 = vmatpush.msra.mxu0 %v3801
      %3913 = vmatpush.msra.mxu0 %v3800
      %3914 = vmatpush.msra.mxu0 %v3799
      %3915 = vmatpush.msra.mxu0 %v3798
      %3916 = vmatpush.msra.mxu0 %v3797
      %3917 = vmatpush.msra.mxu0 %v3796
      %3918 = vmatpush.msra.mxu0 %v3795
      %3919 = vmatpush.msra.mxu0 %v3794
      %3920 = vmatpush.msra.mxu0 %v3793
      %3921 = vmatpush.msra.mxu0 %v3792
      %3922 = vmatmul.f32.gmra.mxu0 %v3729
      %v3923 = vpop.f32.mrf.mxu0
      %v3924 = vadd.f32 %v3883, %v3923
      %3925 = vmatmul.f32.gmra.mxu0 %v3733
      %v3926 = vpop.f32.mrf.mxu0
      %v3927 = vadd.f32 %v3886, %v3926
      %3928 = vmatmul.f32.gmra.mxu0 %v3737
      %v3929 = vpop.f32.mrf.mxu0
      %v3930 = vadd.f32 %v3889, %v3929
      %3931 = vmatmul.f32.gmra.mxu0 %v3741
      %v3932 = vpop.f32.mrf.mxu0
      %v3933 = vadd.f32 %v3892, %v3932
      %3934 = vmatmul.f32.gmra.mxu0 %v3745
      %v3935 = vpop.f32.mrf.mxu0
      %v3936 = vadd.f32 %v3895, %v3935
      %3937 = vmatmul.f32.gmra.mxu0 %v3749
      %v3938 = vpop.f32.mrf.mxu0
      %v3939 = vadd.f32 %v3898, %v3938
      %3940 = vmatmul.f32.gmra.mxu0 %v3753
      %v3941 = vpop.f32.mrf.mxu0
      %v3942 = vadd.f32 %v3901, %v3941
      %3943 = vmatmul.f32.gmra.mxu0 %v3757
      %v3944 = vpop.f32.mrf.mxu0
      %v3945 = vadd.f32 %v3904, %v3944
      %3946 = vdwg.mxu0
      %3947 = vmatpush.msra.mxu0 %v3823
      %3948 = vmatpush.msra.mxu0 %v3822
      %3949 = vmatpush.msra.mxu0 %v3821
      %3950 = vmatpush.msra.mxu0 %v3820
      %3951 = vmatpush.msra.mxu0 %v3819
      %3952 = vmatpush.msra.mxu0 %v3818
      %3953 = vmatpush.msra.mxu0 %v3817
      %3954 = vmatpush.msra.mxu0 %v3816
      %3955 = vmatpush.msra.mxu0 %v3815
      %3956 = vmatpush.msra.mxu0 %v3814
      %3957 = vmatpush.msra.mxu0 %v3813
      %3958 = vmatpush.msra.mxu0 %v3812
      %3959 = vmatpush.msra.mxu0 %v3811
      %3960 = vmatpush.msra.mxu0 %v3810
      %3961 = vmatpush.msra.mxu0 %v3809
      %3962 = vmatpush.msra.mxu0 %v3808
      %3963 = vmatmul.f32.gmra.mxu0 %v3730
      %v3964 = vpop.f32.mrf.mxu0
      %v3965 = vadd.f32 %v3924, %v3964
      %3966 = vmatmul.f32.gmra.mxu0 %v3734
      %v3967 = vpop.f32.mrf.mxu0
      %v3968 = vadd.f32 %v3927, %v3967
      %3969 = vmatmul.f32.gmra.mxu0 %v3738
      %v3970 = vpop.f32.mrf.mxu0
      %v3971 = vadd.f32 %v3930, %v3970
      %3972 = vmatmul.f32.gmra.mxu0 %v3742
      %v3973 = vpop.f32.mrf.mxu0
      %v3974 = vadd.f32 %v3933, %v3973
      %3975 = vmatmul.f32.gmra.mxu0 %v3746
      %v3976 = vpop.f32.mrf.mxu0
      %v3977 = vadd.f32 %v3936, %v3976
      %3978 = vmatmul.f32.gmra.mxu0 %v3750
      %v3979 = vpop.f32.mrf.mxu0
      %v3980 = vadd.f32 %v3939, %v3979
      %3981 = vmatmul.f32.gmra.mxu0 %v3754
      %v3982 = vpop.f32.mrf.mxu0
      %v3983 = vadd.f32 %v3942, %v3982
      %3984 = vmatmul.f32.gmra.mxu0 %v3758
      %v3985 = vpop.f32.mrf.mxu0
      %v3986 = vadd.f32 %v3945, %v3985
      %3987 = vdwg.mxu0
      %v3988 = vadd.f32 %v3604, %v3965
      %v3989 = vadd.f32 %v3607, %v3968
      %v3990 = vadd.f32 %v3610, %v3971
      %v3991 = vadd.f32 %v3613, %v3974
      %v3992 = vadd.f32 %v3616, %v3977
      %v3993 = vadd.f32 %v3619, %v3980
      %v3994 = vadd.f32 %v3622, %v3983
      %v3995 = vadd.f32 %v3625, %v3986
      %v3996 = vrot.slane %v3001, 7
      %v3997 = vsel %vm3033, %v3078, %v3996
      %v3998 = vrot.slane %v3002, 7
      %v3999 = vsel %vm3033, %v3080, %v3998
      %v4000 = vrot.slane %v3003, 7
      %v4001 = vsel %vm3033, %v3082, %v4000
      %v4002 = vrot.slane %v3004, 7
      %v4003 = vsel %vm3033, %v3084, %v4002
      %v4008 = vsel %vm3134, %v3114, 0.0
      %v4009 = vsel %vm3134, %v3115, 0.0
      %v4010 = vsel %vm3134, %v3116, 0.0
      %v4011 = vsel %vm3134, %v3117, 0.0
      %v4012 = vsel %vm3135, %v3039, 0.0
      %v4013 = vsel %vm3135, %v3041, 0.0
      %v4014 = vsel %vm3135, %v3043, 0.0
      %v4015 = vsel %vm3135, %v3045, 0.0
      %v4016 = vsel %vm3136, %v3047, 0.0
      %v4017 = vsel %vm3136, %v3049, 0.0
      %v4018 = vsel %vm3136, %v3051, 0.0
      %v4019 = vsel %vm3136, %v3053, 0.0
      %v4020 = vsel %vm3137, %v3055, 0.0
      %v4021 = vsel %vm3137, %v3057, 0.0
      %v4022 = vsel %vm3137, %v3059, 0.0
      %v4023 = vsel %vm3137, %v3061, 0.0
      %v4024 = vsel %vm3138, %v3063, 0.0
      %v4025 = vsel %vm3138, %v3065, 0.0
      %v4026 = vsel %vm3138, %v3067, 0.0
      %v4027 = vsel %vm3138, %v3069, 0.0
      %v4028 = vsel %vm3139, %v3071, 0.0
      %v4029 = vsel %vm3139, %v3073, 0.0
      %v4030 = vsel %vm3139, %v3075, 0.0
      %v4031 = vsel %vm3139, %v3077, 0.0
      %v4032 = vsel %vm3140, %v3079, 0.0
      %v4033 = vsel %vm3140, %v3081, 0.0
      %v4034 = vsel %vm3140, %v3083, 0.0
      %v4035 = vsel %vm3140, %v3085, 0.0
      %v4036 = vsel %vm3141, %v3997, 0.0
      %v4037 = vsel %vm3141, %v3999, 0.0
      %v4038 = vsel %vm3141, %v4001, 0.0
      %v4039 = vsel %vm3141, %v4003, 0.0
      %s4040 = scalar_lea.vmem %s5, 1536
      %v4041 = vld [vmem:[%s4040] sm:$0xff]
      %v4042 = vld [vmem:[%s4040 + $0x8] sm:$0xff]
      %v4043 = vld [vmem:[%s4040 + $0x10] sm:$0xff]
      %v4044 = vld [vmem:[%s4040 + $0x18] sm:$0xff]
      %v4045 = vld [vmem:[%s4040 + $0x20] sm:$0xff]
      %v4046 = vld [vmem:[%s4040 + $0x28] sm:$0xff]
      %v4047 = vld [vmem:[%s4040 + $0x30] sm:$0xff]
      %v4048 = vld [vmem:[%s4040 + $0x38] sm:$0xff]
      %v4049 = vld [vmem:[%s4040 + $0x40] sm:$0xff]
      %v4050 = vld [vmem:[%s4040 + $0x48] sm:$0xff]
      %v4051 = vld [vmem:[%s4040 + $0x50] sm:$0xff]
      %v4052 = vld [vmem:[%s4040 + $0x58] sm:$0xff]
      %v4053 = vld [vmem:[%s4040 + $0x60] sm:$0xff]
      %v4054 = vld [vmem:[%s4040 + $0x68] sm:$0xff]
      %v4055 = vld [vmem:[%s4040 + $0x70] sm:$0xff]
      %v4056 = vld [vmem:[%s4040 + $0x78] sm:$0xff]
      %v4057 = vld [vmem:[%s4040 + $0x80] sm:$0xff]
      %v4058 = vld [vmem:[%s4040 + $0x88] sm:$0xff]
      %v4059 = vld [vmem:[%s4040 + $0x90] sm:$0xff]
      %v4060 = vld [vmem:[%s4040 + $0x98] sm:$0xff]
      %v4061 = vld [vmem:[%s4040 + $0xa0] sm:$0xff]
      %v4062 = vld [vmem:[%s4040 + $0xa8] sm:$0xff]
      %v4063 = vld [vmem:[%s4040 + $0xb0] sm:$0xff]
      %v4064 = vld [vmem:[%s4040 + $0xb8] sm:$0xff]
      %v4065 = vld [vmem:[%s4040 + $0xc0] sm:$0xff]
      %v4066 = vld [vmem:[%s4040 + $0xc8] sm:$0xff]
      %v4067 = vld [vmem:[%s4040 + $0xd0] sm:$0xff]
      %v4068 = vld [vmem:[%s4040 + $0xd8] sm:$0xff]
      %v4069 = vld [vmem:[%s4040 + $0xe0] sm:$0xff]
      %v4070 = vld [vmem:[%s4040 + $0xe8] sm:$0xff]
      %v4071 = vld [vmem:[%s4040 + $0xf0] sm:$0xff]
      %v4072 = vld [vmem:[%s4040 + $0xf8] sm:$0xff]
      %v4073 = vld [vmem:[%s4040 + $0x100] sm:$0xff]
      %v4074 = vld [vmem:[%s4040 + $0x108] sm:$0xff]
      %v4075 = vld [vmem:[%s4040 + $0x110] sm:$0xff]
      %v4076 = vld [vmem:[%s4040 + $0x118] sm:$0xff]
      %v4077 = vld [vmem:[%s4040 + $0x120] sm:$0xff]
      %v4078 = vld [vmem:[%s4040 + $0x128] sm:$0xff]
      %v4079 = vld [vmem:[%s4040 + $0x130] sm:$0xff]
      %v4080 = vld [vmem:[%s4040 + $0x138] sm:$0xff]
      %v4081 = vld [vmem:[%s4040 + $0x140] sm:$0xff]
      %v4082 = vld [vmem:[%s4040 + $0x148] sm:$0xff]
      %v4083 = vld [vmem:[%s4040 + $0x150] sm:$0xff]
      %v4084 = vld [vmem:[%s4040 + $0x158] sm:$0xff]
      %v4085 = vld [vmem:[%s4040 + $0x160] sm:$0xff]
      %v4086 = vld [vmem:[%s4040 + $0x168] sm:$0xff]
      %v4087 = vld [vmem:[%s4040 + $0x170] sm:$0xff]
      %v4088 = vld [vmem:[%s4040 + $0x178] sm:$0xff]
      %v4089 = vld [vmem:[%s4040 + $0x180] sm:$0xff]
      %v4090 = vld [vmem:[%s4040 + $0x188] sm:$0xff]
      %v4091 = vld [vmem:[%s4040 + $0x190] sm:$0xff]
      %v4092 = vld [vmem:[%s4040 + $0x198] sm:$0xff]
      %v4093 = vld [vmem:[%s4040 + $0x1a0] sm:$0xff]
      %v4094 = vld [vmem:[%s4040 + $0x1a8] sm:$0xff]
      %v4095 = vld [vmem:[%s4040 + $0x1b0] sm:$0xff]
      %v4096 = vld [vmem:[%s4040 + $0x1b8] sm:$0xff]
      %v4097 = vld [vmem:[%s4040 + $0x1c0] sm:$0xff]
      %v4098 = vld [vmem:[%s4040 + $0x1c8] sm:$0xff]
      %v4099 = vld [vmem:[%s4040 + $0x1d0] sm:$0xff]
      %v4100 = vld [vmem:[%s4040 + $0x1d8] sm:$0xff]
      %v4101 = vld [vmem:[%s4040 + $0x1e0] sm:$0xff]
      %v4102 = vld [vmem:[%s4040 + $0x1e8] sm:$0xff]
      %v4103 = vld [vmem:[%s4040 + $0x1f0] sm:$0xff]
      %v4104 = vld [vmem:[%s4040 + $0x1f8] sm:$0xff]
      %4105 = vmatpush.msra.mxu0 %v4056
      %4106 = vmatpush.msra.mxu0 %v4055
      %4107 = vmatpush.msra.mxu0 %v4054
      %4108 = vmatpush.msra.mxu0 %v4053
      %4109 = vmatpush.msra.mxu0 %v4052
      %4110 = vmatpush.msra.mxu0 %v4051
      %4111 = vmatpush.msra.mxu0 %v4050
      %4112 = vmatpush.msra.mxu0 %v4049
      %4113 = vmatpush.msra.mxu0 %v4048
      %4114 = vmatpush.msra.mxu0 %v4047
      %4115 = vmatpush.msra.mxu0 %v4046
      %4116 = vmatpush.msra.mxu0 %v4045
      %4117 = vmatpush.msra.mxu0 %v4044
      %4118 = vmatpush.msra.mxu0 %v4043
      %4119 = vmatpush.msra.mxu0 %v4042
      %4120 = vmatpush.msra.mxu0 %v4041
      %4121 = vmatmul.f32.gmra.mxu0 %v4008
      %v4122 = vpop.f32.mrf.mxu0
      %v4123 = vadd.f32 0.0, %v4122
      %4124 = vmatmul.f32.gmra.mxu0 %v4012
      %v4125 = vpop.f32.mrf.mxu0
      %v4126 = vadd.f32 0.0, %v4125
      %4127 = vmatmul.f32.gmra.mxu0 %v4016
      %v4128 = vpop.f32.mrf.mxu0
      %v4129 = vadd.f32 0.0, %v4128
      %4130 = vmatmul.f32.gmra.mxu0 %v4020
      %v4131 = vpop.f32.mrf.mxu0
      %v4132 = vadd.f32 0.0, %v4131
      %4133 = vmatmul.f32.gmra.mxu0 %v4024
      %v4134 = vpop.f32.mrf.mxu0
      %v4135 = vadd.f32 0.0, %v4134
      %4136 = vmatmul.f32.gmra.mxu0 %v4028
      %v4137 = vpop.f32.mrf.mxu0
      %v4138 = vadd.f32 0.0, %v4137
      %4139 = vmatmul.f32.gmra.mxu0 %v4032
      %v4140 = vpop.f32.mrf.mxu0
      %v4141 = vadd.f32 0.0, %v4140
      %4142 = vmatmul.f32.gmra.mxu0 %v4036
      %v4143 = vpop.f32.mrf.mxu0
      %v4144 = vadd.f32 0.0, %v4143
      %4145 = vdwg.mxu0
      %4146 = vmatpush.msra.mxu0 %v4072
      %4147 = vmatpush.msra.mxu0 %v4071
      %4148 = vmatpush.msra.mxu0 %v4070
      %4149 = vmatpush.msra.mxu0 %v4069
      %4150 = vmatpush.msra.mxu0 %v4068
      %4151 = vmatpush.msra.mxu0 %v4067
      %4152 = vmatpush.msra.mxu0 %v4066
      %4153 = vmatpush.msra.mxu0 %v4065
      %4154 = vmatpush.msra.mxu0 %v4064
      %4155 = vmatpush.msra.mxu0 %v4063
      %4156 = vmatpush.msra.mxu0 %v4062
      %4157 = vmatpush.msra.mxu0 %v4061
      %4158 = vmatpush.msra.mxu0 %v4060
      %4159 = vmatpush.msra.mxu0 %v4059
      %4160 = vmatpush.msra.mxu0 %v4058
      %4161 = vmatpush.msra.mxu0 %v4057
      %4162 = vmatmul.f32.gmra.mxu0 %v4009
      %v4163 = vpop.f32.mrf.mxu0
      %v4164 = vadd.f32 %v4123, %v4163
      %4165 = vmatmul.f32.gmra.mxu0 %v4013
      %v4166 = vpop.f32.mrf.mxu0
      %v4167 = vadd.f32 %v4126, %v4166
      %4168 = vmatmul.f32.gmra.mxu0 %v4017
      %v4169 = vpop.f32.mrf.mxu0
      %v4170 = vadd.f32 %v4129, %v4169
      %4171 = vmatmul.f32.gmra.mxu0 %v4021
      %v4172 = vpop.f32.mrf.mxu0
      %v4173 = vadd.f32 %v4132, %v4172
      %4174 = vmatmul.f32.gmra.mxu0 %v4025
      %v4175 = vpop.f32.mrf.mxu0
      %v4176 = vadd.f32 %v4135, %v4175
      %4177 = vmatmul.f32.gmra.mxu0 %v4029
      %v4178 = vpop.f32.mrf.mxu0
      %v4179 = vadd.f32 %v4138, %v4178
      %4180 = vmatmul.f32.gmra.mxu0 %v4033
      %v4181 = vpop.f32.mrf.mxu0
      %v4182 = vadd.f32 %v4141, %v4181
      %4183 = vmatmul.f32.gmra.mxu0 %v4037
      %v4184 = vpop.f32.mrf.mxu0
      %v4185 = vadd.f32 %v4144, %v4184
      %4186 = vdwg.mxu0
      %4187 = vmatpush.msra.mxu0 %v4088
      %4188 = vmatpush.msra.mxu0 %v4087
      %4189 = vmatpush.msra.mxu0 %v4086
      %4190 = vmatpush.msra.mxu0 %v4085
      %4191 = vmatpush.msra.mxu0 %v4084
      %4192 = vmatpush.msra.mxu0 %v4083
      %4193 = vmatpush.msra.mxu0 %v4082
      %4194 = vmatpush.msra.mxu0 %v4081
      %4195 = vmatpush.msra.mxu0 %v4080
      %4196 = vmatpush.msra.mxu0 %v4079
      %4197 = vmatpush.msra.mxu0 %v4078
      %4198 = vmatpush.msra.mxu0 %v4077
      %4199 = vmatpush.msra.mxu0 %v4076
      %4200 = vmatpush.msra.mxu0 %v4075
      %4201 = vmatpush.msra.mxu0 %v4074
      %4202 = vmatpush.msra.mxu0 %v4073
      %4203 = vmatmul.f32.gmra.mxu0 %v4010
      %v4204 = vpop.f32.mrf.mxu0
      %v4205 = vadd.f32 %v4164, %v4204
      %4206 = vmatmul.f32.gmra.mxu0 %v4014
      %v4207 = vpop.f32.mrf.mxu0
      %v4208 = vadd.f32 %v4167, %v4207
      %4209 = vmatmul.f32.gmra.mxu0 %v4018
      %v4210 = vpop.f32.mrf.mxu0
      %v4211 = vadd.f32 %v4170, %v4210
      %4212 = vmatmul.f32.gmra.mxu0 %v4022
      %v4213 = vpop.f32.mrf.mxu0
      %v4214 = vadd.f32 %v4173, %v4213
      %4215 = vmatmul.f32.gmra.mxu0 %v4026
      %v4216 = vpop.f32.mrf.mxu0
      %v4217 = vadd.f32 %v4176, %v4216
      %4218 = vmatmul.f32.gmra.mxu0 %v4030
      %v4219 = vpop.f32.mrf.mxu0
      %v4220 = vadd.f32 %v4179, %v4219
      %4221 = vmatmul.f32.gmra.mxu0 %v4034
      %v4222 = vpop.f32.mrf.mxu0
      %v4223 = vadd.f32 %v4182, %v4222
      %4224 = vmatmul.f32.gmra.mxu0 %v4038
      %v4225 = vpop.f32.mrf.mxu0
      %v4226 = vadd.f32 %v4185, %v4225
      %4227 = vdwg.mxu0
      %4228 = vmatpush.msra.mxu0 %v4104
      %4229 = vmatpush.msra.mxu0 %v4103
      %4230 = vmatpush.msra.mxu0 %v4102
      %4231 = vmatpush.msra.mxu0 %v4101
      %4232 = vmatpush.msra.mxu0 %v4100
      %4233 = vmatpush.msra.mxu0 %v4099
      %4234 = vmatpush.msra.mxu0 %v4098
      %4235 = vmatpush.msra.mxu0 %v4097
      %4236 = vmatpush.msra.mxu0 %v4096
      %4237 = vmatpush.msra.mxu0 %v4095
      %4238 = vmatpush.msra.mxu0 %v4094
      %4239 = vmatpush.msra.mxu0 %v4093
      %4240 = vmatpush.msra.mxu0 %v4092
      %4241 = vmatpush.msra.mxu0 %v4091
      %4242 = vmatpush.msra.mxu0 %v4090
      %4243 = vmatpush.msra.mxu0 %v4089
      %4244 = vmatmul.f32.gmra.mxu0 %v4011
      %v4245 = vpop.f32.mrf.mxu0
      %v4246 = vadd.f32 %v4205, %v4245
      %4247 = vmatmul.f32.gmra.mxu0 %v4015
      %v4248 = vpop.f32.mrf.mxu0
      %v4249 = vadd.f32 %v4208, %v4248
      %4250 = vmatmul.f32.gmra.mxu0 %v4019
      %v4251 = vpop.f32.mrf.mxu0
      %v4252 = vadd.f32 %v4211, %v4251
      %4253 = vmatmul.f32.gmra.mxu0 %v4023
      %v4254 = vpop.f32.mrf.mxu0
      %v4255 = vadd.f32 %v4214, %v4254
      %4256 = vmatmul.f32.gmra.mxu0 %v4027
      %v4257 = vpop.f32.mrf.mxu0
      %v4258 = vadd.f32 %v4217, %v4257
      %4259 = vmatmul.f32.gmra.mxu0 %v4031
      %v4260 = vpop.f32.mrf.mxu0
      %v4261 = vadd.f32 %v4220, %v4260
      %4262 = vmatmul.f32.gmra.mxu0 %v4035
      %v4263 = vpop.f32.mrf.mxu0
      %v4264 = vadd.f32 %v4223, %v4263
      %4265 = vmatmul.f32.gmra.mxu0 %v4039
      %v4266 = vpop.f32.mrf.mxu0
      %v4267 = vadd.f32 %v4226, %v4266
      %4268 = vdwg.mxu0
      %v4269 = vadd.f32 %v3988, %v4246
      %v4270 = vadd.f32 %v3989, %v4249
      %v4271 = vadd.f32 %v3990, %v4252
      %v4272 = vadd.f32 %v3991, %v4255
      %v4273 = vadd.f32 %v3992, %v4258
      %v4274 = vadd.f32 %v3993, %v4261
      %v4275 = vadd.f32 %v3994, %v4264
      %v4276 = vadd.f32 %v3995, %v4267
      %s4277 = scalar_lea.vmem %s5, 2048
      %v4278 = vld [vmem:[%s4277] sm:$0xff]
      %v4279 = vld [vmem:[%s4277 + $0x8] sm:$0xff]
      %v4280 = vld [vmem:[%s4277 + $0x10] sm:$0xff]
      %v4281 = vld [vmem:[%s4277 + $0x18] sm:$0xff]
      %v4282 = vld [vmem:[%s4277 + $0x20] sm:$0xff]
      %v4283 = vld [vmem:[%s4277 + $0x28] sm:$0xff]
      %v4284 = vld [vmem:[%s4277 + $0x30] sm:$0xff]
      %v4285 = vld [vmem:[%s4277 + $0x38] sm:$0xff]
      %v4286 = vld [vmem:[%s4277 + $0x40] sm:$0xff]
      %v4287 = vld [vmem:[%s4277 + $0x48] sm:$0xff]
      %v4288 = vld [vmem:[%s4277 + $0x50] sm:$0xff]
      %v4289 = vld [vmem:[%s4277 + $0x58] sm:$0xff]
      %v4290 = vld [vmem:[%s4277 + $0x60] sm:$0xff]
      %v4291 = vld [vmem:[%s4277 + $0x68] sm:$0xff]
      %v4292 = vld [vmem:[%s4277 + $0x70] sm:$0xff]
      %v4293 = vld [vmem:[%s4277 + $0x78] sm:$0xff]
      %v4294 = vld [vmem:[%s4277 + $0x80] sm:$0xff]
      %v4295 = vld [vmem:[%s4277 + $0x88] sm:$0xff]
      %v4296 = vld [vmem:[%s4277 + $0x90] sm:$0xff]
      %v4297 = vld [vmem:[%s4277 + $0x98] sm:$0xff]
      %v4298 = vld [vmem:[%s4277 + $0xa0] sm:$0xff]
      %v4299 = vld [vmem:[%s4277 + $0xa8] sm:$0xff]
      %v4300 = vld [vmem:[%s4277 + $0xb0] sm:$0xff]
      %v4301 = vld [vmem:[%s4277 + $0xb8] sm:$0xff]
      %v4302 = vld [vmem:[%s4277 + $0xc0] sm:$0xff]
      %v4303 = vld [vmem:[%s4277 + $0xc8] sm:$0xff]
      %v4304 = vld [vmem:[%s4277 + $0xd0] sm:$0xff]
      %v4305 = vld [vmem:[%s4277 + $0xd8] sm:$0xff]
      %v4306 = vld [vmem:[%s4277 + $0xe0] sm:$0xff]
      %v4307 = vld [vmem:[%s4277 + $0xe8] sm:$0xff]
      %v4308 = vld [vmem:[%s4277 + $0xf0] sm:$0xff]
      %v4309 = vld [vmem:[%s4277 + $0xf8] sm:$0xff]
      %v4310 = vld [vmem:[%s4277 + $0x100] sm:$0xff]
      %v4311 = vld [vmem:[%s4277 + $0x108] sm:$0xff]
      %v4312 = vld [vmem:[%s4277 + $0x110] sm:$0xff]
      %v4313 = vld [vmem:[%s4277 + $0x118] sm:$0xff]
      %v4314 = vld [vmem:[%s4277 + $0x120] sm:$0xff]
      %v4315 = vld [vmem:[%s4277 + $0x128] sm:$0xff]
      %v4316 = vld [vmem:[%s4277 + $0x130] sm:$0xff]
      %v4317 = vld [vmem:[%s4277 + $0x138] sm:$0xff]
      %v4318 = vld [vmem:[%s4277 + $0x140] sm:$0xff]
      %v4319 = vld [vmem:[%s4277 + $0x148] sm:$0xff]
      %v4320 = vld [vmem:[%s4277 + $0x150] sm:$0xff]
      %v4321 = vld [vmem:[%s4277 + $0x158] sm:$0xff]
      %v4322 = vld [vmem:[%s4277 + $0x160] sm:$0xff]
      %v4323 = vld [vmem:[%s4277 + $0x168] sm:$0xff]
      %v4324 = vld [vmem:[%s4277 + $0x170] sm:$0xff]
      %v4325 = vld [vmem:[%s4277 + $0x178] sm:$0xff]
      %v4326 = vld [vmem:[%s4277 + $0x180] sm:$0xff]
      %v4327 = vld [vmem:[%s4277 + $0x188] sm:$0xff]
      %v4328 = vld [vmem:[%s4277 + $0x190] sm:$0xff]
      %v4329 = vld [vmem:[%s4277 + $0x198] sm:$0xff]
      %v4330 = vld [vmem:[%s4277 + $0x1a0] sm:$0xff]
      %v4331 = vld [vmem:[%s4277 + $0x1a8] sm:$0xff]
      %v4332 = vld [vmem:[%s4277 + $0x1b0] sm:$0xff]
      %v4333 = vld [vmem:[%s4277 + $0x1b8] sm:$0xff]
      %v4334 = vld [vmem:[%s4277 + $0x1c0] sm:$0xff]
      %v4335 = vld [vmem:[%s4277 + $0x1c8] sm:$0xff]
      %v4336 = vld [vmem:[%s4277 + $0x1d0] sm:$0xff]
      %v4337 = vld [vmem:[%s4277 + $0x1d8] sm:$0xff]
      %v4338 = vld [vmem:[%s4277 + $0x1e0] sm:$0xff]
      %v4339 = vld [vmem:[%s4277 + $0x1e8] sm:$0xff]
      %v4340 = vld [vmem:[%s4277 + $0x1f0] sm:$0xff]
      %v4341 = vld [vmem:[%s4277 + $0x1f8] sm:$0xff]
      %4342 = vmatpush.msra.mxu0 %v4293
      %4343 = vmatpush.msra.mxu0 %v4292
      %4344 = vmatpush.msra.mxu0 %v4291
      %4345 = vmatpush.msra.mxu0 %v4290
      %4346 = vmatpush.msra.mxu0 %v4289
      %4347 = vmatpush.msra.mxu0 %v4288
      %4348 = vmatpush.msra.mxu0 %v4287
      %4349 = vmatpush.msra.mxu0 %v4286
      %4350 = vmatpush.msra.mxu0 %v4285
      %4351 = vmatpush.msra.mxu0 %v4284
      %4352 = vmatpush.msra.mxu0 %v4283
      %4353 = vmatpush.msra.mxu0 %v4282
      %4354 = vmatpush.msra.mxu0 %v4281
      %4355 = vmatpush.msra.mxu0 %v4280
      %4356 = vmatpush.msra.mxu0 %v4279
      %4357 = vmatpush.msra.mxu0 %v4278
      %4358 = vmatmul.f32.gmra.mxu0 %v2973
      %v4359 = vpop.f32.mrf.mxu0
      %v4360 = vadd.f32 0.0, %v4359
      %4361 = vmatmul.f32.gmra.mxu0 %v2977
      %v4362 = vpop.f32.mrf.mxu0
      %v4363 = vadd.f32 0.0, %v4362
      %4364 = vmatmul.f32.gmra.mxu0 %v2981
      %v4365 = vpop.f32.mrf.mxu0
      %v4366 = vadd.f32 0.0, %v4365
      %4367 = vmatmul.f32.gmra.mxu0 %v2985
      %v4368 = vpop.f32.mrf.mxu0
      %v4369 = vadd.f32 0.0, %v4368
      %4370 = vmatmul.f32.gmra.mxu0 %v2989
      %v4371 = vpop.f32.mrf.mxu0
      %v4372 = vadd.f32 0.0, %v4371
      %4373 = vmatmul.f32.gmra.mxu0 %v2993
      %v4374 = vpop.f32.mrf.mxu0
      %v4375 = vadd.f32 0.0, %v4374
      %4376 = vmatmul.f32.gmra.mxu0 %v2997
      %v4377 = vpop.f32.mrf.mxu0
      %v4378 = vadd.f32 0.0, %v4377
      %4379 = vmatmul.f32.gmra.mxu0 %v3001
      %v4380 = vpop.f32.mrf.mxu0
      %v4381 = vadd.f32 0.0, %v4380
      %4382 = vdwg.mxu0
      %4383 = vmatpush.msra.mxu0 %v4309
      %4384 = vmatpush.msra.mxu0 %v4308
      %4385 = vmatpush.msra.mxu0 %v4307
      %4386 = vmatpush.msra.mxu0 %v4306
      %4387 = vmatpush.msra.mxu0 %v4305
      %4388 = vmatpush.msra.mxu0 %v4304
      %4389 = vmatpush.msra.mxu0 %v4303
      %4390 = vmatpush.msra.mxu0 %v4302
      %4391 = vmatpush.msra.mxu0 %v4301
      %4392 = vmatpush.msra.mxu0 %v4300
      %4393 = vmatpush.msra.mxu0 %v4299
      %4394 = vmatpush.msra.mxu0 %v4298
      %4395 = vmatpush.msra.mxu0 %v4297
      %4396 = vmatpush.msra.mxu0 %v4296
      %4397 = vmatpush.msra.mxu0 %v4295
      %4398 = vmatpush.msra.mxu0 %v4294
      %4399 = vmatmul.f32.gmra.mxu0 %v2974
      %v4400 = vpop.f32.mrf.mxu0
      %v4401 = vadd.f32 %v4360, %v4400
      %4402 = vmatmul.f32.gmra.mxu0 %v2978
      %v4403 = vpop.f32.mrf.mxu0
      %v4404 = vadd.f32 %v4363, %v4403
      %4405 = vmatmul.f32.gmra.mxu0 %v2982
      %v4406 = vpop.f32.mrf.mxu0
      %v4407 = vadd.f32 %v4366, %v4406
      %4408 = vmatmul.f32.gmra.mxu0 %v2986
      %v4409 = vpop.f32.mrf.mxu0
      %v4410 = vadd.f32 %v4369, %v4409
      %4411 = vmatmul.f32.gmra.mxu0 %v2990
      %v4412 = vpop.f32.mrf.mxu0
      %v4413 = vadd.f32 %v4372, %v4412
      %4414 = vmatmul.f32.gmra.mxu0 %v2994
      %v4415 = vpop.f32.mrf.mxu0
      %v4416 = vadd.f32 %v4375, %v4415
      %4417 = vmatmul.f32.gmra.mxu0 %v2998
      %v4418 = vpop.f32.mrf.mxu0
      %v4419 = vadd.f32 %v4378, %v4418
      %4420 = vmatmul.f32.gmra.mxu0 %v3002
      %v4421 = vpop.f32.mrf.mxu0
      %v4422 = vadd.f32 %v4381, %v4421
      %4423 = vdwg.mxu0
      %4424 = vmatpush.msra.mxu0 %v4325
      %4425 = vmatpush.msra.mxu0 %v4324
      %4426 = vmatpush.msra.mxu0 %v4323
      %4427 = vmatpush.msra.mxu0 %v4322
      %4428 = vmatpush.msra.mxu0 %v4321
      %4429 = vmatpush.msra.mxu0 %v4320
      %4430 = vmatpush.msra.mxu0 %v4319
      %4431 = vmatpush.msra.mxu0 %v4318
      %4432 = vmatpush.msra.mxu0 %v4317
      %4433 = vmatpush.msra.mxu0 %v4316
      %4434 = vmatpush.msra.mxu0 %v4315
      %4435 = vmatpush.msra.mxu0 %v4314
      %4436 = vmatpush.msra.mxu0 %v4313
      %4437 = vmatpush.msra.mxu0 %v4312
      %4438 = vmatpush.msra.mxu0 %v4311
      %4439 = vmatpush.msra.mxu0 %v4310
      %4440 = vmatmul.f32.gmra.mxu0 %v2975
      %v4441 = vpop.f32.mrf.mxu0
      %v4442 = vadd.f32 %v4401, %v4441
      %4443 = vmatmul.f32.gmra.mxu0 %v2979
      %v4444 = vpop.f32.mrf.mxu0
      %v4445 = vadd.f32 %v4404, %v4444
      %4446 = vmatmul.f32.gmra.mxu0 %v2983
      %v4447 = vpop.f32.mrf.mxu0
      %v4448 = vadd.f32 %v4407, %v4447
      %4449 = vmatmul.f32.gmra.mxu0 %v2987
      %v4450 = vpop.f32.mrf.mxu0
      %v4451 = vadd.f32 %v4410, %v4450
      %4452 = vmatmul.f32.gmra.mxu0 %v2991
      %v4453 = vpop.f32.mrf.mxu0
      %v4454 = vadd.f32 %v4413, %v4453
      %4455 = vmatmul.f32.gmra.mxu0 %v2995
      %v4456 = vpop.f32.mrf.mxu0
      %v4457 = vadd.f32 %v4416, %v4456
      %4458 = vmatmul.f32.gmra.mxu0 %v2999
      %v4459 = vpop.f32.mrf.mxu0
      %v4460 = vadd.f32 %v4419, %v4459
      %4461 = vmatmul.f32.gmra.mxu0 %v3003
      %v4462 = vpop.f32.mrf.mxu0
      %v4463 = vadd.f32 %v4422, %v4462
      %4464 = vdwg.mxu0
      %4465 = vmatpush.msra.mxu0 %v4341
      %4466 = vmatpush.msra.mxu0 %v4340
      %4467 = vmatpush.msra.mxu0 %v4339
      %4468 = vmatpush.msra.mxu0 %v4338
      %4469 = vmatpush.msra.mxu0 %v4337
      %4470 = vmatpush.msra.mxu0 %v4336
      %4471 = vmatpush.msra.mxu0 %v4335
      %4472 = vmatpush.msra.mxu0 %v4334
      %4473 = vmatpush.msra.mxu0 %v4333
      %4474 = vmatpush.msra.mxu0 %v4332
      %4475 = vmatpush.msra.mxu0 %v4331
      %4476 = vmatpush.msra.mxu0 %v4330
      %4477 = vmatpush.msra.mxu0 %v4329
      %4478 = vmatpush.msra.mxu0 %v4328
      %4479 = vmatpush.msra.mxu0 %v4327
      %4480 = vmatpush.msra.mxu0 %v4326
      %4481 = vmatmul.f32.gmra.mxu0 %v2976
      %v4482 = vpop.f32.mrf.mxu0
      %v4483 = vadd.f32 %v4442, %v4482
      %4484 = vmatmul.f32.gmra.mxu0 %v2980
      %v4485 = vpop.f32.mrf.mxu0
      %v4486 = vadd.f32 %v4445, %v4485
      %4487 = vmatmul.f32.gmra.mxu0 %v2984
      %v4488 = vpop.f32.mrf.mxu0
      %v4489 = vadd.f32 %v4448, %v4488
      %4490 = vmatmul.f32.gmra.mxu0 %v2988
      %v4491 = vpop.f32.mrf.mxu0
      %v4492 = vadd.f32 %v4451, %v4491
      %4493 = vmatmul.f32.gmra.mxu0 %v2992
      %v4494 = vpop.f32.mrf.mxu0
      %v4495 = vadd.f32 %v4454, %v4494
      %4496 = vmatmul.f32.gmra.mxu0 %v2996
      %v4497 = vpop.f32.mrf.mxu0
      %v4498 = vadd.f32 %v4457, %v4497
      %4499 = vmatmul.f32.gmra.mxu0 %v3000
      %v4500 = vpop.f32.mrf.mxu0
      %v4501 = vadd.f32 %v4460, %v4500
      %4502 = vmatmul.f32.gmra.mxu0 %v3004
      %v4503 = vpop.f32.mrf.mxu0
      %v4504 = vadd.f32 %v4463, %v4503
      %4505 = vdwg.mxu0
      %v4506 = vadd.f32 %v4269, %v4483
      %v4507 = vadd.f32 %v4270, %v4486
      %v4508 = vadd.f32 %v4271, %v4489
      %v4509 = vadd.f32 %v4272, %v4492
      %v4510 = vadd.f32 %v4273, %v4495
      %v4511 = vadd.f32 %v4274, %v4498
      %v4512 = vadd.f32 %v4275, %v4501
      %v4513 = vadd.f32 %v4276, %v4504
      %v4518 = vsel %vm299, %v3683, 0.0
      %v4519 = vsel %vm299, %v3685, 0.0
      %v4520 = vsel %vm299, %v3687, 0.0
      %v4521 = vsel %vm299, %v3689, 0.0
      %v4522 = vsel %vm445, %v3636, 0.0
      %v4523 = vsel %vm445, %v3638, 0.0
      %v4524 = vsel %vm445, %v3640, 0.0
      %v4525 = vsel %vm445, %v3642, 0.0
      %v4526 = vsel %vm446, %v3644, 0.0
      %v4527 = vsel %vm446, %v3646, 0.0
      %v4528 = vsel %vm446, %v3648, 0.0
      %v4529 = vsel %vm446, %v3650, 0.0
      %v4530 = vsel %vm447, %v3652, 0.0
      %v4531 = vsel %vm447, %v3654, 0.0
      %v4532 = vsel %vm447, %v3656, 0.0
      %v4533 = vsel %vm447, %v3658, 0.0
      %v4534 = vsel %vm448, %v3660, 0.0
      %v4535 = vsel %vm448, %v3662, 0.0
      %v4536 = vsel %vm448, %v3664, 0.0
      %v4537 = vsel %vm448, %v3666, 0.0
      %v4538 = vsel %vm449, %v3668, 0.0
      %v4539 = vsel %vm449, %v3670, 0.0
      %v4540 = vsel %vm449, %v3672, 0.0
      %v4541 = vsel %vm449, %v3674, 0.0
      %v4542 = vsel %vm450, %v3676, 0.0
      %v4543 = vsel %vm450, %v3678, 0.0
      %v4544 = vsel %vm450, %v3680, 0.0
      %v4545 = vsel %vm450, %v3682, 0.0
      %v4546 = vsel %vm451, %v3684, 0.0
      %v4547 = vsel %vm451, %v3686, 0.0
      %v4548 = vsel %vm451, %v3688, 0.0
      %v4549 = vsel %vm451, %v3690, 0.0
      %v4550 = vsel %vm452, %v4518, 0.0
      %v4551 = vsel %vm452, %v4519, 0.0
      %v4552 = vsel %vm452, %v4520, 0.0
      %v4553 = vsel %vm452, %v4521, 0.0
      %s4554 = scalar_lea.vmem %s5, 2560
      %v4555 = vld [vmem:[%s4554] sm:$0xff]
      %v4556 = vld [vmem:[%s4554 + $0x8] sm:$0xff]
      %v4557 = vld [vmem:[%s4554 + $0x10] sm:$0xff]
      %v4558 = vld [vmem:[%s4554 + $0x18] sm:$0xff]
      %v4559 = vld [vmem:[%s4554 + $0x20] sm:$0xff]
      %v4560 = vld [vmem:[%s4554 + $0x28] sm:$0xff]
      %v4561 = vld [vmem:[%s4554 + $0x30] sm:$0xff]
      %v4562 = vld [vmem:[%s4554 + $0x38] sm:$0xff]
      %v4563 = vld [vmem:[%s4554 + $0x40] sm:$0xff]
      %v4564 = vld [vmem:[%s4554 + $0x48] sm:$0xff]
      %v4565 = vld [vmem:[%s4554 + $0x50] sm:$0xff]
      %v4566 = vld [vmem:[%s4554 + $0x58] sm:$0xff]
      %v4567 = vld [vmem:[%s4554 + $0x60] sm:$0xff]
      %v4568 = vld [vmem:[%s4554 + $0x68] sm:$0xff]
      %v4569 = vld [vmem:[%s4554 + $0x70] sm:$0xff]
      %v4570 = vld [vmem:[%s4554 + $0x78] sm:$0xff]
      %v4571 = vld [vmem:[%s4554 + $0x80] sm:$0xff]
      %v4572 = vld [vmem:[%s4554 + $0x88] sm:$0xff]
      %v4573 = vld [vmem:[%s4554 + $0x90] sm:$0xff]
      %v4574 = vld [vmem:[%s4554 + $0x98] sm:$0xff]
      %v4575 = vld [vmem:[%s4554 + $0xa0] sm:$0xff]
      %v4576 = vld [vmem:[%s4554 + $0xa8] sm:$0xff]
      %v4577 = vld [vmem:[%s4554 + $0xb0] sm:$0xff]
      %v4578 = vld [vmem:[%s4554 + $0xb8] sm:$0xff]
      %v4579 = vld [vmem:[%s4554 + $0xc0] sm:$0xff]
      %v4580 = vld [vmem:[%s4554 + $0xc8] sm:$0xff]
      %v4581 = vld [vmem:[%s4554 + $0xd0] sm:$0xff]
      %v4582 = vld [vmem:[%s4554 + $0xd8] sm:$0xff]
      %v4583 = vld [vmem:[%s4554 + $0xe0] sm:$0xff]
      %v4584 = vld [vmem:[%s4554 + $0xe8] sm:$0xff]
      %v4585 = vld [vmem:[%s4554 + $0xf0] sm:$0xff]
      %v4586 = vld [vmem:[%s4554 + $0xf8] sm:$0xff]
      %v4587 = vld [vmem:[%s4554 + $0x100] sm:$0xff]
      %v4588 = vld [vmem:[%s4554 + $0x108] sm:$0xff]
      %v4589 = vld [vmem:[%s4554 + $0x110] sm:$0xff]
      %v4590 = vld [vmem:[%s4554 + $0x118] sm:$0xff]
      %v4591 = vld [vmem:[%s4554 + $0x120] sm:$0xff]
      %v4592 = vld [vmem:[%s4554 + $0x128] sm:$0xff]
      %v4593 = vld [vmem:[%s4554 + $0x130] sm:$0xff]
      %v4594 = vld [vmem:[%s4554 + $0x138] sm:$0xff]
      %v4595 = vld [vmem:[%s4554 + $0x140] sm:$0xff]
      %v4596 = vld [vmem:[%s4554 + $0x148] sm:$0xff]
      %v4597 = vld [vmem:[%s4554 + $0x150] sm:$0xff]
      %v4598 = vld [vmem:[%s4554 + $0x158] sm:$0xff]
      %v4599 = vld [vmem:[%s4554 + $0x160] sm:$0xff]
      %v4600 = vld [vmem:[%s4554 + $0x168] sm:$0xff]
      %v4601 = vld [vmem:[%s4554 + $0x170] sm:$0xff]
      %v4602 = vld [vmem:[%s4554 + $0x178] sm:$0xff]
      %v4603 = vld [vmem:[%s4554 + $0x180] sm:$0xff]
      %v4604 = vld [vmem:[%s4554 + $0x188] sm:$0xff]
      %v4605 = vld [vmem:[%s4554 + $0x190] sm:$0xff]
      %v4606 = vld [vmem:[%s4554 + $0x198] sm:$0xff]
      %v4607 = vld [vmem:[%s4554 + $0x1a0] sm:$0xff]
      %v4608 = vld [vmem:[%s4554 + $0x1a8] sm:$0xff]
      %v4609 = vld [vmem:[%s4554 + $0x1b0] sm:$0xff]
      %v4610 = vld [vmem:[%s4554 + $0x1b8] sm:$0xff]
      %v4611 = vld [vmem:[%s4554 + $0x1c0] sm:$0xff]
      %v4612 = vld [vmem:[%s4554 + $0x1c8] sm:$0xff]
      %v4613 = vld [vmem:[%s4554 + $0x1d0] sm:$0xff]
      %v4614 = vld [vmem:[%s4554 + $0x1d8] sm:$0xff]
      %v4615 = vld [vmem:[%s4554 + $0x1e0] sm:$0xff]
      %v4616 = vld [vmem:[%s4554 + $0x1e8] sm:$0xff]
      %v4617 = vld [vmem:[%s4554 + $0x1f0] sm:$0xff]
      %v4618 = vld [vmem:[%s4554 + $0x1f8] sm:$0xff]
      %4619 = vmatpush.msra.mxu0 %v4570
      %4620 = vmatpush.msra.mxu0 %v4569
      %4621 = vmatpush.msra.mxu0 %v4568
      %4622 = vmatpush.msra.mxu0 %v4567
      %4623 = vmatpush.msra.mxu0 %v4566
      %4624 = vmatpush.msra.mxu0 %v4565
      %4625 = vmatpush.msra.mxu0 %v4564
      %4626 = vmatpush.msra.mxu0 %v4563
      %4627 = vmatpush.msra.mxu0 %v4562
      %4628 = vmatpush.msra.mxu0 %v4561
      %4629 = vmatpush.msra.mxu0 %v4560
      %4630 = vmatpush.msra.mxu0 %v4559
      %4631 = vmatpush.msra.mxu0 %v4558
      %4632 = vmatpush.msra.mxu0 %v4557
      %4633 = vmatpush.msra.mxu0 %v4556
      %4634 = vmatpush.msra.mxu0 %v4555
      %4635 = vmatmul.f32.gmra.mxu0 %v4522
      %v4636 = vpop.f32.mrf.mxu0
      %v4637 = vadd.f32 0.0, %v4636
      %4638 = vmatmul.f32.gmra.mxu0 %v4526
      %v4639 = vpop.f32.mrf.mxu0
      %v4640 = vadd.f32 0.0, %v4639
      %4641 = vmatmul.f32.gmra.mxu0 %v4530
      %v4642 = vpop.f32.mrf.mxu0
      %v4643 = vadd.f32 0.0, %v4642
      %4644 = vmatmul.f32.gmra.mxu0 %v4534
      %v4645 = vpop.f32.mrf.mxu0
      %v4646 = vadd.f32 0.0, %v4645
      %4647 = vmatmul.f32.gmra.mxu0 %v4538
      %v4648 = vpop.f32.mrf.mxu0
      %v4649 = vadd.f32 0.0, %v4648
      %4650 = vmatmul.f32.gmra.mxu0 %v4542
      %v4651 = vpop.f32.mrf.mxu0
      %v4652 = vadd.f32 0.0, %v4651
      %4653 = vmatmul.f32.gmra.mxu0 %v4546
      %v4654 = vpop.f32.mrf.mxu0
      %v4655 = vadd.f32 0.0, %v4654
      %4656 = vmatmul.f32.gmra.mxu0 %v4550
      %v4657 = vpop.f32.mrf.mxu0
      %v4658 = vadd.f32 0.0, %v4657
      %4659 = vdwg.mxu0
      %4660 = vmatpush.msra.mxu0 %v4586
      %4661 = vmatpush.msra.mxu0 %v4585
      %4662 = vmatpush.msra.mxu0 %v4584
      %4663 = vmatpush.msra.mxu0 %v4583
      %4664 = vmatpush.msra.mxu0 %v4582
      %4665 = vmatpush.msra.mxu0 %v4581
      %4666 = vmatpush.msra.mxu0 %v4580
      %4667 = vmatpush.msra.mxu0 %v4579
      %4668 = vmatpush.msra.mxu0 %v4578
      %4669 = vmatpush.msra.mxu0 %v4577
      %4670 = vmatpush.msra.mxu0 %v4576
      %4671 = vmatpush.msra.mxu0 %v4575
      %4672 = vmatpush.msra.mxu0 %v4574
      %4673 = vmatpush.msra.mxu0 %v4573
      %4674 = vmatpush.msra.mxu0 %v4572
      %4675 = vmatpush.msra.mxu0 %v4571
      %4676 = vmatmul.f32.gmra.mxu0 %v4523
      %v4677 = vpop.f32.mrf.mxu0
      %v4678 = vadd.f32 %v4637, %v4677
      %4679 = vmatmul.f32.gmra.mxu0 %v4527
      %v4680 = vpop.f32.mrf.mxu0
      %v4681 = vadd.f32 %v4640, %v4680
      %4682 = vmatmul.f32.gmra.mxu0 %v4531
      %v4683 = vpop.f32.mrf.mxu0
      %v4684 = vadd.f32 %v4643, %v4683
      %4685 = vmatmul.f32.gmra.mxu0 %v4535
      %v4686 = vpop.f32.mrf.mxu0
      %v4687 = vadd.f32 %v4646, %v4686
      %4688 = vmatmul.f32.gmra.mxu0 %v4539
      %v4689 = vpop.f32.mrf.mxu0
      %v4690 = vadd.f32 %v4649, %v4689
      %4691 = vmatmul.f32.gmra.mxu0 %v4543
      %v4692 = vpop.f32.mrf.mxu0
      %v4693 = vadd.f32 %v4652, %v4692
      %4694 = vmatmul.f32.gmra.mxu0 %v4547
      %v4695 = vpop.f32.mrf.mxu0
      %v4696 = vadd.f32 %v4655, %v4695
      %4697 = vmatmul.f32.gmra.mxu0 %v4551
      %v4698 = vpop.f32.mrf.mxu0
      %v4699 = vadd.f32 %v4658, %v4698
      %4700 = vdwg.mxu0
      %4701 = vmatpush.msra.mxu0 %v4602
      %4702 = vmatpush.msra.mxu0 %v4601
      %4703 = vmatpush.msra.mxu0 %v4600
      %4704 = vmatpush.msra.mxu0 %v4599
      %4705 = vmatpush.msra.mxu0 %v4598
      %4706 = vmatpush.msra.mxu0 %v4597
      %4707 = vmatpush.msra.mxu0 %v4596
      %4708 = vmatpush.msra.mxu0 %v4595
      %4709 = vmatpush.msra.mxu0 %v4594
      %4710 = vmatpush.msra.mxu0 %v4593
      %4711 = vmatpush.msra.mxu0 %v4592
      %4712 = vmatpush.msra.mxu0 %v4591
      %4713 = vmatpush.msra.mxu0 %v4590
      %4714 = vmatpush.msra.mxu0 %v4589
      %4715 = vmatpush.msra.mxu0 %v4588
      %4716 = vmatpush.msra.mxu0 %v4587
      %4717 = vmatmul.f32.gmra.mxu0 %v4524
      %v4718 = vpop.f32.mrf.mxu0
      %v4719 = vadd.f32 %v4678, %v4718
      %4720 = vmatmul.f32.gmra.mxu0 %v4528
      %v4721 = vpop.f32.mrf.mxu0
      %v4722 = vadd.f32 %v4681, %v4721
      %4723 = vmatmul.f32.gmra.mxu0 %v4532
      %v4724 = vpop.f32.mrf.mxu0
      %v4725 = vadd.f32 %v4684, %v4724
      %4726 = vmatmul.f32.gmra.mxu0 %v4536
      %v4727 = vpop.f32.mrf.mxu0
      %v4728 = vadd.f32 %v4687, %v4727
      %4729 = vmatmul.f32.gmra.mxu0 %v4540
      %v4730 = vpop.f32.mrf.mxu0
      %v4731 = vadd.f32 %v4690, %v4730
      %4732 = vmatmul.f32.gmra.mxu0 %v4544
      %v4733 = vpop.f32.mrf.mxu0
      %v4734 = vadd.f32 %v4693, %v4733
      %4735 = vmatmul.f32.gmra.mxu0 %v4548
      %v4736 = vpop.f32.mrf.mxu0
      %v4737 = vadd.f32 %v4696, %v4736
      %4738 = vmatmul.f32.gmra.mxu0 %v4552
      %v4739 = vpop.f32.mrf.mxu0
      %v4740 = vadd.f32 %v4699, %v4739
      %4741 = vdwg.mxu0
      %4742 = vmatpush.msra.mxu0 %v4618
      %4743 = vmatpush.msra.mxu0 %v4617
      %4744 = vmatpush.msra.mxu0 %v4616
      %4745 = vmatpush.msra.mxu0 %v4615
      %4746 = vmatpush.msra.mxu0 %v4614
      %4747 = vmatpush.msra.mxu0 %v4613
      %4748 = vmatpush.msra.mxu0 %v4612
      %4749 = vmatpush.msra.mxu0 %v4611
      %4750 = vmatpush.msra.mxu0 %v4610
      %4751 = vmatpush.msra.mxu0 %v4609
      %4752 = vmatpush.msra.mxu0 %v4608
      %4753 = vmatpush.msra.mxu0 %v4607
      %4754 = vmatpush.msra.mxu0 %v4606
      %4755 = vmatpush.msra.mxu0 %v4605
      %4756 = vmatpush.msra.mxu0 %v4604
      %4757 = vmatpush.msra.mxu0 %v4603
      %4758 = vmatmul.f32.gmra.mxu0 %v4525
      %v4759 = vpop.f32.mrf.mxu0
      %v4760 = vadd.f32 %v4719, %v4759
      %4761 = vmatmul.f32.gmra.mxu0 %v4529
      %v4762 = vpop.f32.mrf.mxu0
      %v4763 = vadd.f32 %v4722, %v4762
      %4764 = vmatmul.f32.gmra.mxu0 %v4533
      %v4765 = vpop.f32.mrf.mxu0
      %v4766 = vadd.f32 %v4725, %v4765
      %4767 = vmatmul.f32.gmra.mxu0 %v4537
      %v4768 = vpop.f32.mrf.mxu0
      %v4769 = vadd.f32 %v4728, %v4768
      %4770 = vmatmul.f32.gmra.mxu0 %v4541
      %v4771 = vpop.f32.mrf.mxu0
      %v4772 = vadd.f32 %v4731, %v4771
      %4773 = vmatmul.f32.gmra.mxu0 %v4545
      %v4774 = vpop.f32.mrf.mxu0
      %v4775 = vadd.f32 %v4734, %v4774
      %4776 = vmatmul.f32.gmra.mxu0 %v4549
      %v4777 = vpop.f32.mrf.mxu0
      %v4778 = vadd.f32 %v4737, %v4777
      %4779 = vmatmul.f32.gmra.mxu0 %v4553
      %v4780 = vpop.f32.mrf.mxu0
      %v4781 = vadd.f32 %v4740, %v4780
      %4782 = vdwg.mxu0
      %v4783 = vadd.f32 %v4506, %v4760
      %v4784 = vadd.f32 %v4507, %v4763
      %v4785 = vadd.f32 %v4508, %v4766
      %v4786 = vadd.f32 %v4509, %v4769
      %v4787 = vadd.f32 %v4510, %v4772
      %v4788 = vadd.f32 %v4511, %v4775
      %v4789 = vadd.f32 %v4512, %v4778
      %v4790 = vadd.f32 %v4513, %v4781
      %v4795 = vsel %vm3033, %v3996, 0.0
      %v4796 = vsel %vm3033, %v3998, 0.0
      %v4797 = vsel %vm3033, %v4000, 0.0
      %v4798 = vsel %vm3033, %v4002, 0.0
      %v4799 = vsel %vm3134, %v3039, 0.0
      %v4800 = vsel %vm3134, %v3041, 0.0
      %v4801 = vsel %vm3134, %v3043, 0.0
      %v4802 = vsel %vm3134, %v3045, 0.0
      %v4803 = vsel %vm3135, %v3047, 0.0
      %v4804 = vsel %vm3135, %v3049, 0.0
      %v4805 = vsel %vm3135, %v3051, 0.0
      %v4806 = vsel %vm3135, %v3053, 0.0
      %v4807 = vsel %vm3136, %v3055, 0.0
      %v4808 = vsel %vm3136, %v3057, 0.0
      %v4809 = vsel %vm3136, %v3059, 0.0
      %v4810 = vsel %vm3136, %v3061, 0.0
      %v4811 = vsel %vm3137, %v3063, 0.0
      %v4812 = vsel %vm3137, %v3065, 0.0
      %v4813 = vsel %vm3137, %v3067, 0.0
      %v4814 = vsel %vm3137, %v3069, 0.0
      %v4815 = vsel %vm3138, %v3071, 0.0
      %v4816 = vsel %vm3138, %v3073, 0.0
      %v4817 = vsel %vm3138, %v3075, 0.0
      %v4818 = vsel %vm3138, %v3077, 0.0
      %v4819 = vsel %vm3139, %v3079, 0.0
      %v4820 = vsel %vm3139, %v3081, 0.0
      %v4821 = vsel %vm3139, %v3083, 0.0
      %v4822 = vsel %vm3139, %v3085, 0.0
      %v4823 = vsel %vm3140, %v3997, 0.0
      %v4824 = vsel %vm3140, %v3999, 0.0
      %v4825 = vsel %vm3140, %v4001, 0.0
      %v4826 = vsel %vm3140, %v4003, 0.0
      %v4827 = vsel %vm3141, %v4795, 0.0
      %v4828 = vsel %vm3141, %v4796, 0.0
      %v4829 = vsel %vm3141, %v4797, 0.0
      %v4830 = vsel %vm3141, %v4798, 0.0
      %s4831 = scalar_lea.vmem %s5, 3072
      %v4832 = vld [vmem:[%s4831] sm:$0xff]
      %v4833 = vld [vmem:[%s4831 + $0x8] sm:$0xff]
      %v4834 = vld [vmem:[%s4831 + $0x10] sm:$0xff]
      %v4835 = vld [vmem:[%s4831 + $0x18] sm:$0xff]
      %v4836 = vld [vmem:[%s4831 + $0x20] sm:$0xff]
      %v4837 = vld [vmem:[%s4831 + $0x28] sm:$0xff]
      %v4838 = vld [vmem:[%s4831 + $0x30] sm:$0xff]
      %v4839 = vld [vmem:[%s4831 + $0x38] sm:$0xff]
      %v4840 = vld [vmem:[%s4831 + $0x40] sm:$0xff]
      %v4841 = vld [vmem:[%s4831 + $0x48] sm:$0xff]
      %v4842 = vld [vmem:[%s4831 + $0x50] sm:$0xff]
      %v4843 = vld [vmem:[%s4831 + $0x58] sm:$0xff]
      %v4844 = vld [vmem:[%s4831 + $0x60] sm:$0xff]
      %v4845 = vld [vmem:[%s4831 + $0x68] sm:$0xff]
      %v4846 = vld [vmem:[%s4831 + $0x70] sm:$0xff]
      %v4847 = vld [vmem:[%s4831 + $0x78] sm:$0xff]
      %v4848 = vld [vmem:[%s4831 + $0x80] sm:$0xff]
      %v4849 = vld [vmem:[%s4831 + $0x88] sm:$0xff]
      %v4850 = vld [vmem:[%s4831 + $0x90] sm:$0xff]
      %v4851 = vld [vmem:[%s4831 + $0x98] sm:$0xff]
      %v4852 = vld [vmem:[%s4831 + $0xa0] sm:$0xff]
      %v4853 = vld [vmem:[%s4831 + $0xa8] sm:$0xff]
      %v4854 = vld [vmem:[%s4831 + $0xb0] sm:$0xff]
      %v4855 = vld [vmem:[%s4831 + $0xb8] sm:$0xff]
      %v4856 = vld [vmem:[%s4831 + $0xc0] sm:$0xff]
      %v4857 = vld [vmem:[%s4831 + $0xc8] sm:$0xff]
      %v4858 = vld [vmem:[%s4831 + $0xd0] sm:$0xff]
      %v4859 = vld [vmem:[%s4831 + $0xd8] sm:$0xff]
      %v4860 = vld [vmem:[%s4831 + $0xe0] sm:$0xff]
      %v4861 = vld [vmem:[%s4831 + $0xe8] sm:$0xff]
      %v4862 = vld [vmem:[%s4831 + $0xf0] sm:$0xff]
      %v4863 = vld [vmem:[%s4831 + $0xf8] sm:$0xff]
      %v4864 = vld [vmem:[%s4831 + $0x100] sm:$0xff]
      %v4865 = vld [vmem:[%s4831 + $0x108] sm:$0xff]
      %v4866 = vld [vmem:[%s4831 + $0x110] sm:$0xff]
      %v4867 = vld [vmem:[%s4831 + $0x118] sm:$0xff]
      %v4868 = vld [vmem:[%s4831 + $0x120] sm:$0xff]
      %v4869 = vld [vmem:[%s4831 + $0x128] sm:$0xff]
      %v4870 = vld [vmem:[%s4831 + $0x130] sm:$0xff]
      %v4871 = vld [vmem:[%s4831 + $0x138] sm:$0xff]
      %v4872 = vld [vmem:[%s4831 + $0x140] sm:$0xff]
      %v4873 = vld [vmem:[%s4831 + $0x148] sm:$0xff]
      %v4874 = vld [vmem:[%s4831 + $0x150] sm:$0xff]
      %v4875 = vld [vmem:[%s4831 + $0x158] sm:$0xff]
      %v4876 = vld [vmem:[%s4831 + $0x160] sm:$0xff]
      %v4877 = vld [vmem:[%s4831 + $0x168] sm:$0xff]
      %v4878 = vld [vmem:[%s4831 + $0x170] sm:$0xff]
      %v4879 = vld [vmem:[%s4831 + $0x178] sm:$0xff]
      %v4880 = vld [vmem:[%s4831 + $0x180] sm:$0xff]
      %v4881 = vld [vmem:[%s4831 + $0x188] sm:$0xff]
      %v4882 = vld [vmem:[%s4831 + $0x190] sm:$0xff]
      %v4883 = vld [vmem:[%s4831 + $0x198] sm:$0xff]
      %v4884 = vld [vmem:[%s4831 + $0x1a0] sm:$0xff]
      %v4885 = vld [vmem:[%s4831 + $0x1a8] sm:$0xff]
      %v4886 = vld [vmem:[%s4831 + $0x1b0] sm:$0xff]
      %v4887 = vld [vmem:[%s4831 + $0x1b8] sm:$0xff]
      %v4888 = vld [vmem:[%s4831 + $0x1c0] sm:$0xff]
      %v4889 = vld [vmem:[%s4831 + $0x1c8] sm:$0xff]
      %v4890 = vld [vmem:[%s4831 + $0x1d0] sm:$0xff]
      %v4891 = vld [vmem:[%s4831 + $0x1d8] sm:$0xff]
      %v4892 = vld [vmem:[%s4831 + $0x1e0] sm:$0xff]
      %v4893 = vld [vmem:[%s4831 + $0x1e8] sm:$0xff]
      %v4894 = vld [vmem:[%s4831 + $0x1f0] sm:$0xff]
      %v4895 = vld [vmem:[%s4831 + $0x1f8] sm:$0xff]
      %4896 = vmatpush.msra.mxu0 %v4847
      %4897 = vmatpush.msra.mxu0 %v4846
      %4898 = vmatpush.msra.mxu0 %v4845
      %4899 = vmatpush.msra.mxu0 %v4844
      %4900 = vmatpush.msra.mxu0 %v4843
      %4901 = vmatpush.msra.mxu0 %v4842
      %4902 = vmatpush.msra.mxu0 %v4841
      %4903 = vmatpush.msra.mxu0 %v4840
      %4904 = vmatpush.msra.mxu0 %v4839
      %4905 = vmatpush.msra.mxu0 %v4838
      %4906 = vmatpush.msra.mxu0 %v4837
      %4907 = vmatpush.msra.mxu0 %v4836
      %4908 = vmatpush.msra.mxu0 %v4835
      %4909 = vmatpush.msra.mxu0 %v4834
      %4910 = vmatpush.msra.mxu0 %v4833
      %4911 = vmatpush.msra.mxu0 %v4832
      %4912 = vmatmul.f32.gmra.mxu0 %v4799
      %v4913 = vpop.f32.mrf.mxu0
      %v4914 = vadd.f32 0.0, %v4913
      %4915 = vmatmul.f32.gmra.mxu0 %v4803
      %v4916 = vpop.f32.mrf.mxu0
      %v4917 = vadd.f32 0.0, %v4916
      %4918 = vmatmul.f32.gmra.mxu0 %v4807
      %v4919 = vpop.f32.mrf.mxu0
      %v4920 = vadd.f32 0.0, %v4919
      %4921 = vmatmul.f32.gmra.mxu0 %v4811
      %v4922 = vpop.f32.mrf.mxu0
      %v4923 = vadd.f32 0.0, %v4922
      %4924 = vmatmul.f32.gmra.mxu0 %v4815
      %v4925 = vpop.f32.mrf.mxu0
      %v4926 = vadd.f32 0.0, %v4925
      %4927 = vmatmul.f32.gmra.mxu0 %v4819
      %v4928 = vpop.f32.mrf.mxu0
      %v4929 = vadd.f32 0.0, %v4928
      %4930 = vmatmul.f32.gmra.mxu0 %v4823
      %v4931 = vpop.f32.mrf.mxu0
      %v4932 = vadd.f32 0.0, %v4931
      %4933 = vmatmul.f32.gmra.mxu0 %v4827
      %v4934 = vpop.f32.mrf.mxu0
      %v4935 = vadd.f32 0.0, %v4934
      %4936 = vdwg.mxu0
      %4937 = vmatpush.msra.mxu0 %v4863
      %4938 = vmatpush.msra.mxu0 %v4862
      %4939 = vmatpush.msra.mxu0 %v4861
      %4940 = vmatpush.msra.mxu0 %v4860
      %4941 = vmatpush.msra.mxu0 %v4859
      %4942 = vmatpush.msra.mxu0 %v4858
      %4943 = vmatpush.msra.mxu0 %v4857
      %4944 = vmatpush.msra.mxu0 %v4856
      %4945 = vmatpush.msra.mxu0 %v4855
      %4946 = vmatpush.msra.mxu0 %v4854
      %4947 = vmatpush.msra.mxu0 %v4853
      %4948 = vmatpush.msra.mxu0 %v4852
      %4949 = vmatpush.msra.mxu0 %v4851
      %4950 = vmatpush.msra.mxu0 %v4850
      %4951 = vmatpush.msra.mxu0 %v4849
      %4952 = vmatpush.msra.mxu0 %v4848
      %4953 = vmatmul.f32.gmra.mxu0 %v4800
      %v4954 = vpop.f32.mrf.mxu0
      %v4955 = vadd.f32 %v4914, %v4954
      %4956 = vmatmul.f32.gmra.mxu0 %v4804
      %v4957 = vpop.f32.mrf.mxu0
      %v4958 = vadd.f32 %v4917, %v4957
      %4959 = vmatmul.f32.gmra.mxu0 %v4808
      %v4960 = vpop.f32.mrf.mxu0
      %v4961 = vadd.f32 %v4920, %v4960
      %4962 = vmatmul.f32.gmra.mxu0 %v4812
      %v4963 = vpop.f32.mrf.mxu0
      %v4964 = vadd.f32 %v4923, %v4963
      %4965 = vmatmul.f32.gmra.mxu0 %v4816
      %v4966 = vpop.f32.mrf.mxu0
      %v4967 = vadd.f32 %v4926, %v4966
      %4968 = vmatmul.f32.gmra.mxu0 %v4820
      %v4969 = vpop.f32.mrf.mxu0
      %v4970 = vadd.f32 %v4929, %v4969
      %4971 = vmatmul.f32.gmra.mxu0 %v4824
      %v4972 = vpop.f32.mrf.mxu0
      %v4973 = vadd.f32 %v4932, %v4972
      %4974 = vmatmul.f32.gmra.mxu0 %v4828
      %v4975 = vpop.f32.mrf.mxu0
      %v4976 = vadd.f32 %v4935, %v4975
      %4977 = vdwg.mxu0
      %4978 = vmatpush.msra.mxu0 %v4879
      %4979 = vmatpush.msra.mxu0 %v4878
      %4980 = vmatpush.msra.mxu0 %v4877
      %4981 = vmatpush.msra.mxu0 %v4876
      %4982 = vmatpush.msra.mxu0 %v4875
      %4983 = vmatpush.msra.mxu0 %v4874
      %4984 = vmatpush.msra.mxu0 %v4873
      %4985 = vmatpush.msra.mxu0 %v4872
      %4986 = vmatpush.msra.mxu0 %v4871
      %4987 = vmatpush.msra.mxu0 %v4870
      %4988 = vmatpush.msra.mxu0 %v4869
      %4989 = vmatpush.msra.mxu0 %v4868
      %4990 = vmatpush.msra.mxu0 %v4867
      %4991 = vmatpush.msra.mxu0 %v4866
      %4992 = vmatpush.msra.mxu0 %v4865
      %4993 = vmatpush.msra.mxu0 %v4864
      %4994 = vmatmul.f32.gmra.mxu0 %v4801
      %v4995 = vpop.f32.mrf.mxu0
      %v4996 = vadd.f32 %v4955, %v4995
      %4997 = vmatmul.f32.gmra.mxu0 %v4805
      %v4998 = vpop.f32.mrf.mxu0
      %v4999 = vadd.f32 %v4958, %v4998
      %5000 = vmatmul.f32.gmra.mxu0 %v4809
      %v5001 = vpop.f32.mrf.mxu0
      %v5002 = vadd.f32 %v4961, %v5001
      %5003 = vmatmul.f32.gmra.mxu0 %v4813
      %v5004 = vpop.f32.mrf.mxu0
      %v5005 = vadd.f32 %v4964, %v5004
      %5006 = vmatmul.f32.gmra.mxu0 %v4817
      %v5007 = vpop.f32.mrf.mxu0
      %v5008 = vadd.f32 %v4967, %v5007
      %5009 = vmatmul.f32.gmra.mxu0 %v4821
      %v5010 = vpop.f32.mrf.mxu0
      %v5011 = vadd.f32 %v4970, %v5010
      %5012 = vmatmul.f32.gmra.mxu0 %v4825
      %v5013 = vpop.f32.mrf.mxu0
      %v5014 = vadd.f32 %v4973, %v5013
      %5015 = vmatmul.f32.gmra.mxu0 %v4829
      %v5016 = vpop.f32.mrf.mxu0
      %v5017 = vadd.f32 %v4976, %v5016
      %5018 = vdwg.mxu0
      %5019 = vmatpush.msra.mxu0 %v4895
      %5020 = vmatpush.msra.mxu0 %v4894
      %5021 = vmatpush.msra.mxu0 %v4893
      %5022 = vmatpush.msra.mxu0 %v4892
      %5023 = vmatpush.msra.mxu0 %v4891
      %5024 = vmatpush.msra.mxu0 %v4890
      %5025 = vmatpush.msra.mxu0 %v4889
      %5026 = vmatpush.msra.mxu0 %v4888
      %5027 = vmatpush.msra.mxu0 %v4887
      %5028 = vmatpush.msra.mxu0 %v4886
      %5029 = vmatpush.msra.mxu0 %v4885
      %5030 = vmatpush.msra.mxu0 %v4884
      %5031 = vmatpush.msra.mxu0 %v4883
      %5032 = vmatpush.msra.mxu0 %v4882
      %5033 = vmatpush.msra.mxu0 %v4881
      %5034 = vmatpush.msra.mxu0 %v4880
      %5035 = vmatmul.f32.gmra.mxu0 %v4802
      %v5036 = vpop.f32.mrf.mxu0
      %v5037 = vadd.f32 %v4996, %v5036
      %5038 = vmatmul.f32.gmra.mxu0 %v4806
      %v5039 = vpop.f32.mrf.mxu0
      %v5040 = vadd.f32 %v4999, %v5039
      %5041 = vmatmul.f32.gmra.mxu0 %v4810
      %v5042 = vpop.f32.mrf.mxu0
      %v5043 = vadd.f32 %v5002, %v5042
      %5044 = vmatmul.f32.gmra.mxu0 %v4814
      %v5045 = vpop.f32.mrf.mxu0
      %v5046 = vadd.f32 %v5005, %v5045
      %5047 = vmatmul.f32.gmra.mxu0 %v4818
      %v5048 = vpop.f32.mrf.mxu0
      %v5049 = vadd.f32 %v5008, %v5048
      %5050 = vmatmul.f32.gmra.mxu0 %v4822
      %v5051 = vpop.f32.mrf.mxu0
      %v5052 = vadd.f32 %v5011, %v5051
      %5053 = vmatmul.f32.gmra.mxu0 %v4826
      %v5054 = vpop.f32.mrf.mxu0
      %v5055 = vadd.f32 %v5014, %v5054
      %5056 = vmatmul.f32.gmra.mxu0 %v4830
      %v5057 = vpop.f32.mrf.mxu0
      %v5058 = vadd.f32 %v5017, %v5057
      %5059 = vdwg.mxu0
      %v5060 = vadd.f32 %v4783, %v5037
      %v5061 = vadd.f32 %v4784, %v5040
      %v5062 = vadd.f32 %v4785, %v5043
      %v5063 = vadd.f32 %v4786, %v5046
      %v5064 = vadd.f32 %v4787, %v5049
      %v5065 = vadd.f32 %v4788, %v5052
      %v5066 = vadd.f32 %v4789, %v5055
      %v5067 = vadd.f32 %v4790, %v5058
      %s5068 = scalar_lea.vmem %s5, 3584
      %v5069 = vld [vmem:[%s5068] sm:$0xff]
      %v5070 = vld [vmem:[%s5068 + $0x8] sm:$0xff]
      %v5071 = vld [vmem:[%s5068 + $0x10] sm:$0xff]
      %v5072 = vld [vmem:[%s5068 + $0x18] sm:$0xff]
      %v5073 = vld [vmem:[%s5068 + $0x20] sm:$0xff]
      %v5074 = vld [vmem:[%s5068 + $0x28] sm:$0xff]
      %v5075 = vld [vmem:[%s5068 + $0x30] sm:$0xff]
      %v5076 = vld [vmem:[%s5068 + $0x38] sm:$0xff]
      %v5077 = vld [vmem:[%s5068 + $0x40] sm:$0xff]
      %v5078 = vld [vmem:[%s5068 + $0x48] sm:$0xff]
      %v5079 = vld [vmem:[%s5068 + $0x50] sm:$0xff]
      %v5080 = vld [vmem:[%s5068 + $0x58] sm:$0xff]
      %v5081 = vld [vmem:[%s5068 + $0x60] sm:$0xff]
      %v5082 = vld [vmem:[%s5068 + $0x68] sm:$0xff]
      %v5083 = vld [vmem:[%s5068 + $0x70] sm:$0xff]
      %v5084 = vld [vmem:[%s5068 + $0x78] sm:$0xff]
      %v5085 = vld [vmem:[%s5068 + $0x80] sm:$0xff]
      %v5086 = vld [vmem:[%s5068 + $0x88] sm:$0xff]
      %v5087 = vld [vmem:[%s5068 + $0x90] sm:$0xff]
      %v5088 = vld [vmem:[%s5068 + $0x98] sm:$0xff]
      %v5089 = vld [vmem:[%s5068 + $0xa0] sm:$0xff]
      %v5090 = vld [vmem:[%s5068 + $0xa8] sm:$0xff]
      %v5091 = vld [vmem:[%s5068 + $0xb0] sm:$0xff]
      %v5092 = vld [vmem:[%s5068 + $0xb8] sm:$0xff]
      %v5093 = vld [vmem:[%s5068 + $0xc0] sm:$0xff]
      %v5094 = vld [vmem:[%s5068 + $0xc8] sm:$0xff]
      %v5095 = vld [vmem:[%s5068 + $0xd0] sm:$0xff]
      %v5096 = vld [vmem:[%s5068 + $0xd8] sm:$0xff]
      %v5097 = vld [vmem:[%s5068 + $0xe0] sm:$0xff]
      %v5098 = vld [vmem:[%s5068 + $0xe8] sm:$0xff]
      %v5099 = vld [vmem:[%s5068 + $0xf0] sm:$0xff]
      %v5100 = vld [vmem:[%s5068 + $0xf8] sm:$0xff]
      %v5101 = vld [vmem:[%s5068 + $0x100] sm:$0xff]
      %v5102 = vld [vmem:[%s5068 + $0x108] sm:$0xff]
      %v5103 = vld [vmem:[%s5068 + $0x110] sm:$0xff]
      %v5104 = vld [vmem:[%s5068 + $0x118] sm:$0xff]
      %v5105 = vld [vmem:[%s5068 + $0x120] sm:$0xff]
      %v5106 = vld [vmem:[%s5068 + $0x128] sm:$0xff]
      %v5107 = vld [vmem:[%s5068 + $0x130] sm:$0xff]
      %v5108 = vld [vmem:[%s5068 + $0x138] sm:$0xff]
      %v5109 = vld [vmem:[%s5068 + $0x140] sm:$0xff]
      %v5110 = vld [vmem:[%s5068 + $0x148] sm:$0xff]
      %v5111 = vld [vmem:[%s5068 + $0x150] sm:$0xff]
      %v5112 = vld [vmem:[%s5068 + $0x158] sm:$0xff]
      %v5113 = vld [vmem:[%s5068 + $0x160] sm:$0xff]
      %v5114 = vld [vmem:[%s5068 + $0x168] sm:$0xff]
      %v5115 = vld [vmem:[%s5068 + $0x170] sm:$0xff]
      %v5116 = vld [vmem:[%s5068 + $0x178] sm:$0xff]
      %v5117 = vld [vmem:[%s5068 + $0x180] sm:$0xff]
      %v5118 = vld [vmem:[%s5068 + $0x188] sm:$0xff]
      %v5119 = vld [vmem:[%s5068 + $0x190] sm:$0xff]
      %v5120 = vld [vmem:[%s5068 + $0x198] sm:$0xff]
      %v5121 = vld [vmem:[%s5068 + $0x1a0] sm:$0xff]
      %v5122 = vld [vmem:[%s5068 + $0x1a8] sm:$0xff]
      %v5123 = vld [vmem:[%s5068 + $0x1b0] sm:$0xff]
      %v5124 = vld [vmem:[%s5068 + $0x1b8] sm:$0xff]
      %v5125 = vld [vmem:[%s5068 + $0x1c0] sm:$0xff]
      %v5126 = vld [vmem:[%s5068 + $0x1c8] sm:$0xff]
      %v5127 = vld [vmem:[%s5068 + $0x1d0] sm:$0xff]
      %v5128 = vld [vmem:[%s5068 + $0x1d8] sm:$0xff]
      %v5129 = vld [vmem:[%s5068 + $0x1e0] sm:$0xff]
      %v5130 = vld [vmem:[%s5068 + $0x1e8] sm:$0xff]
      %v5131 = vld [vmem:[%s5068 + $0x1f0] sm:$0xff]
      %v5132 = vld [vmem:[%s5068 + $0x1f8] sm:$0xff]
      %5133 = vmatpush.msra.mxu0 %v5084
      %5134 = vmatpush.msra.mxu0 %v5083
      %5135 = vmatpush.msra.mxu0 %v5082
      %5136 = vmatpush.msra.mxu0 %v5081
      %5137 = vmatpush.msra.mxu0 %v5080
      %5138 = vmatpush.msra.mxu0 %v5079
      %5139 = vmatpush.msra.mxu0 %v5078
      %5140 = vmatpush.msra.mxu0 %v5077
      %5141 = vmatpush.msra.mxu0 %v5076
      %5142 = vmatpush.msra.mxu0 %v5075
      %5143 = vmatpush.msra.mxu0 %v5074
      %5144 = vmatpush.msra.mxu0 %v5073
      %5145 = vmatpush.msra.mxu0 %v5072
      %5146 = vmatpush.msra.mxu0 %v5071
      %5147 = vmatpush.msra.mxu0 %v5070
      %5148 = vmatpush.msra.mxu0 %v5069
      %5149 = vmatmul.f32.gmra.mxu0 %v2977
      %v5150 = vpop.f32.mrf.mxu0
      %v5151 = vadd.f32 0.0, %v5150
      %5152 = vmatmul.f32.gmra.mxu0 %v2981
      %v5153 = vpop.f32.mrf.mxu0
      %v5154 = vadd.f32 0.0, %v5153
      %5155 = vmatmul.f32.gmra.mxu0 %v2985
      %v5156 = vpop.f32.mrf.mxu0
      %v5157 = vadd.f32 0.0, %v5156
      %5158 = vmatmul.f32.gmra.mxu0 %v2989
      %v5159 = vpop.f32.mrf.mxu0
      %v5160 = vadd.f32 0.0, %v5159
      %5161 = vmatmul.f32.gmra.mxu0 %v2993
      %v5162 = vpop.f32.mrf.mxu0
      %v5163 = vadd.f32 0.0, %v5162
      %5164 = vmatmul.f32.gmra.mxu0 %v2997
      %v5165 = vpop.f32.mrf.mxu0
      %v5166 = vadd.f32 0.0, %v5165
      %5167 = vmatmul.f32.gmra.mxu0 %v3001
      %v5168 = vpop.f32.mrf.mxu0
      %v5169 = vadd.f32 0.0, %v5168
      %5170 = vmatmul.f32.gmra.mxu0 0.0
      %v5171 = vpop.f32.mrf.mxu0
      %v5172 = vadd.f32 0.0, %v5171
      %5173 = vdwg.mxu0
      %5174 = vmatpush.msra.mxu0 %v5100
      %5175 = vmatpush.msra.mxu0 %v5099
      %5176 = vmatpush.msra.mxu0 %v5098
      %5177 = vmatpush.msra.mxu0 %v5097
      %5178 = vmatpush.msra.mxu0 %v5096
      %5179 = vmatpush.msra.mxu0 %v5095
      %5180 = vmatpush.msra.mxu0 %v5094
      %5181 = vmatpush.msra.mxu0 %v5093
      %5182 = vmatpush.msra.mxu0 %v5092
      %5183 = vmatpush.msra.mxu0 %v5091
      %5184 = vmatpush.msra.mxu0 %v5090
      %5185 = vmatpush.msra.mxu0 %v5089
      %5186 = vmatpush.msra.mxu0 %v5088
      %5187 = vmatpush.msra.mxu0 %v5087
      %5188 = vmatpush.msra.mxu0 %v5086
      %5189 = vmatpush.msra.mxu0 %v5085
      %5190 = vmatmul.f32.gmra.mxu0 %v2978
      %v5191 = vpop.f32.mrf.mxu0
      %v5192 = vadd.f32 %v5151, %v5191
      %5193 = vmatmul.f32.gmra.mxu0 %v2982
      %v5194 = vpop.f32.mrf.mxu0
      %v5195 = vadd.f32 %v5154, %v5194
      %5196 = vmatmul.f32.gmra.mxu0 %v2986
      %v5197 = vpop.f32.mrf.mxu0
      %v5198 = vadd.f32 %v5157, %v5197
      %5199 = vmatmul.f32.gmra.mxu0 %v2990
      %v5200 = vpop.f32.mrf.mxu0
      %v5201 = vadd.f32 %v5160, %v5200
      %5202 = vmatmul.f32.gmra.mxu0 %v2994
      %v5203 = vpop.f32.mrf.mxu0
      %v5204 = vadd.f32 %v5163, %v5203
      %5205 = vmatmul.f32.gmra.mxu0 %v2998
      %v5206 = vpop.f32.mrf.mxu0
      %v5207 = vadd.f32 %v5166, %v5206
      %5208 = vmatmul.f32.gmra.mxu0 %v3002
      %v5209 = vpop.f32.mrf.mxu0
      %v5210 = vadd.f32 %v5169, %v5209
      %5211 = vmatmul.f32.gmra.mxu0 0.0
      %v5212 = vpop.f32.mrf.mxu0
      %v5213 = vadd.f32 %v5172, %v5212
      %5214 = vdwg.mxu0
      %5215 = vmatpush.msra.mxu0 %v5116
      %5216 = vmatpush.msra.mxu0 %v5115
      %5217 = vmatpush.msra.mxu0 %v5114
      %5218 = vmatpush.msra.mxu0 %v5113
      %5219 = vmatpush.msra.mxu0 %v5112
      %5220 = vmatpush.msra.mxu0 %v5111
      %5221 = vmatpush.msra.mxu0 %v5110
      %5222 = vmatpush.msra.mxu0 %v5109
      %5223 = vmatpush.msra.mxu0 %v5108
      %5224 = vmatpush.msra.mxu0 %v5107
      %5225 = vmatpush.msra.mxu0 %v5106
      %5226 = vmatpush.msra.mxu0 %v5105
      %5227 = vmatpush.msra.mxu0 %v5104
      %5228 = vmatpush.msra.mxu0 %v5103
      %5229 = vmatpush.msra.mxu0 %v5102
      %5230 = vmatpush.msra.mxu0 %v5101
      %5231 = vmatmul.f32.gmra.mxu0 %v2979
      %v5232 = vpop.f32.mrf.mxu0
      %v5233 = vadd.f32 %v5192, %v5232
      %5234 = vmatmul.f32.gmra.mxu0 %v2983
      %v5235 = vpop.f32.mrf.mxu0
      %v5236 = vadd.f32 %v5195, %v5235
      %5237 = vmatmul.f32.gmra.mxu0 %v2987
      %v5238 = vpop.f32.mrf.mxu0
      %v5239 = vadd.f32 %v5198, %v5238
      %5240 = vmatmul.f32.gmra.mxu0 %v2991
      %v5241 = vpop.f32.mrf.mxu0
      %v5242 = vadd.f32 %v5201, %v5241
      %5243 = vmatmul.f32.gmra.mxu0 %v2995
      %v5244 = vpop.f32.mrf.mxu0
      %v5245 = vadd.f32 %v5204, %v5244
      %5246 = vmatmul.f32.gmra.mxu0 %v2999
      %v5247 = vpop.f32.mrf.mxu0
      %v5248 = vadd.f32 %v5207, %v5247
      %5249 = vmatmul.f32.gmra.mxu0 %v3003
      %v5250 = vpop.f32.mrf.mxu0
      %v5251 = vadd.f32 %v5210, %v5250
      %5252 = vmatmul.f32.gmra.mxu0 0.0
      %v5253 = vpop.f32.mrf.mxu0
      %v5254 = vadd.f32 %v5213, %v5253
      %5255 = vdwg.mxu0
      %5256 = vmatpush.msra.mxu0 %v5132
      %5257 = vmatpush.msra.mxu0 %v5131
      %5258 = vmatpush.msra.mxu0 %v5130
      %5259 = vmatpush.msra.mxu0 %v5129
      %5260 = vmatpush.msra.mxu0 %v5128
      %5261 = vmatpush.msra.mxu0 %v5127
      %5262 = vmatpush.msra.mxu0 %v5126
      %5263 = vmatpush.msra.mxu0 %v5125
      %5264 = vmatpush.msra.mxu0 %v5124
      %5265 = vmatpush.msra.mxu0 %v5123
      %5266 = vmatpush.msra.mxu0 %v5122
      %5267 = vmatpush.msra.mxu0 %v5121
      %5268 = vmatpush.msra.mxu0 %v5120
      %5269 = vmatpush.msra.mxu0 %v5119
      %5270 = vmatpush.msra.mxu0 %v5118
      %5271 = vmatpush.msra.mxu0 %v5117
      %5272 = vmatmul.f32.gmra.mxu0 %v2980
      %v5273 = vpop.f32.mrf.mxu0
      %v5274 = vadd.f32 %v5233, %v5273
      %5275 = vmatmul.f32.gmra.mxu0 %v2984
      %v5276 = vpop.f32.mrf.mxu0
      %v5277 = vadd.f32 %v5236, %v5276
      %5278 = vmatmul.f32.gmra.mxu0 %v2988
      %v5279 = vpop.f32.mrf.mxu0
      %v5280 = vadd.f32 %v5239, %v5279
      %5281 = vmatmul.f32.gmra.mxu0 %v2992
      %v5282 = vpop.f32.mrf.mxu0
      %v5283 = vadd.f32 %v5242, %v5282
      %5284 = vmatmul.f32.gmra.mxu0 %v2996
      %v5285 = vpop.f32.mrf.mxu0
      %v5286 = vadd.f32 %v5245, %v5285
      %5287 = vmatmul.f32.gmra.mxu0 %v3000
      %v5288 = vpop.f32.mrf.mxu0
      %v5289 = vadd.f32 %v5248, %v5288
      %5290 = vmatmul.f32.gmra.mxu0 %v3004
      %v5291 = vpop.f32.mrf.mxu0
      %v5292 = vadd.f32 %v5251, %v5291
      %5293 = vmatmul.f32.gmra.mxu0 0.0
      %v5294 = vpop.f32.mrf.mxu0
      %v5295 = vadd.f32 %v5254, %v5294
      %5296 = vdwg.mxu0
      %v5297 = vadd.f32 %v5060, %v5274
      %v5298 = vadd.f32 %v5061, %v5277
      %v5299 = vadd.f32 %v5062, %v5280
      %v5300 = vadd.f32 %v5063, %v5283
      %v5301 = vadd.f32 %v5064, %v5286
      %v5302 = vadd.f32 %v5065, %v5289
      %v5303 = vadd.f32 %v5066, %v5292
      %v5304 = vadd.f32 %v5067, %v5295
      %v5305 = vsel %vm445, %v3644, 0.0
      %v5306 = vsel %vm445, %v3646, 0.0
      %v5307 = vsel %vm445, %v3648, 0.0
      %v5308 = vsel %vm445, %v3650, 0.0
      %v5309 = vsel %vm446, %v3652, 0.0
      %v5310 = vsel %vm446, %v3654, 0.0
      %v5311 = vsel %vm446, %v3656, 0.0
      %v5312 = vsel %vm446, %v3658, 0.0
      %v5313 = vsel %vm447, %v3660, 0.0
      %v5314 = vsel %vm447, %v3662, 0.0
      %v5315 = vsel %vm447, %v3664, 0.0
      %v5316 = vsel %vm447, %v3666, 0.0
      %v5317 = vsel %vm448, %v3668, 0.0
      %v5318 = vsel %vm448, %v3670, 0.0
      %v5319 = vsel %vm448, %v3672, 0.0
      %v5320 = vsel %vm448, %v3674, 0.0
      %v5321 = vsel %vm449, %v3676, 0.0
      %v5322 = vsel %vm449, %v3678, 0.0
      %v5323 = vsel %vm449, %v3680, 0.0
      %v5324 = vsel %vm449, %v3682, 0.0
      %v5325 = vsel %vm450, %v3684, 0.0
      %v5326 = vsel %vm450, %v3686, 0.0
      %v5327 = vsel %vm450, %v3688, 0.0
      %v5328 = vsel %vm450, %v3690, 0.0
      %v5329 = vsel %vm451, %v4518, 0.0
      %v5330 = vsel %vm451, %v4519, 0.0
      %v5331 = vsel %vm451, %v4520, 0.0
      %v5332 = vsel %vm451, %v4521, 0.0
      %s5333 = scalar_lea.vmem %s5, 4096
      %v5334 = vld [vmem:[%s5333] sm:$0xff]
      %v5335 = vld [vmem:[%s5333 + $0x8] sm:$0xff]
      %v5336 = vld [vmem:[%s5333 + $0x10] sm:$0xff]
      %v5337 = vld [vmem:[%s5333 + $0x18] sm:$0xff]
      %v5338 = vld [vmem:[%s5333 + $0x20] sm:$0xff]
      %v5339 = vld [vmem:[%s5333 + $0x28] sm:$0xff]
      %v5340 = vld [vmem:[%s5333 + $0x30] sm:$0xff]
      %v5341 = vld [vmem:[%s5333 + $0x38] sm:$0xff]
      %v5342 = vld [vmem:[%s5333 + $0x40] sm:$0xff]
      %v5343 = vld [vmem:[%s5333 + $0x48] sm:$0xff]
      %v5344 = vld [vmem:[%s5333 + $0x50] sm:$0xff]
      %v5345 = vld [vmem:[%s5333 + $0x58] sm:$0xff]
      %v5346 = vld [vmem:[%s5333 + $0x60] sm:$0xff]
      %v5347 = vld [vmem:[%s5333 + $0x68] sm:$0xff]
      %v5348 = vld [vmem:[%s5333 + $0x70] sm:$0xff]
      %v5349 = vld [vmem:[%s5333 + $0x78] sm:$0xff]
      %v5350 = vld [vmem:[%s5333 + $0x80] sm:$0xff]
      %v5351 = vld [vmem:[%s5333 + $0x88] sm:$0xff]
      %v5352 = vld [vmem:[%s5333 + $0x90] sm:$0xff]
      %v5353 = vld [vmem:[%s5333 + $0x98] sm:$0xff]
      %v5354 = vld [vmem:[%s5333 + $0xa0] sm:$0xff]
      %v5355 = vld [vmem:[%s5333 + $0xa8] sm:$0xff]
      %v5356 = vld [vmem:[%s5333 + $0xb0] sm:$0xff]
      %v5357 = vld [vmem:[%s5333 + $0xb8] sm:$0xff]
      %v5358 = vld [vmem:[%s5333 + $0xc0] sm:$0xff]
      %v5359 = vld [vmem:[%s5333 + $0xc8] sm:$0xff]
      %v5360 = vld [vmem:[%s5333 + $0xd0] sm:$0xff]
      %v5361 = vld [vmem:[%s5333 + $0xd8] sm:$0xff]
      %v5362 = vld [vmem:[%s5333 + $0xe0] sm:$0xff]
      %v5363 = vld [vmem:[%s5333 + $0xe8] sm:$0xff]
      %v5364 = vld [vmem:[%s5333 + $0xf0] sm:$0xff]
      %v5365 = vld [vmem:[%s5333 + $0xf8] sm:$0xff]
      %v5366 = vld [vmem:[%s5333 + $0x100] sm:$0xff]
      %v5367 = vld [vmem:[%s5333 + $0x108] sm:$0xff]
      %v5368 = vld [vmem:[%s5333 + $0x110] sm:$0xff]
      %v5369 = vld [vmem:[%s5333 + $0x118] sm:$0xff]
      %v5370 = vld [vmem:[%s5333 + $0x120] sm:$0xff]
      %v5371 = vld [vmem:[%s5333 + $0x128] sm:$0xff]
      %v5372 = vld [vmem:[%s5333 + $0x130] sm:$0xff]
      %v5373 = vld [vmem:[%s5333 + $0x138] sm:$0xff]
      %v5374 = vld [vmem:[%s5333 + $0x140] sm:$0xff]
      %v5375 = vld [vmem:[%s5333 + $0x148] sm:$0xff]
      %v5376 = vld [vmem:[%s5333 + $0x150] sm:$0xff]
      %v5377 = vld [vmem:[%s5333 + $0x158] sm:$0xff]
      %v5378 = vld [vmem:[%s5333 + $0x160] sm:$0xff]
      %v5379 = vld [vmem:[%s5333 + $0x168] sm:$0xff]
      %v5380 = vld [vmem:[%s5333 + $0x170] sm:$0xff]
      %v5381 = vld [vmem:[%s5333 + $0x178] sm:$0xff]
      %v5382 = vld [vmem:[%s5333 + $0x180] sm:$0xff]
      %v5383 = vld [vmem:[%s5333 + $0x188] sm:$0xff]
      %v5384 = vld [vmem:[%s5333 + $0x190] sm:$0xff]
      %v5385 = vld [vmem:[%s5333 + $0x198] sm:$0xff]
      %v5386 = vld [vmem:[%s5333 + $0x1a0] sm:$0xff]
      %v5387 = vld [vmem:[%s5333 + $0x1a8] sm:$0xff]
      %v5388 = vld [vmem:[%s5333 + $0x1b0] sm:$0xff]
      %v5389 = vld [vmem:[%s5333 + $0x1b8] sm:$0xff]
      %v5390 = vld [vmem:[%s5333 + $0x1c0] sm:$0xff]
      %v5391 = vld [vmem:[%s5333 + $0x1c8] sm:$0xff]
      %v5392 = vld [vmem:[%s5333 + $0x1d0] sm:$0xff]
      %v5393 = vld [vmem:[%s5333 + $0x1d8] sm:$0xff]
      %v5394 = vld [vmem:[%s5333 + $0x1e0] sm:$0xff]
      %v5395 = vld [vmem:[%s5333 + $0x1e8] sm:$0xff]
      %v5396 = vld [vmem:[%s5333 + $0x1f0] sm:$0xff]
      %v5397 = vld [vmem:[%s5333 + $0x1f8] sm:$0xff]
      %5398 = vmatpush.msra.mxu0 %v5349
      %5399 = vmatpush.msra.mxu0 %v5348
      %5400 = vmatpush.msra.mxu0 %v5347
      %5401 = vmatpush.msra.mxu0 %v5346
      %5402 = vmatpush.msra.mxu0 %v5345
      %5403 = vmatpush.msra.mxu0 %v5344
      %5404 = vmatpush.msra.mxu0 %v5343
      %5405 = vmatpush.msra.mxu0 %v5342
      %5406 = vmatpush.msra.mxu0 %v5341
      %5407 = vmatpush.msra.mxu0 %v5340
      %5408 = vmatpush.msra.mxu0 %v5339
      %5409 = vmatpush.msra.mxu0 %v5338
      %5410 = vmatpush.msra.mxu0 %v5337
      %5411 = vmatpush.msra.mxu0 %v5336
      %5412 = vmatpush.msra.mxu0 %v5335
      %5413 = vmatpush.msra.mxu0 %v5334
      %5414 = vmatmul.f32.gmra.mxu0 %v5305
      %v5415 = vpop.f32.mrf.mxu0
      %v5416 = vadd.f32 0.0, %v5415
      %5417 = vmatmul.f32.gmra.mxu0 %v5309
      %v5418 = vpop.f32.mrf.mxu0
      %v5419 = vadd.f32 0.0, %v5418
      %5420 = vmatmul.f32.gmra.mxu0 %v5313
      %v5421 = vpop.f32.mrf.mxu0
      %v5422 = vadd.f32 0.0, %v5421
      %5423 = vmatmul.f32.gmra.mxu0 %v5317
      %v5424 = vpop.f32.mrf.mxu0
      %v5425 = vadd.f32 0.0, %v5424
      %5426 = vmatmul.f32.gmra.mxu0 %v5321
      %v5427 = vpop.f32.mrf.mxu0
      %v5428 = vadd.f32 0.0, %v5427
      %5429 = vmatmul.f32.gmra.mxu0 %v5325
      %v5430 = vpop.f32.mrf.mxu0
      %v5431 = vadd.f32 0.0, %v5430
      %5432 = vmatmul.f32.gmra.mxu0 %v5329
      %v5433 = vpop.f32.mrf.mxu0
      %v5434 = vadd.f32 0.0, %v5433
      %5435 = vmatmul.f32.gmra.mxu0 0.0
      %v5436 = vpop.f32.mrf.mxu0
      %v5437 = vadd.f32 0.0, %v5436
      %5438 = vdwg.mxu0
      %5439 = vmatpush.msra.mxu0 %v5365
      %5440 = vmatpush.msra.mxu0 %v5364
      %5441 = vmatpush.msra.mxu0 %v5363
      %5442 = vmatpush.msra.mxu0 %v5362
      %5443 = vmatpush.msra.mxu0 %v5361
      %5444 = vmatpush.msra.mxu0 %v5360
      %5445 = vmatpush.msra.mxu0 %v5359
      %5446 = vmatpush.msra.mxu0 %v5358
      %5447 = vmatpush.msra.mxu0 %v5357
      %5448 = vmatpush.msra.mxu0 %v5356
      %5449 = vmatpush.msra.mxu0 %v5355
      %5450 = vmatpush.msra.mxu0 %v5354
      %5451 = vmatpush.msra.mxu0 %v5353
      %5452 = vmatpush.msra.mxu0 %v5352
      %5453 = vmatpush.msra.mxu0 %v5351
      %5454 = vmatpush.msra.mxu0 %v5350
      %5455 = vmatmul.f32.gmra.mxu0 %v5306
      %v5456 = vpop.f32.mrf.mxu0
      %v5457 = vadd.f32 %v5416, %v5456
      %5458 = vmatmul.f32.gmra.mxu0 %v5310
      %v5459 = vpop.f32.mrf.mxu0
      %v5460 = vadd.f32 %v5419, %v5459
      %5461 = vmatmul.f32.gmra.mxu0 %v5314
      %v5462 = vpop.f32.mrf.mxu0
      %v5463 = vadd.f32 %v5422, %v5462
      %5464 = vmatmul.f32.gmra.mxu0 %v5318
      %v5465 = vpop.f32.mrf.mxu0
      %v5466 = vadd.f32 %v5425, %v5465
      %5467 = vmatmul.f32.gmra.mxu0 %v5322
      %v5468 = vpop.f32.mrf.mxu0
      %v5469 = vadd.f32 %v5428, %v5468
      %5470 = vmatmul.f32.gmra.mxu0 %v5326
      %v5471 = vpop.f32.mrf.mxu0
      %v5472 = vadd.f32 %v5431, %v5471
      %5473 = vmatmul.f32.gmra.mxu0 %v5330
      %v5474 = vpop.f32.mrf.mxu0
      %v5475 = vadd.f32 %v5434, %v5474
      %5476 = vmatmul.f32.gmra.mxu0 0.0
      %v5477 = vpop.f32.mrf.mxu0
      %v5478 = vadd.f32 %v5437, %v5477
      %5479 = vdwg.mxu0
      %5480 = vmatpush.msra.mxu0 %v5381
      %5481 = vmatpush.msra.mxu0 %v5380
      %5482 = vmatpush.msra.mxu0 %v5379
      %5483 = vmatpush.msra.mxu0 %v5378
      %5484 = vmatpush.msra.mxu0 %v5377
      %5485 = vmatpush.msra.mxu0 %v5376
      %5486 = vmatpush.msra.mxu0 %v5375
      %5487 = vmatpush.msra.mxu0 %v5374
      %5488 = vmatpush.msra.mxu0 %v5373
      %5489 = vmatpush.msra.mxu0 %v5372
      %5490 = vmatpush.msra.mxu0 %v5371
      %5491 = vmatpush.msra.mxu0 %v5370
      %5492 = vmatpush.msra.mxu0 %v5369
      %5493 = vmatpush.msra.mxu0 %v5368
      %5494 = vmatpush.msra.mxu0 %v5367
      %5495 = vmatpush.msra.mxu0 %v5366
      %5496 = vmatmul.f32.gmra.mxu0 %v5307
      %v5497 = vpop.f32.mrf.mxu0
      %v5498 = vadd.f32 %v5457, %v5497
      %5499 = vmatmul.f32.gmra.mxu0 %v5311
      %v5500 = vpop.f32.mrf.mxu0
      %v5501 = vadd.f32 %v5460, %v5500
      %5502 = vmatmul.f32.gmra.mxu0 %v5315
      %v5503 = vpop.f32.mrf.mxu0
      %v5504 = vadd.f32 %v5463, %v5503
      %5505 = vmatmul.f32.gmra.mxu0 %v5319
      %v5506 = vpop.f32.mrf.mxu0
      %v5507 = vadd.f32 %v5466, %v5506
      %5508 = vmatmul.f32.gmra.mxu0 %v5323
      %v5509 = vpop.f32.mrf.mxu0
      %v5510 = vadd.f32 %v5469, %v5509
      %5511 = vmatmul.f32.gmra.mxu0 %v5327
      %v5512 = vpop.f32.mrf.mxu0
      %v5513 = vadd.f32 %v5472, %v5512
      %5514 = vmatmul.f32.gmra.mxu0 %v5331
      %v5515 = vpop.f32.mrf.mxu0
      %v5516 = vadd.f32 %v5475, %v5515
      %5517 = vmatmul.f32.gmra.mxu0 0.0
      %v5518 = vpop.f32.mrf.mxu0
      %v5519 = vadd.f32 %v5478, %v5518
      %5520 = vdwg.mxu0
      %5521 = vmatpush.msra.mxu0 %v5397
      %5522 = vmatpush.msra.mxu0 %v5396
      %5523 = vmatpush.msra.mxu0 %v5395
      %5524 = vmatpush.msra.mxu0 %v5394
      %5525 = vmatpush.msra.mxu0 %v5393
      %5526 = vmatpush.msra.mxu0 %v5392
      %5527 = vmatpush.msra.mxu0 %v5391
      %5528 = vmatpush.msra.mxu0 %v5390
      %5529 = vmatpush.msra.mxu0 %v5389
      %5530 = vmatpush.msra.mxu0 %v5388
      %5531 = vmatpush.msra.mxu0 %v5387
      %5532 = vmatpush.msra.mxu0 %v5386
      %5533 = vmatpush.msra.mxu0 %v5385
      %5534 = vmatpush.msra.mxu0 %v5384
      %5535 = vmatpush.msra.mxu0 %v5383
      %5536 = vmatpush.msra.mxu0 %v5382
      %5537 = vmatmul.f32.gmra.mxu0 %v5308
      %v5538 = vpop.f32.mrf.mxu0
      %v5539 = vadd.f32 %v5498, %v5538
      %5540 = vmatmul.f32.gmra.mxu0 %v5312
      %v5541 = vpop.f32.mrf.mxu0
      %v5542 = vadd.f32 %v5501, %v5541
      %5543 = vmatmul.f32.gmra.mxu0 %v5316
      %v5544 = vpop.f32.mrf.mxu0
      %v5545 = vadd.f32 %v5504, %v5544
      %5546 = vmatmul.f32.gmra.mxu0 %v5320
      %v5547 = vpop.f32.mrf.mxu0
      %v5548 = vadd.f32 %v5507, %v5547
      %5549 = vmatmul.f32.gmra.mxu0 %v5324
      %v5550 = vpop.f32.mrf.mxu0
      %v5551 = vadd.f32 %v5510, %v5550
      %5552 = vmatmul.f32.gmra.mxu0 %v5328
      %v5553 = vpop.f32.mrf.mxu0
      %v5554 = vadd.f32 %v5513, %v5553
      %5555 = vmatmul.f32.gmra.mxu0 %v5332
      %v5556 = vpop.f32.mrf.mxu0
      %v5557 = vadd.f32 %v5516, %v5556
      %5558 = vmatmul.f32.gmra.mxu0 0.0
      %v5559 = vpop.f32.mrf.mxu0
      %v5560 = vadd.f32 %v5519, %v5559
      %5561 = vdwg.mxu0
      %v5562 = vadd.f32 %v5297, %v5539
      %v5563 = vadd.f32 %v5298, %v5542
      %v5564 = vadd.f32 %v5299, %v5545
      %v5565 = vadd.f32 %v5300, %v5548
      %v5566 = vadd.f32 %v5301, %v5551
      %v5567 = vadd.f32 %v5302, %v5554
      %v5568 = vadd.f32 %v5303, %v5557
      %v5569 = vadd.f32 %v5304, %v5560
      %v5570 = vld [vmem:[%s6] sm:$0x1]
      %v5572 = vperm.slane %v5570, 0
      %v5574 = vadd.f32 %v5562, %v5572
      %v5575 = vadd.f32 %v5563, %v5572
      %v5576 = vadd.f32 %v5564, %v5572
      %v5577 = vadd.f32 %v5565, %v5572
      %v5578 = vadd.f32 %v5566, %v5572
      %v5579 = vadd.f32 %v5567, %v5572
      %v5580 = vadd.f32 %v5568, %v5572
      %v5581 = vadd.f32 %v5569, %v5572
      %vm5582 = vcmask 392192
      %5583 = vst.msk [vmem:[%s278] sm:$0xff] %vm5582, %v5574
      %5584 = vst.msk [vmem:[%s278 + $0x8] sm:$0xff] %vm5582, %v5575
      %5585 = vst.msk [vmem:[%s278 + $0x10] sm:$0xff] %vm5582, %v5576
      %5586 = vst.msk [vmem:[%s278 + $0x18] sm:$0xff] %vm5582, %v5577
      %5587 = vst.msk [vmem:[%s278 + $0x20] sm:$0xff] %vm5582, %v5578
      %5588 = vst.msk [vmem:[%s278 + $0x28] sm:$0xff] %vm5582, %v5579
      %5589 = vst.msk [vmem:[%s278 + $0x30] sm:$0xff] %vm5582, %v5580
      %5590 = vst.msk [vmem:[%s278 + $0x38] sm:$0xff] %vm5582, %v5581
      %p5591 = scmp.lt.s32.totalorder %s18, 1
      %s5592 = scalar_select %p5591, %s18, 1
      %s5593 = smul.addr %s5592, 8
      %s5594 = smul.addr %s5593, 8
      %s5595 = scalar_lea.vmem %s7, %s5594
      // Predicated region
      $region49: #{tpu_custom_call.1} parent=47 // pred_check
        %p5596 = pneg %p188
      $region50: #{tpu_custom_call.1} parent=47 // pred_check_branch
        %5598 = sbr.rel (%p5596) target = $region52
      $region51: #{tpu_custom_call.1} parent=47 // pred_region
        _
      $region52: #{tpu_custom_call.1} parent=47 // pred_fallthru
        _
    $region48: #{tpu_custom_call.1} parent=5 // pred_fallthru
      _
    %p5599 = scmp.le.s32.totalorder 2, %s13
    // Predicated region
    $region53: #{tpu_custom_call.1} parent=5 // pred_check
      %p5600 = pneg %p5599
    $region54: #{tpu_custom_call.1} parent=5 // pred_check_branch
      %5602 = sbr.rel (%p5600) target = $region56
    $region55: #{tpu_custom_call.1} parent=5 // pred_region
      %s5603 = ssub.s32 %s13, 2
      // Predicated region
      $region57: #{tpu_custom_call.1} parent=55 // pred_check
        %p5604 = pneg %p194
      $region58: #{tpu_custom_call.1} parent=55 // pred_check_branch
        %5606 = sbr.rel (%p5604) target = $region60
      $region59: #{tpu_custom_call.1} parent=55 // pred_region
        %p5607 = scmp.lt.s32.totalorder %s19, 1
        %s5608 = scalar_select %p5607, %s19, 1
        %s5609 = smul.addr %s5608, 8
        %s5610 = smul.addr %s5609, 8
        %s5611 = scalar_lea.vmem %s7, %s5610
      $region60: #{tpu_custom_call.1} parent=55 // pred_fallthru
        _
    $region56: #{tpu_custom_call.1} parent=5 // pred_fallthru
      _
  $region6: #{tpu_custom_call.1} parent=0 // loop_footer
    %s17 = sadd.s32 1, %s13
  $region7: #{tpu_custom_call.1} parent=0 // loop_footer_branch
    %12 = sbr.rel target = $region3
  $region8: #{tpu_custom_call.1} parent=0 // loop_exit
    _

</llo_original>
